<compile_context>
chip_gen: v7x
topology: tpu7x:2x2x1
jax: 0.10.0
libtpu: 0.0.40
codegen_flags: <defaults>
</compile_context>

<pallas_src>
import functools
import math

import jax
import jax.numpy as jnp
from jax.experimental import pallas as pl
from jax.experimental.pallas import tpu as pltpu


# ---------------------------------------------------------------------------
# Kernel: one grid step == one batch block (Bblk, S, dim), block fully fused.
# ---------------------------------------------------------------------------
def encoder_block_kernel(eps, x_ref, anw_ref, fnw_ref, wvo_ref, w13_ref,
                         w2_ref, o_ref):
    f32, bf16 = jnp.float32, jnp.bfloat16
    bblk, seq, dim = x_ref.shape
    hidden = w2_ref.shape[0]

    x = x_ref[...]                                              # (Bblk, S, dim) f32

    def rms_norm(t, w_ref):
        # f32 elementwise; rsqrt lands on the (otherwise idle) EUP slot.
        inv = jax.lax.rsqrt(jnp.mean(t * t, axis=-1, keepdims=True) + eps)
        return (t * inv) * w_ref[...]                           # (1, dim) gain broadcasts

    # ---- attention sub-block (exact dead-compute-eliminated form) ----------
    # 'itkl,imtn->itkn' == outer(row_sum(softmax)==1, seq_sum(values)): every
    # seq position receives (sum_seq xn) @ Wv^T @ Wo^T.  Wvo is prefused in the
    # wrapper, and the seq sum is taken BEFORE the projection (linearity), so
    # the whole attention path is one (Bblk, dim) @ (dim, dim) dot.
    xn = rms_norm(x, anw_ref)                                   # (Bblk, S, dim)
    xn_sum = jnp.sum(xn, axis=1)                                # (Bblk, dim)
    attn = jnp.dot(xn_sum.astype(bf16), wvo_ref[...],
                   preferred_element_type=f32)                  # (Bblk, dim)
    h = x + attn[:, None, :]                                    # residual, broadcast over seq

    # ---- feed-forward sub-block on flattened rows (MXU M = Bblk*S) ----------
    hn = rms_norm(h, fnw_ref).reshape(bblk * seq, dim)          # (M, dim)
    g = jnp.dot(hn.astype(bf16), w13_ref[...],
                preferred_element_type=f32)                     # (M, 2*hidden), fused w1|w3
    act = jax.nn.silu(g[:, :hidden]) * g[:, hidden:]            # SwiGLU in f32
    ffn = jnp.dot(act.astype(bf16), w2_ref[...],
                  preferred_element_type=f32)                   # (M, dim)
    # TODO(synk): if hidden grows so that g exceeds a few MiB, tile the
    # w13-matmul + SwiGLU + w2-matmul over hidden chunks with an f32 VMEM
    # accumulator instead of materializing the full g.

    o_ref[...] = h + ffn.reshape(bblk, seq, dim)


# ---------------------------------------------------------------------------
# One-time parameter prep (hoisted out of the per-call forward).
# Weights are given in the torch nn.Linear layout (out_features, in_features).
# ---------------------------------------------------------------------------
def prepare_encoder_block_params(attn_norm_w, ffn_norm_w, wv, wo, w1, w2, w3):
    f32, bf16 = jnp.float32, jnp.bfloat16
    dim = wv.shape[1]
    # Fused value+output projection: attn_row = (sum_seq xn) @ Wv^T @ Wo^T.
    wvo = jnp.dot(wv.T.astype(f32), wo.T.astype(f32),
                  precision=jax.lax.Precision.HIGHEST).astype(bf16)  # (dim, dim)
    w13 = jnp.concatenate([w1.T, w3.T], axis=1).astype(bf16)         # (dim, 2*hidden)
    w2t = w2.T.astype(bf16)                                          # (hidden, dim)
    anw = attn_norm_w.reshape(1, dim).astype(f32)
    fnw = ffn_norm_w.reshape(1, dim).astype(f32)
    return {"anw": anw, "fnw": fnw, "wvo": wvo, "w13": w13, "w2": w2t}


def _pick_batch_block(batch, seq, max_rows):
    """Largest divisor of `batch` whose flattened row count Bblk*seq <= max_rows."""
    bblk = 1
    for cand in range(1, batch + 1):
        if batch % cand == 0 and cand * seq <= max_rows:
            bblk = cand
    return bblk


def _build_call(B, S, dim, hidden, bblk, eps, single_buffer_weights):
    weight_kwargs = {}
    if single_buffer_weights:
        # Grid-invariant blocks gain nothing from double-buffering; at
        # production dims (dim=512, hidden=2048) this saves ~7 MiB of VMEM.
        weight_kwargs["pipeline_mode"] = pl.Buffered(buffer_count=1)

    def invariant(shape):
        return pl.BlockSpec(shape, lambda b: (0,) * len(shape), **weight_kwargs)

    kernel = functools.partial(encoder_block_kernel, float(eps))
    return pl.pallas_call(
        kernel,
        out_shape=jax.ShapeDtypeStruct((B, S, dim), jnp.float32),
        grid=(B // bblk,),
        in_specs=[
            pl.BlockSpec((bblk, S, dim), lambda b: (b, 0, 0)),  # x
            invariant((1, dim)),            # attention_norm gain (f32)
            invariant((1, dim)),            # ffn_norm gain       (f32)
            invariant((dim, dim)),          # Wvo  (bf16, prefused Wv^T Wo^T)
            invariant((dim, 2 * hidden)),   # W1|W3 (bf16, fused)
            invariant((hidden, dim)),       # W2   (bf16)
        ],
        out_specs=pl.BlockSpec((bblk, S, dim), lambda b: (b, 0, 0)),
        compiler_params=pltpu.CompilerParams(
            # Even step count keeps both v7x TensorCores busy; no-op on v5e/v6e.
            dimension_semantics=("parallel",),
            vmem_limit_bytes=32 * 1024 * 1024),
    )


def encoder_block_pallas(x, params, eps=1e-5, max_rows=256):
    """Fused EncoderBlock forward.  `params` from prepare_encoder_block_params().

    max_rows is the target MXU M dimension per grid step (Bblk*S):
    128 fills the v5e MXU; 256 fills the v6e/v7x MXU.
    """
    B, S, dim = x.shape
    hidden = params["w2"].shape[0]
    bblk = _pick_batch_block(B, S, max_rows)
    args = (x.astype(jnp.float32), params["anw"], params["fnw"],
            params["wvo"], params["w13"], params["w2"])
    try:
        out = _build_call(B, S, dim, hidden, bblk, eps, True)(*args)
        return jax.block_until_ready(out)
    except Exception:
        # TODO(synk): this jax build rejected pipeline_mode=pl.Buffered(1);
        # fall back to default (double-buffered) weight specs.
        return _build_call(B, S, dim, hidden, bblk, eps, False)(*args)


# ---------------------------------------------------------------------------
# Faithful plain-JAX transliteration of the FULL torch forward (f32), used to
# verify the kernel (including that the q/k/RoPE/softmax path is output-dead).
# ---------------------------------------------------------------------------
def reference_encoder_block(x, attn_norm_w, ffn_norm_w,
                            wq, wk, wv, wo, w1, w2, w3,
                            freqs_cos, freqs_sin, n_heads, eps):
    B, S, dim = x.shape
    H = n_heads
    D = dim // H

    def rms_norm(t, w):
        return w * (t * jax.lax.rsqrt(jnp.mean(t * t, axis=-1, keepdims=True) + eps))

    def rope(t):  # mirrors torch.view_as_complex on (..., D//2, 2)
        tr = t.reshape(B, S, H, D // 2, 2)
        re, im = tr[..., 0], tr[..., 1]
        c = freqs_cos[None, :, None, :]
        s = freqs_sin[None, :, None, :]
        return jnp.stack([re * c - im * s, re * s + im * c], axis=-1).reshape(B, S, H, D)

    # --- SelfAttention ---
    xn = rms_norm(x, attn_norm_w)
    xq = (xn @ wq.T).reshape(B, S, H, D)
    xk = (xn @ wk.T).reshape(B, S, H, D)
    xv = (xn @ wv.T).reshape(B, S, H, D)
    xq = rope(xq)
    keys = rope(xk)              # repeat_kv is identity (n_rep == 1)
    values = xv
    scores = jnp.einsum('imkl,inkl->ikmn', xq, keys) / math.sqrt(D)
    scores = jax.nn.softmax(scores.astype(jnp.float32), axis=-1)
    output = jnp.einsum('itkl,imtn->itkn', scores, values)     # torch's contraction, verbatim
    output = output.transpose(0, 2, 1, 3).reshape(B, S, H * D)
    h = x + output @ wo.T

    # --- FeedForward ---
    hn = rms_norm(h, ffn_norm_w)
    ffn = (jax.nn.silu(hn @ w1.T) * (hn @ w3.T)) @ w2.T
    return h + ffn


if __name__ == "__main__":
    # Small shapes consistent with the module (ModelArgs: batch_size=32,
    # seq_size=16; dim/heads scaled down from 512/8 to 128/4).  With S=16 and
    # max_rows=256 this gives Bblk=16 -> grid=(2,), MXU M=256 per step.
    B, S, DIM, H = 32, 16, 128, 4
    D = DIM // H                     # head_dim = 32
    HIDDEN = 4 * DIM                 # 512
    EPS = 1e-5                       # args.norm_eps

    key = jax.random.PRNGKey(0)
    kx, kq, kk, kv, ko, k1, k2, k3, kan, kfn = jax.random.split(key, 10)

    def linear_init(k, out_f, in_f):        # torch Linear layout: (out, in)
        return jax.random.normal(k, (out_f, in_f), dtype=jnp.float32) / math.sqrt(in_f)

    x = jax.random.normal(kx, (B, S, DIM), dtype=jnp.float32)
    wq = linear_init(kq, H * D, DIM)
    wk = linear_init(kk, H * D, DIM)
    wv = linear_init(kv, H * D, DIM)
    wo = linear_init(ko, DIM, H * D)
    w1 = linear_init(k1, HIDDEN, DIM)
    w2 = linear_init(k2, DIM, HIDDEN)
    w3 = linear_init(k3, HIDDEN, DIM)
    attn_norm_w = 1.0 + 0.1 * jax.random.normal(kan, (DIM,), dtype=jnp.float32)
    ffn_norm_w = 1.0 + 0.1 * jax.random.normal(kfn, (DIM,), dtype=jnp.float32)

    # RoPE tables (used only by the reference; provably output-irrelevant here).
    half = D // 2
    inv_freq = 1.0 / (10000.0 ** (jnp.arange(half, dtype=jnp.float32) * 2.0 / D))
    angles = jnp.arange(S, dtype=jnp.float32)[:, None] * inv_freq[None, :]
    freqs_cos, freqs_sin = jnp.cos(angles), jnp.sin(angles)

    # One-time weight prep, then the forward (kernel) itself.
    params = prepare_encoder_block_params(attn_norm_w, ffn_norm_w, wv, wo, w1, w2, w3)
    out = encoder_block_pallas(x, params, eps=EPS)
    out = jax.block_until_ready(out)

    ref = reference_encoder_block(x, attn_norm_w, ffn_norm_w, wq, wk, wv, wo,
                                  w1, w2, w3, freqs_cos, freqs_sin, H, EPS)
    ref = jax.block_until_ready(ref)

    assert out.shape == (B, S, DIM)
    diff = out - ref
    max_err = float(jnp.max(jnp.abs(diff)))
    rel_err = float(jnp.sqrt(jnp.sum(diff * diff) / jnp.sum(ref * ref)))
    # Norm-based check is the meaningful guard: any semantic change (e.g. the
    # upstream module switching to standard attention, which would invalidate
    # the dead-compute elimination) gives an O(1) relative error here, far
    # above bf16-vs-f32 rounding noise.
    assert rel_err < 2e-2, f"relative error = {rel_err}"
    # Element-wise check with tolerance for bf16 MXU (f32 accumulation) tails.
    assert jnp.allclose(out, ref, atol=2e-1, rtol=5e-2), f"max abs err = {max_err}"
    print("KERNEL_OK")
</pallas_src>

<mosaic_0001>
module attributes {stable_mosaic.version = 11 : i64} {
  func.func @encoder_block_kernel(%arg0: i32, %arg1: memref<16x16x128xf32, #tpu.memory_space<vmem>>, %arg2: memref<1x128xf32, #tpu.memory_space<vmem>>, %arg3: memref<1x128xf32, #tpu.memory_space<vmem>>, %arg4: memref<128x128xbf16, #tpu.memory_space<vmem>>, %arg5: memref<128x1024xbf16, #tpu.memory_space<vmem>>, %arg6: memref<512x128xbf16, #tpu.memory_space<vmem>>, %arg7: memref<16x16x128xf32, #tpu.memory_space<vmem>>) attributes {dimension_semantics = [#tpu.dimension_semantics<parallel>], iteration_bounds = array<i64: 2>, scalar_prefetch = 0 : i64, scratch_operands = 0 : i64, tpu.core_type = #tpu.core_type<tc>, window_params = [{transform_indices = @transform_0, window_bounds = array<i64: 16, 16, 128>}, {pipeline_mode = #tpu.pipeline_mode<synchronous>, transform_indices = @transform_1, window_bounds = array<i64: 1, 128>}, {pipeline_mode = #tpu.pipeline_mode<synchronous>, transform_indices = @transform_2, window_bounds = array<i64: 1, 128>}, {pipeline_mode = #tpu.pipeline_mode<synchronous>, transform_indices = @transform_3, window_bounds = array<i64: 128, 128>}, {pipeline_mode = #tpu.pipeline_mode<synchronous>, transform_indices = @transform_4, window_bounds = array<i64: 128, 1024>}, {pipeline_mode = #tpu.pipeline_mode<synchronous>, transform_indices = @transform_5, window_bounds = array<i64: 512, 128>}, {transform_indices = @transform_6, window_bounds = array<i64: 16, 16, 128>}]} {
    %c0 = arith.constant 0 : index
    %c0_0 = arith.constant 0 : index
    %c0_1 = arith.constant 0 : index
    %0 = vector.load %arg1[%c0, %c0_0, %c0_1] : memref<16x16x128xf32, #tpu.memory_space<vmem>>, vector<16x16x128xf32>
    %1 = arith.mulf %0, %0 : vector<16x16x128xf32>
    %cst = arith.constant dense<0.000000e+00> : vector<16x16xf32>
    %2 = vector.multi_reduction <add>, %1, %cst [2] : vector<16x16x128xf32> to vector<16x16xf32>
    %3 = vector.shape_cast %2 : vector<16x16xf32> to vector<16x16x1xf32>
    %cst_2 = arith.constant 1.280000e+02 : f32
    %4 = vector.broadcast %cst_2 : f32 to vector<16x16x1xf32>
    %5 = arith.divf %3, %4 : vector<16x16x1xf32>
    %cst_3 = arith.constant 9.99999974E-6 : f32
    %6 = vector.broadcast %cst_3 : f32 to vector<16x16x1xf32>
    %7 = arith.addf %5, %6 : vector<16x16x1xf32>
    %8 = math.rsqrt %7 : vector<16x16x1xf32>
    %9 = vector.broadcast %8 : vector<16x16x1xf32> to vector<16x16x128xf32>
    %10 = arith.mulf %0, %9 : vector<16x16x128xf32>
    %c0_4 = arith.constant 0 : index
    %c0_5 = arith.constant 0 : index
    %11 = vector.load %arg2[%c0_4, %c0_5] : memref<1x128xf32, #tpu.memory_space<vmem>>, vector<1x128xf32>
    %12 = vector.shape_cast %11 : vector<1x128xf32> to vector<1x1x128xf32>
    %13 = vector.broadcast %12 : vector<1x1x128xf32> to vector<16x16x128xf32>
    %14 = arith.mulf %10, %13 : vector<16x16x128xf32>
    %cst_6 = arith.constant dense<0.000000e+00> : vector<16x128xf32>
    %15 = vector.multi_reduction <add>, %14, %cst_6 [1] : vector<16x16x128xf32> to vector<16x128xf32>
    %16 = arith.truncf %15 : vector<16x128xf32> to vector<16x128xbf16>
    %c0_7 = arith.constant 0 : index
    %c0_8 = arith.constant 0 : index
    %17 = vector.load %arg4[%c0_7, %c0_8] : memref<128x128xbf16, #tpu.memory_space<vmem>>, vector<128x128xbf16>
    %cst_9 = arith.constant dense<0.000000e+00> : vector<16x128xf32>
    %18 = tpu.matmul %16, %17, %cst_9 {dimension_numbers = #tpu.dot_dimension_numbers<[1], [0], [0], [1], [0, 0, 1, 1], [], []>} : vector<16x128xbf16>, vector<128x128xbf16>, vector<16x128xf32> -> vector<16x128xf32>
    %19 = vector.shape_cast %18 : vector<16x128xf32> to vector<16x1x128xf32>
    %20 = vector.broadcast %19 : vector<16x1x128xf32> to vector<16x16x128xf32>
    %21 = arith.addf %0, %20 : vector<16x16x128xf32>
    %22 = arith.mulf %21, %21 : vector<16x16x128xf32>
    %cst_10 = arith.constant dense<0.000000e+00> : vector<16x16xf32>
    %23 = vector.multi_reduction <add>, %22, %cst_10 [2] : vector<16x16x128xf32> to vector<16x16xf32>
    %24 = vector.shape_cast %23 : vector<16x16xf32> to vector<16x16x1xf32>
    %cst_11 = arith.constant 1.280000e+02 : f32
    %25 = vector.broadcast %cst_11 : f32 to vector<16x16x1xf32>
    %26 = arith.divf %24, %25 : vector<16x16x1xf32>
    %cst_12 = arith.constant 9.99999974E-6 : f32
    %27 = vector.broadcast %cst_12 : f32 to vector<16x16x1xf32>
    %28 = arith.addf %26, %27 : vector<16x16x1xf32>
    %29 = math.rsqrt %28 : vector<16x16x1xf32>
    %30 = vector.broadcast %29 : vector<16x16x1xf32> to vector<16x16x128xf32>
    %31 = arith.mulf %21, %30 : vector<16x16x128xf32>
    %c0_13 = arith.constant 0 : index
    %c0_14 = arith.constant 0 : index
    %32 = vector.load %arg3[%c0_13, %c0_14] : memref<1x128xf32, #tpu.memory_space<vmem>>, vector<1x128xf32>
    %33 = vector.shape_cast %32 : vector<1x128xf32> to vector<1x1x128xf32>
    %34 = vector.broadcast %33 : vector<1x1x128xf32> to vector<16x16x128xf32>
    %35 = arith.mulf %31, %34 : vector<16x16x128xf32>
    %36 = vector.shape_cast %35 : vector<16x16x128xf32> to vector<256x128xf32>
    %37 = arith.truncf %36 : vector<256x128xf32> to vector<256x128xbf16>
    %c0_15 = arith.constant 0 : index
    %c0_16 = arith.constant 0 : index
    %38 = vector.load %arg5[%c0_15, %c0_16] : memref<128x1024xbf16, #tpu.memory_space<vmem>>, vector<128x1024xbf16>
    %cst_17 = arith.constant dense<0.000000e+00> : vector<256x1024xf32>
    %39 = tpu.matmul %37, %38, %cst_17 {dimension_numbers = #tpu.dot_dimension_numbers<[1], [0], [0], [1], [0, 0, 1, 1], [], []>} : vector<256x128xbf16>, vector<128x1024xbf16>, vector<256x1024xf32> -> vector<256x1024xf32>
    %40 = vector.extract_strided_slice %39 {offsets = [0, 0], sizes = [256, 512], strides = [1, 1]} : vector<256x1024xf32> to vector<256x512xf32>
    %41 = arith.negf %40 : vector<256x512xf32>
    %42 = math.exp %41 : vector<256x512xf32>
    %cst_18 = arith.constant 1.000000e+00 : f32
    %43 = vector.broadcast %cst_18 : f32 to vector<256x512xf32>
    %44 = arith.addf %43, %42 : vector<256x512xf32>
    %45 = arith.divf %43, %44 : vector<256x512xf32>
    %46 = arith.mulf %40, %45 : vector<256x512xf32>
    %47 = vector.extract_strided_slice %39 {offsets = [0, 512], sizes = [256, 512], strides = [1, 1]} : vector<256x1024xf32> to vector<256x512xf32>
    %48 = arith.mulf %46, %47 : vector<256x512xf32>
    %49 = arith.truncf %48 : vector<256x512xf32> to vector<256x512xbf16>
    %c0_19 = arith.constant 0 : index
    %c0_20 = arith.constant 0 : index
    %50 = vector.load %arg6[%c0_19, %c0_20] : memref<512x128xbf16, #tpu.memory_space<vmem>>, vector<512x128xbf16>
    %cst_21 = arith.constant dense<0.000000e+00> : vector<256x128xf32>
    %51 = tpu.matmul %49, %50, %cst_21 {dimension_numbers = #tpu.dot_dimension_numbers<[1], [0], [0], [1], [0, 0, 1, 1], [], []>} : vector<256x512xbf16>, vector<512x128xbf16>, vector<256x128xf32> -> vector<256x128xf32>
    %52 = vector.shape_cast %51 : vector<256x128xf32> to vector<16x16x128xf32>
    %53 = arith.addf %21, %52 : vector<16x16x128xf32>
    %c0_22 = arith.constant 0 : index
    %c0_23 = arith.constant 0 : index
    %c0_24 = arith.constant 0 : index
    %54 = vector.load %arg7[%c0_22, %c0_23, %c0_24] : memref<16x16x128xf32, #tpu.memory_space<vmem>>, vector<16x16x128xf32>
    tpu.vector_store %arg7[%c0_22, %c0_23, %c0_24], %53 {strides = array<i32>} : memref<16x16x128xf32, #tpu.memory_space<vmem>>, vector<16x16x128xf32>,
    return
  }
  func.func @transform_0(%arg0: i32) -> (i32, i32, i32) {
    %c0_i32 = arith.constant 0 : i32
    %c0_i32_0 = arith.constant 0 : i32
    %c0_i32_1 = arith.constant 0 : i32
    return %arg0, %c0_i32, %c0_i32_0 : i32, i32, i32
  }
  func.func @transform_1(%arg0: i32) -> (i32, i32) {
    %c0_i32 = arith.constant 0 : i32
    %c0_i32_0 = arith.constant 0 : i32
    %c0_i32_1 = arith.constant 0 : i32
    return %c0_i32, %c0_i32_0 : i32, i32
  }
  func.func @transform_2(%arg0: i32) -> (i32, i32) {
    %c0_i32 = arith.constant 0 : i32
    %c0_i32_0 = arith.constant 0 : i32
    %c0_i32_1 = arith.constant 0 : i32
    return %c0_i32, %c0_i32_0 : i32, i32
  }
  func.func @transform_3(%arg0: i32) -> (i32, i32) {
    %c0_i32 = arith.constant 0 : i32
    %c0_i32_0 = arith.constant 0 : i32
    %c0_i32_1 = arith.constant 0 : i32
    return %c0_i32, %c0_i32_0 : i32, i32
  }
  func.func @transform_4(%arg0: i32) -> (i32, i32) {
    %c0_i32 = arith.constant 0 : i32
    %c0_i32_0 = arith.constant 0 : i32
    %c0_i32_1 = arith.constant 0 : i32
    return %c0_i32, %c0_i32_0 : i32, i32
  }
  func.func @transform_5(%arg0: i32) -> (i32, i32) {
    %c0_i32 = arith.constant 0 : i32
    %c0_i32_0 = arith.constant 0 : i32
    %c0_i32_1 = arith.constant 0 : i32
    return %c0_i32, %c0_i32_0 : i32, i32
  }
  func.func @transform_6(%arg0: i32) -> (i32, i32, i32) {
    %c0_i32 = arith.constant 0 : i32
    %c0_i32_0 = arith.constant 0 : i32
    %c0_i32_1 = arith.constant 0 : i32
    return %arg0, %c0_i32, %c0_i32_0 : i32, i32, i32
  }
}

module attributes {stable_mosaic.version = 11 : i64} {
  func.func @encoder_block_kernel(%arg0: i32, %arg1: memref<16x16x128xf32, #tpu.memory_space<vmem>>, %arg2: memref<1x128xf32, #tpu.memory_space<vmem>>, %arg3: memref<1x128xf32, #tpu.memory_space<vmem>>, %arg4: memref<128x128xbf16, #tpu.memory_space<vmem>>, %arg5: memref<128x1024xbf16, #tpu.memory_space<vmem>>, %arg6: memref<512x128xbf16, #tpu.memory_space<vmem>>, %arg7: memref<16x16x128xf32, #tpu.memory_space<vmem>>) attributes {dimension_semantics = [#tpu.dimension_semantics<parallel>], iteration_bounds = array<i64: 2>, scalar_prefetch = 0 : i64, scratch_operands = 0 : i64, tpu.core_type = #tpu.core_type<tc>, window_params = [{transform_indices = @transform_0, window_bounds = array<i64: 16, 16, 128>}, {pipeline_mode = #tpu.pipeline_mode<synchronous>, transform_indices = @transform_1, window_bounds = array<i64: 1, 128>}, {pipeline_mode = #tpu.pipeline_mode<synchronous>, transform_indices = @transform_2, window_bounds = array<i64: 1, 128>}, {pipeline_mode = #tpu.pipeline_mode<synchronous>, transform_indices = @transform_3, window_bounds = array<i64: 128, 128>}, {pipeline_mode = #tpu.pipeline_mode<synchronous>, transform_indices = @transform_4, window_bounds = array<i64: 128, 1024>}, {pipeline_mode = #tpu.pipeline_mode<synchronous>, transform_indices = @transform_5, window_bounds = array<i64: 512, 128>}, {transform_indices = @transform_6, window_bounds = array<i64: 16, 16, 128>}]} {
    %c0 = arith.constant 0 : index
    %c0_0 = arith.constant 0 : index
    %c0_1 = arith.constant 0 : index
    %0 = vector.load %arg1[%c0, %c0_0, %c0_1] : memref<16x16x128xf32, #tpu.memory_space<vmem>>, vector<16x16x128xf32>
    %1 = arith.mulf %0, %0 : vector<16x16x128xf32>
    %cst = arith.constant dense<0.000000e+00> : vector<16x16xf32>
    %2 = vector.multi_reduction <add>, %1, %cst [2] : vector<16x16x128xf32> to vector<16x16xf32>
    %3 = vector.shape_cast %2 : vector<16x16xf32> to vector<16x16x1xf32>
    %cst_2 = arith.constant 1.280000e+02 : f32
    %4 = vector.broadcast %cst_2 : f32 to vector<16x16x1xf32>
    %5 = arith.divf %3, %4 : vector<16x16x1xf32>
    %cst_3 = arith.constant 9.99999974E-6 : f32
    %6 = vector.broadcast %cst_3 : f32 to vector<16x16x1xf32>
    %7 = arith.addf %5, %6 : vector<16x16x1xf32>
    %8 = math.rsqrt %7 : vector<16x16x1xf32>
    %9 = vector.broadcast %8 : vector<16x16x1xf32> to vector<16x16x128xf32>
    %10 = arith.mulf %0, %9 : vector<16x16x128xf32>
    %c0_4 = arith.constant 0 : index
    %c0_5 = arith.constant 0 : index
    %11 = vector.load %arg2[%c0_4, %c0_5] : memref<1x128xf32, #tpu.memory_space<vmem>>, vector<1x128xf32>
    %12 = vector.shape_cast %11 : vector<1x128xf32> to vector<1x1x128xf32>
    %13 = vector.broadcast %12 : vector<1x1x128xf32> to vector<16x16x128xf32>
    %14 = arith.mulf %10, %13 : vector<16x16x128xf32>
    %cst_6 = arith.constant dense<0.000000e+00> : vector<16x128xf32>
    %15 = vector.multi_reduction <add>, %14, %cst_6 [1] : vector<16x16x128xf32> to vector<16x128xf32>
    %16 = arith.truncf %15 : vector<16x128xf32> to vector<16x128xbf16>
    %c0_7 = arith.constant 0 : index
    %c0_8 = arith.constant 0 : index
    %17 = vector.load %arg4[%c0_7, %c0_8] : memref<128x128xbf16, #tpu.memory_space<vmem>>, vector<128x128xbf16>
    %cst_9 = arith.constant dense<0.000000e+00> : vector<16x128xf32>
    %18 = tpu.matmul %16, %17, %cst_9 {dimension_numbers = #tpu.dot_dimension_numbers<[1], [0], [0], [1], [0, 0, 1, 1], [], []>} : vector<16x128xbf16>, vector<128x128xbf16>, vector<16x128xf32> -> vector<16x128xf32>
    %19 = vector.shape_cast %18 : vector<16x128xf32> to vector<16x1x128xf32>
    %20 = vector.broadcast %19 : vector<16x1x128xf32> to vector<16x16x128xf32>
    %21 = arith.addf %0, %20 : vector<16x16x128xf32>
    %22 = arith.mulf %21, %21 : vector<16x16x128xf32>
    %cst_10 = arith.constant dense<0.000000e+00> : vector<16x16xf32>
    %23 = vector.multi_reduction <add>, %22, %cst_10 [2] : vector<16x16x128xf32> to vector<16x16xf32>
    %24 = vector.shape_cast %23 : vector<16x16xf32> to vector<16x16x1xf32>
    %cst_11 = arith.constant 1.280000e+02 : f32
    %25 = vector.broadcast %cst_11 : f32 to vector<16x16x1xf32>
    %26 = arith.divf %24, %25 : vector<16x16x1xf32>
    %cst_12 = arith.constant 9.99999974E-6 : f32
    %27 = vector.broadcast %cst_12 : f32 to vector<16x16x1xf32>
    %28 = arith.addf %26, %27 : vector<16x16x1xf32>
    %29 = math.rsqrt %28 : vector<16x16x1xf32>
    %30 = vector.broadcast %29 : vector<16x16x1xf32> to vector<16x16x128xf32>
    %31 = arith.mulf %21, %30 : vector<16x16x128xf32>
    %c0_13 = arith.constant 0 : index
    %c0_14 = arith.constant 0 : index
    %32 = vector.load %arg3[%c0_13, %c0_14] : memref<1x128xf32, #tpu.memory_space<vmem>>, vector<1x128xf32>
    %33 = vector.shape_cast %32 : vector<1x128xf32> to vector<1x1x128xf32>
    %34 = vector.broadcast %33 : vector<1x1x128xf32> to vector<16x16x128xf32>
    %35 = arith.mulf %31, %34 : vector<16x16x128xf32>
    %36 = vector.shape_cast %35 : vector<16x16x128xf32> to vector<256x128xf32>
    %37 = arith.truncf %36 : vector<256x128xf32> to vector<256x128xbf16>
    %c0_15 = arith.constant 0 : index
    %c0_16 = arith.constant 0 : index
    %38 = vector.load %arg5[%c0_15, %c0_16] : memref<128x1024xbf16, #tpu.memory_space<vmem>>, vector<128x1024xbf16>
    %cst_17 = arith.constant dense<0.000000e+00> : vector<256x1024xf32>
    %39 = tpu.matmul %37, %38, %cst_17 {dimension_numbers = #tpu.dot_dimension_numbers<[1], [0], [0], [1], [0, 0, 1, 1], [], []>} : vector<256x128xbf16>, vector<128x1024xbf16>, vector<256x1024xf32> -> vector<256x1024xf32>
    %40 = vector.extract_strided_slice %39 {offsets = [0, 0], sizes = [256, 512], strides = [1, 1]} : vector<256x1024xf32> to vector<256x512xf32>
    %41 = arith.negf %40 : vector<256x512xf32>
    %42 = math.exp %41 : vector<256x512xf32>
    %cst_18 = arith.constant 1.000000e+00 : f32
    %43 = vector.broadcast %cst_18 : f32 to vector<256x512xf32>
    %44 = arith.addf %43, %42 : vector<256x512xf32>
    %45 = arith.divf %43, %44 : vector<256x512xf32>
    %46 = arith.mulf %40, %45 : vector<256x512xf32>
    %47 = vector.extract_strided_slice %39 {offsets = [0, 512], sizes = [256, 512], strides = [1, 1]} : vector<256x1024xf32> to vector<256x512xf32>
    %48 = arith.mulf %46, %47 : vector<256x512xf32>
    %49 = arith.truncf %48 : vector<256x512xf32> to vector<256x512xbf16>
    %c0_19 = arith.constant 0 : index
    %c0_20 = arith.constant 0 : index
    %50 = vector.load %arg6[%c0_19, %c0_20] : memref<512x128xbf16, #tpu.memory_space<vmem>>, vector<512x128xbf16>
    %cst_21 = arith.constant dense<0.000000e+00> : vector<256x128xf32>
    %51 = tpu.matmul %49, %50, %cst_21 {dimension_numbers = #tpu.dot_dimension_numbers<[1], [0], [0], [1], [0, 0, 1, 1], [], []>} : vector<256x512xbf16>, vector<512x128xbf16>, vector<256x128xf32> -> vector<256x128xf32>
    %52 = vector.shape_cast %51 : vector<256x128xf32> to vector<16x16x128xf32>
    %53 = arith.addf %21, %52 : vector<16x16x128xf32>
    %c0_22 = arith.constant 0 : index
    %c0_23 = arith.constant 0 : index
    %c0_24 = arith.constant 0 : index
    %54 = vector.load %arg7[%c0_22, %c0_23, %c0_24] : memref<16x16x128xf32, #tpu.memory_space<vmem>>, vector<16x16x128xf32>
    tpu.vector_store %arg7[%c0_22, %c0_23, %c0_24], %53 {strides = array<i32>} : memref<16x16x128xf32, #tpu.memory_space<vmem>>, vector<16x16x128xf32>,
    return
  }
  func.func @transform_0(%arg0: i32) -> (i32, i32, i32) {
    %c0_i32 = arith.constant 0 : i32
    %c0_i32_0 = arith.constant 0 : i32
    %c0_i32_1 = arith.constant 0 : i32
    return %arg0, %c0_i32, %c0_i32_0 : i32, i32, i32
  }
  func.func @transform_1(%arg0: i32) -> (i32, i32) {
    %c0_i32 = arith.constant 0 : i32
    %c0_i32_0 = arith.constant 0 : i32
    %c0_i32_1 = arith.constant 0 : i32
    return %c0_i32, %c0_i32_0 : i32, i32
  }
  func.func @transform_2(%arg0: i32) -> (i32, i32) {
    %c0_i32 = arith.constant 0 : i32
    %c0_i32_0 = arith.constant 0 : i32
    %c0_i32_1 = arith.constant 0 : i32
    return %c0_i32, %c0_i32_0 : i32, i32
  }
  func.func @transform_3(%arg0: i32) -> (i32, i32) {
    %c0_i32 = arith.constant 0 : i32
    %c0_i32_0 = arith.constant 0 : i32
    %c0_i32_1 = arith.constant 0 : i32
    return %c0_i32, %c0_i32_0 : i32, i32
  }
  func.func @transform_4(%arg0: i32) -> (i32, i32) {
    %c0_i32 = arith.constant 0 : i32
    %c0_i32_0 = arith.constant 0 : i32
    %c0_i32_1 = arith.constant 0 : i32
    return %c0_i32, %c0_i32_0 : i32, i32
  }
  func.func @transform_5(%arg0: i32) -> (i32, i32) {
    %c0_i32 = arith.constant 0 : i32
    %c0_i32_0 = arith.constant 0 : i32
    %c0_i32_1 = arith.constant 0 : i32
    return %c0_i32, %c0_i32_0 : i32, i32
  }
  func.func @transform_6(%arg0: i32) -> (i32, i32, i32) {
    %c0_i32 = arith.constant 0 : i32
    %c0_i32_0 = arith.constant 0 : i32
    %c0_i32_1 = arith.constant 0 : i32
    return %arg0, %c0_i32, %c0_i32_0 : i32, i32, i32
  }
}

</mosaic_0001>

<llo_original>
// kernel: tpu_custom_call.1
$region0: #{tpu_custom_call.1}
  #allocation0 [shape = 'u32[]', space=smem, size = 0x4, offset = 0x4, fixed_abs, tag = 'smem constant byte address 0x4 - core index']
  #allocation1 [shape = 'u32[144,128]{1,0:T(1,128)}', space=vmem, size = 0x12000, scoped, tag = 'internal scratch']
  %s0 = inlined_call_operand.hbm [shape: f32[32,16,128], index: 0, kind: input, shape index: {}]
  %s1 = inlined_call_operand.vmem [shape: f32[1,128], index: 1, kind: input, shape index: {}]
  %s2 = inlined_call_operand.vmem [shape: f32[1,128], index: 2, kind: input, shape index: {}]
  %s3 = inlined_call_operand.hbm [shape: bf16[128,128], index: 3, kind: input, shape index: {}]
  %s4 = inlined_call_operand.hbm [shape: bf16[128,1024], index: 4, kind: input, shape index: {}]
  %s5 = inlined_call_operand.hbm [shape: bf16[512,128], index: 5, kind: input, shape index: {}]
  %s6 = inlined_call_operand.hbm [shape: f32[32,16,128], index: 6, kind: output, shape index: {}]
  %s7 = sld [smem:[#allocation0]]
  $region73: #{tpu_custom_call.1} parent=0
    _
  %s9 = ssub.s32 1, %s7
  %s10 = scalar_select 0, %s9, %s7
  $region1: #{tpu_custom_call.1} parent=0
    #allocation2 [shape = 'u8[262144]{0}', space=vmem, size = 0x40000, scoped, tag = 'input window, operand 0']
    #allocation3 [shape = 's32[2]{0}', space=sflag, size = 0x8, scoped, tag = 'scoped memory for tpu_custom_call.1']
    #allocation4 [shape = 's32[2]{0}', space=sflag, size = 0x8, scoped, tag = 'scoped memory for tpu_custom_call.1']
    #allocation5 [shape = 'u8[32768]{0}', space=vmem, size = 0x8000, scoped, tag = 'input window, operand 3, single buffered']
    #allocation6 [shape = 's32[1]{0}', space=sflag, size = 0x4, scoped, tag = 'scoped memory for tpu_custom_call.1']
    #allocation7 [shape = 'u8[262144]{0}', space=vmem, size = 0x40000, scoped, tag = 'input window, operand 4, single buffered']
    #allocation8 [shape = 'u8[131072]{0}', space=vmem, size = 0x20000, scoped, tag = 'input window, operand 5, single buffered']
    #allocation9 [shape = 's32[1]{0}', space=sflag, size = 0x4, scoped, tag = 'scoped memory for tpu_custom_call.1']
    #allocation10 [shape = 'u8[262144]{0}', space=vmem, size = 0x40000, scoped, tag = 'output window, operand 0']
    %11 = vsyncpa [#allocation3], 0
    %s12 = scalar_lea.sflag [#allocation3], 1
    %13 = vsyncpa %s12, 0
    %14 = vsyncpa [#allocation6], 0
    %15 = vsyncpa [#allocation9], 0
    %16 = vsyncpa [#allocation4], 0
    %s17 = scalar_lea.sflag [#allocation4], 1
    %18 = vsyncpa %s17, 0
    loop: start=0, step=1, limit=4
    $region2: #{tpu_custom_call.1} parent=1 // loop_pre_header
      _
    $region3: #{tpu_custom_call.1} parent=1 // loop_header
      %s20 = sphi 0, %s24
      %p21 = scmp.ge.s32.totalorder %s20, 4
      %s30 = sphi 0, %s32
      %s33 = sphi 0, %s30
      %s34 = sphi 0, %s33
      %s50 = sphi 0, %s34
      %s54 = sphi 0, %s54
      %s56 = sphi 0, %s54
      %s57 = sphi 0, %s56
      %s71 = sphi 0, %s57
      %s75 = sphi 0, %s75
      %s77 = sphi 0, %s75
      %s78 = sphi 0, %s77
      %s92 = sphi 0, %s78
      %s96 = sphi 0, %s96
      %s98 = sphi 0, %s96
      %s99 = sphi 0, %s98
      %s113 = sphi 0, %s99
      %s117 = sphi 0, %s117
      %s119 = sphi 0, %s117
      %s120 = sphi 0, %s119
      %s134 = sphi 0, %s120
      %s138 = sphi 0, %s138
      %s140 = sphi 0, %s138
      %s141 = sphi 0, %s140
      %s155 = sphi 0, %s141
      %s161 = sphi 0, %s163
      %s164 = sphi 0, %s161
      %s165 = sphi 0, %s164
      %s181 = sphi 0, %s165
    $region4: #{tpu_custom_call.1} parent=1 // loop_header_branch
      %23 = sbr.rel (%p21) target = $region8
    $region5: #{tpu_custom_call.1} parent=1 // loop_body
      %s25 = ssub.s32 %s20, 1
      %s26 = ssub.s32 %s20, 2
      %s27 = sadd.s32 %s20, 1
      %s28 = ssub.s32 %s20, %s27
      %p29 = scmp.eq.s32.totalorder %s28, 0
      %s31 = sadd.s32 %s30, 1
      %s32 = scalar_select %p29, %s30, %s31
      %p35 = pneg %p29
      %p36 = scmp.eq.s32.totalorder %s20, 1
      %p37 = por %p35, %p36
      %p38 = scmp.ne.s32.totalorder %s30, %s33
      %p39 = scmp.eq.s32.totalorder %s20, 0
      %p40 = por %p38, %p39
      %p41 = scmp.ne.s32.totalorder %s30, %s33
      %p42 = scmp.eq.s32.totalorder %s25, 1
      %p43 = por %p41, %p42
      %p44 = scmp.ne.s32.totalorder %s33, %s34
      %p45 = scmp.eq.s32.totalorder %s25, 0
      %p46 = por %p44, %p45
      %p47 = scmp.ne.s32.totalorder %s33, %s34
      %p48 = scmp.eq.s32.totalorder %s26, 1
      %p49 = por %p47, %p48
      %p51 = scmp.ne.s32.totalorder %s34, %s50
      %p52 = scmp.eq.s32.totalorder %s26, 0
      %p53 = por %p51, %p52
      %s55 = sadd.s32 %s54, 1
      %p58 = scmp.eq.s32.totalorder %s20, 1
      %p59 = scmp.ne.s32.totalorder %s54, %s56
      %p60 = scmp.eq.s32.totalorder %s20, 0
      %p61 = por %p59, %p60
      %p62 = scmp.ne.s32.totalorder %s54, %s56
      %p63 = scmp.eq.s32.totalorder %s25, 1
      %p64 = por %p62, %p63
      %p65 = scmp.ne.s32.totalorder %s56, %s57
      %p66 = scmp.eq.s32.totalorder %s25, 0
      %p67 = por %p65, %p66
      %p68 = scmp.ne.s32.totalorder %s56, %s57
      %p69 = scmp.eq.s32.totalorder %s26, 1
      %p70 = por %p68, %p69
      %p72 = scmp.ne.s32.totalorder %s57, %s71
      %p73 = scmp.eq.s32.totalorder %s26, 0
      %p74 = por %p72, %p73
      %s76 = sadd.s32 %s75, 1
      %p79 = scmp.eq.s32.totalorder %s20, 1
      %p80 = scmp.ne.s32.totalorder %s75, %s77
      %p81 = scmp.eq.s32.totalorder %s20, 0
      %p82 = por %p80, %p81
      %p83 = scmp.ne.s32.totalorder %s75, %s77
      %p84 = scmp.eq.s32.totalorder %s25, 1
      %p85 = por %p83, %p84
      %p86 = scmp.ne.s32.totalorder %s77, %s78
      %p87 = scmp.eq.s32.totalorder %s25, 0
      %p88 = por %p86, %p87
      %p89 = scmp.ne.s32.totalorder %s77, %s78
      %p90 = scmp.eq.s32.totalorder %s26, 1
      %p91 = por %p89, %p90
      %p93 = scmp.ne.s32.totalorder %s78, %s92
      %p94 = scmp.eq.s32.totalorder %s26, 0
      %p95 = por %p93, %p94
      %s97 = sadd.s32 %s96, 1
      %p100 = scmp.eq.s32.totalorder %s20, 1
      %p101 = scmp.ne.s32.totalorder %s96, %s98
      %p102 = scmp.eq.s32.totalorder %s20, 0
      %p103 = por %p101, %p102
      %p104 = scmp.ne.s32.totalorder %s96, %s98
      %p105 = scmp.eq.s32.totalorder %s25, 1
      %p106 = por %p104, %p105
      %p107 = scmp.ne.s32.totalorder %s98, %s99
      %p108 = scmp.eq.s32.totalorder %s25, 0
      %p109 = por %p107, %p108
      %p110 = scmp.ne.s32.totalorder %s98, %s99
      %p111 = scmp.eq.s32.totalorder %s26, 1
      %p112 = por %p110, %p111
      %p114 = scmp.ne.s32.totalorder %s99, %s113
      %p115 = scmp.eq.s32.totalorder %s26, 0
      %p116 = por %p114, %p115
      %s118 = sadd.s32 %s117, 1
      %p121 = scmp.eq.s32.totalorder %s20, 1
      %p122 = scmp.ne.s32.totalorder %s117, %s119
      %p123 = scmp.eq.s32.totalorder %s20, 0
      %p124 = por %p122, %p123
      %p125 = scmp.ne.s32.totalorder %s117, %s119
      %p126 = scmp.eq.s32.totalorder %s25, 1
      %p127 = por %p125, %p126
      %p128 = scmp.ne.s32.totalorder %s119, %s120
      %p129 = scmp.eq.s32.totalorder %s25, 0
      %p130 = por %p128, %p129
      %p131 = scmp.ne.s32.totalorder %s119, %s120
      %p132 = scmp.eq.s32.totalorder %s26, 1
      %p133 = por %p131, %p132
      %p135 = scmp.ne.s32.totalorder %s120, %s134
      %p136 = scmp.eq.s32.totalorder %s26, 0
      %p137 = por %p135, %p136
      %s139 = sadd.s32 %s138, 1
      %p142 = scmp.eq.s32.totalorder %s20, 1
      %p143 = scmp.ne.s32.totalorder %s138, %s140
      %p144 = scmp.eq.s32.totalorder %s20, 0
      %p145 = por %p143, %p144
      %p146 = scmp.ne.s32.totalorder %s138, %s140
      %p147 = scmp.eq.s32.totalorder %s25, 1
      %p148 = por %p146, %p147
      %p149 = scmp.ne.s32.totalorder %s140, %s141
      %p150 = scmp.eq.s32.totalorder %s25, 0
      %p151 = por %p149, %p150
      %p152 = scmp.ne.s32.totalorder %s140, %s141
      %p153 = scmp.eq.s32.totalorder %s26, 1
      %p154 = por %p152, %p153
      %p156 = scmp.ne.s32.totalorder %s141, %s155
      %p157 = scmp.eq.s32.totalorder %s26, 0
      %p158 = por %p156, %p157
      %s159 = ssub.s32 %s20, %s27
      %p160 = scmp.eq.s32.totalorder %s159, 0
      %s162 = sadd.s32 %s161, 1
      %s163 = scalar_select %p160, %s161, %s162
      %p166 = pneg %p160
      %p167 = scmp.eq.s32.totalorder %s20, 1
      %p168 = por %p166, %p167
      %p169 = scmp.ne.s32.totalorder %s161, %s164
      %p170 = scmp.eq.s32.totalorder %s20, 0
      %p171 = por %p169, %p170
      %p172 = scmp.ne.s32.totalorder %s161, %s164
      %p173 = scmp.eq.s32.totalorder %s25, 1
      %p174 = por %p172, %p173
      %p175 = scmp.ne.s32.totalorder %s164, %s165
      %p176 = scmp.eq.s32.totalorder %s25, 0
      %p177 = por %p175, %p176
      %p178 = scmp.ne.s32.totalorder %s164, %s165
      %p179 = scmp.eq.s32.totalorder %s26, 1
      %p180 = por %p178, %p179
      %p182 = scmp.ne.s32.totalorder %s165, %s181
      %p183 = scmp.eq.s32.totalorder %s26, 0
      %p184 = por %p182, %p183
      %p185 = scmp.le.s32.totalorder 1, %s20
      %p186 = scmp.lt.s32.totalorder %s20, 3
      %p187 = pnand %p185, %p186
      %p188 = pneg %p187
      // Predicated region
      $region9: #{tpu_custom_call.1} parent=5 // pred_check
        _
      $region10: #{tpu_custom_call.1} parent=5 // pred_check_branch
        %190 = sbr.rel (%p187) target = $region12
      $region11: #{tpu_custom_call.1} parent=5 // pred_region
        %s191 = ssub.s32 %s20, 1
        // Predicated region
        $region13: #{tpu_custom_call.1} parent=11 // pred_check
          %p192 = pneg %p67
        $region14: #{tpu_custom_call.1} parent=11 // pred_check_branch
          %194 = sbr.rel (%p192) target = $region16
        $region15: #{tpu_custom_call.1} parent=11 // pred_region
          _
        $region16: #{tpu_custom_call.1} parent=11 // pred_fallthru
          _
        // Predicated region
        $region17: #{tpu_custom_call.1} parent=11 // pred_check
          %p195 = pneg %p88
        $region18: #{tpu_custom_call.1} parent=11 // pred_check_branch
          %197 = sbr.rel (%p195) target = $region20
        $region19: #{tpu_custom_call.1} parent=11 // pred_region
          _
        $region20: #{tpu_custom_call.1} parent=11 // pred_fallthru
          _
        // Predicated region
        $region21: #{tpu_custom_call.1} parent=11 // pred_check
          %p198 = pneg %p109
        $region22: #{tpu_custom_call.1} parent=11 // pred_check_branch
          %200 = sbr.rel (%p198) target = $region24
        $region23: #{tpu_custom_call.1} parent=11 // pred_region
          %s202 = ssub.s32 1024, 1024
          %203 = vsyncadd [#allocation6], %s202
          %s204 = sshll.u32 [#allocation5], 4
          %s205 = int_to_ptr.vmem [resolvable:$true] %s204
          %210 = dma.hbm_to_vmem [thread:$0]  %s3, 1024, %s205, [#allocation6], 64, 64, 4
        $region24: #{tpu_custom_call.1} parent=11 // pred_fallthru
          _
        // Predicated region
        $region25: #{tpu_custom_call.1} parent=11 // pred_check
          %p211 = pneg %p130
        $region26: #{tpu_custom_call.1} parent=11 // pred_check_branch
          %213 = sbr.rel (%p211) target = $region28
        $region27: #{tpu_custom_call.1} parent=11 // pred_region
          %s215 = ssub.s32 8192, 8192
          %216 = vsyncadd [#allocation6], %s215
          %s217 = sshll.u32 [#allocation7], 4
          %s218 = int_to_ptr.vmem [resolvable:$true] %s217
          %223 = dma.hbm_to_vmem [thread:$0]  %s4, 8192, %s218, [#allocation6], 512, 512, 32
        $region28: #{tpu_custom_call.1} parent=11 // pred_fallthru
          _
        // Predicated region
        $region29: #{tpu_custom_call.1} parent=11 // pred_check
          %p224 = pneg %p151
        $region30: #{tpu_custom_call.1} parent=11 // pred_check_branch
          %226 = sbr.rel (%p224) target = $region32
        $region31: #{tpu_custom_call.1} parent=11 // pred_region
          %s228 = ssub.s32 4096, 4096
          %229 = vsyncadd [#allocation9], %s228
          %s230 = sshll.u32 [#allocation8], 4
          %s231 = int_to_ptr.vmem [resolvable:$true] %s230
          %236 = dma.hbm_to_vmem [thread:$0]  %s5, 4096, %s231, [#allocation9], 64, 64, 4
        $region32: #{tpu_custom_call.1} parent=11 // pred_fallthru
          _
      $region12: #{tpu_custom_call.1} parent=5 // pred_fallthru
        _
      %p237 = scmp.lt.s32.totalorder %s20, 2
      // Predicated region
      $region33: #{tpu_custom_call.1} parent=5 // pred_check
        %p238 = pneg %p237
      $region34: #{tpu_custom_call.1} parent=5 // pred_check_branch
        %240 = sbr.rel (%p238) target = $region36
      $region35: #{tpu_custom_call.1} parent=5 // pred_region
        // Predicated region
        $region37: #{tpu_custom_call.1} parent=35 // pred_check
          %p241 = pneg %p40
        $region38: #{tpu_custom_call.1} parent=35 // pred_check_branch
          %243 = sbr.rel (%p241) target = $region40
        $region39: #{tpu_custom_call.1} parent=35 // pred_region
          %s244 = sand.u32 %s30, 1
          %s245 = scalar_lea.sflag [#allocation3], %s244
          %s246 = sand.u32 %s30, 1
          %s247 = smul.addr %s246, 256
          %s248 = scalar_lea.vmem [#allocation2], %s247
          %s249 = smul.u32 16, %s20
          %s251 = ssub.s32 4096, 4096
          %252 = vsyncadd %s245, %s251
          %s253 = smul.addr %s249, 2
          %s254 = smul.addr %s253, 128
          %s255 = scalar_lea.hbm %s0, %s254
          %s256 = sshll.u32 %s248, 4
          %s257 = int_to_ptr.vmem [resolvable:$true] %s256
          %262 = dma.hbm_to_vmem [thread:$0]  %s255, 4096, %s257, %s245, 128, 128, 8
        $region40: #{tpu_custom_call.1} parent=35 // pred_fallthru
          _
      $region36: #{tpu_custom_call.1} parent=5 // pred_fallthru
        _
      %p263 = scmp.le.s32.totalorder 1, %s20
      %p264 = scmp.lt.s32.totalorder %s20, 3
      %p265 = pnand %p263, %p264
      %p266 = pneg %p265
      // Predicated region
      $region41: #{tpu_custom_call.1} parent=5 // pred_check
        _
      $region42: #{tpu_custom_call.1} parent=5 // pred_check_branch
        %268 = sbr.rel (%p265) target = $region44
      $region43: #{tpu_custom_call.1} parent=5 // pred_region
        %s269 = ssub.s32 %s20, 1
        %s270 = sand.u32 %s33, 1
        %s271 = scalar_lea.sflag [#allocation3], %s270
        %s272 = sand.u32 %s33, 1
        %s273 = smul.addr %s272, 256
        %s274 = scalar_lea.vmem [#allocation2], %s273
        // Predicated region
        $region45: #{tpu_custom_call.1} parent=43 // pred_check
          %p275 = pneg %p46
        $region46: #{tpu_custom_call.1} parent=43 // pred_check_branch
          %277 = sbr.rel (%p275) target = $region48
        $region47: #{tpu_custom_call.1} parent=43 // pred_region
          %278 = dma.done %s271, 4096
        $region48: #{tpu_custom_call.1} parent=43 // pred_fallthru
          _
        // Predicated region
        $region49: #{tpu_custom_call.1} parent=43 // pred_check
          %p279 = pneg %p109
        $region50: #{tpu_custom_call.1} parent=43 // pred_check_branch
          %281 = sbr.rel (%p279) target = $region52
        $region51: #{tpu_custom_call.1} parent=43 // pred_region
          %282 = dma.done [#allocation6], 1024
        $region52: #{tpu_custom_call.1} parent=43 // pred_fallthru
          _
        // Predicated region
        $region53: #{tpu_custom_call.1} parent=43 // pred_check
          %p283 = pneg %p130
        $region54: #{tpu_custom_call.1} parent=43 // pred_check_branch
          %285 = sbr.rel (%p283) target = $region56
        $region55: #{tpu_custom_call.1} parent=43 // pred_region
          %286 = dma.done [#allocation6], 8192
        $region56: #{tpu_custom_call.1} parent=43 // pred_fallthru
          _
        // Predicated region
        $region57: #{tpu_custom_call.1} parent=43 // pred_check
          %p287 = pneg %p151
        $region58: #{tpu_custom_call.1} parent=43 // pred_check_branch
          %289 = sbr.rel (%p287) target = $region60
        $region59: #{tpu_custom_call.1} parent=43 // pred_region
          %290 = dma.done [#allocation9], 4096
        $region60: #{tpu_custom_call.1} parent=43 // pred_fallthru
          _
        %s291 = sand.u32 %s33, 1
        %s292 = scalar_lea.sflag [#allocation3], %s291
        %s293 = sand.u32 %s33, 1
        %s294 = smul.addr %s293, 256
        %s295 = scalar_lea.vmem [#allocation2], %s294
        %p296 = pneg %p46
        %p297 = pneg %p43
        %p298 = pneg %p67
        %p299 = pneg %p64
        %p300 = pneg %p88
        %p301 = pneg %p85
        %p302 = pneg %p109
        %p303 = pneg %p106
        %p304 = pneg %p130
        %p305 = pneg %p127
        %p306 = pneg %p151
        %p307 = pneg %p148
        %p308 = pneg %p177
        %p309 = pneg %p174
        %s310 = sand.u32 %s164, 1
        %s311 = scalar_lea.sflag [#allocation4], %s310
        %s312 = sand.u32 %s164, 1
        %s313 = smul.addr %s312, 256
        %s314 = scalar_lea.vmem [#allocation10], %s313
        %s315 = smul.u32 16, %s25
        %s316 = smul.u32 16, %s25
        %v318 = vld [vmem:[%s274] sm:$0xff]
        %v319 = vld [vmem:[%s274 + $0x8] sm:$0xff]
        %v320 = vld [vmem:[%s274 + $0x10] sm:$0xff]
        %v321 = vld [vmem:[%s274 + $0x18] sm:$0xff]
        %v322 = vld [vmem:[%s274 + $0x20] sm:$0xff]
        %v323 = vld [vmem:[%s274 + $0x28] sm:$0xff]
        %v324 = vld [vmem:[%s274 + $0x30] sm:$0xff]
        %v325 = vld [vmem:[%s274 + $0x38] sm:$0xff]
        %v326 = vld [vmem:[%s274 + $0x40] sm:$0xff]
        %v327 = vld [vmem:[%s274 + $0x48] sm:$0xff]
        %v328 = vld [vmem:[%s274 + $0x50] sm:$0xff]
        %v329 = vld [vmem:[%s274 + $0x58] sm:$0xff]
        %v330 = vld [vmem:[%s274 + $0x60] sm:$0xff]
        %v331 = vld [vmem:[%s274 + $0x68] sm:$0xff]
        %v332 = vld [vmem:[%s274 + $0x70] sm:$0xff]
        %v333 = vld [vmem:[%s274 + $0x78] sm:$0xff]
        %v334 = vld [vmem:[%s274 + $0x80] sm:$0xff]
        %v335 = vld [vmem:[%s274 + $0x88] sm:$0xff]
        %v336 = vld [vmem:[%s274 + $0x90] sm:$0xff]
        %v337 = vld [vmem:[%s274 + $0x98] sm:$0xff]
        %v338 = vld [vmem:[%s274 + $0xa0] sm:$0xff]
        %v339 = vld [vmem:[%s274 + $0xa8] sm:$0xff]
        %v340 = vld [vmem:[%s274 + $0xb0] sm:$0xff]
        %v341 = vld [vmem:[%s274 + $0xb8] sm:$0xff]
        %v342 = vld [vmem:[%s274 + $0xc0] sm:$0xff]
        %v343 = vld [vmem:[%s274 + $0xc8] sm:$0xff]
        %v344 = vld [vmem:[%s274 + $0xd0] sm:$0xff]
        %v345 = vld [vmem:[%s274 + $0xd8] sm:$0xff]
        %v346 = vld [vmem:[%s274 + $0xe0] sm:$0xff]
        %v347 = vld [vmem:[%s274 + $0xe8] sm:$0xff]
        %v348 = vld [vmem:[%s274 + $0xf0] sm:$0xff]
        %v349 = vld [vmem:[%s274 + $0xf8] sm:$0xff]
        %v350 = vmul.f32 %v318, %v318
        %v351 = vmul.f32 %v319, %v319
        %v352 = vmul.f32 %v320, %v320
        %v353 = vmul.f32 %v321, %v321
        %v354 = vmul.f32 %v322, %v322
        %v355 = vmul.f32 %v323, %v323
        %v356 = vmul.f32 %v324, %v324
        %v357 = vmul.f32 %v325, %v325
        %v358 = vmul.f32 %v326, %v326
        %v359 = vmul.f32 %v327, %v327
        %v360 = vmul.f32 %v328, %v328
        %v361 = vmul.f32 %v329, %v329
        %v362 = vmul.f32 %v330, %v330
        %v363 = vmul.f32 %v331, %v331
        %v364 = vmul.f32 %v332, %v332
        %v365 = vmul.f32 %v333, %v333
        %v366 = vmul.f32 %v334, %v334
        %v367 = vmul.f32 %v335, %v335
        %v368 = vmul.f32 %v336, %v336
        %v369 = vmul.f32 %v337, %v337
        %v370 = vmul.f32 %v338, %v338
        %v371 = vmul.f32 %v339, %v339
        %v372 = vmul.f32 %v340, %v340
        %v373 = vmul.f32 %v341, %v341
        %v374 = vmul.f32 %v342, %v342
        %v375 = vmul.f32 %v343, %v343
        %v376 = vmul.f32 %v344, %v344
        %v377 = vmul.f32 %v345, %v345
        %v378 = vmul.f32 %v346, %v346
        %v379 = vmul.f32 %v347, %v347
        %v380 = vmul.f32 %v348, %v348
        %v381 = vmul.f32 %v349, %v349
        %382 = vadd.xlane.f32.xlu0 %v350
        %v383 = vpop.xlane.xlu0 %382
        %384 = vadd.xlane.f32.xlu0 %v351
        %v385 = vpop.xlane.xlu0 %384
        %386 = vadd.xlane.f32.xlu0 %v352
        %v387 = vpop.xlane.xlu0 %386
        %388 = vadd.xlane.f32.xlu0 %v353
        %v389 = vpop.xlane.xlu0 %388
        %390 = vadd.xlane.f32.xlu0 %v354
        %v391 = vpop.xlane.xlu0 %390
        %392 = vadd.xlane.f32.xlu0 %v355
        %v393 = vpop.xlane.xlu0 %392
        %394 = vadd.xlane.f32.xlu0 %v356
        %v395 = vpop.xlane.xlu0 %394
        %396 = vadd.xlane.f32.xlu0 %v357
        %v397 = vpop.xlane.xlu0 %396
        %398 = vadd.xlane.f32.xlu0 %v358
        %v399 = vpop.xlane.xlu0 %398
        %400 = vadd.xlane.f32.xlu0 %v359
        %v401 = vpop.xlane.xlu0 %400
        %402 = vadd.xlane.f32.xlu0 %v360
        %v403 = vpop.xlane.xlu0 %402
        %404 = vadd.xlane.f32.xlu0 %v361
        %v405 = vpop.xlane.xlu0 %404
        %406 = vadd.xlane.f32.xlu0 %v362
        %v407 = vpop.xlane.xlu0 %406
        %408 = vadd.xlane.f32.xlu0 %v363
        %v409 = vpop.xlane.xlu0 %408
        %410 = vadd.xlane.f32.xlu0 %v364
        %v411 = vpop.xlane.xlu0 %410
        %412 = vadd.xlane.f32.xlu0 %v365
        %v413 = vpop.xlane.xlu0 %412
        %414 = vadd.xlane.f32.xlu0 %v366
        %v415 = vpop.xlane.xlu0 %414
        %416 = vadd.xlane.f32.xlu0 %v367
        %v417 = vpop.xlane.xlu0 %416
        %418 = vadd.xlane.f32.xlu0 %v368
        %v419 = vpop.xlane.xlu0 %418
        %420 = vadd.xlane.f32.xlu0 %v369
        %v421 = vpop.xlane.xlu0 %420
        %422 = vadd.xlane.f32.xlu0 %v370
        %v423 = vpop.xlane.xlu0 %422
        %424 = vadd.xlane.f32.xlu0 %v371
        %v425 = vpop.xlane.xlu0 %424
        %426 = vadd.xlane.f32.xlu0 %v372
        %v427 = vpop.xlane.xlu0 %426
        %428 = vadd.xlane.f32.xlu0 %v373
        %v429 = vpop.xlane.xlu0 %428
        %430 = vadd.xlane.f32.xlu0 %v374
        %v431 = vpop.xlane.xlu0 %430
        %432 = vadd.xlane.f32.xlu0 %v375
        %v433 = vpop.xlane.xlu0 %432
        %434 = vadd.xlane.f32.xlu0 %v376
        %v435 = vpop.xlane.xlu0 %434
        %436 = vadd.xlane.f32.xlu0 %v377
        %v437 = vpop.xlane.xlu0 %436
        %438 = vadd.xlane.f32.xlu0 %v378
        %v439 = vpop.xlane.xlu0 %438
        %440 = vadd.xlane.f32.xlu0 %v379
        %v441 = vpop.xlane.xlu0 %440
        %442 = vadd.xlane.f32.xlu0 %v380
        %v443 = vpop.xlane.xlu0 %442
        %444 = vadd.xlane.f32.xlu0 %v381
        %v445 = vpop.xlane.xlu0 %444
        %v446 = vrcp.pop 128.0
        %v447 = vmul.f32 %v383, %v446
        %v448 = vmul.f32 %v385, %v446
        %v449 = vmul.f32 %v387, %v446
        %v450 = vmul.f32 %v389, %v446
        %v451 = vmul.f32 %v391, %v446
        %v452 = vmul.f32 %v393, %v446
        %v453 = vmul.f32 %v395, %v446
        %v454 = vmul.f32 %v397, %v446
        %v455 = vmul.f32 %v399, %v446
        %v456 = vmul.f32 %v401, %v446
        %v457 = vmul.f32 %v403, %v446
        %v458 = vmul.f32 %v405, %v446
        %v459 = vmul.f32 %v407, %v446
        %v460 = vmul.f32 %v409, %v446
        %v461 = vmul.f32 %v411, %v446
        %v462 = vmul.f32 %v413, %v446
        %v463 = vmul.f32 %v415, %v446
        %v464 = vmul.f32 %v417, %v446
        %v465 = vmul.f32 %v419, %v446
        %v466 = vmul.f32 %v421, %v446
        %v467 = vmul.f32 %v423, %v446
        %v468 = vmul.f32 %v425, %v446
        %v469 = vmul.f32 %v427, %v446
        %v470 = vmul.f32 %v429, %v446
        %v471 = vmul.f32 %v431, %v446
        %v472 = vmul.f32 %v433, %v446
        %v473 = vmul.f32 %v435, %v446
        %v474 = vmul.f32 %v437, %v446
        %v475 = vmul.f32 %v439, %v446
        %v476 = vmul.f32 %v441, %v446
        %v477 = vmul.f32 %v443, %v446
        %v478 = vmul.f32 %v445, %v446
        %v479 = vadd.f32 %v447, 1e-05
        %v480 = vadd.f32 %v448, 1e-05
        %v481 = vadd.f32 %v449, 1e-05
        %v482 = vadd.f32 %v450, 1e-05
        %v483 = vadd.f32 %v451, 1e-05
        %v484 = vadd.f32 %v452, 1e-05
        %v485 = vadd.f32 %v453, 1e-05
        %v486 = vadd.f32 %v454, 1e-05
        %v487 = vadd.f32 %v455, 1e-05
        %v488 = vadd.f32 %v456, 1e-05
        %v489 = vadd.f32 %v457, 1e-05
        %v490 = vadd.f32 %v458, 1e-05
        %v491 = vadd.f32 %v459, 1e-05
        %v492 = vadd.f32 %v460, 1e-05
        %v493 = vadd.f32 %v461, 1e-05
        %v494 = vadd.f32 %v462, 1e-05
        %v495 = vadd.f32 %v463, 1e-05
        %v496 = vadd.f32 %v464, 1e-05
        %v497 = vadd.f32 %v465, 1e-05
        %v498 = vadd.f32 %v466, 1e-05
        %v499 = vadd.f32 %v467, 1e-05
        %v500 = vadd.f32 %v468, 1e-05
        %v501 = vadd.f32 %v469, 1e-05
        %v502 = vadd.f32 %v470, 1e-05
        %v503 = vadd.f32 %v471, 1e-05
        %v504 = vadd.f32 %v472, 1e-05
        %v505 = vadd.f32 %v473, 1e-05
        %v506 = vadd.f32 %v474, 1e-05
        %v507 = vadd.f32 %v475, 1e-05
        %v508 = vadd.f32 %v476, 1e-05
        %v509 = vadd.f32 %v477, 1e-05
        %v510 = vadd.f32 %v478, 1e-05
        %v511 = vrsqrt.pop %v479
        %v512 = vrsqrt.pop %v480
        %v513 = vrsqrt.pop %v481
        %v514 = vrsqrt.pop %v482
        %v515 = vrsqrt.pop %v483
        %v516 = vrsqrt.pop %v484
        %v517 = vrsqrt.pop %v485
        %v518 = vrsqrt.pop %v486
        %v519 = vrsqrt.pop %v487
        %v520 = vrsqrt.pop %v488
        %v521 = vrsqrt.pop %v489
        %v522 = vrsqrt.pop %v490
        %v523 = vrsqrt.pop %v491
        %v524 = vrsqrt.pop %v492
        %v525 = vrsqrt.pop %v493
        %v526 = vrsqrt.pop %v494
        %v527 = vrsqrt.pop %v495
        %v528 = vrsqrt.pop %v496
        %v529 = vrsqrt.pop %v497
        %v530 = vrsqrt.pop %v498
        %v531 = vrsqrt.pop %v499
        %v532 = vrsqrt.pop %v500
        %v533 = vrsqrt.pop %v501
        %v534 = vrsqrt.pop %v502
        %v535 = vrsqrt.pop %v503
        %v536 = vrsqrt.pop %v504
        %v537 = vrsqrt.pop %v505
        %v538 = vrsqrt.pop %v506
        %v539 = vrsqrt.pop %v507
        %v540 = vrsqrt.pop %v508
        %v541 = vrsqrt.pop %v509
        %v542 = vrsqrt.pop %v510
        %v543 = vmul.f32 %v318, %v511
        %v544 = vmul.f32 %v319, %v512
        %v545 = vmul.f32 %v320, %v513
        %v546 = vmul.f32 %v321, %v514
        %v547 = vmul.f32 %v322, %v515
        %v548 = vmul.f32 %v323, %v516
        %v549 = vmul.f32 %v324, %v517
        %v550 = vmul.f32 %v325, %v518
        %v551 = vmul.f32 %v326, %v519
        %v552 = vmul.f32 %v327, %v520
        %v553 = vmul.f32 %v328, %v521
        %v554 = vmul.f32 %v329, %v522
        %v555 = vmul.f32 %v330, %v523
        %v556 = vmul.f32 %v331, %v524
        %v557 = vmul.f32 %v332, %v525
        %v558 = vmul.f32 %v333, %v526
        %v559 = vmul.f32 %v334, %v527
        %v560 = vmul.f32 %v335, %v528
        %v561 = vmul.f32 %v336, %v529
        %v562 = vmul.f32 %v337, %v530
        %v563 = vmul.f32 %v338, %v531
        %v564 = vmul.f32 %v339, %v532
        %v565 = vmul.f32 %v340, %v533
        %v566 = vmul.f32 %v341, %v534
        %v567 = vmul.f32 %v342, %v535
        %v568 = vmul.f32 %v343, %v536
        %v569 = vmul.f32 %v344, %v537
        %v570 = vmul.f32 %v345, %v538
        %v571 = vmul.f32 %v346, %v539
        %v572 = vmul.f32 %v347, %v540
        %v573 = vmul.f32 %v348, %v541
        %v574 = vmul.f32 %v349, %v542
        %v575 = vld [vmem:[%s1] sm:$0x1]
        %v577 = vlaneseq
        %v578 = vshrl.u32 %v577, 7
        %v579 = vsub.s32 0, %v578
        %v580 = vrot.slane %v575, %v579
        %v582 = vmul.f32 %v543, %v580
        %v583 = vmul.f32 %v544, %v580
        %v584 = vmul.f32 %v545, %v580
        %v585 = vmul.f32 %v546, %v580
        %v586 = vmul.f32 %v547, %v580
        %v587 = vmul.f32 %v548, %v580
        %v588 = vmul.f32 %v549, %v580
        %v589 = vmul.f32 %v550, %v580
        %v590 = vmul.f32 %v551, %v580
        %v591 = vmul.f32 %v552, %v580
        %v592 = vmul.f32 %v553, %v580
        %v593 = vmul.f32 %v554, %v580
        %v594 = vmul.f32 %v555, %v580
        %v595 = vmul.f32 %v556, %v580
        %v596 = vmul.f32 %v557, %v580
        %v597 = vmul.f32 %v558, %v580
        %v598 = vmul.f32 %v559, %v580
        %v599 = vmul.f32 %v560, %v580
        %v600 = vmul.f32 %v561, %v580
        %v601 = vmul.f32 %v562, %v580
        %v602 = vmul.f32 %v563, %v580
        %v603 = vmul.f32 %v564, %v580
        %v604 = vmul.f32 %v565, %v580
        %v605 = vmul.f32 %v566, %v580
        %v606 = vmul.f32 %v567, %v580
        %v607 = vmul.f32 %v568, %v580
        %v608 = vmul.f32 %v569, %v580
        %v609 = vmul.f32 %v570, %v580
        %v610 = vmul.f32 %v571, %v580
        %v611 = vmul.f32 %v572, %v580
        %v612 = vmul.f32 %v573, %v580
        %v613 = vmul.f32 %v574, %v580
        %v614 = vadd.f32 %v582, %v583
        %v615 = vrot.slane %v614, 4
        %v616 = vadd.f32 %v614, %v615
        %v617 = vrot.slane %v616, 2
        %v618 = vadd.f32 %v616, %v617
        %v619 = vrot.slane %v618, 1
        %v620 = vadd.f32 %v618, %v619
        %v621 = vadd.f32 %v584, %v585
        %v622 = vrot.slane %v621, 4
        %v623 = vadd.f32 %v621, %v622
        %v624 = vrot.slane %v623, 2
        %v625 = vadd.f32 %v623, %v624
        %v626 = vrot.slane %v625, 1
        %v627 = vadd.f32 %v625, %v626
        %v628 = vadd.f32 %v586, %v587
        %v629 = vrot.slane %v628, 4
        %v630 = vadd.f32 %v628, %v629
        %v631 = vrot.slane %v630, 2
        %v632 = vadd.f32 %v630, %v631
        %v633 = vrot.slane %v632, 1
        %v634 = vadd.f32 %v632, %v633
        %v635 = vadd.f32 %v588, %v589
        %v636 = vrot.slane %v635, 4
        %v637 = vadd.f32 %v635, %v636
        %v638 = vrot.slane %v637, 2
        %v639 = vadd.f32 %v637, %v638
        %v640 = vrot.slane %v639, 1
        %v641 = vadd.f32 %v639, %v640
        %v642 = vadd.f32 %v590, %v591
        %v643 = vrot.slane %v642, 4
        %v644 = vadd.f32 %v642, %v643
        %v645 = vrot.slane %v644, 2
        %v646 = vadd.f32 %v644, %v645
        %v647 = vrot.slane %v646, 1
        %v648 = vadd.f32 %v646, %v647
        %v649 = vadd.f32 %v592, %v593
        %v650 = vrot.slane %v649, 4
        %v651 = vadd.f32 %v649, %v650
        %v652 = vrot.slane %v651, 2
        %v653 = vadd.f32 %v651, %v652
        %v654 = vrot.slane %v653, 1
        %v655 = vadd.f32 %v653, %v654
        %v656 = vadd.f32 %v594, %v595
        %v657 = vrot.slane %v656, 4
        %v658 = vadd.f32 %v656, %v657
        %v659 = vrot.slane %v658, 2
        %v660 = vadd.f32 %v658, %v659
        %v661 = vrot.slane %v660, 1
        %v662 = vadd.f32 %v660, %v661
        %v663 = vadd.f32 %v596, %v597
        %v664 = vrot.slane %v663, 4
        %v665 = vadd.f32 %v663, %v664
        %v666 = vrot.slane %v665, 2
        %v667 = vadd.f32 %v665, %v666
        %v668 = vrot.slane %v667, 1
        %v669 = vadd.f32 %v667, %v668
        %v670 = vadd.f32 %v598, %v599
        %v671 = vrot.slane %v670, 4
        %v672 = vadd.f32 %v670, %v671
        %v673 = vrot.slane %v672, 2
        %v674 = vadd.f32 %v672, %v673
        %v675 = vrot.slane %v674, 1
        %v676 = vadd.f32 %v674, %v675
        %v677 = vadd.f32 %v600, %v601
        %v678 = vrot.slane %v677, 4
        %v679 = vadd.f32 %v677, %v678
        %v680 = vrot.slane %v679, 2
        %v681 = vadd.f32 %v679, %v680
        %v682 = vrot.slane %v681, 1
        %v683 = vadd.f32 %v681, %v682
        %v684 = vadd.f32 %v602, %v603
        %v685 = vrot.slane %v684, 4
        %v686 = vadd.f32 %v684, %v685
        %v687 = vrot.slane %v686, 2
        %v688 = vadd.f32 %v686, %v687
        %v689 = vrot.slane %v688, 1
        %v690 = vadd.f32 %v688, %v689
        %v691 = vadd.f32 %v604, %v605
        %v692 = vrot.slane %v691, 4
        %v693 = vadd.f32 %v691, %v692
        %v694 = vrot.slane %v693, 2
        %v695 = vadd.f32 %v693, %v694
        %v696 = vrot.slane %v695, 1
        %v697 = vadd.f32 %v695, %v696
        %v698 = vadd.f32 %v606, %v607
        %v699 = vrot.slane %v698, 4
        %v700 = vadd.f32 %v698, %v699
        %v701 = vrot.slane %v700, 2
        %v702 = vadd.f32 %v700, %v701
        %v703 = vrot.slane %v702, 1
        %v704 = vadd.f32 %v702, %v703
        %v705 = vadd.f32 %v608, %v609
        %v706 = vrot.slane %v705, 4
        %v707 = vadd.f32 %v705, %v706
        %v708 = vrot.slane %v707, 2
        %v709 = vadd.f32 %v707, %v708
        %v710 = vrot.slane %v709, 1
        %v711 = vadd.f32 %v709, %v710
        %v712 = vadd.f32 %v610, %v611
        %v713 = vrot.slane %v712, 4
        %v714 = vadd.f32 %v712, %v713
        %v715 = vrot.slane %v714, 2
        %v716 = vadd.f32 %v714, %v715
        %v717 = vrot.slane %v716, 1
        %v718 = vadd.f32 %v716, %v717
        %v719 = vadd.f32 %v612, %v613
        %v720 = vrot.slane %v719, 4
        %v721 = vadd.f32 %v719, %v720
        %v722 = vrot.slane %v721, 2
        %v723 = vadd.f32 %v721, %v722
        %v724 = vrot.slane %v723, 1
        %v725 = vadd.f32 %v723, %v724
        %v726 = vpack.c.bf16 %v620, %v620
        %v727 = vpack.c.bf16 %v627, %v627
        %v728 = vpack.c.bf16 %v634, %v634
        %v729 = vpack.c.bf16 %v641, %v641
        %v730 = vpack.c.bf16 %v648, %v648
        %v731 = vpack.c.bf16 %v655, %v655
        %v732 = vpack.c.bf16 %v662, %v662
        %v733 = vpack.c.bf16 %v669, %v669
        %v734 = vpack.c.bf16 %v676, %v676
        %v735 = vpack.c.bf16 %v683, %v683
        %v736 = vpack.c.bf16 %v690, %v690
        %v737 = vpack.c.bf16 %v697, %v697
        %v738 = vpack.c.bf16 %v704, %v704
        %v739 = vpack.c.bf16 %v711, %v711
        %v740 = vpack.c.bf16 %v718, %v718
        %v741 = vpack.c.bf16 %v725, %v725
        %v742 = vld [vmem:[#allocation5] sm:$0xf]
        %v743 = vld [vmem:[#allocation5 + $0x4] sm:$0xf]
        %v744 = vld [vmem:[#allocation5 + $0x8] sm:$0xf]
        %v745 = vld [vmem:[#allocation5 + $0xc] sm:$0xf]
        %v746 = vld [vmem:[#allocation5 + $0x10] sm:$0xf]
        %v747 = vld [vmem:[#allocation5 + $0x14] sm:$0xf]
        %v748 = vld [vmem:[#allocation5 + $0x18] sm:$0xf]
        %v749 = vld [vmem:[#allocation5 + $0x1c] sm:$0xf]
        %v750 = vld [vmem:[#allocation5 + $0x20] sm:$0xf]
        %v751 = vld [vmem:[#allocation5 + $0x24] sm:$0xf]
        %v752 = vld [vmem:[#allocation5 + $0x28] sm:$0xf]
        %v753 = vld [vmem:[#allocation5 + $0x2c] sm:$0xf]
        %v754 = vld [vmem:[#allocation5 + $0x30] sm:$0xf]
        %v755 = vld [vmem:[#allocation5 + $0x34] sm:$0xf]
        %v756 = vld [vmem:[#allocation5 + $0x38] sm:$0xf]
        %v757 = vld [vmem:[#allocation5 + $0x3c] sm:$0xf]
        %v774 = vunpack.c.l.b16 %v726
        %v775 = vunpack.c.l.b16 %v727
        %v776 = vunpack.c.l.b16 %v728
        %v777 = vunpack.c.l.b16 %v729
        %v778 = vunpack.c.l.b16 %v730
        %v779 = vunpack.c.l.b16 %v731
        %v780 = vunpack.c.l.b16 %v732
        %v781 = vunpack.c.l.b16 %v733
        %v782 = vunpack.c.l.b16 %v734
        %v783 = vunpack.c.l.b16 %v735
        %v784 = vunpack.c.l.b16 %v736
        %v785 = vunpack.c.l.b16 %v737
        %v786 = vunpack.c.l.b16 %v738
        %v787 = vunpack.c.l.b16 %v739
        %v788 = vunpack.c.l.b16 %v740
        %v789 = vunpack.c.l.b16 %v741
        %vm790 = vcmask 1041409
        %v791 = vsel %vm790, %v775, %v774
        %vm792 = vcmask 1042434
        %v793 = vsel %vm792, %v776, %v791
        %vm794 = vcmask 1043459
        %v795 = vsel %vm794, %v777, %v793
        %vm796 = vcmask 1044484
        %v797 = vsel %vm796, %v778, %v795
        %vm798 = vcmask 1045509
        %v799 = vsel %vm798, %v779, %v797
        %vm800 = vcmask 1046534
        %v801 = vsel %vm800, %v780, %v799
        %vm802 = vcmask 1047559
        %v803 = vsel %vm802, %v781, %v801
        %v804 = vsel %vm790, %v783, %v782
        %v805 = vsel %vm792, %v784, %v804
        %v806 = vsel %vm794, %v785, %v805
        %v807 = vsel %vm796, %v786, %v806
        %v808 = vsel %vm798, %v787, %v807
        %v809 = vsel %vm800, %v788, %v808
        %v810 = vsel %vm802, %v789, %v809
        %v811 = vpack.c.b16 %v810, %v803
        %v829 = vunpack.c.l.b16 %v742
        %v830 = vunpack.c.l.b16 %v743
        %v831 = vunpack.c.l.b16 %v744
        %v832 = vunpack.c.l.b16 %v745
        %v833 = vunpack.c.l.b16 %v746
        %v834 = vunpack.c.l.b16 %v747
        %v835 = vunpack.c.l.b16 %v748
        %v836 = vunpack.c.l.b16 %v749
        %v837 = vunpack.c.l.b16 %v750
        %v838 = vunpack.c.l.b16 %v751
        %v839 = vunpack.c.l.b16 %v752
        %v840 = vunpack.c.l.b16 %v753
        %v841 = vunpack.c.l.b16 %v754
        %v842 = vunpack.c.l.b16 %v755
        %v843 = vunpack.c.l.b16 %v756
        %v844 = vunpack.c.l.b16 %v757
        %v845 = vpack.c.b16 %v830, %v829
        %v846 = vpack.c.b16 %v832, %v831
        %v847 = vpack.c.b16 %v834, %v833
        %v848 = vpack.c.b16 %v836, %v835
        %v849 = vpack.c.b16 %v838, %v837
        %v850 = vpack.c.b16 %v840, %v839
        %v851 = vpack.c.b16 %v842, %v841
        %v852 = vpack.c.b16 %v844, %v843
        %861 = vmatprep.subr.bf16.mxu0 0
        %862 = vmatpush1.bf16.msra.mxu0 %v845
        %863 = vmatprep.subr.bf16.mxu0 0
        %864 = vmatpush1.bf16.msra.mxu0 %v846
        %865 = vmatprep.subr.bf16.mxu0 0
        %866 = vmatpush1.bf16.msra.mxu0 %v847
        %867 = vmatprep.subr.bf16.mxu0 0
        %868 = vmatpush1.bf16.msra.mxu0 %v848
        %869 = vmatprep.subr.bf16.mxu0 0
        %870 = vmatpush1.bf16.msra.mxu0 %v849
        %871 = vmatprep.subr.bf16.mxu0 0
        %872 = vmatpush1.bf16.msra.mxu0 %v850
        %873 = vmatprep.subr.bf16.mxu0 0
        %874 = vmatpush1.bf16.msra.mxu0 %v851
        %875 = vmatprep.subr.bf16.mxu0 0
        %876 = vmatpush1.bf16.msra.mxu0 %v852
        %877 = vmatprep.subr.bf16.mxu0 0
        %878 = vmatpush1.bf16.msra.mxu0 0
        %879 = vmatprep.subr.bf16.mxu0 0
        %880 = vmatpush1.bf16.msra.mxu0 0
        %881 = vmatprep.subr.bf16.mxu0 0
        %882 = vmatpush1.bf16.msra.mxu0 0
        %883 = vmatprep.subr.bf16.mxu0 0
        %884 = vmatpush1.bf16.msra.mxu0 0
        %885 = vmatprep.subr.bf16.mxu0 0
        %886 = vmatpush1.bf16.msra.mxu0 0
        %887 = vmatprep.subr.bf16.mxu0 0
        %888 = vmatpush1.bf16.msra.mxu0 0
        %889 = vmatprep.subr.bf16.mxu0 0
        %890 = vmatpush1.bf16.msra.mxu0 0
        %891 = vmatprep.subr.bf16.mxu0 0
        %892 = vmatpush1.bf16.msra.mxu0 0
        %893 = vmatprep.mubr.bf16.mxu0 0
        %894 = vmatmul.mubr.bf16.gmra.mrb[0].mxu0 %v811
        %v895 = vpop.f32.mrb[0].mxu0
        %v896 = vadd.f32 0.0, %v895
        %v897 = vpop.f32.mrb[0].mxu0
        %v898 = vpop.f32.mrb[0].mxu0
        %v899 = vadd.f32 0.0, %v898
        %v900 = vpop.f32.mrb[0].mxu0
        %901 = vdwg.mxu0
        %v904 = vcombine.high %v896, %v896
        %v906 = vunpack.c.l.s4 1966171168
        %v907 = vunpack.c.0.s8 %v906
        %v908 = vlaneseq
        %v909 = vshrl.u32 %v908, 7
        %v910 = vsub.s32 %v907, %v909
        %v911 = vrot.slane %v896, %v910
        %v913 = vunpack.c.l.s4 1966171168
        %v914 = vunpack.c.0.s8 %v913
        %v915 = vlaneseq
        %v916 = vshrl.u32 %v915, 7
        %v917 = vsub.s32 %v914, %v916
        %v918 = vrot.slane %v904, %v917
        %v919 = vcombine.high %v911, %v911
        %v920 = vcombine.high %v918, %v918
        %v922 = vunpack.c.l.s4 1966171168
        %v923 = vunpack.c.0.s8 %v922
        %v924 = vlaneseq
        %v925 = vshrl.u32 %v924, 7
        %v926 = vsub.s32 %v923, %v925
        %v927 = vrot.slane %v911, %v926
        %v929 = vunpack.c.l.s4 1966171168
        %v930 = vunpack.c.0.s8 %v929
        %v931 = vlaneseq
        %v932 = vshrl.u32 %v931, 7
        %v933 = vsub.s32 %v930, %v932
        %v934 = vrot.slane %v918, %v933
        %v936 = vunpack.c.l.s4 1966171168
        %v937 = vunpack.c.0.s8 %v936
        %v938 = vlaneseq
        %v939 = vshrl.u32 %v938, 7
        %v940 = vsub.s32 %v937, %v939
        %v941 = vrot.slane %v919, %v940
        %v943 = vunpack.c.l.s4 1966171168
        %v944 = vunpack.c.0.s8 %v943
        %v945 = vlaneseq
        %v946 = vshrl.u32 %v945, 7
        %v947 = vsub.s32 %v944, %v946
        %v948 = vrot.slane %v920, %v947
        %v949 = vcombine.high %v927, %v927
        %v950 = vcombine.high %v934, %v934
        %v951 = vcombine.high %v941, %v941
        %v952 = vcombine.high %v948, %v948
        %v953 = vcombine.high %v899, %v899
        %v955 = vunpack.c.l.s4 1966171168
        %v956 = vunpack.c.0.s8 %v955
        %v957 = vlaneseq
        %v958 = vshrl.u32 %v957, 7
        %v959 = vsub.s32 %v956, %v958
        %v960 = vrot.slane %v899, %v959
        %v962 = vunpack.c.l.s4 1966171168
        %v963 = vunpack.c.0.s8 %v962
        %v964 = vlaneseq
        %v965 = vshrl.u32 %v964, 7
        %v966 = vsub.s32 %v963, %v965
        %v967 = vrot.slane %v953, %v966
        %v968 = vcombine.high %v960, %v960
        %v969 = vcombine.high %v967, %v967
        %v971 = vunpack.c.l.s4 1966171168
        %v972 = vunpack.c.0.s8 %v971
        %v973 = vlaneseq
        %v974 = vshrl.u32 %v973, 7
        %v975 = vsub.s32 %v972, %v974
        %v976 = vrot.slane %v960, %v975
        %v978 = vunpack.c.l.s4 1966171168
        %v979 = vunpack.c.0.s8 %v978
        %v980 = vlaneseq
        %v981 = vshrl.u32 %v980, 7
        %v982 = vsub.s32 %v979, %v981
        %v983 = vrot.slane %v967, %v982
        %v985 = vunpack.c.l.s4 1966171168
        %v986 = vunpack.c.0.s8 %v985
        %v987 = vlaneseq
        %v988 = vshrl.u32 %v987, 7
        %v989 = vsub.s32 %v986, %v988
        %v990 = vrot.slane %v968, %v989
        %v992 = vunpack.c.l.s4 1966171168
        %v993 = vunpack.c.0.s8 %v992
        %v994 = vlaneseq
        %v995 = vshrl.u32 %v994, 7
        %v996 = vsub.s32 %v993, %v995
        %v997 = vrot.slane %v969, %v996
        %v998 = vcombine.high %v976, %v976
        %v999 = vcombine.high %v983, %v983
        %v1000 = vcombine.high %v990, %v990
        %v1001 = vcombine.high %v997, %v997
        %v1002 = vlaneseq
        %v1003 = vshrl.u32 %v1002, 7
        %v1004 = vsub.s32 0, %v1003
        %v1005 = vrot.slane %v927, %v1004
        %v1006 = vlaneseq
        %v1007 = vshrl.u32 %v1006, 7
        %v1008 = vsub.s32 0, %v1007
        %v1009 = vrot.slane %v941, %v1008
        %v1010 = vlaneseq
        %v1011 = vshrl.u32 %v1010, 7
        %v1012 = vsub.s32 0, %v1011
        %v1013 = vrot.slane %v949, %v1012
        %v1014 = vlaneseq
        %v1015 = vshrl.u32 %v1014, 7
        %v1016 = vsub.s32 0, %v1015
        %v1017 = vrot.slane %v951, %v1016
        %v1018 = vlaneseq
        %v1019 = vshrl.u32 %v1018, 7
        %v1020 = vsub.s32 0, %v1019
        %v1021 = vrot.slane %v934, %v1020
        %v1022 = vlaneseq
        %v1023 = vshrl.u32 %v1022, 7
        %v1024 = vsub.s32 0, %v1023
        %v1025 = vrot.slane %v948, %v1024
        %v1026 = vlaneseq
        %v1027 = vshrl.u32 %v1026, 7
        %v1028 = vsub.s32 0, %v1027
        %v1029 = vrot.slane %v950, %v1028
        %v1030 = vlaneseq
        %v1031 = vshrl.u32 %v1030, 7
        %v1032 = vsub.s32 0, %v1031
        %v1033 = vrot.slane %v952, %v1032
        %v1034 = vlaneseq
        %v1035 = vshrl.u32 %v1034, 7
        %v1036 = vsub.s32 0, %v1035
        %v1037 = vrot.slane %v976, %v1036
        %v1038 = vlaneseq
        %v1039 = vshrl.u32 %v1038, 7
        %v1040 = vsub.s32 0, %v1039
        %v1041 = vrot.slane %v990, %v1040
        %v1042 = vlaneseq
        %v1043 = vshrl.u32 %v1042, 7
        %v1044 = vsub.s32 0, %v1043
        %v1045 = vrot.slane %v998, %v1044
        %v1046 = vlaneseq
        %v1047 = vshrl.u32 %v1046, 7
        %v1048 = vsub.s32 0, %v1047
        %v1049 = vrot.slane %v1000, %v1048
        %v1050 = vlaneseq
        %v1051 = vshrl.u32 %v1050, 7
        %v1052 = vsub.s32 0, %v1051
        %v1053 = vrot.slane %v983, %v1052
        %v1054 = vlaneseq
        %v1055 = vshrl.u32 %v1054, 7
        %v1056 = vsub.s32 0, %v1055
        %v1057 = vrot.slane %v997, %v1056
        %v1058 = vlaneseq
        %v1059 = vshrl.u32 %v1058, 7
        %v1060 = vsub.s32 0, %v1059
        %v1061 = vrot.slane %v999, %v1060
        %v1062 = vlaneseq
        %v1063 = vshrl.u32 %v1062, 7
        %v1064 = vsub.s32 0, %v1063
        %v1065 = vrot.slane %v1001, %v1064
        %v1082 = vadd.f32 %v318, %v1005
        %v1083 = vadd.f32 %v319, %v1005
        %v1084 = vadd.f32 %v320, %v1009
        %v1085 = vadd.f32 %v321, %v1009
        %v1086 = vadd.f32 %v322, %v1013
        %v1087 = vadd.f32 %v323, %v1013
        %v1088 = vadd.f32 %v324, %v1017
        %v1089 = vadd.f32 %v325, %v1017
        %v1090 = vadd.f32 %v326, %v1021
        %v1091 = vadd.f32 %v327, %v1021
        %v1092 = vadd.f32 %v328, %v1025
        %v1093 = vadd.f32 %v329, %v1025
        %v1094 = vadd.f32 %v330, %v1029
        %v1095 = vadd.f32 %v331, %v1029
        %v1096 = vadd.f32 %v332, %v1033
        %v1097 = vadd.f32 %v333, %v1033
        %v1098 = vadd.f32 %v334, %v1037
        %v1099 = vadd.f32 %v335, %v1037
        %v1100 = vadd.f32 %v336, %v1041
        %v1101 = vadd.f32 %v337, %v1041
        %v1102 = vadd.f32 %v338, %v1045
        %v1103 = vadd.f32 %v339, %v1045
        %v1104 = vadd.f32 %v340, %v1049
        %v1105 = vadd.f32 %v341, %v1049
        %v1106 = vadd.f32 %v342, %v1053
        %v1107 = vadd.f32 %v343, %v1053
        %v1108 = vadd.f32 %v344, %v1057
        %v1109 = vadd.f32 %v345, %v1057
        %v1110 = vadd.f32 %v346, %v1061
        %v1111 = vadd.f32 %v347, %v1061
        %v1112 = vadd.f32 %v348, %v1065
        %v1113 = vadd.f32 %v349, %v1065
        %v1114 = vmul.f32 %v1082, %v1082
        %v1115 = vmul.f32 %v1083, %v1083
        %v1116 = vmul.f32 %v1084, %v1084
        %v1117 = vmul.f32 %v1085, %v1085
        %v1118 = vmul.f32 %v1086, %v1086
        %v1119 = vmul.f32 %v1087, %v1087
        %v1120 = vmul.f32 %v1088, %v1088
        %v1121 = vmul.f32 %v1089, %v1089
        %v1122 = vmul.f32 %v1090, %v1090
        %v1123 = vmul.f32 %v1091, %v1091
        %v1124 = vmul.f32 %v1092, %v1092
        %v1125 = vmul.f32 %v1093, %v1093
        %v1126 = vmul.f32 %v1094, %v1094
        %v1127 = vmul.f32 %v1095, %v1095
        %v1128 = vmul.f32 %v1096, %v1096
        %v1129 = vmul.f32 %v1097, %v1097
        %v1130 = vmul.f32 %v1098, %v1098
        %v1131 = vmul.f32 %v1099, %v1099
        %v1132 = vmul.f32 %v1100, %v1100
        %v1133 = vmul.f32 %v1101, %v1101
        %v1134 = vmul.f32 %v1102, %v1102
        %v1135 = vmul.f32 %v1103, %v1103
        %v1136 = vmul.f32 %v1104, %v1104
        %v1137 = vmul.f32 %v1105, %v1105
        %v1138 = vmul.f32 %v1106, %v1106
        %v1139 = vmul.f32 %v1107, %v1107
        %v1140 = vmul.f32 %v1108, %v1108
        %v1141 = vmul.f32 %v1109, %v1109
        %v1142 = vmul.f32 %v1110, %v1110
        %v1143 = vmul.f32 %v1111, %v1111
        %v1144 = vmul.f32 %v1112, %v1112
        %v1145 = vmul.f32 %v1113, %v1113
        %1146 = vadd.xlane.f32.xlu0 %v1114
        %v1147 = vpop.xlane.xlu0 %1146
        %1148 = vadd.xlane.f32.xlu0 %v1115
        %v1149 = vpop.xlane.xlu0 %1148
        %1150 = vadd.xlane.f32.xlu0 %v1116
        %v1151 = vpop.xlane.xlu0 %1150
        %1152 = vadd.xlane.f32.xlu0 %v1117
        %v1153 = vpop.xlane.xlu0 %1152
        %1154 = vadd.xlane.f32.xlu0 %v1118
        %v1155 = vpop.xlane.xlu0 %1154
        %1156 = vadd.xlane.f32.xlu0 %v1119
        %v1157 = vpop.xlane.xlu0 %1156
        %1158 = vadd.xlane.f32.xlu0 %v1120
        %v1159 = vpop.xlane.xlu0 %1158
        %1160 = vadd.xlane.f32.xlu0 %v1121
        %v1161 = vpop.xlane.xlu0 %1160
        %1162 = vadd.xlane.f32.xlu0 %v1122
        %v1163 = vpop.xlane.xlu0 %1162
        %1164 = vadd.xlane.f32.xlu0 %v1123
        %v1165 = vpop.xlane.xlu0 %1164
        %1166 = vadd.xlane.f32.xlu0 %v1124
        %v1167 = vpop.xlane.xlu0 %1166
        %1168 = vadd.xlane.f32.xlu0 %v1125
        %v1169 = vpop.xlane.xlu0 %1168
        %1170 = vadd.xlane.f32.xlu0 %v1126
        %v1171 = vpop.xlane.xlu0 %1170
        %1172 = vadd.xlane.f32.xlu0 %v1127
        %v1173 = vpop.xlane.xlu0 %1172
        %1174 = vadd.xlane.f32.xlu0 %v1128
        %v1175 = vpop.xlane.xlu0 %1174
        %1176 = vadd.xlane.f32.xlu0 %v1129
        %v1177 = vpop.xlane.xlu0 %1176
        %1178 = vadd.xlane.f32.xlu0 %v1130
        %v1179 = vpop.xlane.xlu0 %1178
        %1180 = vadd.xlane.f32.xlu0 %v1131
        %v1181 = vpop.xlane.xlu0 %1180
        %1182 = vadd.xlane.f32.xlu0 %v1132
        %v1183 = vpop.xlane.xlu0 %1182
        %1184 = vadd.xlane.f32.xlu0 %v1133
        %v1185 = vpop.xlane.xlu0 %1184
        %1186 = vadd.xlane.f32.xlu0 %v1134
        %v1187 = vpop.xlane.xlu0 %1186
        %1188 = vadd.xlane.f32.xlu0 %v1135
        %v1189 = vpop.xlane.xlu0 %1188
        %1190 = vadd.xlane.f32.xlu0 %v1136
        %v1191 = vpop.xlane.xlu0 %1190
        %1192 = vadd.xlane.f32.xlu0 %v1137
        %v1193 = vpop.xlane.xlu0 %1192
        %1194 = vadd.xlane.f32.xlu0 %v1138
        %v1195 = vpop.xlane.xlu0 %1194
        %1196 = vadd.xlane.f32.xlu0 %v1139
        %v1197 = vpop.xlane.xlu0 %1196
        %1198 = vadd.xlane.f32.xlu0 %v1140
        %v1199 = vpop.xlane.xlu0 %1198
        %1200 = vadd.xlane.f32.xlu0 %v1141
        %v1201 = vpop.xlane.xlu0 %1200
        %1202 = vadd.xlane.f32.xlu0 %v1142
        %v1203 = vpop.xlane.xlu0 %1202
        %1204 = vadd.xlane.f32.xlu0 %v1143
        %v1205 = vpop.xlane.xlu0 %1204
        %1206 = vadd.xlane.f32.xlu0 %v1144
        %v1207 = vpop.xlane.xlu0 %1206
        %1208 = vadd.xlane.f32.xlu0 %v1145
        %v1209 = vpop.xlane.xlu0 %1208
        %v1210 = vmul.f32 %v1147, %v446
        %v1211 = vmul.f32 %v1149, %v446
        %v1212 = vmul.f32 %v1151, %v446
        %v1213 = vmul.f32 %v1153, %v446
        %v1214 = vmul.f32 %v1155, %v446
        %v1215 = vmul.f32 %v1157, %v446
        %v1216 = vmul.f32 %v1159, %v446
        %v1217 = vmul.f32 %v1161, %v446
        %v1218 = vmul.f32 %v1163, %v446
        %v1219 = vmul.f32 %v1165, %v446
        %v1220 = vmul.f32 %v1167, %v446
        %v1221 = vmul.f32 %v1169, %v446
        %v1222 = vmul.f32 %v1171, %v446
        %v1223 = vmul.f32 %v1173, %v446
        %v1224 = vmul.f32 %v1175, %v446
        %v1225 = vmul.f32 %v1177, %v446
        %v1226 = vmul.f32 %v1179, %v446
        %v1227 = vmul.f32 %v1181, %v446
        %v1228 = vmul.f32 %v1183, %v446
        %v1229 = vmul.f32 %v1185, %v446
        %v1230 = vmul.f32 %v1187, %v446
        %v1231 = vmul.f32 %v1189, %v446
        %v1232 = vmul.f32 %v1191, %v446
        %v1233 = vmul.f32 %v1193, %v446
        %v1234 = vmul.f32 %v1195, %v446
        %v1235 = vmul.f32 %v1197, %v446
        %v1236 = vmul.f32 %v1199, %v446
        %v1237 = vmul.f32 %v1201, %v446
        %v1238 = vmul.f32 %v1203, %v446
        %v1239 = vmul.f32 %v1205, %v446
        %v1240 = vmul.f32 %v1207, %v446
        %v1241 = vmul.f32 %v1209, %v446
        %v1242 = vadd.f32 %v1210, 1e-05
        %v1243 = vadd.f32 %v1211, 1e-05
        %v1244 = vadd.f32 %v1212, 1e-05
        %v1245 = vadd.f32 %v1213, 1e-05
        %v1246 = vadd.f32 %v1214, 1e-05
        %v1247 = vadd.f32 %v1215, 1e-05
        %v1248 = vadd.f32 %v1216, 1e-05
        %v1249 = vadd.f32 %v1217, 1e-05
        %v1250 = vadd.f32 %v1218, 1e-05
        %v1251 = vadd.f32 %v1219, 1e-05
        %v1252 = vadd.f32 %v1220, 1e-05
        %v1253 = vadd.f32 %v1221, 1e-05
        %v1254 = vadd.f32 %v1222, 1e-05
        %v1255 = vadd.f32 %v1223, 1e-05
        %v1256 = vadd.f32 %v1224, 1e-05
        %v1257 = vadd.f32 %v1225, 1e-05
        %v1258 = vadd.f32 %v1226, 1e-05
        %v1259 = vadd.f32 %v1227, 1e-05
        %v1260 = vadd.f32 %v1228, 1e-05
        %v1261 = vadd.f32 %v1229, 1e-05
        %v1262 = vadd.f32 %v1230, 1e-05
        %v1263 = vadd.f32 %v1231, 1e-05
        %v1264 = vadd.f32 %v1232, 1e-05
        %v1265 = vadd.f32 %v1233, 1e-05
        %v1266 = vadd.f32 %v1234, 1e-05
        %v1267 = vadd.f32 %v1235, 1e-05
        %v1268 = vadd.f32 %v1236, 1e-05
        %v1269 = vadd.f32 %v1237, 1e-05
        %v1270 = vadd.f32 %v1238, 1e-05
        %v1271 = vadd.f32 %v1239, 1e-05
        %v1272 = vadd.f32 %v1240, 1e-05
        %v1273 = vadd.f32 %v1241, 1e-05
        %v1274 = vrsqrt.pop %v1242
        %v1275 = vrsqrt.pop %v1243
        %v1276 = vrsqrt.pop %v1244
        %v1277 = vrsqrt.pop %v1245
        %v1278 = vrsqrt.pop %v1246
        %v1279 = vrsqrt.pop %v1247
        %v1280 = vrsqrt.pop %v1248
        %v1281 = vrsqrt.pop %v1249
        %v1282 = vrsqrt.pop %v1250
        %v1283 = vrsqrt.pop %v1251
        %v1284 = vrsqrt.pop %v1252
        %v1285 = vrsqrt.pop %v1253
        %v1286 = vrsqrt.pop %v1254
        %v1287 = vrsqrt.pop %v1255
        %v1288 = vrsqrt.pop %v1256
        %v1289 = vrsqrt.pop %v1257
        %v1290 = vrsqrt.pop %v1258
        %v1291 = vrsqrt.pop %v1259
        %v1292 = vrsqrt.pop %v1260
        %v1293 = vrsqrt.pop %v1261
        %v1294 = vrsqrt.pop %v1262
        %v1295 = vrsqrt.pop %v1263
        %v1296 = vrsqrt.pop %v1264
        %v1297 = vrsqrt.pop %v1265
        %v1298 = vrsqrt.pop %v1266
        %v1299 = vrsqrt.pop %v1267
        %v1300 = vrsqrt.pop %v1268
        %v1301 = vrsqrt.pop %v1269
        %v1302 = vrsqrt.pop %v1270
        %v1303 = vrsqrt.pop %v1271
        %v1304 = vrsqrt.pop %v1272
        %v1305 = vrsqrt.pop %v1273
        %v1306 = vmul.f32 %v1082, %v1274
        %v1307 = vmul.f32 %v1083, %v1275
        %v1308 = vmul.f32 %v1084, %v1276
        %v1309 = vmul.f32 %v1085, %v1277
        %v1310 = vmul.f32 %v1086, %v1278
        %v1311 = vmul.f32 %v1087, %v1279
        %v1312 = vmul.f32 %v1088, %v1280
        %v1313 = vmul.f32 %v1089, %v1281
        %v1314 = vmul.f32 %v1090, %v1282
        %v1315 = vmul.f32 %v1091, %v1283
        %v1316 = vmul.f32 %v1092, %v1284
        %v1317 = vmul.f32 %v1093, %v1285
        %v1318 = vmul.f32 %v1094, %v1286
        %v1319 = vmul.f32 %v1095, %v1287
        %v1320 = vmul.f32 %v1096, %v1288
        %v1321 = vmul.f32 %v1097, %v1289
        %v1322 = vmul.f32 %v1098, %v1290
        %v1323 = vmul.f32 %v1099, %v1291
        %v1324 = vmul.f32 %v1100, %v1292
        %v1325 = vmul.f32 %v1101, %v1293
        %v1326 = vmul.f32 %v1102, %v1294
        %v1327 = vmul.f32 %v1103, %v1295
        %v1328 = vmul.f32 %v1104, %v1296
        %v1329 = vmul.f32 %v1105, %v1297
        %v1330 = vmul.f32 %v1106, %v1298
        %v1331 = vmul.f32 %v1107, %v1299
        %v1332 = vmul.f32 %v1108, %v1300
        %v1333 = vmul.f32 %v1109, %v1301
        %v1334 = vmul.f32 %v1110, %v1302
        %v1335 = vmul.f32 %v1111, %v1303
        %v1336 = vmul.f32 %v1112, %v1304
        %v1337 = vmul.f32 %v1113, %v1305
        %v1338 = vld [vmem:[%s2] sm:$0x1]
        %v1340 = vlaneseq
        %v1341 = vshrl.u32 %v1340, 7
        %v1342 = vsub.s32 0, %v1341
        %v1343 = vrot.slane %v1338, %v1342
        %v1345 = vmul.f32 %v1306, %v1343
        %v1346 = vmul.f32 %v1307, %v1343
        %v1347 = vmul.f32 %v1308, %v1343
        %v1348 = vmul.f32 %v1309, %v1343
        %v1349 = vmul.f32 %v1310, %v1343
        %v1350 = vmul.f32 %v1311, %v1343
        %v1351 = vmul.f32 %v1312, %v1343
        %v1352 = vmul.f32 %v1313, %v1343
        %v1353 = vmul.f32 %v1314, %v1343
        %v1354 = vmul.f32 %v1315, %v1343
        %v1355 = vmul.f32 %v1316, %v1343
        %v1356 = vmul.f32 %v1317, %v1343
        %v1357 = vmul.f32 %v1318, %v1343
        %v1358 = vmul.f32 %v1319, %v1343
        %v1359 = vmul.f32 %v1320, %v1343
        %v1360 = vmul.f32 %v1321, %v1343
        %v1361 = vmul.f32 %v1322, %v1343
        %v1362 = vmul.f32 %v1323, %v1343
        %v1363 = vmul.f32 %v1324, %v1343
        %v1364 = vmul.f32 %v1325, %v1343
        %v1365 = vmul.f32 %v1326, %v1343
        %v1366 = vmul.f32 %v1327, %v1343
        %v1367 = vmul.f32 %v1328, %v1343
        %v1368 = vmul.f32 %v1329, %v1343
        %v1369 = vmul.f32 %v1330, %v1343
        %v1370 = vmul.f32 %v1331, %v1343
        %v1371 = vmul.f32 %v1332, %v1343
        %v1372 = vmul.f32 %v1333, %v1343
        %v1373 = vmul.f32 %v1334, %v1343
        %v1374 = vmul.f32 %v1335, %v1343
        %v1375 = vmul.f32 %v1336, %v1343
        %v1376 = vmul.f32 %v1337, %v1343
        %v1377 = vpack.c.bf16 %v1346, %v1345
        %v1378 = vpack.c.bf16 %v1348, %v1347
        %v1379 = vpack.c.bf16 %v1350, %v1349
        %v1380 = vpack.c.bf16 %v1352, %v1351
        %v1381 = vpack.c.bf16 %v1354, %v1353
        %v1382 = vpack.c.bf16 %v1356, %v1355
        %v1383 = vpack.c.bf16 %v1358, %v1357
        %v1384 = vpack.c.bf16 %v1360, %v1359
        %v1385 = vpack.c.bf16 %v1362, %v1361
        %v1386 = vpack.c.bf16 %v1364, %v1363
        %v1387 = vpack.c.bf16 %v1366, %v1365
        %v1388 = vpack.c.bf16 %v1368, %v1367
        %v1389 = vpack.c.bf16 %v1370, %v1369
        %v1390 = vpack.c.bf16 %v1372, %v1371
        %v1391 = vpack.c.bf16 %v1374, %v1373
        %v1392 = vpack.c.bf16 %v1376, %v1375
        %v1393 = vld [vmem:[#allocation7] sm:$0xff]
        %v1394 = vld [vmem:[#allocation7 + $0x8] sm:$0xff]
        %v1395 = vld [vmem:[#allocation7 + $0x10] sm:$0xff]
        %v1396 = vld [vmem:[#allocation7 + $0x18] sm:$0xff]
        %v1397 = vld [vmem:[#allocation7 + $0x20] sm:$0xff]
        %v1398 = vld [vmem:[#allocation7 + $0x28] sm:$0xff]
        %v1399 = vld [vmem:[#allocation7 + $0x30] sm:$0xff]
        %v1400 = vld [vmem:[#allocation7 + $0x38] sm:$0xff]
        %v1401 = vld [vmem:[#allocation7 + $0x40] sm:$0xff]
        %v1402 = vld [vmem:[#allocation7 + $0x48] sm:$0xff]
        %v1403 = vld [vmem:[#allocation7 + $0x50] sm:$0xff]
        %v1404 = vld [vmem:[#allocation7 + $0x58] sm:$0xff]
        %v1405 = vld [vmem:[#allocation7 + $0x60] sm:$0xff]
        %v1406 = vld [vmem:[#allocation7 + $0x68] sm:$0xff]
        %v1407 = vld [vmem:[#allocation7 + $0x70] sm:$0xff]
        %v1408 = vld [vmem:[#allocation7 + $0x78] sm:$0xff]
        %v1409 = vld [vmem:[#allocation7 + $0x80] sm:$0xff]
        %v1410 = vld [vmem:[#allocation7 + $0x88] sm:$0xff]
        %v1411 = vld [vmem:[#allocation7 + $0x90] sm:$0xff]
        %v1412 = vld [vmem:[#allocation7 + $0x98] sm:$0xff]
        %v1413 = vld [vmem:[#allocation7 + $0xa0] sm:$0xff]
        %v1414 = vld [vmem:[#allocation7 + $0xa8] sm:$0xff]
        %v1415 = vld [vmem:[#allocation7 + $0xb0] sm:$0xff]
        %v1416 = vld [vmem:[#allocation7 + $0xb8] sm:$0xff]
        %v1417 = vld [vmem:[#allocation7 + $0xc0] sm:$0xff]
        %v1418 = vld [vmem:[#allocation7 + $0xc8] sm:$0xff]
        %v1419 = vld [vmem:[#allocation7 + $0xd0] sm:$0xff]
        %v1420 = vld [vmem:[#allocation7 + $0xd8] sm:$0xff]
        %v1421 = vld [vmem:[#allocation7 + $0xe0] sm:$0xff]
        %v1422 = vld [vmem:[#allocation7 + $0xe8] sm:$0xff]
        %v1423 = vld [vmem:[#allocation7 + $0xf0] sm:$0xff]
        %v1424 = vld [vmem:[#allocation7 + $0xf8] sm:$0xff]
        %v1425 = vld [vmem:[#allocation7 + $0x100] sm:$0xff]
        %v1426 = vld [vmem:[#allocation7 + $0x108] sm:$0xff]
        %v1427 = vld [vmem:[#allocation7 + $0x110] sm:$0xff]
        %v1428 = vld [vmem:[#allocation7 + $0x118] sm:$0xff]
        %v1429 = vld [vmem:[#allocation7 + $0x120] sm:$0xff]
        %v1430 = vld [vmem:[#allocation7 + $0x128] sm:$0xff]
        %v1431 = vld [vmem:[#allocation7 + $0x130] sm:$0xff]
        %v1432 = vld [vmem:[#allocation7 + $0x138] sm:$0xff]
        %v1433 = vld [vmem:[#allocation7 + $0x140] sm:$0xff]
        %v1434 = vld [vmem:[#allocation7 + $0x148] sm:$0xff]
        %v1435 = vld [vmem:[#allocation7 + $0x150] sm:$0xff]
        %v1436 = vld [vmem:[#allocation7 + $0x158] sm:$0xff]
        %v1437 = vld [vmem:[#allocation7 + $0x160] sm:$0xff]
        %v1438 = vld [vmem:[#allocation7 + $0x168] sm:$0xff]
        %v1439 = vld [vmem:[#allocation7 + $0x170] sm:$0xff]
        %v1440 = vld [vmem:[#allocation7 + $0x178] sm:$0xff]
        %v1441 = vld [vmem:[#allocation7 + $0x180] sm:$0xff]
        %v1442 = vld [vmem:[#allocation7 + $0x188] sm:$0xff]
        %v1443 = vld [vmem:[#allocation7 + $0x190] sm:$0xff]
        %v1444 = vld [vmem:[#allocation7 + $0x198] sm:$0xff]
        %v1445 = vld [vmem:[#allocation7 + $0x1a0] sm:$0xff]
        %v1446 = vld [vmem:[#allocation7 + $0x1a8] sm:$0xff]
        %v1447 = vld [vmem:[#allocation7 + $0x1b0] sm:$0xff]
        %v1448 = vld [vmem:[#allocation7 + $0x1b8] sm:$0xff]
        %v1449 = vld [vmem:[#allocation7 + $0x1c0] sm:$0xff]
        %v1450 = vld [vmem:[#allocation7 + $0x1c8] sm:$0xff]
        %v1451 = vld [vmem:[#allocation7 + $0x1d0] sm:$0xff]
        %v1452 = vld [vmem:[#allocation7 + $0x1d8] sm:$0xff]
        %v1453 = vld [vmem:[#allocation7 + $0x1e0] sm:$0xff]
        %v1454 = vld [vmem:[#allocation7 + $0x1e8] sm:$0xff]
        %v1455 = vld [vmem:[#allocation7 + $0x1f0] sm:$0xff]
        %v1456 = vld [vmem:[#allocation7 + $0x1f8] sm:$0xff]
        %v1521 = vunpack.c.l.b16 %v1393
        %v1522 = vunpack.c.h.b16 %v1393
        %v1523 = vunpack.c.l.b16 %v1394
        %v1524 = vunpack.c.h.b16 %v1394
        %v1525 = vunpack.c.l.b16 %v1395
        %v1526 = vunpack.c.h.b16 %v1395
        %v1527 = vunpack.c.l.b16 %v1396
        %v1528 = vunpack.c.h.b16 %v1396
        %v1529 = vunpack.c.l.b16 %v1397
        %v1530 = vunpack.c.h.b16 %v1397
        %v1531 = vunpack.c.l.b16 %v1398
        %v1532 = vunpack.c.h.b16 %v1398
        %v1533 = vunpack.c.l.b16 %v1399
        %v1534 = vunpack.c.h.b16 %v1399
        %v1535 = vunpack.c.l.b16 %v1400
        %v1536 = vunpack.c.h.b16 %v1400
        %v1537 = vunpack.c.l.b16 %v1401
        %v1538 = vunpack.c.h.b16 %v1401
        %v1539 = vunpack.c.l.b16 %v1402
        %v1540 = vunpack.c.h.b16 %v1402
        %v1541 = vunpack.c.l.b16 %v1403
        %v1542 = vunpack.c.h.b16 %v1403
        %v1543 = vunpack.c.l.b16 %v1404
        %v1544 = vunpack.c.h.b16 %v1404
        %v1545 = vunpack.c.l.b16 %v1405
        %v1546 = vunpack.c.h.b16 %v1405
        %v1547 = vunpack.c.l.b16 %v1406
        %v1548 = vunpack.c.h.b16 %v1406
        %v1549 = vunpack.c.l.b16 %v1407
        %v1550 = vunpack.c.h.b16 %v1407
        %v1551 = vunpack.c.l.b16 %v1408
        %v1552 = vunpack.c.h.b16 %v1408
        %v1553 = vunpack.c.l.b16 %v1409
        %v1554 = vunpack.c.h.b16 %v1409
        %v1555 = vunpack.c.l.b16 %v1410
        %v1556 = vunpack.c.h.b16 %v1410
        %v1557 = vunpack.c.l.b16 %v1411
        %v1558 = vunpack.c.h.b16 %v1411
        %v1559 = vunpack.c.l.b16 %v1412
        %v1560 = vunpack.c.h.b16 %v1412
        %v1561 = vunpack.c.l.b16 %v1413
        %v1562 = vunpack.c.h.b16 %v1413
        %v1563 = vunpack.c.l.b16 %v1414
        %v1564 = vunpack.c.h.b16 %v1414
        %v1565 = vunpack.c.l.b16 %v1415
        %v1566 = vunpack.c.h.b16 %v1415
        %v1567 = vunpack.c.l.b16 %v1416
        %v1568 = vunpack.c.h.b16 %v1416
        %v1569 = vunpack.c.l.b16 %v1417
        %v1570 = vunpack.c.h.b16 %v1417
        %v1571 = vunpack.c.l.b16 %v1418
        %v1572 = vunpack.c.h.b16 %v1418
        %v1573 = vunpack.c.l.b16 %v1419
        %v1574 = vunpack.c.h.b16 %v1419
        %v1575 = vunpack.c.l.b16 %v1420
        %v1576 = vunpack.c.h.b16 %v1420
        %v1577 = vunpack.c.l.b16 %v1421
        %v1578 = vunpack.c.h.b16 %v1421
        %v1579 = vunpack.c.l.b16 %v1422
        %v1580 = vunpack.c.h.b16 %v1422
        %v1581 = vunpack.c.l.b16 %v1423
        %v1582 = vunpack.c.h.b16 %v1423
        %v1583 = vunpack.c.l.b16 %v1424
        %v1584 = vunpack.c.h.b16 %v1424
        %v1585 = vunpack.c.l.b16 %v1425
        %v1586 = vunpack.c.h.b16 %v1425
        %v1587 = vunpack.c.l.b16 %v1426
        %v1588 = vunpack.c.h.b16 %v1426
        %v1589 = vunpack.c.l.b16 %v1427
        %v1590 = vunpack.c.h.b16 %v1427
        %v1591 = vunpack.c.l.b16 %v1428
        %v1592 = vunpack.c.h.b16 %v1428
        %v1593 = vunpack.c.l.b16 %v1429
        %v1594 = vunpack.c.h.b16 %v1429
        %v1595 = vunpack.c.l.b16 %v1430
        %v1596 = vunpack.c.h.b16 %v1430
        %v1597 = vunpack.c.l.b16 %v1431
        %v1598 = vunpack.c.h.b16 %v1431
        %v1599 = vunpack.c.l.b16 %v1432
        %v1600 = vunpack.c.h.b16 %v1432
        %v1601 = vunpack.c.l.b16 %v1433
        %v1602 = vunpack.c.h.b16 %v1433
        %v1603 = vunpack.c.l.b16 %v1434
        %v1604 = vunpack.c.h.b16 %v1434
        %v1605 = vunpack.c.l.b16 %v1435
        %v1606 = vunpack.c.h.b16 %v1435
        %v1607 = vunpack.c.l.b16 %v1436
        %v1608 = vunpack.c.h.b16 %v1436
        %v1609 = vunpack.c.l.b16 %v1437
        %v1610 = vunpack.c.h.b16 %v1437
        %v1611 = vunpack.c.l.b16 %v1438
        %v1612 = vunpack.c.h.b16 %v1438
        %v1613 = vunpack.c.l.b16 %v1439
        %v1614 = vunpack.c.h.b16 %v1439
        %v1615 = vunpack.c.l.b16 %v1440
        %v1616 = vunpack.c.h.b16 %v1440
        %v1617 = vunpack.c.l.b16 %v1441
        %v1618 = vunpack.c.h.b16 %v1441
        %v1619 = vunpack.c.l.b16 %v1442
        %v1620 = vunpack.c.h.b16 %v1442
        %v1621 = vunpack.c.l.b16 %v1443
        %v1622 = vunpack.c.h.b16 %v1443
        %v1623 = vunpack.c.l.b16 %v1444
        %v1624 = vunpack.c.h.b16 %v1444
        %v1625 = vunpack.c.l.b16 %v1445
        %v1626 = vunpack.c.h.b16 %v1445
        %v1627 = vunpack.c.l.b16 %v1446
        %v1628 = vunpack.c.h.b16 %v1446
        %v1629 = vunpack.c.l.b16 %v1447
        %v1630 = vunpack.c.h.b16 %v1447
        %v1631 = vunpack.c.l.b16 %v1448
        %v1632 = vunpack.c.h.b16 %v1448
        %v1633 = vunpack.c.l.b16 %v1449
        %v1634 = vunpack.c.h.b16 %v1449
        %v1635 = vunpack.c.l.b16 %v1450
        %v1636 = vunpack.c.h.b16 %v1450
        %v1637 = vunpack.c.l.b16 %v1451
        %v1638 = vunpack.c.h.b16 %v1451
        %v1639 = vunpack.c.l.b16 %v1452
        %v1640 = vunpack.c.h.b16 %v1452
        %v1641 = vunpack.c.l.b16 %v1453
        %v1642 = vunpack.c.h.b16 %v1453
        %v1643 = vunpack.c.l.b16 %v1454
        %v1644 = vunpack.c.h.b16 %v1454
        %v1645 = vunpack.c.l.b16 %v1455
        %v1646 = vunpack.c.h.b16 %v1455
        %v1647 = vunpack.c.l.b16 %v1456
        %v1648 = vunpack.c.h.b16 %v1456
        %v1649 = vpack.c.b16 %v1529, %v1521
        %v1650 = vpack.c.b16 %v1530, %v1522
        %v1651 = vpack.c.b16 %v1531, %v1523
        %v1652 = vpack.c.b16 %v1532, %v1524
        %v1653 = vpack.c.b16 %v1533, %v1525
        %v1654 = vpack.c.b16 %v1534, %v1526
        %v1655 = vpack.c.b16 %v1535, %v1527
        %v1656 = vpack.c.b16 %v1536, %v1528
        %v1657 = vpack.c.b16 %v1545, %v1537
        %v1658 = vpack.c.b16 %v1546, %v1538
        %v1659 = vpack.c.b16 %v1547, %v1539
        %v1660 = vpack.c.b16 %v1548, %v1540
        %v1661 = vpack.c.b16 %v1549, %v1541
        %v1662 = vpack.c.b16 %v1550, %v1542
        %v1663 = vpack.c.b16 %v1551, %v1543
        %v1664 = vpack.c.b16 %v1552, %v1544
        %v1665 = vpack.c.b16 %v1561, %v1553
        %v1666 = vpack.c.b16 %v1562, %v1554
        %v1667 = vpack.c.b16 %v1563, %v1555
        %v1668 = vpack.c.b16 %v1564, %v1556
        %v1669 = vpack.c.b16 %v1565, %v1557
        %v1670 = vpack.c.b16 %v1566, %v1558
        %v1671 = vpack.c.b16 %v1567, %v1559
        %v1672 = vpack.c.b16 %v1568, %v1560
        %v1673 = vpack.c.b16 %v1577, %v1569
        %v1674 = vpack.c.b16 %v1578, %v1570
        %v1675 = vpack.c.b16 %v1579, %v1571
        %v1676 = vpack.c.b16 %v1580, %v1572
        %v1677 = vpack.c.b16 %v1581, %v1573
        %v1678 = vpack.c.b16 %v1582, %v1574
        %v1679 = vpack.c.b16 %v1583, %v1575
        %v1680 = vpack.c.b16 %v1584, %v1576
        %v1681 = vpack.c.b16 %v1593, %v1585
        %v1682 = vpack.c.b16 %v1594, %v1586
        %v1683 = vpack.c.b16 %v1595, %v1587
        %v1684 = vpack.c.b16 %v1596, %v1588
        %v1685 = vpack.c.b16 %v1597, %v1589
        %v1686 = vpack.c.b16 %v1598, %v1590
        %v1687 = vpack.c.b16 %v1599, %v1591
        %v1688 = vpack.c.b16 %v1600, %v1592
        %v1689 = vpack.c.b16 %v1609, %v1601
        %v1690 = vpack.c.b16 %v1610, %v1602
        %v1691 = vpack.c.b16 %v1611, %v1603
        %v1692 = vpack.c.b16 %v1612, %v1604
        %v1693 = vpack.c.b16 %v1613, %v1605
        %v1694 = vpack.c.b16 %v1614, %v1606
        %v1695 = vpack.c.b16 %v1615, %v1607
        %v1696 = vpack.c.b16 %v1616, %v1608
        %v1697 = vpack.c.b16 %v1625, %v1617
        %v1698 = vpack.c.b16 %v1626, %v1618
        %v1699 = vpack.c.b16 %v1627, %v1619
        %v1700 = vpack.c.b16 %v1628, %v1620
        %v1701 = vpack.c.b16 %v1629, %v1621
        %v1702 = vpack.c.b16 %v1630, %v1622
        %v1703 = vpack.c.b16 %v1631, %v1623
        %v1704 = vpack.c.b16 %v1632, %v1624
        %v1705 = vpack.c.b16 %v1641, %v1633
        %v1706 = vpack.c.b16 %v1642, %v1634
        %v1707 = vpack.c.b16 %v1643, %v1635
        %v1708 = vpack.c.b16 %v1644, %v1636
        %v1709 = vpack.c.b16 %v1645, %v1637
        %v1710 = vpack.c.b16 %v1646, %v1638
        %v1711 = vpack.c.b16 %v1647, %v1639
        %v1712 = vpack.c.b16 %v1648, %v1640
        %1777 = vmatprep.subr.bf16.mxu0 %v1650
        %1778 = vmatpush1.bf16.msra.mxu0 %v1649
        %1779 = vmatprep.subr.bf16.mxu0 %v1658
        %1780 = vmatpush1.bf16.msra.mxu0 %v1657
        %1781 = vmatprep.subr.bf16.mxu0 %v1666
        %1782 = vmatpush1.bf16.msra.mxu0 %v1665
        %1783 = vmatprep.subr.bf16.mxu0 %v1674
        %1784 = vmatpush1.bf16.msra.mxu0 %v1673
        %1785 = vmatprep.subr.bf16.mxu0 %v1682
        %1786 = vmatpush1.bf16.msra.mxu0 %v1681
        %1787 = vmatprep.subr.bf16.mxu0 %v1690
        %1788 = vmatpush1.bf16.msra.mxu0 %v1689
        %1789 = vmatprep.subr.bf16.mxu0 %v1698
        %1790 = vmatpush1.bf16.msra.mxu0 %v1697
        %1791 = vmatprep.subr.bf16.mxu0 %v1706
        %1792 = vmatpush1.bf16.msra.mxu0 %v1705
        %1793 = vmatprep.subr.bf16.mxu0 0
        %1794 = vmatpush1.bf16.msra.mxu0 0
        %1795 = vmatprep.subr.bf16.mxu0 0
        %1796 = vmatpush1.bf16.msra.mxu0 0
        %1797 = vmatprep.subr.bf16.mxu0 0
        %1798 = vmatpush1.bf16.msra.mxu0 0
        %1799 = vmatprep.subr.bf16.mxu0 0
        %1800 = vmatpush1.bf16.msra.mxu0 0
        %1801 = vmatprep.subr.bf16.mxu0 0
        %1802 = vmatpush1.bf16.msra.mxu0 0
        %1803 = vmatprep.subr.bf16.mxu0 0
        %1804 = vmatpush1.bf16.msra.mxu0 0
        %1805 = vmatprep.subr.bf16.mxu0 0
        %1806 = vmatpush1.bf16.msra.mxu0 0
        %1807 = vmatprep.subr.bf16.mxu0 0
        %1808 = vmatpush1.bf16.msra.mxu0 0
        %1809 = vmatprep.mubr.bf16.mxu0 0
        %1810 = vmatmul.mubr.bf16.gmra.mrb[0].mxu0 %v1377
        %v1811 = vpop.f32.mrb[0].mxu0
        %v1812 = vadd.f32 0.0, %v1811
        %v1813 = vpop.f32.mrb[0].mxu0
        %v1814 = vadd.f32 0.0, %v1813
        %v1815 = vpop.f32.mrb[0].mxu0
        %v1816 = vadd.f32 0.0, %v1815
        %v1817 = vpop.f32.mrb[0].mxu0
        %v1818 = vadd.f32 0.0, %v1817
        %1819 = vmatprep.mubr.bf16.mxu0 0
        %1820 = vmatmul.mubr.bf16.gmra.mrb[0].mxu0 %v1378
        %v1821 = vpop.f32.mrb[0].mxu0
        %v1822 = vadd.f32 0.0, %v1821
        %v1823 = vpop.f32.mrb[0].mxu0
        %v1824 = vadd.f32 0.0, %v1823
        %v1825 = vpop.f32.mrb[0].mxu0
        %v1826 = vadd.f32 0.0, %v1825
        %v1827 = vpop.f32.mrb[0].mxu0
        %v1828 = vadd.f32 0.0, %v1827
        %1829 = vmatprep.mubr.bf16.mxu0 0
        %1830 = vmatmul.mubr.bf16.gmra.mrb[0].mxu0 %v1379
        %v1831 = vpop.f32.mrb[0].mxu0
        %v1832 = vadd.f32 0.0, %v1831
        %v1833 = vpop.f32.mrb[0].mxu0
        %v1834 = vadd.f32 0.0, %v1833
        %v1835 = vpop.f32.mrb[0].mxu0
        %v1836 = vadd.f32 0.0, %v1835
        %v1837 = vpop.f32.mrb[0].mxu0
        %v1838 = vadd.f32 0.0, %v1837
        %1839 = vmatprep.mubr.bf16.mxu0 0
        %1840 = vmatmul.mubr.bf16.gmra.mrb[0].mxu0 %v1380
        %v1841 = vpop.f32.mrb[0].mxu0
        %v1842 = vadd.f32 0.0, %v1841
        %v1843 = vpop.f32.mrb[0].mxu0
        %v1844 = vadd.f32 0.0, %v1843
        %v1845 = vpop.f32.mrb[0].mxu0
        %v1846 = vadd.f32 0.0, %v1845
        %v1847 = vpop.f32.mrb[0].mxu0
        %v1848 = vadd.f32 0.0, %v1847
        %1849 = vmatprep.mubr.bf16.mxu0 0
        %1850 = vmatmul.mubr.bf16.gmra.mrb[0].mxu0 %v1381
        %v1851 = vpop.f32.mrb[0].mxu0
        %v1852 = vadd.f32 0.0, %v1851
        %v1853 = vpop.f32.mrb[0].mxu0
        %v1854 = vadd.f32 0.0, %v1853
        %v1855 = vpop.f32.mrb[0].mxu0
        %v1856 = vadd.f32 0.0, %v1855
        %v1857 = vpop.f32.mrb[0].mxu0
        %v1858 = vadd.f32 0.0, %v1857
        %1859 = vmatprep.mubr.bf16.mxu0 0
        %1860 = vmatmul.mubr.bf16.gmra.mrb[0].mxu0 %v1382
        %v1861 = vpop.f32.mrb[0].mxu0
        %v1862 = vadd.f32 0.0, %v1861
        %v1863 = vpop.f32.mrb[0].mxu0
        %v1864 = vadd.f32 0.0, %v1863
        %v1865 = vpop.f32.mrb[0].mxu0
        %v1866 = vadd.f32 0.0, %v1865
        %v1867 = vpop.f32.mrb[0].mxu0
        %v1868 = vadd.f32 0.0, %v1867
        %1869 = vmatprep.mubr.bf16.mxu0 0
        %1870 = vmatmul.mubr.bf16.gmra.mrb[0].mxu0 %v1383
        %v1871 = vpop.f32.mrb[0].mxu0
        %v1872 = vadd.f32 0.0, %v1871
        %v1873 = vpop.f32.mrb[0].mxu0
        %v1874 = vadd.f32 0.0, %v1873
        %v1875 = vpop.f32.mrb[0].mxu0
        %v1876 = vadd.f32 0.0, %v1875
        %v1877 = vpop.f32.mrb[0].mxu0
        %v1878 = vadd.f32 0.0, %v1877
        %1879 = vmatprep.mubr.bf16.mxu0 0
        %1880 = vmatmul.mubr.bf16.gmra.mrb[0].mxu0 %v1384
        %v1881 = vpop.f32.mrb[0].mxu0
        %v1882 = vadd.f32 0.0, %v1881
        %v1883 = vpop.f32.mrb[0].mxu0
        %v1884 = vadd.f32 0.0, %v1883
        %v1885 = vpop.f32.mrb[0].mxu0
        %v1886 = vadd.f32 0.0, %v1885
        %v1887 = vpop.f32.mrb[0].mxu0
        %v1888 = vadd.f32 0.0, %v1887
        %1889 = vmatprep.mubr.bf16.mxu0 0
        %1890 = vmatmul.mubr.bf16.gmra.mrb[0].mxu0 %v1385
        %v1891 = vpop.f32.mrb[0].mxu0
        %v1892 = vadd.f32 0.0, %v1891
        %v1893 = vpop.f32.mrb[0].mxu0
        %v1894 = vadd.f32 0.0, %v1893
        %v1895 = vpop.f32.mrb[0].mxu0
        %v1896 = vadd.f32 0.0, %v1895
        %v1897 = vpop.f32.mrb[0].mxu0
        %v1898 = vadd.f32 0.0, %v1897
        %1899 = vmatprep.mubr.bf16.mxu0 0
        %1900 = vmatmul.mubr.bf16.gmra.mrb[0].mxu0 %v1386
        %v1901 = vpop.f32.mrb[0].mxu0
        %v1902 = vadd.f32 0.0, %v1901
        %v1903 = vpop.f32.mrb[0].mxu0
        %v1904 = vadd.f32 0.0, %v1903
        %v1905 = vpop.f32.mrb[0].mxu0
        %v1906 = vadd.f32 0.0, %v1905
        %v1907 = vpop.f32.mrb[0].mxu0
        %v1908 = vadd.f32 0.0, %v1907
        %1909 = vmatprep.mubr.bf16.mxu0 0
        %1910 = vmatmul.mubr.bf16.gmra.mrb[0].mxu0 %v1387
        %v1911 = vpop.f32.mrb[0].mxu0
        %v1912 = vadd.f32 0.0, %v1911
        %v1913 = vpop.f32.mrb[0].mxu0
        %v1914 = vadd.f32 0.0, %v1913
        %v1915 = vpop.f32.mrb[0].mxu0
        %v1916 = vadd.f32 0.0, %v1915
        %v1917 = vpop.f32.mrb[0].mxu0
        %v1918 = vadd.f32 0.0, %v1917
        %1919 = vmatprep.mubr.bf16.mxu0 0
        %1920 = vmatmul.mubr.bf16.gmra.mrb[0].mxu0 %v1388
        %v1921 = vpop.f32.mrb[0].mxu0
        %v1922 = vadd.f32 0.0, %v1921
        %v1923 = vpop.f32.mrb[0].mxu0
        %v1924 = vadd.f32 0.0, %v1923
        %v1925 = vpop.f32.mrb[0].mxu0
        %v1926 = vadd.f32 0.0, %v1925
        %v1927 = vpop.f32.mrb[0].mxu0
        %v1928 = vadd.f32 0.0, %v1927
        %1929 = vmatprep.mubr.bf16.mxu0 0
        %1930 = vmatmul.mubr.bf16.gmra.mrb[0].mxu0 %v1389
        %v1931 = vpop.f32.mrb[0].mxu0
        %v1932 = vadd.f32 0.0, %v1931
        %v1933 = vpop.f32.mrb[0].mxu0
        %v1934 = vadd.f32 0.0, %v1933
        %v1935 = vpop.f32.mrb[0].mxu0
        %v1936 = vadd.f32 0.0, %v1935
        %v1937 = vpop.f32.mrb[0].mxu0
        %v1938 = vadd.f32 0.0, %v1937
        %1939 = vmatprep.mubr.bf16.mxu0 0
        %1940 = vmatmul.mubr.bf16.gmra.mrb[0].mxu0 %v1390
        %v1941 = vpop.f32.mrb[0].mxu0
        %v1942 = vadd.f32 0.0, %v1941
        %v1943 = vpop.f32.mrb[0].mxu0
        %v1944 = vadd.f32 0.0, %v1943
        %v1945 = vpop.f32.mrb[0].mxu0
        %v1946 = vadd.f32 0.0, %v1945
        %v1947 = vpop.f32.mrb[0].mxu0
        %v1948 = vadd.f32 0.0, %v1947
        %1949 = vmatprep.mubr.bf16.mxu0 0
        %1950 = vmatmul.mubr.bf16.gmra.mrb[0].mxu0 %v1391
        %v1951 = vpop.f32.mrb[0].mxu0
        %v1952 = vadd.f32 0.0, %v1951
        %v1953 = vpop.f32.mrb[0].mxu0
        %v1954 = vadd.f32 0.0, %v1953
        %v1955 = vpop.f32.mrb[0].mxu0
        %v1956 = vadd.f32 0.0, %v1955
        %v1957 = vpop.f32.mrb[0].mxu0
        %v1958 = vadd.f32 0.0, %v1957
        %1959 = vmatprep.mubr.bf16.mxu0 0
        %1960 = vmatmul.mubr.bf16.gmra.mrb[0].mxu0 %v1392
        %v1961 = vpop.f32.mrb[0].mxu0
        %v1962 = vadd.f32 0.0, %v1961
        %v1963 = vpop.f32.mrb[0].mxu0
        %v1964 = vadd.f32 0.0, %v1963
        %v1965 = vpop.f32.mrb[0].mxu0
        %v1966 = vadd.f32 0.0, %v1965
        %v1967 = vpop.f32.mrb[0].mxu0
        %v1968 = vadd.f32 0.0, %v1967
        %1969 = vdwg.mxu0
        %1970 = vmatprep.subr.bf16.mxu0 %v1652
        %1971 = vmatpush1.bf16.msra.mxu0 %v1651
        %1972 = vmatprep.subr.bf16.mxu0 %v1660
        %1973 = vmatpush1.bf16.msra.mxu0 %v1659
        %1974 = vmatprep.subr.bf16.mxu0 %v1668
        %1975 = vmatpush1.bf16.msra.mxu0 %v1667
        %1976 = vmatprep.subr.bf16.mxu0 %v1676
        %1977 = vmatpush1.bf16.msra.mxu0 %v1675
        %1978 = vmatprep.subr.bf16.mxu0 %v1684
        %1979 = vmatpush1.bf16.msra.mxu0 %v1683
        %1980 = vmatprep.subr.bf16.mxu0 %v1692
        %1981 = vmatpush1.bf16.msra.mxu0 %v1691
        %1982 = vmatprep.subr.bf16.mxu0 %v1700
        %1983 = vmatpush1.bf16.msra.mxu0 %v1699
        %1984 = vmatprep.subr.bf16.mxu0 %v1708
        %1985 = vmatpush1.bf16.msra.mxu0 %v1707
        %1986 = vmatprep.subr.bf16.mxu0 0
        %1987 = vmatpush1.bf16.msra.mxu0 0
        %1988 = vmatprep.subr.bf16.mxu0 0
        %1989 = vmatpush1.bf16.msra.mxu0 0
        %1990 = vmatprep.subr.bf16.mxu0 0
        %1991 = vmatpush1.bf16.msra.mxu0 0
        %1992 = vmatprep.subr.bf16.mxu0 0
        %1993 = vmatpush1.bf16.msra.mxu0 0
        %1994 = vmatprep.subr.bf16.mxu0 0
        %1995 = vmatpush1.bf16.msra.mxu0 0
        %1996 = vmatprep.subr.bf16.mxu0 0
        %1997 = vmatpush1.bf16.msra.mxu0 0
        %1998 = vmatprep.subr.bf16.mxu0 0
        %1999 = vmatpush1.bf16.msra.mxu0 0
        %2000 = vmatprep.subr.bf16.mxu0 0
        %2001 = vmatpush1.bf16.msra.mxu0 0
        %2002 = vmatprep.mubr.bf16.mxu0 0
        %2003 = vmatmul.mubr.bf16.gmra.mrb[0].mxu0 %v1377
        %v2004 = vpop.f32.mrb[0].mxu0
        %v2005 = vadd.f32 0.0, %v2004
        %v2006 = vpop.f32.mrb[0].mxu0
        %v2007 = vadd.f32 0.0, %v2006
        %v2008 = vpop.f32.mrb[0].mxu0
        %v2009 = vadd.f32 0.0, %v2008
        %v2010 = vpop.f32.mrb[0].mxu0
        %v2011 = vadd.f32 0.0, %v2010
        %2012 = vmatprep.mubr.bf16.mxu0 0
        %2013 = vmatmul.mubr.bf16.gmra.mrb[0].mxu0 %v1378
        %v2014 = vpop.f32.mrb[0].mxu0
        %v2015 = vadd.f32 0.0, %v2014
        %v2016 = vpop.f32.mrb[0].mxu0
        %v2017 = vadd.f32 0.0, %v2016
        %v2018 = vpop.f32.mrb[0].mxu0
        %v2019 = vadd.f32 0.0, %v2018
        %v2020 = vpop.f32.mrb[0].mxu0
        %v2021 = vadd.f32 0.0, %v2020
        %2022 = vmatprep.mubr.bf16.mxu0 0
        %2023 = vmatmul.mubr.bf16.gmra.mrb[0].mxu0 %v1379
        %v2024 = vpop.f32.mrb[0].mxu0
        %v2025 = vadd.f32 0.0, %v2024
        %v2026 = vpop.f32.mrb[0].mxu0
        %v2027 = vadd.f32 0.0, %v2026
        %v2028 = vpop.f32.mrb[0].mxu0
        %v2029 = vadd.f32 0.0, %v2028
        %v2030 = vpop.f32.mrb[0].mxu0
        %v2031 = vadd.f32 0.0, %v2030
        %2032 = vmatprep.mubr.bf16.mxu0 0
        %2033 = vmatmul.mubr.bf16.gmra.mrb[0].mxu0 %v1380
        %v2034 = vpop.f32.mrb[0].mxu0
        %v2035 = vadd.f32 0.0, %v2034
        %v2036 = vpop.f32.mrb[0].mxu0
        %v2037 = vadd.f32 0.0, %v2036
        %v2038 = vpop.f32.mrb[0].mxu0
        %v2039 = vadd.f32 0.0, %v2038
        %v2040 = vpop.f32.mrb[0].mxu0
        %v2041 = vadd.f32 0.0, %v2040
        %2042 = vmatprep.mubr.bf16.mxu0 0
        %2043 = vmatmul.mubr.bf16.gmra.mrb[0].mxu0 %v1381
        %v2044 = vpop.f32.mrb[0].mxu0
        %v2045 = vadd.f32 0.0, %v2044
        %v2046 = vpop.f32.mrb[0].mxu0
        %v2047 = vadd.f32 0.0, %v2046
        %v2048 = vpop.f32.mrb[0].mxu0
        %v2049 = vadd.f32 0.0, %v2048
        %v2050 = vpop.f32.mrb[0].mxu0
        %v2051 = vadd.f32 0.0, %v2050
        %2052 = vmatprep.mubr.bf16.mxu0 0
        %2053 = vmatmul.mubr.bf16.gmra.mrb[0].mxu0 %v1382
        %v2054 = vpop.f32.mrb[0].mxu0
        %v2055 = vadd.f32 0.0, %v2054
        %v2056 = vpop.f32.mrb[0].mxu0
        %v2057 = vadd.f32 0.0, %v2056
        %v2058 = vpop.f32.mrb[0].mxu0
        %v2059 = vadd.f32 0.0, %v2058
        %v2060 = vpop.f32.mrb[0].mxu0
        %v2061 = vadd.f32 0.0, %v2060
        %2062 = vmatprep.mubr.bf16.mxu0 0
        %2063 = vmatmul.mubr.bf16.gmra.mrb[0].mxu0 %v1383
        %v2064 = vpop.f32.mrb[0].mxu0
        %v2065 = vadd.f32 0.0, %v2064
        %v2066 = vpop.f32.mrb[0].mxu0
        %v2067 = vadd.f32 0.0, %v2066
        %v2068 = vpop.f32.mrb[0].mxu0
        %v2069 = vadd.f32 0.0, %v2068
        %v2070 = vpop.f32.mrb[0].mxu0
        %v2071 = vadd.f32 0.0, %v2070
        %2072 = vmatprep.mubr.bf16.mxu0 0
        %2073 = vmatmul.mubr.bf16.gmra.mrb[0].mxu0 %v1384
        %v2074 = vpop.f32.mrb[0].mxu0
        %v2075 = vadd.f32 0.0, %v2074
        %v2076 = vpop.f32.mrb[0].mxu0
        %v2077 = vadd.f32 0.0, %v2076
        %v2078 = vpop.f32.mrb[0].mxu0
        %v2079 = vadd.f32 0.0, %v2078
        %v2080 = vpop.f32.mrb[0].mxu0
        %v2081 = vadd.f32 0.0, %v2080
        %2082 = vmatprep.mubr.bf16.mxu0 0
        %2083 = vmatmul.mubr.bf16.gmra.mrb[0].mxu0 %v1385
        %v2084 = vpop.f32.mrb[0].mxu0
        %v2085 = vadd.f32 0.0, %v2084
        %v2086 = vpop.f32.mrb[0].mxu0
        %v2087 = vadd.f32 0.0, %v2086
        %v2088 = vpop.f32.mrb[0].mxu0
        %v2089 = vadd.f32 0.0, %v2088
        %v2090 = vpop.f32.mrb[0].mxu0
        %v2091 = vadd.f32 0.0, %v2090
        %2092 = vmatprep.mubr.bf16.mxu0 0
        %2093 = vmatmul.mubr.bf16.gmra.mrb[0].mxu0 %v1386
        %v2094 = vpop.f32.mrb[0].mxu0
        %v2095 = vadd.f32 0.0, %v2094
        %v2096 = vpop.f32.mrb[0].mxu0
        %v2097 = vadd.f32 0.0, %v2096
        %v2098 = vpop.f32.mrb[0].mxu0
        %v2099 = vadd.f32 0.0, %v2098
        %v2100 = vpop.f32.mrb[0].mxu0
        %v2101 = vadd.f32 0.0, %v2100
        %2102 = vmatprep.mubr.bf16.mxu0 0
        %2103 = vmatmul.mubr.bf16.gmra.mrb[0].mxu0 %v1387
        %v2104 = vpop.f32.mrb[0].mxu0
        %v2105 = vadd.f32 0.0, %v2104
        %v2106 = vpop.f32.mrb[0].mxu0
        %v2107 = vadd.f32 0.0, %v2106
        %v2108 = vpop.f32.mrb[0].mxu0
        %v2109 = vadd.f32 0.0, %v2108
        %v2110 = vpop.f32.mrb[0].mxu0
        %v2111 = vadd.f32 0.0, %v2110
        %2112 = vmatprep.mubr.bf16.mxu0 0
        %2113 = vmatmul.mubr.bf16.gmra.mrb[0].mxu0 %v1388
        %v2114 = vpop.f32.mrb[0].mxu0
        %v2115 = vadd.f32 0.0, %v2114
        %v2116 = vpop.f32.mrb[0].mxu0
        %v2117 = vadd.f32 0.0, %v2116
        %v2118 = vpop.f32.mrb[0].mxu0
        %v2119 = vadd.f32 0.0, %v2118
        %v2120 = vpop.f32.mrb[0].mxu0
        %v2121 = vadd.f32 0.0, %v2120
        %2122 = vmatprep.mubr.bf16.mxu0 0
        %2123 = vmatmul.mubr.bf16.gmra.mrb[0].mxu0 %v1389
        %v2124 = vpop.f32.mrb[0].mxu0
        %v2125 = vadd.f32 0.0, %v2124
        %v2126 = vpop.f32.mrb[0].mxu0
        %v2127 = vadd.f32 0.0, %v2126
        %v2128 = vpop.f32.mrb[0].mxu0
        %v2129 = vadd.f32 0.0, %v2128
        %v2130 = vpop.f32.mrb[0].mxu0
        %v2131 = vadd.f32 0.0, %v2130
        %2132 = vmatprep.mubr.bf16.mxu0 0
        %2133 = vmatmul.mubr.bf16.gmra.mrb[0].mxu0 %v1390
        %v2134 = vpop.f32.mrb[0].mxu0
        %v2135 = vadd.f32 0.0, %v2134
        %v2136 = vpop.f32.mrb[0].mxu0
        %v2137 = vadd.f32 0.0, %v2136
        %v2138 = vpop.f32.mrb[0].mxu0
        %v2139 = vadd.f32 0.0, %v2138
        %v2140 = vpop.f32.mrb[0].mxu0
        %v2141 = vadd.f32 0.0, %v2140
        %2142 = vmatprep.mubr.bf16.mxu0 0
        %2143 = vmatmul.mubr.bf16.gmra.mrb[0].mxu0 %v1391
        %v2144 = vpop.f32.mrb[0].mxu0
        %v2145 = vadd.f32 0.0, %v2144
        %v2146 = vpop.f32.mrb[0].mxu0
        %v2147 = vadd.f32 0.0, %v2146
        %v2148 = vpop.f32.mrb[0].mxu0
        %v2149 = vadd.f32 0.0, %v2148
        %v2150 = vpop.f32.mrb[0].mxu0
        %v2151 = vadd.f32 0.0, %v2150
        %2152 = vmatprep.mubr.bf16.mxu0 0
        %2153 = vmatmul.mubr.bf16.gmra.mrb[0].mxu0 %v1392
        %v2154 = vpop.f32.mrb[0].mxu0
        %v2155 = vadd.f32 0.0, %v2154
        %v2156 = vpop.f32.mrb[0].mxu0
        %v2157 = vadd.f32 0.0, %v2156
        %v2158 = vpop.f32.mrb[0].mxu0
        %v2159 = vadd.f32 0.0, %v2158
        %v2160 = vpop.f32.mrb[0].mxu0
        %v2161 = vadd.f32 0.0, %v2160
        %2162 = vdwg.mxu0
        %2163 = vmatprep.subr.bf16.mxu0 %v1654
        %2164 = vmatpush1.bf16.msra.mxu0 %v1653
        %2165 = vmatprep.subr.bf16.mxu0 %v1662
        %2166 = vmatpush1.bf16.msra.mxu0 %v1661
        %2167 = vmatprep.subr.bf16.mxu0 %v1670
        %2168 = vmatpush1.bf16.msra.mxu0 %v1669
        %2169 = vmatprep.subr.bf16.mxu0 %v1678
        %2170 = vmatpush1.bf16.msra.mxu0 %v1677
        %2171 = vmatprep.subr.bf16.mxu0 %v1686
        %2172 = vmatpush1.bf16.msra.mxu0 %v1685
        %2173 = vmatprep.subr.bf16.mxu0 %v1694
        %2174 = vmatpush1.bf16.msra.mxu0 %v1693
        %2175 = vmatprep.subr.bf16.mxu0 %v1702
        %2176 = vmatpush1.bf16.msra.mxu0 %v1701
        %2177 = vmatprep.subr.bf16.mxu0 %v1710
        %2178 = vmatpush1.bf16.msra.mxu0 %v1709
        %2179 = vmatprep.subr.bf16.mxu0 0
        %2180 = vmatpush1.bf16.msra.mxu0 0
        %2181 = vmatprep.subr.bf16.mxu0 0
        %2182 = vmatpush1.bf16.msra.mxu0 0
        %2183 = vmatprep.subr.bf16.mxu0 0
        %2184 = vmatpush1.bf16.msra.mxu0 0
        %2185 = vmatprep.subr.bf16.mxu0 0
        %2186 = vmatpush1.bf16.msra.mxu0 0
        %2187 = vmatprep.subr.bf16.mxu0 0
        %2188 = vmatpush1.bf16.msra.mxu0 0
        %2189 = vmatprep.subr.bf16.mxu0 0
        %2190 = vmatpush1.bf16.msra.mxu0 0
        %2191 = vmatprep.subr.bf16.mxu0 0
        %2192 = vmatpush1.bf16.msra.mxu0 0
        %2193 = vmatprep.subr.bf16.mxu0 0
        %2194 = vmatpush1.bf16.msra.mxu0 0
        %2195 = vmatprep.mubr.bf16.mxu0 0
        %2196 = vmatmul.mubr.bf16.gmra.mrb[0].mxu0 %v1377
        %v2197 = vpop.f32.mrb[0].mxu0
        %v2198 = vadd.f32 0.0, %v2197
        %v2199 = vpop.f32.mrb[0].mxu0
        %v2200 = vadd.f32 0.0, %v2199
        %v2201 = vpop.f32.mrb[0].mxu0
        %v2202 = vadd.f32 0.0, %v2201
        %v2203 = vpop.f32.mrb[0].mxu0
        %v2204 = vadd.f32 0.0, %v2203
        %2205 = vmatprep.mubr.bf16.mxu0 0
        %2206 = vmatmul.mubr.bf16.gmra.mrb[0].mxu0 %v1378
        %v2207 = vpop.f32.mrb[0].mxu0
        %v2208 = vadd.f32 0.0, %v2207
        %v2209 = vpop.f32.mrb[0].mxu0
        %v2210 = vadd.f32 0.0, %v2209
        %v2211 = vpop.f32.mrb[0].mxu0
        %v2212 = vadd.f32 0.0, %v2211
        %v2213 = vpop.f32.mrb[0].mxu0
        %v2214 = vadd.f32 0.0, %v2213
        %2215 = vmatprep.mubr.bf16.mxu0 0
        %2216 = vmatmul.mubr.bf16.gmra.mrb[0].mxu0 %v1379
        %v2217 = vpop.f32.mrb[0].mxu0
        %v2218 = vadd.f32 0.0, %v2217
        %v2219 = vpop.f32.mrb[0].mxu0
        %v2220 = vadd.f32 0.0, %v2219
        %v2221 = vpop.f32.mrb[0].mxu0
        %v2222 = vadd.f32 0.0, %v2221
        %v2223 = vpop.f32.mrb[0].mxu0
        %v2224 = vadd.f32 0.0, %v2223
        %2225 = vmatprep.mubr.bf16.mxu0 0
        %2226 = vmatmul.mubr.bf16.gmra.mrb[0].mxu0 %v1380
        %v2227 = vpop.f32.mrb[0].mxu0
        %v2228 = vadd.f32 0.0, %v2227
        %v2229 = vpop.f32.mrb[0].mxu0
        %v2230 = vadd.f32 0.0, %v2229
        %v2231 = vpop.f32.mrb[0].mxu0
        %v2232 = vadd.f32 0.0, %v2231
        %v2233 = vpop.f32.mrb[0].mxu0
        %v2234 = vadd.f32 0.0, %v2233
        %2235 = vmatprep.mubr.bf16.mxu0 0
        %2236 = vmatmul.mubr.bf16.gmra.mrb[0].mxu0 %v1381
        %v2237 = vpop.f32.mrb[0].mxu0
        %v2238 = vadd.f32 0.0, %v2237
        %v2239 = vpop.f32.mrb[0].mxu0
        %v2240 = vadd.f32 0.0, %v2239
        %v2241 = vpop.f32.mrb[0].mxu0
        %v2242 = vadd.f32 0.0, %v2241
        %v2243 = vpop.f32.mrb[0].mxu0
        %v2244 = vadd.f32 0.0, %v2243
        %2245 = vmatprep.mubr.bf16.mxu0 0
        %2246 = vmatmul.mubr.bf16.gmra.mrb[0].mxu0 %v1382
        %v2247 = vpop.f32.mrb[0].mxu0
        %v2248 = vadd.f32 0.0, %v2247
        %v2249 = vpop.f32.mrb[0].mxu0
        %v2250 = vadd.f32 0.0, %v2249
        %v2251 = vpop.f32.mrb[0].mxu0
        %v2252 = vadd.f32 0.0, %v2251
        %v2253 = vpop.f32.mrb[0].mxu0
        %v2254 = vadd.f32 0.0, %v2253
        %2255 = vmatprep.mubr.bf16.mxu0 0
        %2256 = vmatmul.mubr.bf16.gmra.mrb[0].mxu0 %v1383
        %v2257 = vpop.f32.mrb[0].mxu0
        %v2258 = vadd.f32 0.0, %v2257
        %v2259 = vpop.f32.mrb[0].mxu0
        %v2260 = vadd.f32 0.0, %v2259
        %v2261 = vpop.f32.mrb[0].mxu0
        %v2262 = vadd.f32 0.0, %v2261
        %v2263 = vpop.f32.mrb[0].mxu0
        %v2264 = vadd.f32 0.0, %v2263
        %2265 = vmatprep.mubr.bf16.mxu0 0
        %2266 = vmatmul.mubr.bf16.gmra.mrb[0].mxu0 %v1384
        %v2267 = vpop.f32.mrb[0].mxu0
        %v2268 = vadd.f32 0.0, %v2267
        %v2269 = vpop.f32.mrb[0].mxu0
        %v2270 = vadd.f32 0.0, %v2269
        %v2271 = vpop.f32.mrb[0].mxu0
        %v2272 = vadd.f32 0.0, %v2271
        %v2273 = vpop.f32.mrb[0].mxu0
        %v2274 = vadd.f32 0.0, %v2273
        %2275 = vmatprep.mubr.bf16.mxu0 0
        %2276 = vmatmul.mubr.bf16.gmra.mrb[0].mxu0 %v1385
        %v2277 = vpop.f32.mrb[0].mxu0
        %v2278 = vadd.f32 0.0, %v2277
        %v2279 = vpop.f32.mrb[0].mxu0
        %v2280 = vadd.f32 0.0, %v2279
        %v2281 = vpop.f32.mrb[0].mxu0
        %v2282 = vadd.f32 0.0, %v2281
        %v2283 = vpop.f32.mrb[0].mxu0
        %v2284 = vadd.f32 0.0, %v2283
        %2285 = vmatprep.mubr.bf16.mxu0 0
        %2286 = vmatmul.mubr.bf16.gmra.mrb[0].mxu0 %v1386
        %v2287 = vpop.f32.mrb[0].mxu0
        %v2288 = vadd.f32 0.0, %v2287
        %v2289 = vpop.f32.mrb[0].mxu0
        %v2290 = vadd.f32 0.0, %v2289
        %v2291 = vpop.f32.mrb[0].mxu0
        %v2292 = vadd.f32 0.0, %v2291
        %v2293 = vpop.f32.mrb[0].mxu0
        %v2294 = vadd.f32 0.0, %v2293
        %2295 = vmatprep.mubr.bf16.mxu0 0
        %2296 = vmatmul.mubr.bf16.gmra.mrb[0].mxu0 %v1387
        %v2297 = vpop.f32.mrb[0].mxu0
        %v2298 = vadd.f32 0.0, %v2297
        %v2299 = vpop.f32.mrb[0].mxu0
        %v2300 = vadd.f32 0.0, %v2299
        %v2301 = vpop.f32.mrb[0].mxu0
        %v2302 = vadd.f32 0.0, %v2301
        %v2303 = vpop.f32.mrb[0].mxu0
        %v2304 = vadd.f32 0.0, %v2303
        %2305 = vmatprep.mubr.bf16.mxu0 0
        %2306 = vmatmul.mubr.bf16.gmra.mrb[0].mxu0 %v1388
        %v2307 = vpop.f32.mrb[0].mxu0
        %v2308 = vadd.f32 0.0, %v2307
        %v2309 = vpop.f32.mrb[0].mxu0
        %v2310 = vadd.f32 0.0, %v2309
        %v2311 = vpop.f32.mrb[0].mxu0
        %v2312 = vadd.f32 0.0, %v2311
        %v2313 = vpop.f32.mrb[0].mxu0
        %v2314 = vadd.f32 0.0, %v2313
        %2315 = vmatprep.mubr.bf16.mxu0 0
        %2316 = vmatmul.mubr.bf16.gmra.mrb[0].mxu0 %v1389
        %v2317 = vpop.f32.mrb[0].mxu0
        %v2318 = vadd.f32 0.0, %v2317
        %v2319 = vpop.f32.mrb[0].mxu0
        %v2320 = vadd.f32 0.0, %v2319
        %v2321 = vpop.f32.mrb[0].mxu0
        %v2322 = vadd.f32 0.0, %v2321
        %v2323 = vpop.f32.mrb[0].mxu0
        %v2324 = vadd.f32 0.0, %v2323
        %2325 = vmatprep.mubr.bf16.mxu0 0
        %2326 = vmatmul.mubr.bf16.gmra.mrb[0].mxu0 %v1390
        %v2327 = vpop.f32.mrb[0].mxu0
        %v2328 = vadd.f32 0.0, %v2327
        %v2329 = vpop.f32.mrb[0].mxu0
        %v2330 = vadd.f32 0.0, %v2329
        %v2331 = vpop.f32.mrb[0].mxu0
        %v2332 = vadd.f32 0.0, %v2331
        %v2333 = vpop.f32.mrb[0].mxu0
        %v2334 = vadd.f32 0.0, %v2333
        %2335 = vmatprep.mubr.bf16.mxu0 0
        %2336 = vmatmul.mubr.bf16.gmra.mrb[0].mxu0 %v1391
        %v2337 = vpop.f32.mrb[0].mxu0
        %v2338 = vadd.f32 0.0, %v2337
        %v2339 = vpop.f32.mrb[0].mxu0
        %v2340 = vadd.f32 0.0, %v2339
        %v2341 = vpop.f32.mrb[0].mxu0
        %v2342 = vadd.f32 0.0, %v2341
        %v2343 = vpop.f32.mrb[0].mxu0
        %v2344 = vadd.f32 0.0, %v2343
        %2345 = vmatprep.mubr.bf16.mxu0 0
        %2346 = vmatmul.mubr.bf16.gmra.mrb[0].mxu0 %v1392
        %v2347 = vpop.f32.mrb[0].mxu0
        %v2348 = vadd.f32 0.0, %v2347
        %v2349 = vpop.f32.mrb[0].mxu0
        %v2350 = vadd.f32 0.0, %v2349
        %v2351 = vpop.f32.mrb[0].mxu0
        %v2352 = vadd.f32 0.0, %v2351
        %v2353 = vpop.f32.mrb[0].mxu0
        %v2354 = vadd.f32 0.0, %v2353
        %2355 = vdwg.mxu0
        %2356 = vmatprep.subr.bf16.mxu0 %v1656
        %2357 = vmatpush1.bf16.msra.mxu0 %v1655
        %2358 = vmatprep.subr.bf16.mxu0 %v1664
        %2359 = vmatpush1.bf16.msra.mxu0 %v1663
        %2360 = vmatprep.subr.bf16.mxu0 %v1672
        %2361 = vmatpush1.bf16.msra.mxu0 %v1671
        %2362 = vmatprep.subr.bf16.mxu0 %v1680
        %2363 = vmatpush1.bf16.msra.mxu0 %v1679
        %2364 = vmatprep.subr.bf16.mxu0 %v1688
        %2365 = vmatpush1.bf16.msra.mxu0 %v1687
        %2366 = vmatprep.subr.bf16.mxu0 %v1696
        %2367 = vmatpush1.bf16.msra.mxu0 %v1695
        %2368 = vmatprep.subr.bf16.mxu0 %v1704
        %2369 = vmatpush1.bf16.msra.mxu0 %v1703
        %2370 = vmatprep.subr.bf16.mxu0 %v1712
        %2371 = vmatpush1.bf16.msra.mxu0 %v1711
        %2372 = vmatprep.subr.bf16.mxu0 0
        %2373 = vmatpush1.bf16.msra.mxu0 0
        %2374 = vmatprep.subr.bf16.mxu0 0
        %2375 = vmatpush1.bf16.msra.mxu0 0
        %2376 = vmatprep.subr.bf16.mxu0 0
        %2377 = vmatpush1.bf16.msra.mxu0 0
        %2378 = vmatprep.subr.bf16.mxu0 0
        %2379 = vmatpush1.bf16.msra.mxu0 0
        %2380 = vmatprep.subr.bf16.mxu0 0
        %2381 = vmatpush1.bf16.msra.mxu0 0
        %2382 = vmatprep.subr.bf16.mxu0 0
        %2383 = vmatpush1.bf16.msra.mxu0 0
        %2384 = vmatprep.subr.bf16.mxu0 0
        %2385 = vmatpush1.bf16.msra.mxu0 0
        %2386 = vmatprep.subr.bf16.mxu0 0
        %2387 = vmatpush1.bf16.msra.mxu0 0
        %2388 = vmatprep.mubr.bf16.mxu0 0
        %2389 = vmatmul.mubr.bf16.gmra.mrb[0].mxu0 %v1377
        %v2390 = vpop.f32.mrb[0].mxu0
        %v2391 = vadd.f32 0.0, %v2390
        %v2392 = vpop.f32.mrb[0].mxu0
        %v2393 = vadd.f32 0.0, %v2392
        %v2394 = vpop.f32.mrb[0].mxu0
        %v2395 = vadd.f32 0.0, %v2394
        %v2396 = vpop.f32.mrb[0].mxu0
        %v2397 = vadd.f32 0.0, %v2396
        %2398 = vmatprep.mubr.bf16.mxu0 0
        %2399 = vmatmul.mubr.bf16.gmra.mrb[0].mxu0 %v1378
        %v2400 = vpop.f32.mrb[0].mxu0
        %v2401 = vadd.f32 0.0, %v2400
        %v2402 = vpop.f32.mrb[0].mxu0
        %v2403 = vadd.f32 0.0, %v2402
        %v2404 = vpop.f32.mrb[0].mxu0
        %v2405 = vadd.f32 0.0, %v2404
        %v2406 = vpop.f32.mrb[0].mxu0
        %v2407 = vadd.f32 0.0, %v2406
        %2408 = vmatprep.mubr.bf16.mxu0 0
        %2409 = vmatmul.mubr.bf16.gmra.mrb[0].mxu0 %v1379
        %v2410 = vpop.f32.mrb[0].mxu0
        %v2411 = vadd.f32 0.0, %v2410
        %v2412 = vpop.f32.mrb[0].mxu0
        %v2413 = vadd.f32 0.0, %v2412
        %v2414 = vpop.f32.mrb[0].mxu0
        %v2415 = vadd.f32 0.0, %v2414
        %v2416 = vpop.f32.mrb[0].mxu0
        %v2417 = vadd.f32 0.0, %v2416
        %2418 = vmatprep.mubr.bf16.mxu0 0
        %2419 = vmatmul.mubr.bf16.gmra.mrb[0].mxu0 %v1380
        %v2420 = vpop.f32.mrb[0].mxu0
        %v2421 = vadd.f32 0.0, %v2420
        %v2422 = vpop.f32.mrb[0].mxu0
        %v2423 = vadd.f32 0.0, %v2422
        %v2424 = vpop.f32.mrb[0].mxu0
        %v2425 = vadd.f32 0.0, %v2424
        %v2426 = vpop.f32.mrb[0].mxu0
        %v2427 = vadd.f32 0.0, %v2426
        %2428 = vmatprep.mubr.bf16.mxu0 0
        %2429 = vmatmul.mubr.bf16.gmra.mrb[0].mxu0 %v1381
        %v2430 = vpop.f32.mrb[0].mxu0
        %v2431 = vadd.f32 0.0, %v2430
        %v2432 = vpop.f32.mrb[0].mxu0
        %v2433 = vadd.f32 0.0, %v2432
        %v2434 = vpop.f32.mrb[0].mxu0
        %v2435 = vadd.f32 0.0, %v2434
        %v2436 = vpop.f32.mrb[0].mxu0
        %v2437 = vadd.f32 0.0, %v2436
        %2438 = vmatprep.mubr.bf16.mxu0 0
        %2439 = vmatmul.mubr.bf16.gmra.mrb[0].mxu0 %v1382
        %v2440 = vpop.f32.mrb[0].mxu0
        %v2441 = vadd.f32 0.0, %v2440
        %v2442 = vpop.f32.mrb[0].mxu0
        %v2443 = vadd.f32 0.0, %v2442
        %v2444 = vpop.f32.mrb[0].mxu0
        %v2445 = vadd.f32 0.0, %v2444
        %v2446 = vpop.f32.mrb[0].mxu0
        %v2447 = vadd.f32 0.0, %v2446
        %2448 = vmatprep.mubr.bf16.mxu0 0
        %2449 = vmatmul.mubr.bf16.gmra.mrb[0].mxu0 %v1383
        %v2450 = vpop.f32.mrb[0].mxu0
        %v2451 = vadd.f32 0.0, %v2450
        %v2452 = vpop.f32.mrb[0].mxu0
        %v2453 = vadd.f32 0.0, %v2452
        %v2454 = vpop.f32.mrb[0].mxu0
        %v2455 = vadd.f32 0.0, %v2454
        %v2456 = vpop.f32.mrb[0].mxu0
        %v2457 = vadd.f32 0.0, %v2456
        %2458 = vmatprep.mubr.bf16.mxu0 0
        %2459 = vmatmul.mubr.bf16.gmra.mrb[0].mxu0 %v1384
        %v2460 = vpop.f32.mrb[0].mxu0
        %v2461 = vadd.f32 0.0, %v2460
        %v2462 = vpop.f32.mrb[0].mxu0
        %v2463 = vadd.f32 0.0, %v2462
        %v2464 = vpop.f32.mrb[0].mxu0
        %v2465 = vadd.f32 0.0, %v2464
        %v2466 = vpop.f32.mrb[0].mxu0
        %v2467 = vadd.f32 0.0, %v2466
        %2468 = vmatprep.mubr.bf16.mxu0 0
        %2469 = vmatmul.mubr.bf16.gmra.mrb[0].mxu0 %v1385
        %v2470 = vpop.f32.mrb[0].mxu0
        %v2471 = vadd.f32 0.0, %v2470
        %v2472 = vpop.f32.mrb[0].mxu0
        %v2473 = vadd.f32 0.0, %v2472
        %v2474 = vpop.f32.mrb[0].mxu0
        %v2475 = vadd.f32 0.0, %v2474
        %v2476 = vpop.f32.mrb[0].mxu0
        %v2477 = vadd.f32 0.0, %v2476
        %2478 = vmatprep.mubr.bf16.mxu0 0
        %2479 = vmatmul.mubr.bf16.gmra.mrb[0].mxu0 %v1386
        %v2480 = vpop.f32.mrb[0].mxu0
        %v2481 = vadd.f32 0.0, %v2480
        %v2482 = vpop.f32.mrb[0].mxu0
        %v2483 = vadd.f32 0.0, %v2482
        %v2484 = vpop.f32.mrb[0].mxu0
        %v2485 = vadd.f32 0.0, %v2484
        %v2486 = vpop.f32.mrb[0].mxu0
        %v2487 = vadd.f32 0.0, %v2486
        %2488 = vmatprep.mubr.bf16.mxu0 0
        %2489 = vmatmul.mubr.bf16.gmra.mrb[0].mxu0 %v1387
        %v2490 = vpop.f32.mrb[0].mxu0
        %v2491 = vadd.f32 0.0, %v2490
        %v2492 = vpop.f32.mrb[0].mxu0
        %v2493 = vadd.f32 0.0, %v2492
        %v2494 = vpop.f32.mrb[0].mxu0
        %v2495 = vadd.f32 0.0, %v2494
        %v2496 = vpop.f32.mrb[0].mxu0
        %v2497 = vadd.f32 0.0, %v2496
        %2498 = vmatprep.mubr.bf16.mxu0 0
        %2499 = vmatmul.mubr.bf16.gmra.mrb[0].mxu0 %v1388
        %v2500 = vpop.f32.mrb[0].mxu0
        %v2501 = vadd.f32 0.0, %v2500
        %v2502 = vpop.f32.mrb[0].mxu0
        %v2503 = vadd.f32 0.0, %v2502
        %v2504 = vpop.f32.mrb[0].mxu0
        %v2505 = vadd.f32 0.0, %v2504
        %v2506 = vpop.f32.mrb[0].mxu0
        %v2507 = vadd.f32 0.0, %v2506
        %2508 = vmatprep.mubr.bf16.mxu0 0
        %2509 = vmatmul.mubr.bf16.gmra.mrb[0].mxu0 %v1389
        %v2510 = vpop.f32.mrb[0].mxu0
        %v2511 = vadd.f32 0.0, %v2510
        %v2512 = vpop.f32.mrb[0].mxu0
        %v2513 = vadd.f32 0.0, %v2512
        %v2514 = vpop.f32.mrb[0].mxu0
        %v2515 = vadd.f32 0.0, %v2514
        %v2516 = vpop.f32.mrb[0].mxu0
        %v2517 = vadd.f32 0.0, %v2516
        %2518 = vmatprep.mubr.bf16.mxu0 0
        %2519 = vmatmul.mubr.bf16.gmra.mrb[0].mxu0 %v1390
        %v2520 = vpop.f32.mrb[0].mxu0
        %v2521 = vadd.f32 0.0, %v2520
        %v2522 = vpop.f32.mrb[0].mxu0
        %v2523 = vadd.f32 0.0, %v2522
        %v2524 = vpop.f32.mrb[0].mxu0
        %v2525 = vadd.f32 0.0, %v2524
        %v2526 = vpop.f32.mrb[0].mxu0
        %v2527 = vadd.f32 0.0, %v2526
        %2528 = vmatprep.mubr.bf16.mxu0 0
        %2529 = vmatmul.mubr.bf16.gmra.mrb[0].mxu0 %v1391
        %v2530 = vpop.f32.mrb[0].mxu0
        %v2531 = vadd.f32 0.0, %v2530
        %v2532 = vpop.f32.mrb[0].mxu0
        %v2533 = vadd.f32 0.0, %v2532
        %v2534 = vpop.f32.mrb[0].mxu0
        %v2535 = vadd.f32 0.0, %v2534
        %v2536 = vpop.f32.mrb[0].mxu0
        %v2537 = vadd.f32 0.0, %v2536
        %2538 = vmatprep.mubr.bf16.mxu0 0
        %2539 = vmatmul.mubr.bf16.gmra.mrb[0].mxu0 %v1392
        %v2540 = vpop.f32.mrb[0].mxu0
        %v2541 = vadd.f32 0.0, %v2540
        %v2542 = vpop.f32.mrb[0].mxu0
        %v2543 = vadd.f32 0.0, %v2542
        %v2544 = vpop.f32.mrb[0].mxu0
        %v2545 = vadd.f32 0.0, %v2544
        %v2546 = vpop.f32.mrb[0].mxu0
        %v2547 = vadd.f32 0.0, %v2546
        %2548 = vdwg.mxu0
        %v2549 = vxor.u32 %v1812, 2147483648
        %v2550 = vxor.u32 %v1814, 2147483648
        %v2551 = vxor.u32 %v2005, 2147483648
        %v2552 = vxor.u32 %v2007, 2147483648
        %v2553 = vxor.u32 %v1816, 2147483648
        %v2554 = vxor.u32 %v1818, 2147483648
        %v2555 = vxor.u32 %v2009, 2147483648
        %v2556 = vxor.u32 %v2011, 2147483648
        %v2557 = vxor.u32 %v1822, 2147483648
        %v2558 = vxor.u32 %v1824, 2147483648
        %v2559 = vxor.u32 %v2015, 2147483648
        %v2560 = vxor.u32 %v2017, 2147483648
        %v2561 = vxor.u32 %v1826, 2147483648
        %v2562 = vxor.u32 %v1828, 2147483648
        %v2563 = vxor.u32 %v2019, 2147483648
        %v2564 = vxor.u32 %v2021, 2147483648
        %v2565 = vxor.u32 %v1832, 2147483648
        %v2566 = vxor.u32 %v1834, 2147483648
        %v2567 = vxor.u32 %v2025, 2147483648
        %v2568 = vxor.u32 %v2027, 2147483648
        %v2569 = vxor.u32 %v1836, 2147483648
        %v2570 = vxor.u32 %v1838, 2147483648
        %v2571 = vxor.u32 %v2029, 2147483648
        %v2572 = vxor.u32 %v2031, 2147483648
        %v2573 = vxor.u32 %v1842, 2147483648
        %v2574 = vxor.u32 %v1844, 2147483648
        %v2575 = vxor.u32 %v2035, 2147483648
        %v2576 = vxor.u32 %v2037, 2147483648
        %v2577 = vxor.u32 %v1846, 2147483648
        %v2578 = vxor.u32 %v1848, 2147483648
        %v2579 = vxor.u32 %v2039, 2147483648
        %v2580 = vxor.u32 %v2041, 2147483648
        %v2581 = vxor.u32 %v1852, 2147483648
        %v2582 = vxor.u32 %v1854, 2147483648
        %v2583 = vxor.u32 %v2045, 2147483648
        %v2584 = vxor.u32 %v2047, 2147483648
        %v2585 = vxor.u32 %v1856, 2147483648
        %v2586 = vxor.u32 %v1858, 2147483648
        %v2587 = vxor.u32 %v2049, 2147483648
        %v2588 = vxor.u32 %v2051, 2147483648
        %v2589 = vxor.u32 %v1862, 2147483648
        %v2590 = vxor.u32 %v1864, 2147483648
        %v2591 = vxor.u32 %v2055, 2147483648
        %v2592 = vxor.u32 %v2057, 2147483648
        %v2593 = vxor.u32 %v1866, 2147483648
        %v2594 = vxor.u32 %v1868, 2147483648
        %v2595 = vxor.u32 %v2059, 2147483648
        %v2596 = vxor.u32 %v2061, 2147483648
        %v2597 = vxor.u32 %v1872, 2147483648
        %v2598 = vxor.u32 %v1874, 2147483648
        %v2599 = vxor.u32 %v2065, 2147483648
        %v2600 = vxor.u32 %v2067, 2147483648
        %v2601 = vxor.u32 %v1876, 2147483648
        %v2602 = vxor.u32 %v1878, 2147483648
        %v2603 = vxor.u32 %v2069, 2147483648
        %v2604 = vxor.u32 %v2071, 2147483648
        %v2605 = vxor.u32 %v1882, 2147483648
        %v2606 = vxor.u32 %v1884, 2147483648
        %v2607 = vxor.u32 %v2075, 2147483648
        %v2608 = vxor.u32 %v2077, 2147483648
        %v2609 = vxor.u32 %v1886, 2147483648
        %v2610 = vxor.u32 %v1888, 2147483648
        %v2611 = vxor.u32 %v2079, 2147483648
        %v2612 = vxor.u32 %v2081, 2147483648
        %v2613 = vxor.u32 %v1892, 2147483648
        %v2614 = vxor.u32 %v1894, 2147483648
        %v2615 = vxor.u32 %v2085, 2147483648
        %v2616 = vxor.u32 %v2087, 2147483648
        %v2617 = vxor.u32 %v1896, 2147483648
        %v2618 = vxor.u32 %v1898, 2147483648
        %v2619 = vxor.u32 %v2089, 2147483648
        %v2620 = vxor.u32 %v2091, 2147483648
        %v2621 = vxor.u32 %v1902, 2147483648
        %v2622 = vxor.u32 %v1904, 2147483648
        %v2623 = vxor.u32 %v2095, 2147483648
        %v2624 = vxor.u32 %v2097, 2147483648
        %v2625 = vxor.u32 %v1906, 2147483648
        %v2626 = vxor.u32 %v1908, 2147483648
        %v2627 = vxor.u32 %v2099, 2147483648
        %v2628 = vxor.u32 %v2101, 2147483648
        %v2629 = vxor.u32 %v1912, 2147483648
        %v2630 = vxor.u32 %v1914, 2147483648
        %v2631 = vxor.u32 %v2105, 2147483648
        %v2632 = vxor.u32 %v2107, 2147483648
        %v2633 = vxor.u32 %v1916, 2147483648
        %v2634 = vxor.u32 %v1918, 2147483648
        %v2635 = vxor.u32 %v2109, 2147483648
        %v2636 = vxor.u32 %v2111, 2147483648
        %v2637 = vxor.u32 %v1922, 2147483648
        %v2638 = vxor.u32 %v1924, 2147483648
        %v2639 = vxor.u32 %v2115, 2147483648
        %v2640 = vxor.u32 %v2117, 2147483648
        %v2641 = vxor.u32 %v1926, 2147483648
        %v2642 = vxor.u32 %v1928, 2147483648
        %v2643 = vxor.u32 %v2119, 2147483648
        %v2644 = vxor.u32 %v2121, 2147483648
        %v2645 = vxor.u32 %v1932, 2147483648
        %v2646 = vxor.u32 %v1934, 2147483648
        %v2647 = vxor.u32 %v2125, 2147483648
        %v2648 = vxor.u32 %v2127, 2147483648
        %v2649 = vxor.u32 %v1936, 2147483648
        %v2650 = vxor.u32 %v1938, 2147483648
        %v2651 = vxor.u32 %v2129, 2147483648
        %v2652 = vxor.u32 %v2131, 2147483648
        %v2653 = vxor.u32 %v1942, 2147483648
        %v2654 = vxor.u32 %v1944, 2147483648
        %v2655 = vxor.u32 %v2135, 2147483648
        %v2656 = vxor.u32 %v2137, 2147483648
        %v2657 = vxor.u32 %v1946, 2147483648
        %v2658 = vxor.u32 %v1948, 2147483648
        %v2659 = vxor.u32 %v2139, 2147483648
        %v2660 = vxor.u32 %v2141, 2147483648
        %v2661 = vxor.u32 %v1952, 2147483648
        %v2662 = vxor.u32 %v1954, 2147483648
        %v2663 = vxor.u32 %v2145, 2147483648
        %v2664 = vxor.u32 %v2147, 2147483648
        %v2665 = vxor.u32 %v1956, 2147483648
        %v2666 = vxor.u32 %v1958, 2147483648
        %v2667 = vxor.u32 %v2149, 2147483648
        %v2668 = vxor.u32 %v2151, 2147483648
        %v2669 = vxor.u32 %v1962, 2147483648
        %v2670 = vxor.u32 %v1964, 2147483648
        %v2671 = vxor.u32 %v2155, 2147483648
        %v2672 = vxor.u32 %v2157, 2147483648
        %v2673 = vxor.u32 %v1966, 2147483648
        %v2674 = vxor.u32 %v1968, 2147483648
        %v2675 = vxor.u32 %v2159, 2147483648
        %v2676 = vxor.u32 %v2161, 2147483648
        %v2677 = vmul.f32 %v2549, 1.442695
        %v2678 = vpow.pop %v2677
        %v2679 = vmul.f32 %v2550, 1.442695
        %v2680 = vpow.pop %v2679
        %v2681 = vmul.f32 %v2551, 1.442695
        %v2682 = vpow.pop %v2681
        %v2683 = vmul.f32 %v2552, 1.442695
        %v2684 = vpow.pop %v2683
        %v2685 = vmul.f32 %v2553, 1.442695
        %v2686 = vpow.pop %v2685
        %v2687 = vmul.f32 %v2554, 1.442695
        %v2688 = vpow.pop %v2687
        %v2689 = vmul.f32 %v2555, 1.442695
        %v2690 = vpow.pop %v2689
        %v2691 = vmul.f32 %v2556, 1.442695
        %v2692 = vpow.pop %v2691
        %v2693 = vmul.f32 %v2557, 1.442695
        %v2694 = vpow.pop %v2693
        %v2695 = vmul.f32 %v2558, 1.442695
        %v2696 = vpow.pop %v2695
        %v2697 = vmul.f32 %v2559, 1.442695
        %v2698 = vpow.pop %v2697
        %v2699 = vmul.f32 %v2560, 1.442695
        %v2700 = vpow.pop %v2699
        %v2701 = vmul.f32 %v2561, 1.442695
        %v2702 = vpow.pop %v2701
        %v2703 = vmul.f32 %v2562, 1.442695
        %v2704 = vpow.pop %v2703
        %v2705 = vmul.f32 %v2563, 1.442695
        %v2706 = vpow.pop %v2705
        %v2707 = vmul.f32 %v2564, 1.442695
        %v2708 = vpow.pop %v2707
        %v2709 = vmul.f32 %v2565, 1.442695
        %v2710 = vpow.pop %v2709
        %v2711 = vmul.f32 %v2566, 1.442695
        %v2712 = vpow.pop %v2711
        %v2713 = vmul.f32 %v2567, 1.442695
        %v2714 = vpow.pop %v2713
        %v2715 = vmul.f32 %v2568, 1.442695
        %v2716 = vpow.pop %v2715
        %v2717 = vmul.f32 %v2569, 1.442695
        %v2718 = vpow.pop %v2717
        %v2719 = vmul.f32 %v2570, 1.442695
        %v2720 = vpow.pop %v2719
        %v2721 = vmul.f32 %v2571, 1.442695
        %v2722 = vpow.pop %v2721
        %v2723 = vmul.f32 %v2572, 1.442695
        %v2724 = vpow.pop %v2723
        %v2725 = vmul.f32 %v2573, 1.442695
        %v2726 = vpow.pop %v2725
        %v2727 = vmul.f32 %v2574, 1.442695
        %v2728 = vpow.pop %v2727
        %v2729 = vmul.f32 %v2575, 1.442695
        %v2730 = vpow.pop %v2729
        %v2731 = vmul.f32 %v2576, 1.442695
        %v2732 = vpow.pop %v2731
        %v2733 = vmul.f32 %v2577, 1.442695
        %v2734 = vpow.pop %v2733
        %v2735 = vmul.f32 %v2578, 1.442695
        %v2736 = vpow.pop %v2735
        %v2737 = vmul.f32 %v2579, 1.442695
        %v2738 = vpow.pop %v2737
        %v2739 = vmul.f32 %v2580, 1.442695
        %v2740 = vpow.pop %v2739
        %v2741 = vmul.f32 %v2581, 1.442695
        %v2742 = vpow.pop %v2741
        %v2743 = vmul.f32 %v2582, 1.442695
        %v2744 = vpow.pop %v2743
        %v2745 = vmul.f32 %v2583, 1.442695
        %v2746 = vpow.pop %v2745
        %v2747 = vmul.f32 %v2584, 1.442695
        %v2748 = vpow.pop %v2747
        %v2749 = vmul.f32 %v2585, 1.442695
        %v2750 = vpow.pop %v2749
        %v2751 = vmul.f32 %v2586, 1.442695
        %v2752 = vpow.pop %v2751
        %v2753 = vmul.f32 %v2587, 1.442695
        %v2754 = vpow.pop %v2753
        %v2755 = vmul.f32 %v2588, 1.442695
        %v2756 = vpow.pop %v2755
        %v2757 = vmul.f32 %v2589, 1.442695
        %v2758 = vpow.pop %v2757
        %v2759 = vmul.f32 %v2590, 1.442695
        %v2760 = vpow.pop %v2759
        %v2761 = vmul.f32 %v2591, 1.442695
        %v2762 = vpow.pop %v2761
        %v2763 = vmul.f32 %v2592, 1.442695
        %v2764 = vpow.pop %v2763
        %v2765 = vmul.f32 %v2593, 1.442695
        %v2766 = vpow.pop %v2765
        %v2767 = vmul.f32 %v2594, 1.442695
        %v2768 = vpow.pop %v2767
        %v2769 = vmul.f32 %v2595, 1.442695
        %v2770 = vpow.pop %v2769
        %v2771 = vmul.f32 %v2596, 1.442695
        %v2772 = vpow.pop %v2771
        %v2773 = vmul.f32 %v2597, 1.442695
        %v2774 = vpow.pop %v2773
        %v2775 = vmul.f32 %v2598, 1.442695
        %v2776 = vpow.pop %v2775
        %v2777 = vmul.f32 %v2599, 1.442695
        %v2778 = vpow.pop %v2777
        %v2779 = vmul.f32 %v2600, 1.442695
        %v2780 = vpow.pop %v2779
        %v2781 = vmul.f32 %v2601, 1.442695
        %v2782 = vpow.pop %v2781
        %v2783 = vmul.f32 %v2602, 1.442695
        %v2784 = vpow.pop %v2783
        %v2785 = vmul.f32 %v2603, 1.442695
        %v2786 = vpow.pop %v2785
        %v2787 = vmul.f32 %v2604, 1.442695
        %v2788 = vpow.pop %v2787
        %v2789 = vmul.f32 %v2605, 1.442695
        %v2790 = vpow.pop %v2789
        %v2791 = vmul.f32 %v2606, 1.442695
        %v2792 = vpow.pop %v2791
        %v2793 = vmul.f32 %v2607, 1.442695
        %v2794 = vpow.pop %v2793
        %v2795 = vmul.f32 %v2608, 1.442695
        %v2796 = vpow.pop %v2795
        %v2797 = vmul.f32 %v2609, 1.442695
        %v2798 = vpow.pop %v2797
        %v2799 = vmul.f32 %v2610, 1.442695
        %v2800 = vpow.pop %v2799
        %v2801 = vmul.f32 %v2611, 1.442695
        %v2802 = vpow.pop %v2801
        %v2803 = vmul.f32 %v2612, 1.442695
        %v2804 = vpow.pop %v2803
        %v2805 = vmul.f32 %v2613, 1.442695
        %v2806 = vpow.pop %v2805
        %v2807 = vmul.f32 %v2614, 1.442695
        %v2808 = vpow.pop %v2807
        %v2809 = vmul.f32 %v2615, 1.442695
        %v2810 = vpow.pop %v2809
        %v2811 = vmul.f32 %v2616, 1.442695
        %v2812 = vpow.pop %v2811
        %v2813 = vmul.f32 %v2617, 1.442695
        %v2814 = vpow.pop %v2813
        %v2815 = vmul.f32 %v2618, 1.442695
        %v2816 = vpow.pop %v2815
        %v2817 = vmul.f32 %v2619, 1.442695
        %v2818 = vpow.pop %v2817
        %v2819 = vmul.f32 %v2620, 1.442695
        %v2820 = vpow.pop %v2819
        %v2821 = vmul.f32 %v2621, 1.442695
        %v2822 = vpow.pop %v2821
        %v2823 = vmul.f32 %v2622, 1.442695
        %v2824 = vpow.pop %v2823
        %v2825 = vmul.f32 %v2623, 1.442695
        %v2826 = vpow.pop %v2825
        %v2827 = vmul.f32 %v2624, 1.442695
        %v2828 = vpow.pop %v2827
        %v2829 = vmul.f32 %v2625, 1.442695
        %v2830 = vpow.pop %v2829
        %v2831 = vmul.f32 %v2626, 1.442695
        %v2832 = vpow.pop %v2831
        %v2833 = vmul.f32 %v2627, 1.442695
        %v2834 = vpow.pop %v2833
        %v2835 = vmul.f32 %v2628, 1.442695
        %v2836 = vpow.pop %v2835
        %v2837 = vmul.f32 %v2629, 1.442695
        %v2838 = vpow.pop %v2837
        %v2839 = vmul.f32 %v2630, 1.442695
        %v2840 = vpow.pop %v2839
        %v2841 = vmul.f32 %v2631, 1.442695
        %v2842 = vpow.pop %v2841
        %v2843 = vmul.f32 %v2632, 1.442695
        %v2844 = vpow.pop %v2843
        %v2845 = vmul.f32 %v2633, 1.442695
        %v2846 = vpow.pop %v2845
        %v2847 = vmul.f32 %v2634, 1.442695
        %v2848 = vpow.pop %v2847
        %v2849 = vmul.f32 %v2635, 1.442695
        %v2850 = vpow.pop %v2849
        %v2851 = vmul.f32 %v2636, 1.442695
        %v2852 = vpow.pop %v2851
        %v2853 = vmul.f32 %v2637, 1.442695
        %v2854 = vpow.pop %v2853
        %v2855 = vmul.f32 %v2638, 1.442695
        %v2856 = vpow.pop %v2855
        %v2857 = vmul.f32 %v2639, 1.442695
        %v2858 = vpow.pop %v2857
        %v2859 = vmul.f32 %v2640, 1.442695
        %v2860 = vpow.pop %v2859
        %v2861 = vmul.f32 %v2641, 1.442695
        %v2862 = vpow.pop %v2861
        %v2863 = vmul.f32 %v2642, 1.442695
        %v2864 = vpow.pop %v2863
        %v2865 = vmul.f32 %v2643, 1.442695
        %v2866 = vpow.pop %v2865
        %v2867 = vmul.f32 %v2644, 1.442695
        %v2868 = vpow.pop %v2867
        %v2869 = vmul.f32 %v2645, 1.442695
        %v2870 = vpow.pop %v2869
        %v2871 = vmul.f32 %v2646, 1.442695
        %v2872 = vpow.pop %v2871
        %v2873 = vmul.f32 %v2647, 1.442695
        %v2874 = vpow.pop %v2873
        %v2875 = vmul.f32 %v2648, 1.442695
        %v2876 = vpow.pop %v2875
        %v2877 = vmul.f32 %v2649, 1.442695
        %v2878 = vpow.pop %v2877
        %v2879 = vmul.f32 %v2650, 1.442695
        %v2880 = vpow.pop %v2879
        %v2881 = vmul.f32 %v2651, 1.442695
        %v2882 = vpow.pop %v2881
        %v2883 = vmul.f32 %v2652, 1.442695
        %v2884 = vpow.pop %v2883
        %v2885 = vmul.f32 %v2653, 1.442695
        %v2886 = vpow.pop %v2885
        %v2887 = vmul.f32 %v2654, 1.442695
        %v2888 = vpow.pop %v2887
        %v2889 = vmul.f32 %v2655, 1.442695
        %v2890 = vpow.pop %v2889
        %v2891 = vmul.f32 %v2656, 1.442695
        %v2892 = vpow.pop %v2891
        %v2893 = vmul.f32 %v2657, 1.442695
        %v2894 = vpow.pop %v2893
        %v2895 = vmul.f32 %v2658, 1.442695
        %v2896 = vpow.pop %v2895
        %v2897 = vmul.f32 %v2659, 1.442695
        %v2898 = vpow.pop %v2897
        %v2899 = vmul.f32 %v2660, 1.442695
        %v2900 = vpow.pop %v2899
        %v2901 = vmul.f32 %v2661, 1.442695
        %v2902 = vpow.pop %v2901
        %v2903 = vmul.f32 %v2662, 1.442695
        %v2904 = vpow.pop %v2903
        %v2905 = vmul.f32 %v2663, 1.442695
        %v2906 = vpow.pop %v2905
        %v2907 = vmul.f32 %v2664, 1.442695
        %v2908 = vpow.pop %v2907
        %v2909 = vmul.f32 %v2665, 1.442695
        %v2910 = vpow.pop %v2909
        %v2911 = vmul.f32 %v2666, 1.442695
        %v2912 = vpow.pop %v2911
        %v2913 = vmul.f32 %v2667, 1.442695
        %v2914 = vpow.pop %v2913
        %v2915 = vmul.f32 %v2668, 1.442695
        %v2916 = vpow.pop %v2915
        %v2917 = vmul.f32 %v2669, 1.442695
        %v2918 = vpow.pop %v2917
        %v2919 = vmul.f32 %v2670, 1.442695
        %v2920 = vpow.pop %v2919
        %v2921 = vmul.f32 %v2671, 1.442695
        %v2922 = vpow.pop %v2921
        %v2923 = vmul.f32 %v2672, 1.442695
        %v2924 = vpow.pop %v2923
        %v2925 = vmul.f32 %v2673, 1.442695
        %v2926 = vpow.pop %v2925
        %v2927 = vmul.f32 %v2674, 1.442695
        %v2928 = vpow.pop %v2927
        %v2929 = vmul.f32 %v2675, 1.442695
        %v2930 = vpow.pop %v2929
        %v2931 = vmul.f32 %v2676, 1.442695
        %v2932 = vpow.pop %v2931
        %v2933 = vadd.f32 %v2678, 1.0
        %v2934 = vadd.f32 %v2680, 1.0
        %v2935 = vadd.f32 %v2682, 1.0
        %v2936 = vadd.f32 %v2684, 1.0
        %v2937 = vadd.f32 %v2686, 1.0
        %v2938 = vadd.f32 %v2688, 1.0
        %v2939 = vadd.f32 %v2690, 1.0
        %v2940 = vadd.f32 %v2692, 1.0
        %v2941 = vadd.f32 %v2694, 1.0
        %v2942 = vadd.f32 %v2696, 1.0
        %v2943 = vadd.f32 %v2698, 1.0
        %v2944 = vadd.f32 %v2700, 1.0
        %v2945 = vadd.f32 %v2702, 1.0
        %v2946 = vadd.f32 %v2704, 1.0
        %v2947 = vadd.f32 %v2706, 1.0
        %v2948 = vadd.f32 %v2708, 1.0
        %v2949 = vadd.f32 %v2710, 1.0
        %v2950 = vadd.f32 %v2712, 1.0
        %v2951 = vadd.f32 %v2714, 1.0
        %v2952 = vadd.f32 %v2716, 1.0
        %v2953 = vadd.f32 %v2718, 1.0
        %v2954 = vadd.f32 %v2720, 1.0
        %v2955 = vadd.f32 %v2722, 1.0
        %v2956 = vadd.f32 %v2724, 1.0
        %v2957 = vadd.f32 %v2726, 1.0
        %v2958 = vadd.f32 %v2728, 1.0
        %v2959 = vadd.f32 %v2730, 1.0
        %v2960 = vadd.f32 %v2732, 1.0
        %v2961 = vadd.f32 %v2734, 1.0
        %v2962 = vadd.f32 %v2736, 1.0
        %v2963 = vadd.f32 %v2738, 1.0
        %v2964 = vadd.f32 %v2740, 1.0
        %v2965 = vadd.f32 %v2742, 1.0
        %v2966 = vadd.f32 %v2744, 1.0
        %v2967 = vadd.f32 %v2746, 1.0
        %v2968 = vadd.f32 %v2748, 1.0
        %v2969 = vadd.f32 %v2750, 1.0
        %v2970 = vadd.f32 %v2752, 1.0
        %v2971 = vadd.f32 %v2754, 1.0
        %v2972 = vadd.f32 %v2756, 1.0
        %v2973 = vadd.f32 %v2758, 1.0
        %v2974 = vadd.f32 %v2760, 1.0
        %v2975 = vadd.f32 %v2762, 1.0
        %v2976 = vadd.f32 %v2764, 1.0
        %v2977 = vadd.f32 %v2766, 1.0
        %v2978 = vadd.f32 %v2768, 1.0
        %v2979 = vadd.f32 %v2770, 1.0
        %v2980 = vadd.f32 %v2772, 1.0
        %v2981 = vadd.f32 %v2774, 1.0
        %v2982 = vadd.f32 %v2776, 1.0
        %v2983 = vadd.f32 %v2778, 1.0
        %v2984 = vadd.f32 %v2780, 1.0
        %v2985 = vadd.f32 %v2782, 1.0
        %v2986 = vadd.f32 %v2784, 1.0
        %v2987 = vadd.f32 %v2786, 1.0
        %v2988 = vadd.f32 %v2788, 1.0
        %v2989 = vadd.f32 %v2790, 1.0
        %v2990 = vadd.f32 %v2792, 1.0
        %v2991 = vadd.f32 %v2794, 1.0
        %v2992 = vadd.f32 %v2796, 1.0
        %v2993 = vadd.f32 %v2798, 1.0
        %v2994 = vadd.f32 %v2800, 1.0
        %v2995 = vadd.f32 %v2802, 1.0
        %v2996 = vadd.f32 %v2804, 1.0
        %v2997 = vadd.f32 %v2806, 1.0
        %v2998 = vadd.f32 %v2808, 1.0
        %v2999 = vadd.f32 %v2810, 1.0
        %v3000 = vadd.f32 %v2812, 1.0
        %v3001 = vadd.f32 %v2814, 1.0
        %v3002 = vadd.f32 %v2816, 1.0
        %v3003 = vadd.f32 %v2818, 1.0
        %v3004 = vadd.f32 %v2820, 1.0
        %v3005 = vadd.f32 %v2822, 1.0
        %v3006 = vadd.f32 %v2824, 1.0
        %v3007 = vadd.f32 %v2826, 1.0
        %v3008 = vadd.f32 %v2828, 1.0
        %v3009 = vadd.f32 %v2830, 1.0
        %v3010 = vadd.f32 %v2832, 1.0
        %v3011 = vadd.f32 %v2834, 1.0
        %v3012 = vadd.f32 %v2836, 1.0
        %v3013 = vadd.f32 %v2838, 1.0
        %v3014 = vadd.f32 %v2840, 1.0
        %v3015 = vadd.f32 %v2842, 1.0
        %v3016 = vadd.f32 %v2844, 1.0
        %v3017 = vadd.f32 %v2846, 1.0
        %v3018 = vadd.f32 %v2848, 1.0
        %v3019 = vadd.f32 %v2850, 1.0
        %v3020 = vadd.f32 %v2852, 1.0
        %v3021 = vadd.f32 %v2854, 1.0
        %v3022 = vadd.f32 %v2856, 1.0
        %v3023 = vadd.f32 %v2858, 1.0
        %v3024 = vadd.f32 %v2860, 1.0
        %v3025 = vadd.f32 %v2862, 1.0
        %v3026 = vadd.f32 %v2864, 1.0
        %v3027 = vadd.f32 %v2866, 1.0
        %v3028 = vadd.f32 %v2868, 1.0
        %v3029 = vadd.f32 %v2870, 1.0
        %v3030 = vadd.f32 %v2872, 1.0
        %v3031 = vadd.f32 %v2874, 1.0
        %v3032 = vadd.f32 %v2876, 1.0
        %v3033 = vadd.f32 %v2878, 1.0
        %v3034 = vadd.f32 %v2880, 1.0
        %v3035 = vadd.f32 %v2882, 1.0
        %v3036 = vadd.f32 %v2884, 1.0
        %v3037 = vadd.f32 %v2886, 1.0
        %v3038 = vadd.f32 %v2888, 1.0
        %v3039 = vadd.f32 %v2890, 1.0
        %v3040 = vadd.f32 %v2892, 1.0
        %v3041 = vadd.f32 %v2894, 1.0
        %v3042 = vadd.f32 %v2896, 1.0
        %v3043 = vadd.f32 %v2898, 1.0
        %v3044 = vadd.f32 %v2900, 1.0
        %v3045 = vadd.f32 %v2902, 1.0
        %v3046 = vadd.f32 %v2904, 1.0
        %v3047 = vadd.f32 %v2906, 1.0
        %v3048 = vadd.f32 %v2908, 1.0
        %v3049 = vadd.f32 %v2910, 1.0
        %v3050 = vadd.f32 %v2912, 1.0
        %v3051 = vadd.f32 %v2914, 1.0
        %v3052 = vadd.f32 %v2916, 1.0
        %v3053 = vadd.f32 %v2918, 1.0
        %v3054 = vadd.f32 %v2920, 1.0
        %v3055 = vadd.f32 %v2922, 1.0
        %v3056 = vadd.f32 %v2924, 1.0
        %v3057 = vadd.f32 %v2926, 1.0
        %v3058 = vadd.f32 %v2928, 1.0
        %v3059 = vadd.f32 %v2930, 1.0
        %v3060 = vadd.f32 %v2932, 1.0
        %v3061 = vrcp.pop %v2933
        %v3062 = vmul.f32 1.0, %v3061
        %v3063 = vrcp.pop %v2934
        %v3064 = vmul.f32 1.0, %v3063
        %v3065 = vrcp.pop %v2935
        %v3066 = vmul.f32 1.0, %v3065
        %v3067 = vrcp.pop %v2936
        %v3068 = vmul.f32 1.0, %v3067
        %v3069 = vrcp.pop %v2937
        %v3070 = vmul.f32 1.0, %v3069
        %v3071 = vrcp.pop %v2938
        %v3072 = vmul.f32 1.0, %v3071
        %v3073 = vrcp.pop %v2939
        %v3074 = vmul.f32 1.0, %v3073
        %v3075 = vrcp.pop %v2940
        %v3076 = vmul.f32 1.0, %v3075
        %v3077 = vrcp.pop %v2941
        %v3078 = vmul.f32 1.0, %v3077
        %v3079 = vrcp.pop %v2942
        %v3080 = vmul.f32 1.0, %v3079
        %v3081 = vrcp.pop %v2943
        %v3082 = vmul.f32 1.0, %v3081
        %v3083 = vrcp.pop %v2944
        %v3084 = vmul.f32 1.0, %v3083
        %v3085 = vrcp.pop %v2945
        %v3086 = vmul.f32 1.0, %v3085
        %v3087 = vrcp.pop %v2946
        %v3088 = vmul.f32 1.0, %v3087
        %v3089 = vrcp.pop %v2947
        %v3090 = vmul.f32 1.0, %v3089
        %v3091 = vrcp.pop %v2948
        %v3092 = vmul.f32 1.0, %v3091
        %v3093 = vrcp.pop %v2949
        %v3094 = vmul.f32 1.0, %v3093
        %v3095 = vrcp.pop %v2950
        %v3096 = vmul.f32 1.0, %v3095
        %v3097 = vrcp.pop %v2951
        %v3098 = vmul.f32 1.0, %v3097
        %v3099 = vrcp.pop %v2952
        %v3100 = vmul.f32 1.0, %v3099
        %v3101 = vrcp.pop %v2953
        %v3102 = vmul.f32 1.0, %v3101
        %v3103 = vrcp.pop %v2954
        %v3104 = vmul.f32 1.0, %v3103
        %v3105 = vrcp.pop %v2955
        %v3106 = vmul.f32 1.0, %v3105
        %v3107 = vrcp.pop %v2956
        %v3108 = vmul.f32 1.0, %v3107
        %v3109 = vrcp.pop %v2957
        %v3110 = vmul.f32 1.0, %v3109
        %v3111 = vrcp.pop %v2958
        %v3112 = vmul.f32 1.0, %v3111
        %v3113 = vrcp.pop %v2959
        %v3114 = vmul.f32 1.0, %v3113
        %v3115 = vrcp.pop %v2960
        %v3116 = vmul.f32 1.0, %v3115
        %v3117 = vrcp.pop %v2961
        %v3118 = vmul.f32 1.0, %v3117
        %v3119 = vrcp.pop %v2962
        %v3120 = vmul.f32 1.0, %v3119
        %v3121 = vrcp.pop %v2963
        %v3122 = vmul.f32 1.0, %v3121
        %v3123 = vrcp.pop %v2964
        %v3124 = vmul.f32 1.0, %v3123
        %v3125 = vrcp.pop %v2965
        %v3126 = vmul.f32 1.0, %v3125
        %v3127 = vrcp.pop %v2966
        %v3128 = vmul.f32 1.0, %v3127
        %v3129 = vrcp.pop %v2967
        %v3130 = vmul.f32 1.0, %v3129
        %v3131 = vrcp.pop %v2968
        %v3132 = vmul.f32 1.0, %v3131
        %v3133 = vrcp.pop %v2969
        %v3134 = vmul.f32 1.0, %v3133
        %v3135 = vrcp.pop %v2970
        %v3136 = vmul.f32 1.0, %v3135
        %v3137 = vrcp.pop %v2971
        %v3138 = vmul.f32 1.0, %v3137
        %v3139 = vrcp.pop %v2972
        %v3140 = vmul.f32 1.0, %v3139
        %v3141 = vrcp.pop %v2973
        %v3142 = vmul.f32 1.0, %v3141
        %v3143 = vrcp.pop %v2974
        %v3144 = vmul.f32 1.0, %v3143
        %v3145 = vrcp.pop %v2975
        %v3146 = vmul.f32 1.0, %v3145
        %v3147 = vrcp.pop %v2976
        %v3148 = vmul.f32 1.0, %v3147
        %v3149 = vrcp.pop %v2977
        %v3150 = vmul.f32 1.0, %v3149
        %v3151 = vrcp.pop %v2978
        %v3152 = vmul.f32 1.0, %v3151
        %v3153 = vrcp.pop %v2979
        %v3154 = vmul.f32 1.0, %v3153
        %v3155 = vrcp.pop %v2980
        %v3156 = vmul.f32 1.0, %v3155
        %v3157 = vrcp.pop %v2981
        %v3158 = vmul.f32 1.0, %v3157
        %v3159 = vrcp.pop %v2982
        %v3160 = vmul.f32 1.0, %v3159
        %v3161 = vrcp.pop %v2983
        %v3162 = vmul.f32 1.0, %v3161
        %v3163 = vrcp.pop %v2984
        %v3164 = vmul.f32 1.0, %v3163
        %v3165 = vrcp.pop %v2985
        %v3166 = vmul.f32 1.0, %v3165
        %v3167 = vrcp.pop %v2986
        %v3168 = vmul.f32 1.0, %v3167
        %v3169 = vrcp.pop %v2987
        %v3170 = vmul.f32 1.0, %v3169
        %v3171 = vrcp.pop %v2988
        %v3172 = vmul.f32 1.0, %v3171
        %v3173 = vrcp.pop %v2989
        %v3174 = vmul.f32 1.0, %v3173
        %v3175 = vrcp.pop %v2990
        %v3176 = vmul.f32 1.0, %v3175
        %v3177 = vrcp.pop %v2991
        %v3178 = vmul.f32 1.0, %v3177
        %v3179 = vrcp.pop %v2992
        %v3180 = vmul.f32 1.0, %v3179
        %v3181 = vrcp.pop %v2993
        %v3182 = vmul.f32 1.0, %v3181
        %v3183 = vrcp.pop %v2994
        %v3184 = vmul.f32 1.0, %v3183
        %v3185 = vrcp.pop %v2995
        %v3186 = vmul.f32 1.0, %v3185
        %v3187 = vrcp.pop %v2996
        %v3188 = vmul.f32 1.0, %v3187
        %v3189 = vrcp.pop %v2997
        %v3190 = vmul.f32 1.0, %v3189
        %v3191 = vrcp.pop %v2998
        %v3192 = vmul.f32 1.0, %v3191
        %v3193 = vrcp.pop %v2999
        %v3194 = vmul.f32 1.0, %v3193
        %v3195 = vrcp.pop %v3000
        %v3196 = vmul.f32 1.0, %v3195
        %v3197 = vrcp.pop %v3001
        %v3198 = vmul.f32 1.0, %v3197
        %v3199 = vrcp.pop %v3002
        %v3200 = vmul.f32 1.0, %v3199
        %v3201 = vrcp.pop %v3003
        %v3202 = vmul.f32 1.0, %v3201
        %v3203 = vrcp.pop %v3004
        %v3204 = vmul.f32 1.0, %v3203
        %v3205 = vrcp.pop %v3005
        %v3206 = vmul.f32 1.0, %v3205
        %v3207 = vrcp.pop %v3006
        %v3208 = vmul.f32 1.0, %v3207
        %v3209 = vrcp.pop %v3007
        %v3210 = vmul.f32 1.0, %v3209
        %v3211 = vrcp.pop %v3008
        %v3212 = vmul.f32 1.0, %v3211
        %v3213 = vrcp.pop %v3009
        %v3214 = vmul.f32 1.0, %v3213
        %v3215 = vrcp.pop %v3010
        %v3216 = vmul.f32 1.0, %v3215
        %v3217 = vrcp.pop %v3011
        %v3218 = vmul.f32 1.0, %v3217
        %v3219 = vrcp.pop %v3012
        %v3220 = vmul.f32 1.0, %v3219
        %v3221 = vrcp.pop %v3013
        %v3222 = vmul.f32 1.0, %v3221
        %v3223 = vrcp.pop %v3014
        %v3224 = vmul.f32 1.0, %v3223
        %v3225 = vrcp.pop %v3015
        %v3226 = vmul.f32 1.0, %v3225
        %v3227 = vrcp.pop %v3016
        %v3228 = vmul.f32 1.0, %v3227
        %v3229 = vrcp.pop %v3017
        %v3230 = vmul.f32 1.0, %v3229
        %v3231 = vrcp.pop %v3018
        %v3232 = vmul.f32 1.0, %v3231
        %v3233 = vrcp.pop %v3019
        %v3234 = vmul.f32 1.0, %v3233
        %v3235 = vrcp.pop %v3020
        %v3236 = vmul.f32 1.0, %v3235
        %v3237 = vrcp.pop %v3021
        %v3238 = vmul.f32 1.0, %v3237
        %v3239 = vrcp.pop %v3022
        %v3240 = vmul.f32 1.0, %v3239
        %v3241 = vrcp.pop %v3023
        %v3242 = vmul.f32 1.0, %v3241
        %v3243 = vrcp.pop %v3024
        %v3244 = vmul.f32 1.0, %v3243
        %v3245 = vrcp.pop %v3025
        %v3246 = vmul.f32 1.0, %v3245
        %v3247 = vrcp.pop %v3026
        %v3248 = vmul.f32 1.0, %v3247
        %v3249 = vrcp.pop %v3027
        %v3250 = vmul.f32 1.0, %v3249
        %v3251 = vrcp.pop %v3028
        %v3252 = vmul.f32 1.0, %v3251
        %v3253 = vrcp.pop %v3029
        %v3254 = vmul.f32 1.0, %v3253
        %v3255 = vrcp.pop %v3030
        %v3256 = vmul.f32 1.0, %v3255
        %v3257 = vrcp.pop %v3031
        %v3258 = vmul.f32 1.0, %v3257
        %v3259 = vrcp.pop %v3032
        %v3260 = vmul.f32 1.0, %v3259
        %v3261 = vrcp.pop %v3033
        %v3262 = vmul.f32 1.0, %v3261
        %v3263 = vrcp.pop %v3034
        %v3264 = vmul.f32 1.0, %v3263
        %v3265 = vrcp.pop %v3035
        %v3266 = vmul.f32 1.0, %v3265
        %v3267 = vrcp.pop %v3036
        %v3268 = vmul.f32 1.0, %v3267
        %v3269 = vrcp.pop %v3037
        %v3270 = vmul.f32 1.0, %v3269
        %v3271 = vrcp.pop %v3038
        %v3272 = vmul.f32 1.0, %v3271
        %v3273 = vrcp.pop %v3039
        %v3274 = vmul.f32 1.0, %v3273
        %v3275 = vrcp.pop %v3040
        %v3276 = vmul.f32 1.0, %v3275
        %v3277 = vrcp.pop %v3041
        %v3278 = vmul.f32 1.0, %v3277
        %v3279 = vrcp.pop %v3042
        %v3280 = vmul.f32 1.0, %v3279
        %v3281 = vrcp.pop %v3043
        %v3282 = vmul.f32 1.0, %v3281
        %v3283 = vrcp.pop %v3044
        %v3284 = vmul.f32 1.0, %v3283
        %v3285 = vrcp.pop %v3045
        %v3286 = vmul.f32 1.0, %v3285
        %v3287 = vrcp.pop %v3046
        %v3288 = vmul.f32 1.0, %v3287
        %v3289 = vrcp.pop %v3047
        %v3290 = vmul.f32 1.0, %v3289
        %v3291 = vrcp.pop %v3048
        %v3292 = vmul.f32 1.0, %v3291
        %v3293 = vrcp.pop %v3049
        %v3294 = vmul.f32 1.0, %v3293
        %v3295 = vrcp.pop %v3050
        %v3296 = vmul.f32 1.0, %v3295
        %v3297 = vrcp.pop %v3051
        %v3298 = vmul.f32 1.0, %v3297
        %v3299 = vrcp.pop %v3052
        %v3300 = vmul.f32 1.0, %v3299
        %v3301 = vrcp.pop %v3053
        %v3302 = vmul.f32 1.0, %v3301
        %v3303 = vrcp.pop %v3054
        %v3304 = vmul.f32 1.0, %v3303
        %v3305 = vrcp.pop %v3055
        %v3306 = vmul.f32 1.0, %v3305
        %v3307 = vrcp.pop %v3056
        %v3308 = vmul.f32 1.0, %v3307
        %v3309 = vrcp.pop %v3057
        %v3310 = vmul.f32 1.0, %v3309
        %v3311 = vrcp.pop %v3058
        %v3312 = vmul.f32 1.0, %v3311
        %v3313 = vrcp.pop %v3059
        %v3314 = vmul.f32 1.0, %v3313
        %v3315 = vrcp.pop %v3060
        %v3316 = vmul.f32 1.0, %v3315
        %v3317 = vmul.f32 %v1812, %v3062
        %v3318 = vmul.f32 %v1814, %v3064
        %v3319 = vmul.f32 %v2005, %v3066
        %v3320 = vmul.f32 %v2007, %v3068
        %v3321 = vmul.f32 %v1816, %v3070
        %v3322 = vmul.f32 %v1818, %v3072
        %v3323 = vmul.f32 %v2009, %v3074
        %v3324 = vmul.f32 %v2011, %v3076
        %v3325 = vmul.f32 %v1822, %v3078
        %v3326 = vmul.f32 %v1824, %v3080
        %v3327 = vmul.f32 %v2015, %v3082
        %v3328 = vmul.f32 %v2017, %v3084
        %v3329 = vmul.f32 %v1826, %v3086
        %v3330 = vmul.f32 %v1828, %v3088
        %v3331 = vmul.f32 %v2019, %v3090
        %v3332 = vmul.f32 %v2021, %v3092
        %v3333 = vmul.f32 %v1832, %v3094
        %v3334 = vmul.f32 %v1834, %v3096
        %v3335 = vmul.f32 %v2025, %v3098
        %v3336 = vmul.f32 %v2027, %v3100
        %v3337 = vmul.f32 %v1836, %v3102
        %v3338 = vmul.f32 %v1838, %v3104
        %v3339 = vmul.f32 %v2029, %v3106
        %v3340 = vmul.f32 %v2031, %v3108
        %v3341 = vmul.f32 %v1842, %v3110
        %v3342 = vmul.f32 %v1844, %v3112
        %v3343 = vmul.f32 %v2035, %v3114
        %v3344 = vmul.f32 %v2037, %v3116
        %v3345 = vmul.f32 %v1846, %v3118
        %v3346 = vmul.f32 %v1848, %v3120
        %v3347 = vmul.f32 %v2039, %v3122
        %v3348 = vmul.f32 %v2041, %v3124
        %v3349 = vmul.f32 %v1852, %v3126
        %v3350 = vmul.f32 %v1854, %v3128
        %v3351 = vmul.f32 %v2045, %v3130
        %v3352 = vmul.f32 %v2047, %v3132
        %v3353 = vmul.f32 %v1856, %v3134
        %v3354 = vmul.f32 %v1858, %v3136
        %v3355 = vmul.f32 %v2049, %v3138
        %v3356 = vmul.f32 %v2051, %v3140
        %v3357 = vmul.f32 %v1862, %v3142
        %v3358 = vmul.f32 %v1864, %v3144
        %v3359 = vmul.f32 %v2055, %v3146
        %v3360 = vmul.f32 %v2057, %v3148
        %v3361 = vmul.f32 %v1866, %v3150
        %v3362 = vmul.f32 %v1868, %v3152
        %v3363 = vmul.f32 %v2059, %v3154
        %v3364 = vmul.f32 %v2061, %v3156
        %v3365 = vmul.f32 %v1872, %v3158
        %v3366 = vmul.f32 %v1874, %v3160
        %v3367 = vmul.f32 %v2065, %v3162
        %v3368 = vmul.f32 %v2067, %v3164
        %v3369 = vmul.f32 %v1876, %v3166
        %v3370 = vmul.f32 %v1878, %v3168
        %v3371 = vmul.f32 %v2069, %v3170
        %v3372 = vmul.f32 %v2071, %v3172
        %v3373 = vmul.f32 %v1882, %v3174
        %v3374 = vmul.f32 %v1884, %v3176
        %v3375 = vmul.f32 %v2075, %v3178
        %v3376 = vmul.f32 %v2077, %v3180
        %v3377 = vmul.f32 %v1886, %v3182
        %v3378 = vmul.f32 %v1888, %v3184
        %v3379 = vmul.f32 %v2079, %v3186
        %v3380 = vmul.f32 %v2081, %v3188
        %v3381 = vmul.f32 %v1892, %v3190
        %v3382 = vmul.f32 %v1894, %v3192
        %v3383 = vmul.f32 %v2085, %v3194
        %v3384 = vmul.f32 %v2087, %v3196
        %v3385 = vmul.f32 %v1896, %v3198
        %v3386 = vmul.f32 %v1898, %v3200
        %v3387 = vmul.f32 %v2089, %v3202
        %v3388 = vmul.f32 %v2091, %v3204
        %v3389 = vmul.f32 %v1902, %v3206
        %v3390 = vmul.f32 %v1904, %v3208
        %v3391 = vmul.f32 %v2095, %v3210
        %v3392 = vmul.f32 %v2097, %v3212
        %v3393 = vmul.f32 %v1906, %v3214
        %v3394 = vmul.f32 %v1908, %v3216
        %v3395 = vmul.f32 %v2099, %v3218
        %v3396 = vmul.f32 %v2101, %v3220
        %v3397 = vmul.f32 %v1912, %v3222
        %v3398 = vmul.f32 %v1914, %v3224
        %v3399 = vmul.f32 %v2105, %v3226
        %v3400 = vmul.f32 %v2107, %v3228
        %v3401 = vmul.f32 %v1916, %v3230
        %v3402 = vmul.f32 %v1918, %v3232
        %v3403 = vmul.f32 %v2109, %v3234
        %v3404 = vmul.f32 %v2111, %v3236
        %v3405 = vmul.f32 %v1922, %v3238
        %v3406 = vmul.f32 %v1924, %v3240
        %v3407 = vmul.f32 %v2115, %v3242
        %v3408 = vmul.f32 %v2117, %v3244
        %v3409 = vmul.f32 %v1926, %v3246
        %v3410 = vmul.f32 %v1928, %v3248
        %v3411 = vmul.f32 %v2119, %v3250
        %v3412 = vmul.f32 %v2121, %v3252
        %v3413 = vmul.f32 %v1932, %v3254
        %v3414 = vmul.f32 %v1934, %v3256
        %v3415 = vmul.f32 %v2125, %v3258
        %v3416 = vmul.f32 %v2127, %v3260
        %v3417 = vmul.f32 %v1936, %v3262
        %v3418 = vmul.f32 %v1938, %v3264
        %v3419 = vmul.f32 %v2129, %v3266
        %v3420 = vmul.f32 %v2131, %v3268
        %v3421 = vmul.f32 %v1942, %v3270
        %v3422 = vmul.f32 %v1944, %v3272
        %v3423 = vmul.f32 %v2135, %v3274
        %v3424 = vmul.f32 %v2137, %v3276
        %v3425 = vmul.f32 %v1946, %v3278
        %v3426 = vmul.f32 %v1948, %v3280
        %v3427 = vmul.f32 %v2139, %v3282
        %v3428 = vmul.f32 %v2141, %v3284
        %v3429 = vmul.f32 %v1952, %v3286
        %v3430 = vmul.f32 %v1954, %v3288
        %v3431 = vmul.f32 %v2145, %v3290
        %v3432 = vmul.f32 %v2147, %v3292
        %v3433 = vmul.f32 %v1956, %v3294
        %v3434 = vmul.f32 %v1958, %v3296
        %v3435 = vmul.f32 %v2149, %v3298
        %v3436 = vmul.f32 %v2151, %v3300
        %v3437 = vmul.f32 %v1962, %v3302
        %v3438 = vmul.f32 %v1964, %v3304
        %v3439 = vmul.f32 %v2155, %v3306
        %v3440 = vmul.f32 %v2157, %v3308
        %v3441 = vmul.f32 %v1966, %v3310
        %v3442 = vmul.f32 %v1968, %v3312
        %v3443 = vmul.f32 %v2159, %v3314
        %v3444 = vmul.f32 %v2161, %v3316
        %v3445 = vmul.f32 %v3317, %v2198
        %v3446 = vmul.f32 %v3318, %v2200
        %v3447 = vmul.f32 %v3319, %v2391
        %v3448 = vmul.f32 %v3320, %v2393
        %v3449 = vmul.f32 %v3321, %v2202
        %v3450 = vmul.f32 %v3322, %v2204
        %v3451 = vmul.f32 %v3323, %v2395
        %v3452 = vmul.f32 %v3324, %v2397
        %v3453 = vmul.f32 %v3325, %v2208
        %v3454 = vmul.f32 %v3326, %v2210
        %v3455 = vmul.f32 %v3327, %v2401
        %v3456 = vmul.f32 %v3328, %v2403
        %v3457 = vmul.f32 %v3329, %v2212
        %v3458 = vmul.f32 %v3330, %v2214
        %v3459 = vmul.f32 %v3331, %v2405
        %v3460 = vmul.f32 %v3332, %v2407
        %v3461 = vmul.f32 %v3333, %v2218
        %v3462 = vmul.f32 %v3334, %v2220
        %v3463 = vmul.f32 %v3335, %v2411
        %v3464 = vmul.f32 %v3336, %v2413
        %v3465 = vmul.f32 %v3337, %v2222
        %v3466 = vmul.f32 %v3338, %v2224
        %v3467 = vmul.f32 %v3339, %v2415
        %v3468 = vmul.f32 %v3340, %v2417
        %v3469 = vmul.f32 %v3341, %v2228
        %v3470 = vmul.f32 %v3342, %v2230
        %v3471 = vmul.f32 %v3343, %v2421
        %v3472 = vmul.f32 %v3344, %v2423
        %v3473 = vmul.f32 %v3345, %v2232
        %v3474 = vmul.f32 %v3346, %v2234
        %v3475 = vmul.f32 %v3347, %v2425
        %v3476 = vmul.f32 %v3348, %v2427
        %v3477 = vmul.f32 %v3349, %v2238
        %v3478 = vmul.f32 %v3350, %v2240
        %v3479 = vmul.f32 %v3351, %v2431
        %v3480 = vmul.f32 %v3352, %v2433
        %v3481 = vmul.f32 %v3353, %v2242
        %v3482 = vmul.f32 %v3354, %v2244
        %v3483 = vmul.f32 %v3355, %v2435
        %v3484 = vmul.f32 %v3356, %v2437
        %v3485 = vmul.f32 %v3357, %v2248
        %v3486 = vmul.f32 %v3358, %v2250
        %v3487 = vmul.f32 %v3359, %v2441
        %v3488 = vmul.f32 %v3360, %v2443
        %v3489 = vmul.f32 %v3361, %v2252
        %v3490 = vmul.f32 %v3362, %v2254
        %v3491 = vmul.f32 %v3363, %v2445
        %v3492 = vmul.f32 %v3364, %v2447
        %v3493 = vmul.f32 %v3365, %v2258
        %v3494 = vmul.f32 %v3366, %v2260
        %v3495 = vmul.f32 %v3367, %v2451
        %v3496 = vmul.f32 %v3368, %v2453
        %v3497 = vmul.f32 %v3369, %v2262
        %v3498 = vmul.f32 %v3370, %v2264
        %v3499 = vmul.f32 %v3371, %v2455
        %v3500 = vmul.f32 %v3372, %v2457
        %v3501 = vmul.f32 %v3373, %v2268
        %v3502 = vmul.f32 %v3374, %v2270
        %v3503 = vmul.f32 %v3375, %v2461
        %v3504 = vmul.f32 %v3376, %v2463
        %v3505 = vmul.f32 %v3377, %v2272
        %v3506 = vmul.f32 %v3378, %v2274
        %v3507 = vmul.f32 %v3379, %v2465
        %v3508 = vmul.f32 %v3380, %v2467
        %v3509 = vmul.f32 %v3381, %v2278
        %v3510 = vmul.f32 %v3382, %v2280
        %v3511 = vmul.f32 %v3383, %v2471
        %v3512 = vmul.f32 %v3384, %v2473
        %v3513 = vmul.f32 %v3385, %v2282
        %v3514 = vmul.f32 %v3386, %v2284
        %v3515 = vmul.f32 %v3387, %v2475
        %v3516 = vmul.f32 %v3388, %v2477
        %v3517 = vmul.f32 %v3389, %v2288
        %v3518 = vmul.f32 %v3390, %v2290
        %v3519 = vmul.f32 %v3391, %v2481
        %v3520 = vmul.f32 %v3392, %v2483
        %v3521 = vmul.f32 %v3393, %v2292
        %v3522 = vmul.f32 %v3394, %v2294
        %v3523 = vmul.f32 %v3395, %v2485
        %v3524 = vmul.f32 %v3396, %v2487
        %v3525 = vmul.f32 %v3397, %v2298
        %v3526 = vmul.f32 %v3398, %v2300
        %v3527 = vmul.f32 %v3399, %v2491
        %v3528 = vmul.f32 %v3400, %v2493
        %v3529 = vmul.f32 %v3401, %v2302
        %v3530 = vmul.f32 %v3402, %v2304
        %v3531 = vmul.f32 %v3403, %v2495
        %v3532 = vmul.f32 %v3404, %v2497
        %v3533 = vmul.f32 %v3405, %v2308
        %v3534 = vmul.f32 %v3406, %v2310
        %v3535 = vmul.f32 %v3407, %v2501
        %v3536 = vmul.f32 %v3408, %v2503
        %v3537 = vmul.f32 %v3409, %v2312
        %v3538 = vmul.f32 %v3410, %v2314
        %v3539 = vmul.f32 %v3411, %v2505
        %v3540 = vmul.f32 %v3412, %v2507
        %v3541 = vmul.f32 %v3413, %v2318
        %v3542 = vmul.f32 %v3414, %v2320
        %v3543 = vmul.f32 %v3415, %v2511
        %v3544 = vmul.f32 %v3416, %v2513
        %v3545 = vmul.f32 %v3417, %v2322
        %v3546 = vmul.f32 %v3418, %v2324
        %v3547 = vmul.f32 %v3419, %v2515
        %v3548 = vmul.f32 %v3420, %v2517
        %v3549 = vmul.f32 %v3421, %v2328
        %v3550 = vmul.f32 %v3422, %v2330
        %v3551 = vmul.f32 %v3423, %v2521
        %v3552 = vmul.f32 %v3424, %v2523
        %v3553 = vmul.f32 %v3425, %v2332
        %v3554 = vmul.f32 %v3426, %v2334
        %v3555 = vmul.f32 %v3427, %v2525
        %v3556 = vmul.f32 %v3428, %v2527
        %v3557 = vmul.f32 %v3429, %v2338
        %v3558 = vmul.f32 %v3430, %v2340
        %v3559 = vmul.f32 %v3431, %v2531
        %v3560 = vmul.f32 %v3432, %v2533
        %v3561 = vmul.f32 %v3433, %v2342
        %v3562 = vmul.f32 %v3434, %v2344
        %v3563 = vmul.f32 %v3435, %v2535
        %v3564 = vmul.f32 %v3436, %v2537
        %v3565 = vmul.f32 %v3437, %v2348
        %v3566 = vmul.f32 %v3438, %v2350
        %v3567 = vmul.f32 %v3439, %v2541
        %v3568 = vmul.f32 %v3440, %v2543
        %v3569 = vmul.f32 %v3441, %v2352
        %v3570 = vmul.f32 %v3442, %v2354
        %v3571 = vmul.f32 %v3443, %v2545
        %v3572 = vmul.f32 %v3444, %v2547
        %v3573 = vpack.c.bf16 %v3449, %v3445
        %v3574 = vpack.c.bf16 %v3450, %v3446
        %v3575 = vpack.c.bf16 %v3451, %v3447
        %v3576 = vpack.c.bf16 %v3452, %v3448
        %v3577 = vpack.c.bf16 %v3457, %v3453
        %v3578 = vpack.c.bf16 %v3458, %v3454
        %v3579 = vpack.c.bf16 %v3459, %v3455
        %v3580 = vpack.c.bf16 %v3460, %v3456
        %v3581 = vpack.c.bf16 %v3465, %v3461
        %v3582 = vpack.c.bf16 %v3466, %v3462
        %v3583 = vpack.c.bf16 %v3467, %v3463
        %v3584 = vpack.c.bf16 %v3468, %v3464
        %v3585 = vpack.c.bf16 %v3473, %v3469
        %v3586 = vpack.c.bf16 %v3474, %v3470
        %v3587 = vpack.c.bf16 %v3475, %v3471
        %v3588 = vpack.c.bf16 %v3476, %v3472
        %v3589 = vpack.c.bf16 %v3481, %v3477
        %v3590 = vpack.c.bf16 %v3482, %v3478
        %v3591 = vpack.c.bf16 %v3483, %v3479
        %v3592 = vpack.c.bf16 %v3484, %v3480
        %v3593 = vpack.c.bf16 %v3489, %v3485
        %v3594 = vpack.c.bf16 %v3490, %v3486
        %v3595 = vpack.c.bf16 %v3491, %v3487
        %v3596 = vpack.c.bf16 %v3492, %v3488
        %v3597 = vpack.c.bf16 %v3497, %v3493
        %v3598 = vpack.c.bf16 %v3498, %v3494
        %v3599 = vpack.c.bf16 %v3499, %v3495
        %v3600 = vpack.c.bf16 %v3500, %v3496
        %v3601 = vpack.c.bf16 %v3505, %v3501
        %v3602 = vpack.c.bf16 %v3506, %v3502
        %v3603 = vpack.c.bf16 %v3507, %v3503
        %v3604 = vpack.c.bf16 %v3508, %v3504
        %v3605 = vpack.c.bf16 %v3513, %v3509
        %v3606 = vpack.c.bf16 %v3514, %v3510
        %v3607 = vpack.c.bf16 %v3515, %v3511
        %v3608 = vpack.c.bf16 %v3516, %v3512
        %v3609 = vpack.c.bf16 %v3521, %v3517
        %v3610 = vpack.c.bf16 %v3522, %v3518
        %v3611 = vpack.c.bf16 %v3523, %v3519
        %v3612 = vpack.c.bf16 %v3524, %v3520
        %v3613 = vpack.c.bf16 %v3529, %v3525
        %v3614 = vpack.c.bf16 %v3530, %v3526
        %v3615 = vpack.c.bf16 %v3531, %v3527
        %v3616 = vpack.c.bf16 %v3532, %v3528
        %v3617 = vpack.c.bf16 %v3537, %v3533
        %v3618 = vpack.c.bf16 %v3538, %v3534
        %v3619 = vpack.c.bf16 %v3539, %v3535
        %v3620 = vpack.c.bf16 %v3540, %v3536
        %v3621 = vpack.c.bf16 %v3545, %v3541
        %v3622 = vpack.c.bf16 %v3546, %v3542
        %v3623 = vpack.c.bf16 %v3547, %v3543
        %v3624 = vpack.c.bf16 %v3548, %v3544
        %v3625 = vpack.c.bf16 %v3553, %v3549
        %v3626 = vpack.c.bf16 %v3554, %v3550
        %v3627 = vpack.c.bf16 %v3555, %v3551
        %v3628 = vpack.c.bf16 %v3556, %v3552
        %v3629 = vpack.c.bf16 %v3561, %v3557
        %v3630 = vpack.c.bf16 %v3562, %v3558
        %v3631 = vpack.c.bf16 %v3563, %v3559
        %v3632 = vpack.c.bf16 %v3564, %v3560
        %v3633 = vpack.c.bf16 %v3569, %v3565
        %v3634 = vpack.c.bf16 %v3570, %v3566
        %v3635 = vpack.c.bf16 %v3571, %v3567
        %v3636 = vpack.c.bf16 %v3572, %v3568
        %v3637 = vld [vmem:[#allocation8] sm:$0xf]
        %v3638 = vld [vmem:[#allocation8 + $0x4] sm:$0xf]
        %v3639 = vld [vmem:[#allocation8 + $0x8] sm:$0xf]
        %v3640 = vld [vmem:[#allocation8 + $0xc] sm:$0xf]
        %v3641 = vld [vmem:[#allocation8 + $0x10] sm:$0xf]
        %v3642 = vld [vmem:[#allocation8 + $0x14] sm:$0xf]
        %v3643 = vld [vmem:[#allocation8 + $0x18] sm:$0xf]
        %v3644 = vld [vmem:[#allocation8 + $0x1c] sm:$0xf]
        %v3645 = vld [vmem:[#allocation8 + $0x20] sm:$0xf]
        %v3646 = vld [vmem:[#allocation8 + $0x24] sm:$0xf]
        %v3647 = vld [vmem:[#allocation8 + $0x28] sm:$0xf]
        %v3648 = vld [vmem:[#allocation8 + $0x2c] sm:$0xf]
        %v3649 = vld [vmem:[#allocation8 + $0x30] sm:$0xf]
        %v3650 = vld [vmem:[#allocation8 + $0x34] sm:$0xf]
        %v3651 = vld [vmem:[#allocation8 + $0x38] sm:$0xf]
        %v3652 = vld [vmem:[#allocation8 + $0x3c] sm:$0xf]
        %v3653 = vld [vmem:[#allocation8 + $0x40] sm:$0xf]
        %v3654 = vld [vmem:[#allocation8 + $0x44] sm:$0xf]
        %v3655 = vld [vmem:[#allocation8 + $0x48] sm:$0xf]
        %v3656 = vld [vmem:[#allocation8 + $0x4c] sm:$0xf]
        %v3657 = vld [vmem:[#allocation8 + $0x50] sm:$0xf]
        %v3658 = vld [vmem:[#allocation8 + $0x54] sm:$0xf]
        %v3659 = vld [vmem:[#allocation8 + $0x58] sm:$0xf]
        %v3660 = vld [vmem:[#allocation8 + $0x5c] sm:$0xf]
        %v3661 = vld [vmem:[#allocation8 + $0x60] sm:$0xf]
        %v3662 = vld [vmem:[#allocation8 + $0x64] sm:$0xf]
        %v3663 = vld [vmem:[#allocation8 + $0x68] sm:$0xf]
        %v3664 = vld [vmem:[#allocation8 + $0x6c] sm:$0xf]
        %v3665 = vld [vmem:[#allocation8 + $0x70] sm:$0xf]
        %v3666 = vld [vmem:[#allocation8 + $0x74] sm:$0xf]
        %v3667 = vld [vmem:[#allocation8 + $0x78] sm:$0xf]
        %v3668 = vld [vmem:[#allocation8 + $0x7c] sm:$0xf]
        %v3669 = vld [vmem:[#allocation8 + $0x80] sm:$0xf]
        %v3670 = vld [vmem:[#allocation8 + $0x84] sm:$0xf]
        %v3671 = vld [vmem:[#allocation8 + $0x88] sm:$0xf]
        %v3672 = vld [vmem:[#allocation8 + $0x8c] sm:$0xf]
        %v3673 = vld [vmem:[#allocation8 + $0x90] sm:$0xf]
        %v3674 = vld [vmem:[#allocation8 + $0x94] sm:$0xf]
        %v3675 = vld [vmem:[#allocation8 + $0x98] sm:$0xf]
        %v3676 = vld [vmem:[#allocation8 + $0x9c] sm:$0xf]
        %v3677 = vld [vmem:[#allocation8 + $0xa0] sm:$0xf]
        %v3678 = vld [vmem:[#allocation8 + $0xa4] sm:$0xf]
        %v3679 = vld [vmem:[#allocation8 + $0xa8] sm:$0xf]
        %v3680 = vld [vmem:[#allocation8 + $0xac] sm:$0xf]
        %v3681 = vld [vmem:[#allocation8 + $0xb0] sm:$0xf]
        %v3682 = vld [vmem:[#allocation8 + $0xb4] sm:$0xf]
        %v3683 = vld [vmem:[#allocation8 + $0xb8] sm:$0xf]
        %v3684 = vld [vmem:[#allocation8 + $0xbc] sm:$0xf]
        %v3685 = vld [vmem:[#allocation8 + $0xc0] sm:$0xf]
        %v3686 = vld [vmem:[#allocation8 + $0xc4] sm:$0xf]
        %v3687 = vld [vmem:[#allocation8 + $0xc8] sm:$0xf]
        %v3688 = vld [vmem:[#allocation8 + $0xcc] sm:$0xf]
        %v3689 = vld [vmem:[#allocation8 + $0xd0] sm:$0xf]
        %v3690 = vld [vmem:[#allocation8 + $0xd4] sm:$0xf]
        %v3691 = vld [vmem:[#allocation8 + $0xd8] sm:$0xf]
        %v3692 = vld [vmem:[#allocation8 + $0xdc] sm:$0xf]
        %v3693 = vld [vmem:[#allocation8 + $0xe0] sm:$0xf]
        %v3694 = vld [vmem:[#allocation8 + $0xe4] sm:$0xf]
        %v3695 = vld [vmem:[#allocation8 + $0xe8] sm:$0xf]
        %v3696 = vld [vmem:[#allocation8 + $0xec] sm:$0xf]
        %v3697 = vld [vmem:[#allocation8 + $0xf0] sm:$0xf]
        %v3698 = vld [vmem:[#allocation8 + $0xf4] sm:$0xf]
        %v3699 = vld [vmem:[#allocation8 + $0xf8] sm:$0xf]
        %v3700 = vld [vmem:[#allocation8 + $0xfc] sm:$0xf]
        %v3765 = vunpack.c.l.b16 %v3637
        %v3766 = vunpack.c.l.b16 %v3638
        %v3767 = vunpack.c.l.b16 %v3639
        %v3768 = vunpack.c.l.b16 %v3640
        %v3769 = vunpack.c.l.b16 %v3641
        %v3770 = vunpack.c.l.b16 %v3642
        %v3771 = vunpack.c.l.b16 %v3643
        %v3772 = vunpack.c.l.b16 %v3644
        %v3773 = vunpack.c.l.b16 %v3645
        %v3774 = vunpack.c.l.b16 %v3646
        %v3775 = vunpack.c.l.b16 %v3647
        %v3776 = vunpack.c.l.b16 %v3648
        %v3777 = vunpack.c.l.b16 %v3649
        %v3778 = vunpack.c.l.b16 %v3650
        %v3779 = vunpack.c.l.b16 %v3651
        %v3780 = vunpack.c.l.b16 %v3652
        %v3781 = vunpack.c.l.b16 %v3653
        %v3782 = vunpack.c.l.b16 %v3654
        %v3783 = vunpack.c.l.b16 %v3655
        %v3784 = vunpack.c.l.b16 %v3656
        %v3785 = vunpack.c.l.b16 %v3657
        %v3786 = vunpack.c.l.b16 %v3658
        %v3787 = vunpack.c.l.b16 %v3659
        %v3788 = vunpack.c.l.b16 %v3660
        %v3789 = vunpack.c.l.b16 %v3661
        %v3790 = vunpack.c.l.b16 %v3662
        %v3791 = vunpack.c.l.b16 %v3663
        %v3792 = vunpack.c.l.b16 %v3664
        %v3793 = vunpack.c.l.b16 %v3665
        %v3794 = vunpack.c.l.b16 %v3666
        %v3795 = vunpack.c.l.b16 %v3667
        %v3796 = vunpack.c.l.b16 %v3668
        %v3797 = vunpack.c.l.b16 %v3669
        %v3798 = vunpack.c.l.b16 %v3670
        %v3799 = vunpack.c.l.b16 %v3671
        %v3800 = vunpack.c.l.b16 %v3672
        %v3801 = vunpack.c.l.b16 %v3673
        %v3802 = vunpack.c.l.b16 %v3674
        %v3803 = vunpack.c.l.b16 %v3675
        %v3804 = vunpack.c.l.b16 %v3676
        %v3805 = vunpack.c.l.b16 %v3677
        %v3806 = vunpack.c.l.b16 %v3678
        %v3807 = vunpack.c.l.b16 %v3679
        %v3808 = vunpack.c.l.b16 %v3680
        %v3809 = vunpack.c.l.b16 %v3681
        %v3810 = vunpack.c.l.b16 %v3682
        %v3811 = vunpack.c.l.b16 %v3683
        %v3812 = vunpack.c.l.b16 %v3684
        %v3813 = vunpack.c.l.b16 %v3685
        %v3814 = vunpack.c.l.b16 %v3686
        %v3815 = vunpack.c.l.b16 %v3687
        %v3816 = vunpack.c.l.b16 %v3688
        %v3817 = vunpack.c.l.b16 %v3689
        %v3818 = vunpack.c.l.b16 %v3690
        %v3819 = vunpack.c.l.b16 %v3691
        %v3820 = vunpack.c.l.b16 %v3692
        %v3821 = vunpack.c.l.b16 %v3693
        %v3822 = vunpack.c.l.b16 %v3694
        %v3823 = vunpack.c.l.b16 %v3695
        %v3824 = vunpack.c.l.b16 %v3696
        %v3825 = vunpack.c.l.b16 %v3697
        %v3826 = vunpack.c.l.b16 %v3698
        %v3827 = vunpack.c.l.b16 %v3699
        %v3828 = vunpack.c.l.b16 %v3700
        %v3829 = vpack.c.b16 %v3766, %v3765
        %v3830 = vpack.c.b16 %v3768, %v3767
        %v3831 = vpack.c.b16 %v3770, %v3769
        %v3832 = vpack.c.b16 %v3772, %v3771
        %v3833 = vpack.c.b16 %v3774, %v3773
        %v3834 = vpack.c.b16 %v3776, %v3775
        %v3835 = vpack.c.b16 %v3778, %v3777
        %v3836 = vpack.c.b16 %v3780, %v3779
        %v3837 = vpack.c.b16 %v3782, %v3781
        %v3838 = vpack.c.b16 %v3784, %v3783
        %v3839 = vpack.c.b16 %v3786, %v3785
        %v3840 = vpack.c.b16 %v3788, %v3787
        %v3841 = vpack.c.b16 %v3790, %v3789
        %v3842 = vpack.c.b16 %v3792, %v3791
        %v3843 = vpack.c.b16 %v3794, %v3793
        %v3844 = vpack.c.b16 %v3796, %v3795
        %v3845 = vpack.c.b16 %v3798, %v3797
        %v3846 = vpack.c.b16 %v3800, %v3799
        %v3847 = vpack.c.b16 %v3802, %v3801
        %v3848 = vpack.c.b16 %v3804, %v3803
        %v3849 = vpack.c.b16 %v3806, %v3805
        %v3850 = vpack.c.b16 %v3808, %v3807
        %v3851 = vpack.c.b16 %v3810, %v3809
        %v3852 = vpack.c.b16 %v3812, %v3811
        %v3853 = vpack.c.b16 %v3814, %v3813
        %v3854 = vpack.c.b16 %v3816, %v3815
        %v3855 = vpack.c.b16 %v3818, %v3817
        %v3856 = vpack.c.b16 %v3820, %v3819
        %v3857 = vpack.c.b16 %v3822, %v3821
        %v3858 = vpack.c.b16 %v3824, %v3823
        %v3859 = vpack.c.b16 %v3826, %v3825
        %v3860 = vpack.c.b16 %v3828, %v3827
        %3893 = vmatprep.subr.bf16.mxu0 0
        %3894 = vmatpush1.bf16.msra.mxu0 %v3829
        %3895 = vmatprep.subr.bf16.mxu0 0
        %3896 = vmatpush1.bf16.msra.mxu0 %v3830
        %3897 = vmatprep.subr.bf16.mxu0 0
        %3898 = vmatpush1.bf16.msra.mxu0 %v3831
        %3899 = vmatprep.subr.bf16.mxu0 0
        %3900 = vmatpush1.bf16.msra.mxu0 %v3832
        %3901 = vmatprep.subr.bf16.mxu0 0
        %3902 = vmatpush1.bf16.msra.mxu0 %v3833
        %3903 = vmatprep.subr.bf16.mxu0 0
        %3904 = vmatpush1.bf16.msra.mxu0 %v3834
        %3905 = vmatprep.subr.bf16.mxu0 0
        %3906 = vmatpush1.bf16.msra.mxu0 %v3835
        %3907 = vmatprep.subr.bf16.mxu0 0
        %3908 = vmatpush1.bf16.msra.mxu0 %v3836
        %3909 = vmatprep.subr.bf16.mxu0 0
        %3910 = vmatpush1.bf16.msra.mxu0 %v3837
        %3911 = vmatprep.subr.bf16.mxu0 0
        %3912 = vmatpush1.bf16.msra.mxu0 %v3838
        %3913 = vmatprep.subr.bf16.mxu0 0
        %3914 = vmatpush1.bf16.msra.mxu0 %v3839
        %3915 = vmatprep.subr.bf16.mxu0 0
        %3916 = vmatpush1.bf16.msra.mxu0 %v3840
        %3917 = vmatprep.subr.bf16.mxu0 0
        %3918 = vmatpush1.bf16.msra.mxu0 %v3841
        %3919 = vmatprep.subr.bf16.mxu0 0
        %3920 = vmatpush1.bf16.msra.mxu0 %v3842
        %3921 = vmatprep.subr.bf16.mxu0 0
        %3922 = vmatpush1.bf16.msra.mxu0 %v3843
        %3923 = vmatprep.subr.bf16.mxu0 0
        %3924 = vmatpush1.bf16.msra.mxu0 %v3844
        %3925 = vmatprep.mubr.bf16.mxu0 %v3574
        %3926 = vmatmul.mubr.bf16.gmra.mrb[0].mxu0 %v3573
        %v3927 = vpop.f32.mrb[0].mxu0
        %v3928 = vadd.f32 0.0, %v3927
        %v3929 = vpop.f32.mrb[0].mxu0
        %v3930 = vpop.f32.mrb[0].mxu0
        %v3931 = vadd.f32 0.0, %v3930
        %v3932 = vpop.f32.mrb[0].mxu0
        %3933 = vmatprep.mubr.bf16.mxu0 %v3578
        %3934 = vmatmul.mubr.bf16.gmra.mrb[0].mxu0 %v3577
        %v3935 = vpop.f32.mrb[0].mxu0
        %v3936 = vadd.f32 0.0, %v3935
        %v3937 = vpop.f32.mrb[0].mxu0
        %v3938 = vpop.f32.mrb[0].mxu0
        %v3939 = vadd.f32 0.0, %v3938
        %v3940 = vpop.f32.mrb[0].mxu0
        %3941 = vmatprep.mubr.bf16.mxu0 %v3582
        %3942 = vmatmul.mubr.bf16.gmra.mrb[0].mxu0 %v3581
        %v3943 = vpop.f32.mrb[0].mxu0
        %v3944 = vadd.f32 0.0, %v3943
        %v3945 = vpop.f32.mrb[0].mxu0
        %v3946 = vpop.f32.mrb[0].mxu0
        %v3947 = vadd.f32 0.0, %v3946
        %v3948 = vpop.f32.mrb[0].mxu0
        %3949 = vmatprep.mubr.bf16.mxu0 %v3586
        %3950 = vmatmul.mubr.bf16.gmra.mrb[0].mxu0 %v3585
        %v3951 = vpop.f32.mrb[0].mxu0
        %v3952 = vadd.f32 0.0, %v3951
        %v3953 = vpop.f32.mrb[0].mxu0
        %v3954 = vpop.f32.mrb[0].mxu0
        %v3955 = vadd.f32 0.0, %v3954
        %v3956 = vpop.f32.mrb[0].mxu0
        %3957 = vmatprep.mubr.bf16.mxu0 %v3590
        %3958 = vmatmul.mubr.bf16.gmra.mrb[0].mxu0 %v3589
        %v3959 = vpop.f32.mrb[0].mxu0
        %v3960 = vadd.f32 0.0, %v3959
        %v3961 = vpop.f32.mrb[0].mxu0
        %v3962 = vpop.f32.mrb[0].mxu0
        %v3963 = vadd.f32 0.0, %v3962
        %v3964 = vpop.f32.mrb[0].mxu0
        %3965 = vmatprep.mubr.bf16.mxu0 %v3594
        %3966 = vmatmul.mubr.bf16.gmra.mrb[0].mxu0 %v3593
        %v3967 = vpop.f32.mrb[0].mxu0
        %v3968 = vadd.f32 0.0, %v3967
        %v3969 = vpop.f32.mrb[0].mxu0
        %v3970 = vpop.f32.mrb[0].mxu0
        %v3971 = vadd.f32 0.0, %v3970
        %v3972 = vpop.f32.mrb[0].mxu0
        %3973 = vmatprep.mubr.bf16.mxu0 %v3598
        %3974 = vmatmul.mubr.bf16.gmra.mrb[0].mxu0 %v3597
        %v3975 = vpop.f32.mrb[0].mxu0
        %v3976 = vadd.f32 0.0, %v3975
        %v3977 = vpop.f32.mrb[0].mxu0
        %v3978 = vpop.f32.mrb[0].mxu0
        %v3979 = vadd.f32 0.0, %v3978
        %v3980 = vpop.f32.mrb[0].mxu0
        %3981 = vmatprep.mubr.bf16.mxu0 %v3602
        %3982 = vmatmul.mubr.bf16.gmra.mrb[0].mxu0 %v3601
        %v3983 = vpop.f32.mrb[0].mxu0
        %v3984 = vadd.f32 0.0, %v3983
        %v3985 = vpop.f32.mrb[0].mxu0
        %v3986 = vpop.f32.mrb[0].mxu0
        %v3987 = vadd.f32 0.0, %v3986
        %v3988 = vpop.f32.mrb[0].mxu0
        %3989 = vmatprep.mubr.bf16.mxu0 %v3606
        %3990 = vmatmul.mubr.bf16.gmra.mrb[0].mxu0 %v3605
        %v3991 = vpop.f32.mrb[0].mxu0
        %v3992 = vadd.f32 0.0, %v3991
        %v3993 = vpop.f32.mrb[0].mxu0
        %v3994 = vpop.f32.mrb[0].mxu0
        %v3995 = vadd.f32 0.0, %v3994
        %v3996 = vpop.f32.mrb[0].mxu0
        %3997 = vmatprep.mubr.bf16.mxu0 %v3610
        %3998 = vmatmul.mubr.bf16.gmra.mrb[0].mxu0 %v3609
        %v3999 = vpop.f32.mrb[0].mxu0
        %v4000 = vadd.f32 0.0, %v3999
        %v4001 = vpop.f32.mrb[0].mxu0
        %v4002 = vpop.f32.mrb[0].mxu0
        %v4003 = vadd.f32 0.0, %v4002
        %v4004 = vpop.f32.mrb[0].mxu0
        %4005 = vmatprep.mubr.bf16.mxu0 %v3614
        %4006 = vmatmul.mubr.bf16.gmra.mrb[0].mxu0 %v3613
        %v4007 = vpop.f32.mrb[0].mxu0
        %v4008 = vadd.f32 0.0, %v4007
        %v4009 = vpop.f32.mrb[0].mxu0
        %v4010 = vpop.f32.mrb[0].mxu0
        %v4011 = vadd.f32 0.0, %v4010
        %v4012 = vpop.f32.mrb[0].mxu0
        %4013 = vmatprep.mubr.bf16.mxu0 %v3618
        %4014 = vmatmul.mubr.bf16.gmra.mrb[0].mxu0 %v3617
        %v4015 = vpop.f32.mrb[0].mxu0
        %v4016 = vadd.f32 0.0, %v4015
        %v4017 = vpop.f32.mrb[0].mxu0
        %v4018 = vpop.f32.mrb[0].mxu0
        %v4019 = vadd.f32 0.0, %v4018
        %v4020 = vpop.f32.mrb[0].mxu0
        %4021 = vmatprep.mubr.bf16.mxu0 %v3622
        %4022 = vmatmul.mubr.bf16.gmra.mrb[0].mxu0 %v3621
        %v4023 = vpop.f32.mrb[0].mxu0
        %v4024 = vadd.f32 0.0, %v4023
        %v4025 = vpop.f32.mrb[0].mxu0
        %v4026 = vpop.f32.mrb[0].mxu0
        %v4027 = vadd.f32 0.0, %v4026
        %v4028 = vpop.f32.mrb[0].mxu0
        %4029 = vmatprep.mubr.bf16.mxu0 %v3626
        %4030 = vmatmul.mubr.bf16.gmra.mrb[0].mxu0 %v3625
        %v4031 = vpop.f32.mrb[0].mxu0
        %v4032 = vadd.f32 0.0, %v4031
        %v4033 = vpop.f32.mrb[0].mxu0
        %v4034 = vpop.f32.mrb[0].mxu0
        %v4035 = vadd.f32 0.0, %v4034
        %v4036 = vpop.f32.mrb[0].mxu0
        %4037 = vmatprep.mubr.bf16.mxu0 %v3630
        %4038 = vmatmul.mubr.bf16.gmra.mrb[0].mxu0 %v3629
        %v4039 = vpop.f32.mrb[0].mxu0
        %v4040 = vadd.f32 0.0, %v4039
        %v4041 = vpop.f32.mrb[0].mxu0
        %v4042 = vpop.f32.mrb[0].mxu0
        %v4043 = vadd.f32 0.0, %v4042
        %v4044 = vpop.f32.mrb[0].mxu0
        %4045 = vmatprep.mubr.bf16.mxu0 %v3634
        %4046 = vmatmul.mubr.bf16.gmra.mrb[0].mxu0 %v3633
        %v4047 = vpop.f32.mrb[0].mxu0
        %v4048 = vadd.f32 0.0, %v4047
        %v4049 = vpop.f32.mrb[0].mxu0
        %v4050 = vpop.f32.mrb[0].mxu0
        %v4051 = vadd.f32 0.0, %v4050
        %v4052 = vpop.f32.mrb[0].mxu0
        %4053 = vdwg.mxu0
        %4054 = vmatprep.subr.bf16.mxu0 0
        %4055 = vmatpush1.bf16.msra.mxu0 %v3845
        %4056 = vmatprep.subr.bf16.mxu0 0
        %4057 = vmatpush1.bf16.msra.mxu0 %v3846
        %4058 = vmatprep.subr.bf16.mxu0 0
        %4059 = vmatpush1.bf16.msra.mxu0 %v3847
        %4060 = vmatprep.subr.bf16.mxu0 0
        %4061 = vmatpush1.bf16.msra.mxu0 %v3848
        %4062 = vmatprep.subr.bf16.mxu0 0
        %4063 = vmatpush1.bf16.msra.mxu0 %v3849
        %4064 = vmatprep.subr.bf16.mxu0 0
        %4065 = vmatpush1.bf16.msra.mxu0 %v3850
        %4066 = vmatprep.subr.bf16.mxu0 0
        %4067 = vmatpush1.bf16.msra.mxu0 %v3851
        %4068 = vmatprep.subr.bf16.mxu0 0
        %4069 = vmatpush1.bf16.msra.mxu0 %v3852
        %4070 = vmatprep.subr.bf16.mxu0 0
        %4071 = vmatpush1.bf16.msra.mxu0 %v3853
        %4072 = vmatprep.subr.bf16.mxu0 0
        %4073 = vmatpush1.bf16.msra.mxu0 %v3854
        %4074 = vmatprep.subr.bf16.mxu0 0
        %4075 = vmatpush1.bf16.msra.mxu0 %v3855
        %4076 = vmatprep.subr.bf16.mxu0 0
        %4077 = vmatpush1.bf16.msra.mxu0 %v3856
        %4078 = vmatprep.subr.bf16.mxu0 0
        %4079 = vmatpush1.bf16.msra.mxu0 %v3857
        %4080 = vmatprep.subr.bf16.mxu0 0
        %4081 = vmatpush1.bf16.msra.mxu0 %v3858
        %4082 = vmatprep.subr.bf16.mxu0 0
        %4083 = vmatpush1.bf16.msra.mxu0 %v3859
        %4084 = vmatprep.subr.bf16.mxu0 0
        %4085 = vmatpush1.bf16.msra.mxu0 %v3860
        %4086 = vmatprep.mubr.bf16.mxu0 %v3576
        %4087 = vmatmul.mubr.bf16.gmra.mrb[0].mxu0 %v3575
        %v4088 = vpop.f32.mrb[0].mxu0
        %v4089 = vadd.f32 %v3928, %v4088
        %v4090 = vpop.f32.mrb[0].mxu0
        %v4091 = vpop.f32.mrb[0].mxu0
        %v4092 = vadd.f32 %v3931, %v4091
        %v4093 = vpop.f32.mrb[0].mxu0
        %4094 = vmatprep.mubr.bf16.mxu0 %v3580
        %4095 = vmatmul.mubr.bf16.gmra.mrb[0].mxu0 %v3579
        %v4096 = vpop.f32.mrb[0].mxu0
        %v4097 = vadd.f32 %v3936, %v4096
        %v4098 = vpop.f32.mrb[0].mxu0
        %v4099 = vpop.f32.mrb[0].mxu0
        %v4100 = vadd.f32 %v3939, %v4099
        %v4101 = vpop.f32.mrb[0].mxu0
        %4102 = vmatprep.mubr.bf16.mxu0 %v3584
        %4103 = vmatmul.mubr.bf16.gmra.mrb[0].mxu0 %v3583
        %v4104 = vpop.f32.mrb[0].mxu0
        %v4105 = vadd.f32 %v3944, %v4104
        %v4106 = vpop.f32.mrb[0].mxu0
        %v4107 = vpop.f32.mrb[0].mxu0
        %v4108 = vadd.f32 %v3947, %v4107
        %v4109 = vpop.f32.mrb[0].mxu0
        %4110 = vmatprep.mubr.bf16.mxu0 %v3588
        %4111 = vmatmul.mubr.bf16.gmra.mrb[0].mxu0 %v3587
        %v4112 = vpop.f32.mrb[0].mxu0
        %v4113 = vadd.f32 %v3952, %v4112
        %v4114 = vpop.f32.mrb[0].mxu0
        %v4115 = vpop.f32.mrb[0].mxu0
        %v4116 = vadd.f32 %v3955, %v4115
        %v4117 = vpop.f32.mrb[0].mxu0
        %4118 = vmatprep.mubr.bf16.mxu0 %v3592
        %4119 = vmatmul.mubr.bf16.gmra.mrb[0].mxu0 %v3591
        %v4120 = vpop.f32.mrb[0].mxu0
        %v4121 = vadd.f32 %v3960, %v4120
        %v4122 = vpop.f32.mrb[0].mxu0
        %v4123 = vpop.f32.mrb[0].mxu0
        %v4124 = vadd.f32 %v3963, %v4123
        %v4125 = vpop.f32.mrb[0].mxu0
        %4126 = vmatprep.mubr.bf16.mxu0 %v3596
        %4127 = vmatmul.mubr.bf16.gmra.mrb[0].mxu0 %v3595
        %v4128 = vpop.f32.mrb[0].mxu0
        %v4129 = vadd.f32 %v3968, %v4128
        %v4130 = vpop.f32.mrb[0].mxu0
        %v4131 = vpop.f32.mrb[0].mxu0
        %v4132 = vadd.f32 %v3971, %v4131
        %v4133 = vpop.f32.mrb[0].mxu0
        %4134 = vmatprep.mubr.bf16.mxu0 %v3600
        %4135 = vmatmul.mubr.bf16.gmra.mrb[0].mxu0 %v3599
        %v4136 = vpop.f32.mrb[0].mxu0
        %v4137 = vadd.f32 %v3976, %v4136
        %v4138 = vpop.f32.mrb[0].mxu0
        %v4139 = vpop.f32.mrb[0].mxu0
        %v4140 = vadd.f32 %v3979, %v4139
        %v4141 = vpop.f32.mrb[0].mxu0
        %4142 = vmatprep.mubr.bf16.mxu0 %v3604
        %4143 = vmatmul.mubr.bf16.gmra.mrb[0].mxu0 %v3603
        %v4144 = vpop.f32.mrb[0].mxu0
        %v4145 = vadd.f32 %v3984, %v4144
        %v4146 = vpop.f32.mrb[0].mxu0
        %v4147 = vpop.f32.mrb[0].mxu0
        %v4148 = vadd.f32 %v3987, %v4147
        %v4149 = vpop.f32.mrb[0].mxu0
        %4150 = vmatprep.mubr.bf16.mxu0 %v3608
        %4151 = vmatmul.mubr.bf16.gmra.mrb[0].mxu0 %v3607
        %v4152 = vpop.f32.mrb[0].mxu0
        %v4153 = vadd.f32 %v3992, %v4152
        %v4154 = vpop.f32.mrb[0].mxu0
        %v4155 = vpop.f32.mrb[0].mxu0
        %v4156 = vadd.f32 %v3995, %v4155
        %v4157 = vpop.f32.mrb[0].mxu0
        %4158 = vmatprep.mubr.bf16.mxu0 %v3612
        %4159 = vmatmul.mubr.bf16.gmra.mrb[0].mxu0 %v3611
        %v4160 = vpop.f32.mrb[0].mxu0
        %v4161 = vadd.f32 %v4000, %v4160
        %v4162 = vpop.f32.mrb[0].mxu0
        %v4163 = vpop.f32.mrb[0].mxu0
        %v4164 = vadd.f32 %v4003, %v4163
        %v4165 = vpop.f32.mrb[0].mxu0
        %4166 = vmatprep.mubr.bf16.mxu0 %v3616
        %4167 = vmatmul.mubr.bf16.gmra.mrb[0].mxu0 %v3615
        %v4168 = vpop.f32.mrb[0].mxu0
        %v4169 = vadd.f32 %v4008, %v4168
        %v4170 = vpop.f32.mrb[0].mxu0
        %v4171 = vpop.f32.mrb[0].mxu0
        %v4172 = vadd.f32 %v4011, %v4171
        %v4173 = vpop.f32.mrb[0].mxu0
        %4174 = vmatprep.mubr.bf16.mxu0 %v3620
        %4175 = vmatmul.mubr.bf16.gmra.mrb[0].mxu0 %v3619
        %v4176 = vpop.f32.mrb[0].mxu0
        %v4177 = vadd.f32 %v4016, %v4176
        %v4178 = vpop.f32.mrb[0].mxu0
        %v4179 = vpop.f32.mrb[0].mxu0
        %v4180 = vadd.f32 %v4019, %v4179
        %v4181 = vpop.f32.mrb[0].mxu0
        %4182 = vmatprep.mubr.bf16.mxu0 %v3624
        %4183 = vmatmul.mubr.bf16.gmra.mrb[0].mxu0 %v3623
        %v4184 = vpop.f32.mrb[0].mxu0
        %v4185 = vadd.f32 %v4024, %v4184
        %v4186 = vpop.f32.mrb[0].mxu0
        %v4187 = vpop.f32.mrb[0].mxu0
        %v4188 = vadd.f32 %v4027, %v4187
        %v4189 = vpop.f32.mrb[0].mxu0
        %4190 = vmatprep.mubr.bf16.mxu0 %v3628
        %4191 = vmatmul.mubr.bf16.gmra.mrb[0].mxu0 %v3627
        %v4192 = vpop.f32.mrb[0].mxu0
        %v4193 = vadd.f32 %v4032, %v4192
        %v4194 = vpop.f32.mrb[0].mxu0
        %v4195 = vpop.f32.mrb[0].mxu0
        %v4196 = vadd.f32 %v4035, %v4195
        %v4197 = vpop.f32.mrb[0].mxu0
        %4198 = vmatprep.mubr.bf16.mxu0 %v3632
        %4199 = vmatmul.mubr.bf16.gmra.mrb[0].mxu0 %v3631
        %v4200 = vpop.f32.mrb[0].mxu0
        %v4201 = vadd.f32 %v4040, %v4200
        %v4202 = vpop.f32.mrb[0].mxu0
        %v4203 = vpop.f32.mrb[0].mxu0
        %v4204 = vadd.f32 %v4043, %v4203
        %v4205 = vpop.f32.mrb[0].mxu0
        %4206 = vmatprep.mubr.bf16.mxu0 %v3636
        %4207 = vmatmul.mubr.bf16.gmra.mrb[0].mxu0 %v3635
        %v4208 = vpop.f32.mrb[0].mxu0
        %v4209 = vadd.f32 %v4048, %v4208
        %v4210 = vpop.f32.mrb[0].mxu0
        %v4211 = vpop.f32.mrb[0].mxu0
        %v4212 = vadd.f32 %v4051, %v4211
        %v4213 = vpop.f32.mrb[0].mxu0
        %4214 = vdwg.mxu0
        %v4215 = vadd.f32 %v1082, %v4089
        %v4216 = vadd.f32 %v1083, %v4092
        %v4217 = vadd.f32 %v1084, %v4097
        %v4218 = vadd.f32 %v1085, %v4100
        %v4219 = vadd.f32 %v1086, %v4105
        %v4220 = vadd.f32 %v1087, %v4108
        %v4221 = vadd.f32 %v1088, %v4113
        %v4222 = vadd.f32 %v1089, %v4116
        %v4223 = vadd.f32 %v1090, %v4121
        %v4224 = vadd.f32 %v1091, %v4124
        %v4225 = vadd.f32 %v1092, %v4129
        %v4226 = vadd.f32 %v1093, %v4132
        %v4227 = vadd.f32 %v1094, %v4137
        %v4228 = vadd.f32 %v1095, %v4140
        %v4229 = vadd.f32 %v1096, %v4145
        %v4230 = vadd.f32 %v1097, %v4148
        %v4231 = vadd.f32 %v1098, %v4153
        %v4232 = vadd.f32 %v1099, %v4156
        %v4233 = vadd.f32 %v1100, %v4161
        %v4234 = vadd.f32 %v1101, %v4164
        %v4235 = vadd.f32 %v1102, %v4169
        %v4236 = vadd.f32 %v1103, %v4172
        %v4237 = vadd.f32 %v1104, %v4177
        %v4238 = vadd.f32 %v1105, %v4180
        %v4239 = vadd.f32 %v1106, %v4185
        %v4240 = vadd.f32 %v1107, %v4188
        %v4241 = vadd.f32 %v1108, %v4193
        %v4242 = vadd.f32 %v1109, %v4196
        %v4243 = vadd.f32 %v1110, %v4201
        %v4244 = vadd.f32 %v1111, %v4204
        %v4245 = vadd.f32 %v1112, %v4209
        %v4246 = vadd.f32 %v1113, %v4212
        %4247 = vst [vmem:[%s314] sm:$0xff] %v4215
        %4248 = vst [vmem:[%s314 + $0x8] sm:$0xff] %v4216
        %4249 = vst [vmem:[%s314 + $0x10] sm:$0xff] %v4217
        %4250 = vst [vmem:[%s314 + $0x18] sm:$0xff] %v4218
        %4251 = vst [vmem:[%s314 + $0x20] sm:$0xff] %v4219
        %4252 = vst [vmem:[%s314 + $0x28] sm:$0xff] %v4220
        %4253 = vst [vmem:[%s314 + $0x30] sm:$0xff] %v4221
        %4254 = vst [vmem:[%s314 + $0x38] sm:$0xff] %v4222
        %4255 = vst [vmem:[%s314 + $0x40] sm:$0xff] %v4223
        %4256 = vst [vmem:[%s314 + $0x48] sm:$0xff] %v4224
        %4257 = vst [vmem:[%s314 + $0x50] sm:$0xff] %v4225
        %4258 = vst [vmem:[%s314 + $0x58] sm:$0xff] %v4226
        %4259 = vst [vmem:[%s314 + $0x60] sm:$0xff] %v4227
        %4260 = vst [vmem:[%s314 + $0x68] sm:$0xff] %v4228
        %4261 = vst [vmem:[%s314 + $0x70] sm:$0xff] %v4229
        %4262 = vst [vmem:[%s314 + $0x78] sm:$0xff] %v4230
        %4263 = vst [vmem:[%s314 + $0x80] sm:$0xff] %v4231
        %4264 = vst [vmem:[%s314 + $0x88] sm:$0xff] %v4232
        %4265 = vst [vmem:[%s314 + $0x90] sm:$0xff] %v4233
        %4266 = vst [vmem:[%s314 + $0x98] sm:$0xff] %v4234
        %4267 = vst [vmem:[%s314 + $0xa0] sm:$0xff] %v4235
        %4268 = vst [vmem:[%s314 + $0xa8] sm:$0xff] %v4236
        %4269 = vst [vmem:[%s314 + $0xb0] sm:$0xff] %v4237
        %4270 = vst [vmem:[%s314 + $0xb8] sm:$0xff] %v4238
        %4271 = vst [vmem:[%s314 + $0xc0] sm:$0xff] %v4239
        %4272 = vst [vmem:[%s314 + $0xc8] sm:$0xff] %v4240
        %4273 = vst [vmem:[%s314 + $0xd0] sm:$0xff] %v4241
        %4274 = vst [vmem:[%s314 + $0xd8] sm:$0xff] %v4242
        %4275 = vst [vmem:[%s314 + $0xe0] sm:$0xff] %v4243
        %4276 = vst [vmem:[%s314 + $0xe8] sm:$0xff] %v4244
        %4277 = vst [vmem:[%s314 + $0xf0] sm:$0xff] %v4245
        %4278 = vst [vmem:[%s314 + $0xf8] sm:$0xff] %v4246
        %s4279 = sand.u32 %s164, 1
        %s4280 = scalar_lea.sflag [#allocation4], %s4279
        %s4281 = sand.u32 %s164, 1
        %s4282 = smul.addr %s4281, 256
        %s4283 = scalar_lea.vmem [#allocation10], %s4282
        // Predicated region
        $region61: #{tpu_custom_call.1} parent=43 // pred_check
          %p4284 = pneg %p174
        $region62: #{tpu_custom_call.1} parent=43 // pred_check_branch
          %4286 = sbr.rel (%p4284) target = $region64
        $region63: #{tpu_custom_call.1} parent=43 // pred_region
          %s4287 = smul.u32 16, %s25
          %s4289 = ssub.s32 4096, 4096
          %4290 = vsyncadd %s4280, %s4289
          %s4291 = smul.addr %s4287, 2
          %s4292 = smul.addr %s4291, 128
          %s4293 = scalar_lea.hbm %s6, %s4292
          %s4294 = sshll.u32 %s4283, 4
          %s4295 = int_to_ptr.vmem [resolvable:$true] %s4294
          %4300 = dma.vmem_to_hbm [thread:$0]  %s4295, 4096, %s4293, %s4280, 128, 128, 8
        $region64: #{tpu_custom_call.1} parent=43 // pred_fallthru
          _
      $region44: #{tpu_custom_call.1} parent=5 // pred_fallthru
        _
      %p4301 = scmp.le.s32.totalorder 2, %s20
      // Predicated region
      $region65: #{tpu_custom_call.1} parent=5 // pred_check
        %p4302 = pneg %p4301
      $region66: #{tpu_custom_call.1} parent=5 // pred_check_branch
        %4304 = sbr.rel (%p4302) target = $region68
      $region67: #{tpu_custom_call.1} parent=5 // pred_region
        %s4305 = ssub.s32 %s20, 2
        // Predicated region
        $region69: #{tpu_custom_call.1} parent=67 // pred_check
          %p4306 = pneg %p180
        $region70: #{tpu_custom_call.1} parent=67 // pred_check_branch
          %4308 = sbr.rel (%p4306) target = $region72
        $region71: #{tpu_custom_call.1} parent=67 // pred_region
          %s4309 = sand.u32 %s165, 1
          %s4310 = scalar_lea.sflag [#allocation4], %s4309
          %s4311 = sand.u32 %s165, 1
          %s4312 = smul.addr %s4311, 256
          %s4313 = scalar_lea.vmem [#allocation10], %s4312
          %4314 = dma.done %s4310, 4096
        $region72: #{tpu_custom_call.1} parent=67 // pred_fallthru
          _
      $region68: #{tpu_custom_call.1} parent=5 // pred_fallthru
        _
    $region6: #{tpu_custom_call.1} parent=1 // loop_footer
      %s24 = sadd.s32 1, %s20
    $region7: #{tpu_custom_call.1} parent=1 // loop_footer_branch
      %19 = sbr.rel target = $region3
    $region8: #{tpu_custom_call.1} parent=1 // loop_exit
      _
    %4315 = vsyncpa [#allocation3], 1
    %s4316 = scalar_lea.sflag [#allocation3], 1
    %4317 = vsyncpa %s4316, 1
    %4318 = vsyncpa [#allocation6], 1
    %4319 = vsyncpa [#allocation9], 1
    %4320 = vsyncpa [#allocation4], 1
    %s4321 = scalar_lea.sflag [#allocation4], 1
    %4322 = vsyncpa %s4321, 1

// kernel: tpu_custom_call.1
$region0: #{tpu_custom_call.1}
  #allocation0 [shape = 'u32[]', space=smem, size = 0x4, offset = 0x4, fixed_abs, tag = 'smem constant byte address 0x4 - core index']
  #allocation1 [shape = 'u32[144,128]{1,0:T(1,128)}', space=vmem, size = 0x12000, scoped, tag = 'internal scratch']
  %s0 = inlined_call_operand.hbm [shape: f32[32,16,128], index: 0, kind: input, shape index: {}]
  %s1 = inlined_call_operand.vmem [shape: f32[1,128], index: 1, kind: input, shape index: {}]
  %s2 = inlined_call_operand.vmem [shape: f32[1,128], index: 2, kind: input, shape index: {}]
  %s3 = inlined_call_operand.hbm [shape: bf16[128,128], index: 3, kind: input, shape index: {}]
  %s4 = inlined_call_operand.hbm [shape: bf16[128,1024], index: 4, kind: input, shape index: {}]
  %s5 = inlined_call_operand.hbm [shape: bf16[512,128], index: 5, kind: input, shape index: {}]
  %s6 = inlined_call_operand.hbm [shape: f32[32,16,128], index: 6, kind: output, shape index: {}]
  %s7 = sld [smem:[#allocation0]]
  $region73: #{tpu_custom_call.1} parent=0
    _
  %s9 = ssub.s32 1, %s7
  %s10 = scalar_select 0, %s9, %s7
  $region1: #{tpu_custom_call.1} parent=0
    #allocation2 [shape = 'u8[262144]{0}', space=vmem, size = 0x40000, scoped, tag = 'input window, operand 0']
    #allocation3 [shape = 's32[2]{0}', space=sflag, size = 0x8, scoped, tag = 'scoped memory for tpu_custom_call.1']
    #allocation4 [shape = 's32[2]{0}', space=sflag, size = 0x8, scoped, tag = 'scoped memory for tpu_custom_call.1']
    #allocation5 [shape = 'u8[32768]{0}', space=vmem, size = 0x8000, scoped, tag = 'input window, operand 3, single buffered']
    #allocation6 [shape = 's32[1]{0}', space=sflag, size = 0x4, scoped, tag = 'scoped memory for tpu_custom_call.1']
    #allocation7 [shape = 'u8[262144]{0}', space=vmem, size = 0x40000, scoped, tag = 'input window, operand 4, single buffered']
    #allocation8 [shape = 'u8[131072]{0}', space=vmem, size = 0x20000, scoped, tag = 'input window, operand 5, single buffered']
    #allocation9 [shape = 's32[1]{0}', space=sflag, size = 0x4, scoped, tag = 'scoped memory for tpu_custom_call.1']
    #allocation10 [shape = 'u8[262144]{0}', space=vmem, size = 0x40000, scoped, tag = 'output window, operand 0']
    %11 = vsyncpa [#allocation3], 0
    %s12 = scalar_lea.sflag [#allocation3], 1
    %13 = vsyncpa %s12, 0
    %14 = vsyncpa [#allocation6], 0
    %15 = vsyncpa [#allocation9], 0
    %16 = vsyncpa [#allocation4], 0
    %s17 = scalar_lea.sflag [#allocation4], 1
    %18 = vsyncpa %s17, 0
    loop: start=0, step=1, limit=4
    $region2: #{tpu_custom_call.1} parent=1 // loop_pre_header
      _
    $region3: #{tpu_custom_call.1} parent=1 // loop_header
      %s20 = sphi 0, %s24
      %p21 = scmp.ge.s32.totalorder %s20, 4
      %s30 = sphi 0, %s32
      %s33 = sphi 0, %s30
      %s34 = sphi 0, %s33
      %s50 = sphi 0, %s34
      %s54 = sphi 0, %s54
      %s56 = sphi 0, %s54
      %s57 = sphi 0, %s56
      %s71 = sphi 0, %s57
      %s75 = sphi 0, %s75
      %s77 = sphi 0, %s75
      %s78 = sphi 0, %s77
      %s92 = sphi 0, %s78
      %s96 = sphi 0, %s96
      %s98 = sphi 0, %s96
      %s99 = sphi 0, %s98
      %s113 = sphi 0, %s99
      %s117 = sphi 0, %s117
      %s119 = sphi 0, %s117
      %s120 = sphi 0, %s119
      %s134 = sphi 0, %s120
      %s138 = sphi 0, %s138
      %s140 = sphi 0, %s138
      %s141 = sphi 0, %s140
      %s155 = sphi 0, %s141
      %s161 = sphi 0, %s163
      %s164 = sphi 0, %s161
      %s165 = sphi 0, %s164
      %s181 = sphi 0, %s165
    $region4: #{tpu_custom_call.1} parent=1 // loop_header_branch
      %23 = sbr.rel (%p21) target = $region8
    $region5: #{tpu_custom_call.1} parent=1 // loop_body
      %s25 = ssub.s32 %s20, 1
      %s26 = ssub.s32 %s20, 2
      %s27 = sadd.s32 %s20, 1
      %s28 = ssub.s32 %s20, %s27
      %p29 = scmp.eq.s32.totalorder %s28, 0
      %s31 = sadd.s32 %s30, 1
      %s32 = scalar_select %p29, %s30, %s31
      %p35 = pneg %p29
      %p36 = scmp.eq.s32.totalorder %s20, 1
      %p37 = por %p35, %p36
      %p38 = scmp.ne.s32.totalorder %s30, %s33
      %p39 = scmp.eq.s32.totalorder %s20, 0
      %p40 = por %p38, %p39
      %p41 = scmp.ne.s32.totalorder %s30, %s33
      %p42 = scmp.eq.s32.totalorder %s25, 1
      %p43 = por %p41, %p42
      %p44 = scmp.ne.s32.totalorder %s33, %s34
      %p45 = scmp.eq.s32.totalorder %s25, 0
      %p46 = por %p44, %p45
      %p47 = scmp.ne.s32.totalorder %s33, %s34
      %p48 = scmp.eq.s32.totalorder %s26, 1
      %p49 = por %p47, %p48
      %p51 = scmp.ne.s32.totalorder %s34, %s50
      %p52 = scmp.eq.s32.totalorder %s26, 0
      %p53 = por %p51, %p52
      %s55 = sadd.s32 %s54, 1
      %p58 = scmp.eq.s32.totalorder %s20, 1
      %p59 = scmp.ne.s32.totalorder %s54, %s56
      %p60 = scmp.eq.s32.totalorder %s20, 0
      %p61 = por %p59, %p60
      %p62 = scmp.ne.s32.totalorder %s54, %s56
      %p63 = scmp.eq.s32.totalorder %s25, 1
      %p64 = por %p62, %p63
      %p65 = scmp.ne.s32.totalorder %s56, %s57
      %p66 = scmp.eq.s32.totalorder %s25, 0
      %p67 = por %p65, %p66
      %p68 = scmp.ne.s32.totalorder %s56, %s57
      %p69 = scmp.eq.s32.totalorder %s26, 1
      %p70 = por %p68, %p69
      %p72 = scmp.ne.s32.totalorder %s57, %s71
      %p73 = scmp.eq.s32.totalorder %s26, 0
      %p74 = por %p72, %p73
      %s76 = sadd.s32 %s75, 1
      %p79 = scmp.eq.s32.totalorder %s20, 1
      %p80 = scmp.ne.s32.totalorder %s75, %s77
      %p81 = scmp.eq.s32.totalorder %s20, 0
      %p82 = por %p80, %p81
      %p83 = scmp.ne.s32.totalorder %s75, %s77
      %p84 = scmp.eq.s32.totalorder %s25, 1
      %p85 = por %p83, %p84
      %p86 = scmp.ne.s32.totalorder %s77, %s78
      %p87 = scmp.eq.s32.totalorder %s25, 0
      %p88 = por %p86, %p87
      %p89 = scmp.ne.s32.totalorder %s77, %s78
      %p90 = scmp.eq.s32.totalorder %s26, 1
      %p91 = por %p89, %p90
      %p93 = scmp.ne.s32.totalorder %s78, %s92
      %p94 = scmp.eq.s32.totalorder %s26, 0
      %p95 = por %p93, %p94
      %s97 = sadd.s32 %s96, 1
      %p100 = scmp.eq.s32.totalorder %s20, 1
      %p101 = scmp.ne.s32.totalorder %s96, %s98
      %p102 = scmp.eq.s32.totalorder %s20, 0
      %p103 = por %p101, %p102
      %p104 = scmp.ne.s32.totalorder %s96, %s98
      %p105 = scmp.eq.s32.totalorder %s25, 1
      %p106 = por %p104, %p105
      %p107 = scmp.ne.s32.totalorder %s98, %s99
      %p108 = scmp.eq.s32.totalorder %s25, 0
      %p109 = por %p107, %p108
      %p110 = scmp.ne.s32.totalorder %s98, %s99
      %p111 = scmp.eq.s32.totalorder %s26, 1
      %p112 = por %p110, %p111
      %p114 = scmp.ne.s32.totalorder %s99, %s113
      %p115 = scmp.eq.s32.totalorder %s26, 0
      %p116 = por %p114, %p115
      %s118 = sadd.s32 %s117, 1
      %p121 = scmp.eq.s32.totalorder %s20, 1
      %p122 = scmp.ne.s32.totalorder %s117, %s119
      %p123 = scmp.eq.s32.totalorder %s20, 0
      %p124 = por %p122, %p123
      %p125 = scmp.ne.s32.totalorder %s117, %s119
      %p126 = scmp.eq.s32.totalorder %s25, 1
      %p127 = por %p125, %p126
      %p128 = scmp.ne.s32.totalorder %s119, %s120
      %p129 = scmp.eq.s32.totalorder %s25, 0
      %p130 = por %p128, %p129
      %p131 = scmp.ne.s32.totalorder %s119, %s120
      %p132 = scmp.eq.s32.totalorder %s26, 1
      %p133 = por %p131, %p132
      %p135 = scmp.ne.s32.totalorder %s120, %s134
      %p136 = scmp.eq.s32.totalorder %s26, 0
      %p137 = por %p135, %p136
      %s139 = sadd.s32 %s138, 1
      %p142 = scmp.eq.s32.totalorder %s20, 1
      %p143 = scmp.ne.s32.totalorder %s138, %s140
      %p144 = scmp.eq.s32.totalorder %s20, 0
      %p145 = por %p143, %p144
      %p146 = scmp.ne.s32.totalorder %s138, %s140
      %p147 = scmp.eq.s32.totalorder %s25, 1
      %p148 = por %p146, %p147
      %p149 = scmp.ne.s32.totalorder %s140, %s141
      %p150 = scmp.eq.s32.totalorder %s25, 0
      %p151 = por %p149, %p150
      %p152 = scmp.ne.s32.totalorder %s140, %s141
      %p153 = scmp.eq.s32.totalorder %s26, 1
      %p154 = por %p152, %p153
      %p156 = scmp.ne.s32.totalorder %s141, %s155
      %p157 = scmp.eq.s32.totalorder %s26, 0
      %p158 = por %p156, %p157
      %s159 = ssub.s32 %s20, %s27
      %p160 = scmp.eq.s32.totalorder %s159, 0
      %s162 = sadd.s32 %s161, 1
      %s163 = scalar_select %p160, %s161, %s162
      %p166 = pneg %p160
      %p167 = scmp.eq.s32.totalorder %s20, 1
      %p168 = por %p166, %p167
      %p169 = scmp.ne.s32.totalorder %s161, %s164
      %p170 = scmp.eq.s32.totalorder %s20, 0
      %p171 = por %p169, %p170
      %p172 = scmp.ne.s32.totalorder %s161, %s164
      %p173 = scmp.eq.s32.totalorder %s25, 1
      %p174 = por %p172, %p173
      %p175 = scmp.ne.s32.totalorder %s164, %s165
      %p176 = scmp.eq.s32.totalorder %s25, 0
      %p177 = por %p175, %p176
      %p178 = scmp.ne.s32.totalorder %s164, %s165
      %p179 = scmp.eq.s32.totalorder %s26, 1
      %p180 = por %p178, %p179
      %p182 = scmp.ne.s32.totalorder %s165, %s181
      %p183 = scmp.eq.s32.totalorder %s26, 0
      %p184 = por %p182, %p183
      %p185 = scmp.le.s32.totalorder 1, %s20
      %p186 = scmp.lt.s32.totalorder %s20, 3
      %p187 = pnand %p185, %p186
      %p188 = pneg %p187
      // Predicated region
      $region9: #{tpu_custom_call.1} parent=5 // pred_check
        _
      $region10: #{tpu_custom_call.1} parent=5 // pred_check_branch
        %190 = sbr.rel (%p187) target = $region12
      $region11: #{tpu_custom_call.1} parent=5 // pred_region
        %s191 = ssub.s32 %s20, 1
        // Predicated region
        $region13: #{tpu_custom_call.1} parent=11 // pred_check
          %p192 = pneg %p67
        $region14: #{tpu_custom_call.1} parent=11 // pred_check_branch
          %194 = sbr.rel (%p192) target = $region16
        $region15: #{tpu_custom_call.1} parent=11 // pred_region
          _
        $region16: #{tpu_custom_call.1} parent=11 // pred_fallthru
          _
        // Predicated region
        $region17: #{tpu_custom_call.1} parent=11 // pred_check
          %p195 = pneg %p88
        $region18: #{tpu_custom_call.1} parent=11 // pred_check_branch
          %197 = sbr.rel (%p195) target = $region20
        $region19: #{tpu_custom_call.1} parent=11 // pred_region
          _
        $region20: #{tpu_custom_call.1} parent=11 // pred_fallthru
          _
        // Predicated region
        $region21: #{tpu_custom_call.1} parent=11 // pred_check
          %p198 = pneg %p109
        $region22: #{tpu_custom_call.1} parent=11 // pred_check_branch
          %200 = sbr.rel (%p198) target = $region24
        $region23: #{tpu_custom_call.1} parent=11 // pred_region
          %s202 = ssub.s32 1024, 1024
          %203 = vsyncadd [#allocation6], %s202
          %s204 = sshll.u32 [#allocation5], 4
          %s205 = int_to_ptr.vmem [resolvable:$true] %s204
          %210 = dma.hbm_to_vmem [thread:$0]  %s3, 1024, %s205, [#allocation6], 64, 64, 4
        $region24: #{tpu_custom_call.1} parent=11 // pred_fallthru
          _
        // Predicated region
        $region25: #{tpu_custom_call.1} parent=11 // pred_check
          %p211 = pneg %p130
        $region26: #{tpu_custom_call.1} parent=11 // pred_check_branch
          %213 = sbr.rel (%p211) target = $region28
        $region27: #{tpu_custom_call.1} parent=11 // pred_region
          %s215 = ssub.s32 8192, 8192
          %216 = vsyncadd [#allocation6], %s215
          %s217 = sshll.u32 [#allocation7], 4
          %s218 = int_to_ptr.vmem [resolvable:$true] %s217
          %223 = dma.hbm_to_vmem [thread:$0]  %s4, 8192, %s218, [#allocation6], 512, 512, 32
        $region28: #{tpu_custom_call.1} parent=11 // pred_fallthru
          _
        // Predicated region
        $region29: #{tpu_custom_call.1} parent=11 // pred_check
          %p224 = pneg %p151
        $region30: #{tpu_custom_call.1} parent=11 // pred_check_branch
          %226 = sbr.rel (%p224) target = $region32
        $region31: #{tpu_custom_call.1} parent=11 // pred_region
          %s228 = ssub.s32 4096, 4096
          %229 = vsyncadd [#allocation9], %s228
          %s230 = sshll.u32 [#allocation8], 4
          %s231 = int_to_ptr.vmem [resolvable:$true] %s230
          %236 = dma.hbm_to_vmem [thread:$0]  %s5, 4096, %s231, [#allocation9], 64, 64, 4
        $region32: #{tpu_custom_call.1} parent=11 // pred_fallthru
          _
      $region12: #{tpu_custom_call.1} parent=5 // pred_fallthru
        _
      %p237 = scmp.lt.s32.totalorder %s20, 2
      // Predicated region
      $region33: #{tpu_custom_call.1} parent=5 // pred_check
        %p238 = pneg %p237
      $region34: #{tpu_custom_call.1} parent=5 // pred_check_branch
        %240 = sbr.rel (%p238) target = $region36
      $region35: #{tpu_custom_call.1} parent=5 // pred_region
        // Predicated region
        $region37: #{tpu_custom_call.1} parent=35 // pred_check
          %p241 = pneg %p40
        $region38: #{tpu_custom_call.1} parent=35 // pred_check_branch
          %243 = sbr.rel (%p241) target = $region40
        $region39: #{tpu_custom_call.1} parent=35 // pred_region
          %s244 = sand.u32 %s30, 1
          %s245 = scalar_lea.sflag [#allocation3], %s244
          %s246 = sand.u32 %s30, 1
          %s247 = smul.addr %s246, 256
          %s248 = scalar_lea.vmem [#allocation2], %s247
          %s249 = smul.u32 16, %s20
          %s251 = ssub.s32 4096, 4096
          %252 = vsyncadd %s245, %s251
          %s253 = smul.addr %s249, 2
          %s254 = smul.addr %s253, 128
          %s255 = scalar_lea.hbm %s0, %s254
          %s256 = sshll.u32 %s248, 4
          %s257 = int_to_ptr.vmem [resolvable:$true] %s256
          %262 = dma.hbm_to_vmem [thread:$0]  %s255, 4096, %s257, %s245, 128, 128, 8
        $region40: #{tpu_custom_call.1} parent=35 // pred_fallthru
          _
      $region36: #{tpu_custom_call.1} parent=5 // pred_fallthru
        _
      %p263 = scmp.le.s32.totalorder 1, %s20
      %p264 = scmp.lt.s32.totalorder %s20, 3
      %p265 = pnand %p263, %p264
      %p266 = pneg %p265
      // Predicated region
      $region41: #{tpu_custom_call.1} parent=5 // pred_check
        _
      $region42: #{tpu_custom_call.1} parent=5 // pred_check_branch
        %268 = sbr.rel (%p265) target = $region44
      $region43: #{tpu_custom_call.1} parent=5 // pred_region
        %s269 = ssub.s32 %s20, 1
        %s270 = sand.u32 %s33, 1
        %s271 = scalar_lea.sflag [#allocation3], %s270
        %s272 = sand.u32 %s33, 1
        %s273 = smul.addr %s272, 256
        %s274 = scalar_lea.vmem [#allocation2], %s273
        // Predicated region
        $region45: #{tpu_custom_call.1} parent=43 // pred_check
          %p275 = pneg %p46
        $region46: #{tpu_custom_call.1} parent=43 // pred_check_branch
          %277 = sbr.rel (%p275) target = $region48
        $region47: #{tpu_custom_call.1} parent=43 // pred_region
          %278 = dma.done %s271, 4096
        $region48: #{tpu_custom_call.1} parent=43 // pred_fallthru
          _
        // Predicated region
        $region49: #{tpu_custom_call.1} parent=43 // pred_check
          %p279 = pneg %p109
        $region50: #{tpu_custom_call.1} parent=43 // pred_check_branch
          %281 = sbr.rel (%p279) target = $region52
        $region51: #{tpu_custom_call.1} parent=43 // pred_region
          %282 = dma.done [#allocation6], 1024
        $region52: #{tpu_custom_call.1} parent=43 // pred_fallthru
          _
        // Predicated region
        $region53: #{tpu_custom_call.1} parent=43 // pred_check
          %p283 = pneg %p130
        $region54: #{tpu_custom_call.1} parent=43 // pred_check_branch
          %285 = sbr.rel (%p283) target = $region56
        $region55: #{tpu_custom_call.1} parent=43 // pred_region
          %286 = dma.done [#allocation6], 8192
        $region56: #{tpu_custom_call.1} parent=43 // pred_fallthru
          _
        // Predicated region
        $region57: #{tpu_custom_call.1} parent=43 // pred_check
          %p287 = pneg %p151
        $region58: #{tpu_custom_call.1} parent=43 // pred_check_branch
          %289 = sbr.rel (%p287) target = $region60
        $region59: #{tpu_custom_call.1} parent=43 // pred_region
          %290 = dma.done [#allocation9], 4096
        $region60: #{tpu_custom_call.1} parent=43 // pred_fallthru
          _
        %s291 = sand.u32 %s33, 1
        %s292 = scalar_lea.sflag [#allocation3], %s291
        %s293 = sand.u32 %s33, 1
        %s294 = smul.addr %s293, 256
        %s295 = scalar_lea.vmem [#allocation2], %s294
        %p296 = pneg %p46
        %p297 = pneg %p43
        %p298 = pneg %p67
        %p299 = pneg %p64
        %p300 = pneg %p88
        %p301 = pneg %p85
        %p302 = pneg %p109
        %p303 = pneg %p106
        %p304 = pneg %p130
        %p305 = pneg %p127
        %p306 = pneg %p151
        %p307 = pneg %p148
        %p308 = pneg %p177
        %p309 = pneg %p174
        %s310 = sand.u32 %s164, 1
        %s311 = scalar_lea.sflag [#allocation4], %s310
        %s312 = sand.u32 %s164, 1
        %s313 = smul.addr %s312, 256
        %s314 = scalar_lea.vmem [#allocation10], %s313
        %s315 = smul.u32 16, %s25
        %s316 = smul.u32 16, %s25
        %v318 = vld [vmem:[%s274] sm:$0xff]
        %v319 = vld [vmem:[%s274 + $0x8] sm:$0xff]
        %v320 = vld [vmem:[%s274 + $0x10] sm:$0xff]
        %v321 = vld [vmem:[%s274 + $0x18] sm:$0xff]
        %v322 = vld [vmem:[%s274 + $0x20] sm:$0xff]
        %v323 = vld [vmem:[%s274 + $0x28] sm:$0xff]
        %v324 = vld [vmem:[%s274 + $0x30] sm:$0xff]
        %v325 = vld [vmem:[%s274 + $0x38] sm:$0xff]
        %v326 = vld [vmem:[%s274 + $0x40] sm:$0xff]
        %v327 = vld [vmem:[%s274 + $0x48] sm:$0xff]
        %v328 = vld [vmem:[%s274 + $0x50] sm:$0xff]
        %v329 = vld [vmem:[%s274 + $0x58] sm:$0xff]
        %v330 = vld [vmem:[%s274 + $0x60] sm:$0xff]
        %v331 = vld [vmem:[%s274 + $0x68] sm:$0xff]
        %v332 = vld [vmem:[%s274 + $0x70] sm:$0xff]
        %v333 = vld [vmem:[%s274 + $0x78] sm:$0xff]
        %v334 = vld [vmem:[%s274 + $0x80] sm:$0xff]
        %v335 = vld [vmem:[%s274 + $0x88] sm:$0xff]
        %v336 = vld [vmem:[%s274 + $0x90] sm:$0xff]
        %v337 = vld [vmem:[%s274 + $0x98] sm:$0xff]
        %v338 = vld [vmem:[%s274 + $0xa0] sm:$0xff]
        %v339 = vld [vmem:[%s274 + $0xa8] sm:$0xff]
        %v340 = vld [vmem:[%s274 + $0xb0] sm:$0xff]
        %v341 = vld [vmem:[%s274 + $0xb8] sm:$0xff]
        %v342 = vld [vmem:[%s274 + $0xc0] sm:$0xff]
        %v343 = vld [vmem:[%s274 + $0xc8] sm:$0xff]
        %v344 = vld [vmem:[%s274 + $0xd0] sm:$0xff]
        %v345 = vld [vmem:[%s274 + $0xd8] sm:$0xff]
        %v346 = vld [vmem:[%s274 + $0xe0] sm:$0xff]
        %v347 = vld [vmem:[%s274 + $0xe8] sm:$0xff]
        %v348 = vld [vmem:[%s274 + $0xf0] sm:$0xff]
        %v349 = vld [vmem:[%s274 + $0xf8] sm:$0xff]
        %v350 = vmul.f32 %v318, %v318
        %v351 = vmul.f32 %v319, %v319
        %v352 = vmul.f32 %v320, %v320
        %v353 = vmul.f32 %v321, %v321
        %v354 = vmul.f32 %v322, %v322
        %v355 = vmul.f32 %v323, %v323
        %v356 = vmul.f32 %v324, %v324
        %v357 = vmul.f32 %v325, %v325
        %v358 = vmul.f32 %v326, %v326
        %v359 = vmul.f32 %v327, %v327
        %v360 = vmul.f32 %v328, %v328
        %v361 = vmul.f32 %v329, %v329
        %v362 = vmul.f32 %v330, %v330
        %v363 = vmul.f32 %v331, %v331
        %v364 = vmul.f32 %v332, %v332
        %v365 = vmul.f32 %v333, %v333
        %v366 = vmul.f32 %v334, %v334
        %v367 = vmul.f32 %v335, %v335
        %v368 = vmul.f32 %v336, %v336
        %v369 = vmul.f32 %v337, %v337
        %v370 = vmul.f32 %v338, %v338
        %v371 = vmul.f32 %v339, %v339
        %v372 = vmul.f32 %v340, %v340
        %v373 = vmul.f32 %v341, %v341
        %v374 = vmul.f32 %v342, %v342
        %v375 = vmul.f32 %v343, %v343
        %v376 = vmul.f32 %v344, %v344
        %v377 = vmul.f32 %v345, %v345
        %v378 = vmul.f32 %v346, %v346
        %v379 = vmul.f32 %v347, %v347
        %v380 = vmul.f32 %v348, %v348
        %v381 = vmul.f32 %v349, %v349
        %382 = vadd.xlane.f32.xlu0 %v350
        %v383 = vpop.xlane.xlu0 %382
        %384 = vadd.xlane.f32.xlu0 %v351
        %v385 = vpop.xlane.xlu0 %384
        %386 = vadd.xlane.f32.xlu0 %v352
        %v387 = vpop.xlane.xlu0 %386
        %388 = vadd.xlane.f32.xlu0 %v353
        %v389 = vpop.xlane.xlu0 %388
        %390 = vadd.xlane.f32.xlu0 %v354
        %v391 = vpop.xlane.xlu0 %390
        %392 = vadd.xlane.f32.xlu0 %v355
        %v393 = vpop.xlane.xlu0 %392
        %394 = vadd.xlane.f32.xlu0 %v356
        %v395 = vpop.xlane.xlu0 %394
        %396 = vadd.xlane.f32.xlu0 %v357
        %v397 = vpop.xlane.xlu0 %396
        %398 = vadd.xlane.f32.xlu0 %v358
        %v399 = vpop.xlane.xlu0 %398
        %400 = vadd.xlane.f32.xlu0 %v359
        %v401 = vpop.xlane.xlu0 %400
        %402 = vadd.xlane.f32.xlu0 %v360
        %v403 = vpop.xlane.xlu0 %402
        %404 = vadd.xlane.f32.xlu0 %v361
        %v405 = vpop.xlane.xlu0 %404
        %406 = vadd.xlane.f32.xlu0 %v362
        %v407 = vpop.xlane.xlu0 %406
        %408 = vadd.xlane.f32.xlu0 %v363
        %v409 = vpop.xlane.xlu0 %408
        %410 = vadd.xlane.f32.xlu0 %v364
        %v411 = vpop.xlane.xlu0 %410
        %412 = vadd.xlane.f32.xlu0 %v365
        %v413 = vpop.xlane.xlu0 %412
        %414 = vadd.xlane.f32.xlu0 %v366
        %v415 = vpop.xlane.xlu0 %414
        %416 = vadd.xlane.f32.xlu0 %v367
        %v417 = vpop.xlane.xlu0 %416
        %418 = vadd.xlane.f32.xlu0 %v368
        %v419 = vpop.xlane.xlu0 %418
        %420 = vadd.xlane.f32.xlu0 %v369
        %v421 = vpop.xlane.xlu0 %420
        %422 = vadd.xlane.f32.xlu0 %v370
        %v423 = vpop.xlane.xlu0 %422
        %424 = vadd.xlane.f32.xlu0 %v371
        %v425 = vpop.xlane.xlu0 %424
        %426 = vadd.xlane.f32.xlu0 %v372
        %v427 = vpop.xlane.xlu0 %426
        %428 = vadd.xlane.f32.xlu0 %v373
        %v429 = vpop.xlane.xlu0 %428
        %430 = vadd.xlane.f32.xlu0 %v374
        %v431 = vpop.xlane.xlu0 %430
        %432 = vadd.xlane.f32.xlu0 %v375
        %v433 = vpop.xlane.xlu0 %432
        %434 = vadd.xlane.f32.xlu0 %v376
        %v435 = vpop.xlane.xlu0 %434
        %436 = vadd.xlane.f32.xlu0 %v377
        %v437 = vpop.xlane.xlu0 %436
        %438 = vadd.xlane.f32.xlu0 %v378
        %v439 = vpop.xlane.xlu0 %438
        %440 = vadd.xlane.f32.xlu0 %v379
        %v441 = vpop.xlane.xlu0 %440
        %442 = vadd.xlane.f32.xlu0 %v380
        %v443 = vpop.xlane.xlu0 %442
        %444 = vadd.xlane.f32.xlu0 %v381
        %v445 = vpop.xlane.xlu0 %444
        %v446 = vrcp.pop 128.0
        %v447 = vmul.f32 %v383, %v446
        %v448 = vmul.f32 %v385, %v446
        %v449 = vmul.f32 %v387, %v446
        %v450 = vmul.f32 %v389, %v446
        %v451 = vmul.f32 %v391, %v446
        %v452 = vmul.f32 %v393, %v446
        %v453 = vmul.f32 %v395, %v446
        %v454 = vmul.f32 %v397, %v446
        %v455 = vmul.f32 %v399, %v446
        %v456 = vmul.f32 %v401, %v446
        %v457 = vmul.f32 %v403, %v446
        %v458 = vmul.f32 %v405, %v446
        %v459 = vmul.f32 %v407, %v446
        %v460 = vmul.f32 %v409, %v446
        %v461 = vmul.f32 %v411, %v446
        %v462 = vmul.f32 %v413, %v446
        %v463 = vmul.f32 %v415, %v446
        %v464 = vmul.f32 %v417, %v446
        %v465 = vmul.f32 %v419, %v446
        %v466 = vmul.f32 %v421, %v446
        %v467 = vmul.f32 %v423, %v446
        %v468 = vmul.f32 %v425, %v446
        %v469 = vmul.f32 %v427, %v446
        %v470 = vmul.f32 %v429, %v446
        %v471 = vmul.f32 %v431, %v446
        %v472 = vmul.f32 %v433, %v446
        %v473 = vmul.f32 %v435, %v446
        %v474 = vmul.f32 %v437, %v446
        %v475 = vmul.f32 %v439, %v446
        %v476 = vmul.f32 %v441, %v446
        %v477 = vmul.f32 %v443, %v446
        %v478 = vmul.f32 %v445, %v446
        %v479 = vadd.f32 %v447, 1e-05
        %v480 = vadd.f32 %v448, 1e-05
        %v481 = vadd.f32 %v449, 1e-05
        %v482 = vadd.f32 %v450, 1e-05
        %v483 = vadd.f32 %v451, 1e-05
        %v484 = vadd.f32 %v452, 1e-05
        %v485 = vadd.f32 %v453, 1e-05
        %v486 = vadd.f32 %v454, 1e-05
        %v487 = vadd.f32 %v455, 1e-05
        %v488 = vadd.f32 %v456, 1e-05
        %v489 = vadd.f32 %v457, 1e-05
        %v490 = vadd.f32 %v458, 1e-05
        %v491 = vadd.f32 %v459, 1e-05
        %v492 = vadd.f32 %v460, 1e-05
        %v493 = vadd.f32 %v461, 1e-05
        %v494 = vadd.f32 %v462, 1e-05
        %v495 = vadd.f32 %v463, 1e-05
        %v496 = vadd.f32 %v464, 1e-05
        %v497 = vadd.f32 %v465, 1e-05
        %v498 = vadd.f32 %v466, 1e-05
        %v499 = vadd.f32 %v467, 1e-05
        %v500 = vadd.f32 %v468, 1e-05
        %v501 = vadd.f32 %v469, 1e-05
        %v502 = vadd.f32 %v470, 1e-05
        %v503 = vadd.f32 %v471, 1e-05
        %v504 = vadd.f32 %v472, 1e-05
        %v505 = vadd.f32 %v473, 1e-05
        %v506 = vadd.f32 %v474, 1e-05
        %v507 = vadd.f32 %v475, 1e-05
        %v508 = vadd.f32 %v476, 1e-05
        %v509 = vadd.f32 %v477, 1e-05
        %v510 = vadd.f32 %v478, 1e-05
        %v511 = vrsqrt.pop %v479
        %v512 = vrsqrt.pop %v480
        %v513 = vrsqrt.pop %v481
        %v514 = vrsqrt.pop %v482
        %v515 = vrsqrt.pop %v483
        %v516 = vrsqrt.pop %v484
        %v517 = vrsqrt.pop %v485
        %v518 = vrsqrt.pop %v486
        %v519 = vrsqrt.pop %v487
        %v520 = vrsqrt.pop %v488
        %v521 = vrsqrt.pop %v489
        %v522 = vrsqrt.pop %v490
        %v523 = vrsqrt.pop %v491
        %v524 = vrsqrt.pop %v492
        %v525 = vrsqrt.pop %v493
        %v526 = vrsqrt.pop %v494
        %v527 = vrsqrt.pop %v495
        %v528 = vrsqrt.pop %v496
        %v529 = vrsqrt.pop %v497
        %v530 = vrsqrt.pop %v498
        %v531 = vrsqrt.pop %v499
        %v532 = vrsqrt.pop %v500
        %v533 = vrsqrt.pop %v501
        %v534 = vrsqrt.pop %v502
        %v535 = vrsqrt.pop %v503
        %v536 = vrsqrt.pop %v504
        %v537 = vrsqrt.pop %v505
        %v538 = vrsqrt.pop %v506
        %v539 = vrsqrt.pop %v507
        %v540 = vrsqrt.pop %v508
        %v541 = vrsqrt.pop %v509
        %v542 = vrsqrt.pop %v510
        %v543 = vmul.f32 %v318, %v511
        %v544 = vmul.f32 %v319, %v512
        %v545 = vmul.f32 %v320, %v513
        %v546 = vmul.f32 %v321, %v514
        %v547 = vmul.f32 %v322, %v515
        %v548 = vmul.f32 %v323, %v516
        %v549 = vmul.f32 %v324, %v517
        %v550 = vmul.f32 %v325, %v518
        %v551 = vmul.f32 %v326, %v519
        %v552 = vmul.f32 %v327, %v520
        %v553 = vmul.f32 %v328, %v521
        %v554 = vmul.f32 %v329, %v522
        %v555 = vmul.f32 %v330, %v523
        %v556 = vmul.f32 %v331, %v524
        %v557 = vmul.f32 %v332, %v525
        %v558 = vmul.f32 %v333, %v526
        %v559 = vmul.f32 %v334, %v527
        %v560 = vmul.f32 %v335, %v528
        %v561 = vmul.f32 %v336, %v529
        %v562 = vmul.f32 %v337, %v530
        %v563 = vmul.f32 %v338, %v531
        %v564 = vmul.f32 %v339, %v532
        %v565 = vmul.f32 %v340, %v533
        %v566 = vmul.f32 %v341, %v534
        %v567 = vmul.f32 %v342, %v535
        %v568 = vmul.f32 %v343, %v536
        %v569 = vmul.f32 %v344, %v537
        %v570 = vmul.f32 %v345, %v538
        %v571 = vmul.f32 %v346, %v539
        %v572 = vmul.f32 %v347, %v540
        %v573 = vmul.f32 %v348, %v541
        %v574 = vmul.f32 %v349, %v542
        %v575 = vld [vmem:[%s1] sm:$0x1]
        %v577 = vlaneseq
        %v578 = vshrl.u32 %v577, 7
        %v579 = vsub.s32 0, %v578
        %v580 = vrot.slane %v575, %v579
        %v582 = vmul.f32 %v543, %v580
        %v583 = vmul.f32 %v544, %v580
        %v584 = vmul.f32 %v545, %v580
        %v585 = vmul.f32 %v546, %v580
        %v586 = vmul.f32 %v547, %v580
        %v587 = vmul.f32 %v548, %v580
        %v588 = vmul.f32 %v549, %v580
        %v589 = vmul.f32 %v550, %v580
        %v590 = vmul.f32 %v551, %v580
        %v591 = vmul.f32 %v552, %v580
        %v592 = vmul.f32 %v553, %v580
        %v593 = vmul.f32 %v554, %v580
        %v594 = vmul.f32 %v555, %v580
        %v595 = vmul.f32 %v556, %v580
        %v596 = vmul.f32 %v557, %v580
        %v597 = vmul.f32 %v558, %v580
        %v598 = vmul.f32 %v559, %v580
        %v599 = vmul.f32 %v560, %v580
        %v600 = vmul.f32 %v561, %v580
        %v601 = vmul.f32 %v562, %v580
        %v602 = vmul.f32 %v563, %v580
        %v603 = vmul.f32 %v564, %v580
        %v604 = vmul.f32 %v565, %v580
        %v605 = vmul.f32 %v566, %v580
        %v606 = vmul.f32 %v567, %v580
        %v607 = vmul.f32 %v568, %v580
        %v608 = vmul.f32 %v569, %v580
        %v609 = vmul.f32 %v570, %v580
        %v610 = vmul.f32 %v571, %v580
        %v611 = vmul.f32 %v572, %v580
        %v612 = vmul.f32 %v573, %v580
        %v613 = vmul.f32 %v574, %v580
        %v614 = vadd.f32 %v582, %v583
        %v615 = vrot.slane %v614, 4
        %v616 = vadd.f32 %v614, %v615
        %v617 = vrot.slane %v616, 2
        %v618 = vadd.f32 %v616, %v617
        %v619 = vrot.slane %v618, 1
        %v620 = vadd.f32 %v618, %v619
        %v621 = vadd.f32 %v584, %v585
        %v622 = vrot.slane %v621, 4
        %v623 = vadd.f32 %v621, %v622
        %v624 = vrot.slane %v623, 2
        %v625 = vadd.f32 %v623, %v624
        %v626 = vrot.slane %v625, 1
        %v627 = vadd.f32 %v625, %v626
        %v628 = vadd.f32 %v586, %v587
        %v629 = vrot.slane %v628, 4
        %v630 = vadd.f32 %v628, %v629
        %v631 = vrot.slane %v630, 2
        %v632 = vadd.f32 %v630, %v631
        %v633 = vrot.slane %v632, 1
        %v634 = vadd.f32 %v632, %v633
        %v635 = vadd.f32 %v588, %v589
        %v636 = vrot.slane %v635, 4
        %v637 = vadd.f32 %v635, %v636
        %v638 = vrot.slane %v637, 2
        %v639 = vadd.f32 %v637, %v638
        %v640 = vrot.slane %v639, 1
        %v641 = vadd.f32 %v639, %v640
        %v642 = vadd.f32 %v590, %v591
        %v643 = vrot.slane %v642, 4
        %v644 = vadd.f32 %v642, %v643
        %v645 = vrot.slane %v644, 2
        %v646 = vadd.f32 %v644, %v645
        %v647 = vrot.slane %v646, 1
        %v648 = vadd.f32 %v646, %v647
        %v649 = vadd.f32 %v592, %v593
        %v650 = vrot.slane %v649, 4
        %v651 = vadd.f32 %v649, %v650
        %v652 = vrot.slane %v651, 2
        %v653 = vadd.f32 %v651, %v652
        %v654 = vrot.slane %v653, 1
        %v655 = vadd.f32 %v653, %v654
        %v656 = vadd.f32 %v594, %v595
        %v657 = vrot.slane %v656, 4
        %v658 = vadd.f32 %v656, %v657
        %v659 = vrot.slane %v658, 2
        %v660 = vadd.f32 %v658, %v659
        %v661 = vrot.slane %v660, 1
        %v662 = vadd.f32 %v660, %v661
        %v663 = vadd.f32 %v596, %v597
        %v664 = vrot.slane %v663, 4
        %v665 = vadd.f32 %v663, %v664
        %v666 = vrot.slane %v665, 2
        %v667 = vadd.f32 %v665, %v666
        %v668 = vrot.slane %v667, 1
        %v669 = vadd.f32 %v667, %v668
        %v670 = vadd.f32 %v598, %v599
        %v671 = vrot.slane %v670, 4
        %v672 = vadd.f32 %v670, %v671
        %v673 = vrot.slane %v672, 2
        %v674 = vadd.f32 %v672, %v673
        %v675 = vrot.slane %v674, 1
        %v676 = vadd.f32 %v674, %v675
        %v677 = vadd.f32 %v600, %v601
        %v678 = vrot.slane %v677, 4
        %v679 = vadd.f32 %v677, %v678
        %v680 = vrot.slane %v679, 2
        %v681 = vadd.f32 %v679, %v680
        %v682 = vrot.slane %v681, 1
        %v683 = vadd.f32 %v681, %v682
        %v684 = vadd.f32 %v602, %v603
        %v685 = vrot.slane %v684, 4
        %v686 = vadd.f32 %v684, %v685
        %v687 = vrot.slane %v686, 2
        %v688 = vadd.f32 %v686, %v687
        %v689 = vrot.slane %v688, 1
        %v690 = vadd.f32 %v688, %v689
        %v691 = vadd.f32 %v604, %v605
        %v692 = vrot.slane %v691, 4
        %v693 = vadd.f32 %v691, %v692
        %v694 = vrot.slane %v693, 2
        %v695 = vadd.f32 %v693, %v694
        %v696 = vrot.slane %v695, 1
        %v697 = vadd.f32 %v695, %v696
        %v698 = vadd.f32 %v606, %v607
        %v699 = vrot.slane %v698, 4
        %v700 = vadd.f32 %v698, %v699
        %v701 = vrot.slane %v700, 2
        %v702 = vadd.f32 %v700, %v701
        %v703 = vrot.slane %v702, 1
        %v704 = vadd.f32 %v702, %v703
        %v705 = vadd.f32 %v608, %v609
        %v706 = vrot.slane %v705, 4
        %v707 = vadd.f32 %v705, %v706
        %v708 = vrot.slane %v707, 2
        %v709 = vadd.f32 %v707, %v708
        %v710 = vrot.slane %v709, 1
        %v711 = vadd.f32 %v709, %v710
        %v712 = vadd.f32 %v610, %v611
        %v713 = vrot.slane %v712, 4
        %v714 = vadd.f32 %v712, %v713
        %v715 = vrot.slane %v714, 2
        %v716 = vadd.f32 %v714, %v715
        %v717 = vrot.slane %v716, 1
        %v718 = vadd.f32 %v716, %v717
        %v719 = vadd.f32 %v612, %v613
        %v720 = vrot.slane %v719, 4
        %v721 = vadd.f32 %v719, %v720
        %v722 = vrot.slane %v721, 2
        %v723 = vadd.f32 %v721, %v722
        %v724 = vrot.slane %v723, 1
        %v725 = vadd.f32 %v723, %v724
        %v726 = vpack.c.bf16 %v620, %v620
        %v727 = vpack.c.bf16 %v627, %v627
        %v728 = vpack.c.bf16 %v634, %v634
        %v729 = vpack.c.bf16 %v641, %v641
        %v730 = vpack.c.bf16 %v648, %v648
        %v731 = vpack.c.bf16 %v655, %v655
        %v732 = vpack.c.bf16 %v662, %v662
        %v733 = vpack.c.bf16 %v669, %v669
        %v734 = vpack.c.bf16 %v676, %v676
        %v735 = vpack.c.bf16 %v683, %v683
        %v736 = vpack.c.bf16 %v690, %v690
        %v737 = vpack.c.bf16 %v697, %v697
        %v738 = vpack.c.bf16 %v704, %v704
        %v739 = vpack.c.bf16 %v711, %v711
        %v740 = vpack.c.bf16 %v718, %v718
        %v741 = vpack.c.bf16 %v725, %v725
        %v742 = vld [vmem:[#allocation5] sm:$0xf]
        %v743 = vld [vmem:[#allocation5 + $0x4] sm:$0xf]
        %v744 = vld [vmem:[#allocation5 + $0x8] sm:$0xf]
        %v745 = vld [vmem:[#allocation5 + $0xc] sm:$0xf]
        %v746 = vld [vmem:[#allocation5 + $0x10] sm:$0xf]
        %v747 = vld [vmem:[#allocation5 + $0x14] sm:$0xf]
        %v748 = vld [vmem:[#allocation5 + $0x18] sm:$0xf]
        %v749 = vld [vmem:[#allocation5 + $0x1c] sm:$0xf]
        %v750 = vld [vmem:[#allocation5 + $0x20] sm:$0xf]
        %v751 = vld [vmem:[#allocation5 + $0x24] sm:$0xf]
        %v752 = vld [vmem:[#allocation5 + $0x28] sm:$0xf]
        %v753 = vld [vmem:[#allocation5 + $0x2c] sm:$0xf]
        %v754 = vld [vmem:[#allocation5 + $0x30] sm:$0xf]
        %v755 = vld [vmem:[#allocation5 + $0x34] sm:$0xf]
        %v756 = vld [vmem:[#allocation5 + $0x38] sm:$0xf]
        %v757 = vld [vmem:[#allocation5 + $0x3c] sm:$0xf]
        %v774 = vunpack.c.l.b16 %v726
        %v775 = vunpack.c.l.b16 %v727
        %v776 = vunpack.c.l.b16 %v728
        %v777 = vunpack.c.l.b16 %v729
        %v778 = vunpack.c.l.b16 %v730
        %v779 = vunpack.c.l.b16 %v731
        %v780 = vunpack.c.l.b16 %v732
        %v781 = vunpack.c.l.b16 %v733
        %v782 = vunpack.c.l.b16 %v734
        %v783 = vunpack.c.l.b16 %v735
        %v784 = vunpack.c.l.b16 %v736
        %v785 = vunpack.c.l.b16 %v737
        %v786 = vunpack.c.l.b16 %v738
        %v787 = vunpack.c.l.b16 %v739
        %v788 = vunpack.c.l.b16 %v740
        %v789 = vunpack.c.l.b16 %v741
        %vm790 = vcmask 1041409
        %v791 = vsel %vm790, %v775, %v774
        %vm792 = vcmask 1042434
        %v793 = vsel %vm792, %v776, %v791
        %vm794 = vcmask 1043459
        %v795 = vsel %vm794, %v777, %v793
        %vm796 = vcmask 1044484
        %v797 = vsel %vm796, %v778, %v795
        %vm798 = vcmask 1045509
        %v799 = vsel %vm798, %v779, %v797
        %vm800 = vcmask 1046534
        %v801 = vsel %vm800, %v780, %v799
        %vm802 = vcmask 1047559
        %v803 = vsel %vm802, %v781, %v801
        %v804 = vsel %vm790, %v783, %v782
        %v805 = vsel %vm792, %v784, %v804
        %v806 = vsel %vm794, %v785, %v805
        %v807 = vsel %vm796, %v786, %v806
        %v808 = vsel %vm798, %v787, %v807
        %v809 = vsel %vm800, %v788, %v808
        %v810 = vsel %vm802, %v789, %v809
        %v811 = vpack.c.b16 %v810, %v803
        %v829 = vunpack.c.l.b16 %v742
        %v830 = vunpack.c.l.b16 %v743
        %v831 = vunpack.c.l.b16 %v744
        %v832 = vunpack.c.l.b16 %v745
        %v833 = vunpack.c.l.b16 %v746
        %v834 = vunpack.c.l.b16 %v747
        %v835 = vunpack.c.l.b16 %v748
        %v836 = vunpack.c.l.b16 %v749
        %v837 = vunpack.c.l.b16 %v750
        %v838 = vunpack.c.l.b16 %v751
        %v839 = vunpack.c.l.b16 %v752
        %v840 = vunpack.c.l.b16 %v753
        %v841 = vunpack.c.l.b16 %v754
        %v842 = vunpack.c.l.b16 %v755
        %v843 = vunpack.c.l.b16 %v756
        %v844 = vunpack.c.l.b16 %v757
        %v845 = vpack.c.b16 %v830, %v829
        %v846 = vpack.c.b16 %v832, %v831
        %v847 = vpack.c.b16 %v834, %v833
        %v848 = vpack.c.b16 %v836, %v835
        %v849 = vpack.c.b16 %v838, %v837
        %v850 = vpack.c.b16 %v840, %v839
        %v851 = vpack.c.b16 %v842, %v841
        %v852 = vpack.c.b16 %v844, %v843
        %861 = vmatprep.subr.bf16.mxu0 0
        %862 = vmatpush1.bf16.msra.mxu0 %v845
        %863 = vmatprep.subr.bf16.mxu0 0
        %864 = vmatpush1.bf16.msra.mxu0 %v846
        %865 = vmatprep.subr.bf16.mxu0 0
        %866 = vmatpush1.bf16.msra.mxu0 %v847
        %867 = vmatprep.subr.bf16.mxu0 0
        %868 = vmatpush1.bf16.msra.mxu0 %v848
        %869 = vmatprep.subr.bf16.mxu0 0
        %870 = vmatpush1.bf16.msra.mxu0 %v849
        %871 = vmatprep.subr.bf16.mxu0 0
        %872 = vmatpush1.bf16.msra.mxu0 %v850
        %873 = vmatprep.subr.bf16.mxu0 0
        %874 = vmatpush1.bf16.msra.mxu0 %v851
        %875 = vmatprep.subr.bf16.mxu0 0
        %876 = vmatpush1.bf16.msra.mxu0 %v852
        %877 = vmatprep.subr.bf16.mxu0 0
        %878 = vmatpush1.bf16.msra.mxu0 0
        %879 = vmatprep.subr.bf16.mxu0 0
        %880 = vmatpush1.bf16.msra.mxu0 0
        %881 = vmatprep.subr.bf16.mxu0 0
        %882 = vmatpush1.bf16.msra.mxu0 0
        %883 = vmatprep.subr.bf16.mxu0 0
        %884 = vmatpush1.bf16.msra.mxu0 0
        %885 = vmatprep.subr.bf16.mxu0 0
        %886 = vmatpush1.bf16.msra.mxu0 0
        %887 = vmatprep.subr.bf16.mxu0 0
        %888 = vmatpush1.bf16.msra.mxu0 0
        %889 = vmatprep.subr.bf16.mxu0 0
        %890 = vmatpush1.bf16.msra.mxu0 0
        %891 = vmatprep.subr.bf16.mxu0 0
        %892 = vmatpush1.bf16.msra.mxu0 0
        %893 = vmatprep.mubr.bf16.mxu0 0
        %894 = vmatmul.mubr.bf16.gmra.mrb[0].mxu0 %v811
        %v895 = vpop.f32.mrb[0].mxu0
        %v896 = vadd.f32 0.0, %v895
        %v897 = vpop.f32.mrb[0].mxu0
        %v898 = vpop.f32.mrb[0].mxu0
        %v899 = vadd.f32 0.0, %v898
        %v900 = vpop.f32.mrb[0].mxu0
        %901 = vdwg.mxu0
        %v904 = vcombine.high %v896, %v896
        %v906 = vunpack.c.l.s4 1966171168
        %v907 = vunpack.c.0.s8 %v906
        %v908 = vlaneseq
        %v909 = vshrl.u32 %v908, 7
        %v910 = vsub.s32 %v907, %v909
        %v911 = vrot.slane %v896, %v910
        %v913 = vunpack.c.l.s4 1966171168
        %v914 = vunpack.c.0.s8 %v913
        %v915 = vlaneseq
        %v916 = vshrl.u32 %v915, 7
        %v917 = vsub.s32 %v914, %v916
        %v918 = vrot.slane %v904, %v917
        %v919 = vcombine.high %v911, %v911
        %v920 = vcombine.high %v918, %v918
        %v922 = vunpack.c.l.s4 1966171168
        %v923 = vunpack.c.0.s8 %v922
        %v924 = vlaneseq
        %v925 = vshrl.u32 %v924, 7
        %v926 = vsub.s32 %v923, %v925
        %v927 = vrot.slane %v911, %v926
        %v929 = vunpack.c.l.s4 1966171168
        %v930 = vunpack.c.0.s8 %v929
        %v931 = vlaneseq
        %v932 = vshrl.u32 %v931, 7
        %v933 = vsub.s32 %v930, %v932
        %v934 = vrot.slane %v918, %v933
        %v936 = vunpack.c.l.s4 1966171168
        %v937 = vunpack.c.0.s8 %v936
        %v938 = vlaneseq
        %v939 = vshrl.u32 %v938, 7
        %v940 = vsub.s32 %v937, %v939
        %v941 = vrot.slane %v919, %v940
        %v943 = vunpack.c.l.s4 1966171168
        %v944 = vunpack.c.0.s8 %v943
        %v945 = vlaneseq
        %v946 = vshrl.u32 %v945, 7
        %v947 = vsub.s32 %v944, %v946
        %v948 = vrot.slane %v920, %v947
        %v949 = vcombine.high %v927, %v927
        %v950 = vcombine.high %v934, %v934
        %v951 = vcombine.high %v941, %v941
        %v952 = vcombine.high %v948, %v948
        %v953 = vcombine.high %v899, %v899
        %v955 = vunpack.c.l.s4 1966171168
        %v956 = vunpack.c.0.s8 %v955
        %v957 = vlaneseq
        %v958 = vshrl.u32 %v957, 7
        %v959 = vsub.s32 %v956, %v958
        %v960 = vrot.slane %v899, %v959
        %v962 = vunpack.c.l.s4 1966171168
        %v963 = vunpack.c.0.s8 %v962
        %v964 = vlaneseq
        %v965 = vshrl.u32 %v964, 7
        %v966 = vsub.s32 %v963, %v965
        %v967 = vrot.slane %v953, %v966
        %v968 = vcombine.high %v960, %v960
        %v969 = vcombine.high %v967, %v967
        %v971 = vunpack.c.l.s4 1966171168
        %v972 = vunpack.c.0.s8 %v971
        %v973 = vlaneseq
        %v974 = vshrl.u32 %v973, 7
        %v975 = vsub.s32 %v972, %v974
        %v976 = vrot.slane %v960, %v975
        %v978 = vunpack.c.l.s4 1966171168
        %v979 = vunpack.c.0.s8 %v978
        %v980 = vlaneseq
        %v981 = vshrl.u32 %v980, 7
        %v982 = vsub.s32 %v979, %v981
        %v983 = vrot.slane %v967, %v982
        %v985 = vunpack.c.l.s4 1966171168
        %v986 = vunpack.c.0.s8 %v985
        %v987 = vlaneseq
        %v988 = vshrl.u32 %v987, 7
        %v989 = vsub.s32 %v986, %v988
        %v990 = vrot.slane %v968, %v989
        %v992 = vunpack.c.l.s4 1966171168
        %v993 = vunpack.c.0.s8 %v992
        %v994 = vlaneseq
        %v995 = vshrl.u32 %v994, 7
        %v996 = vsub.s32 %v993, %v995
        %v997 = vrot.slane %v969, %v996
        %v998 = vcombine.high %v976, %v976
        %v999 = vcombine.high %v983, %v983
        %v1000 = vcombine.high %v990, %v990
        %v1001 = vcombine.high %v997, %v997
        %v1002 = vlaneseq
        %v1003 = vshrl.u32 %v1002, 7
        %v1004 = vsub.s32 0, %v1003
        %v1005 = vrot.slane %v927, %v1004
        %v1006 = vlaneseq
        %v1007 = vshrl.u32 %v1006, 7
        %v1008 = vsub.s32 0, %v1007
        %v1009 = vrot.slane %v941, %v1008
        %v1010 = vlaneseq
        %v1011 = vshrl.u32 %v1010, 7
        %v1012 = vsub.s32 0, %v1011
        %v1013 = vrot.slane %v949, %v1012
        %v1014 = vlaneseq
        %v1015 = vshrl.u32 %v1014, 7
        %v1016 = vsub.s32 0, %v1015
        %v1017 = vrot.slane %v951, %v1016
        %v1018 = vlaneseq
        %v1019 = vshrl.u32 %v1018, 7
        %v1020 = vsub.s32 0, %v1019
        %v1021 = vrot.slane %v934, %v1020
        %v1022 = vlaneseq
        %v1023 = vshrl.u32 %v1022, 7
        %v1024 = vsub.s32 0, %v1023
        %v1025 = vrot.slane %v948, %v1024
        %v1026 = vlaneseq
        %v1027 = vshrl.u32 %v1026, 7
        %v1028 = vsub.s32 0, %v1027
        %v1029 = vrot.slane %v950, %v1028
        %v1030 = vlaneseq
        %v1031 = vshrl.u32 %v1030, 7
        %v1032 = vsub.s32 0, %v1031
        %v1033 = vrot.slane %v952, %v1032
        %v1034 = vlaneseq
        %v1035 = vshrl.u32 %v1034, 7
        %v1036 = vsub.s32 0, %v1035
        %v1037 = vrot.slane %v976, %v1036
        %v1038 = vlaneseq
        %v1039 = vshrl.u32 %v1038, 7
        %v1040 = vsub.s32 0, %v1039
        %v1041 = vrot.slane %v990, %v1040
        %v1042 = vlaneseq
        %v1043 = vshrl.u32 %v1042, 7
        %v1044 = vsub.s32 0, %v1043
        %v1045 = vrot.slane %v998, %v1044
        %v1046 = vlaneseq
        %v1047 = vshrl.u32 %v1046, 7
        %v1048 = vsub.s32 0, %v1047
        %v1049 = vrot.slane %v1000, %v1048
        %v1050 = vlaneseq
        %v1051 = vshrl.u32 %v1050, 7
        %v1052 = vsub.s32 0, %v1051
        %v1053 = vrot.slane %v983, %v1052
        %v1054 = vlaneseq
        %v1055 = vshrl.u32 %v1054, 7
        %v1056 = vsub.s32 0, %v1055
        %v1057 = vrot.slane %v997, %v1056
        %v1058 = vlaneseq
        %v1059 = vshrl.u32 %v1058, 7
        %v1060 = vsub.s32 0, %v1059
        %v1061 = vrot.slane %v999, %v1060
        %v1062 = vlaneseq
        %v1063 = vshrl.u32 %v1062, 7
        %v1064 = vsub.s32 0, %v1063
        %v1065 = vrot.slane %v1001, %v1064
        %v1082 = vadd.f32 %v318, %v1005
        %v1083 = vadd.f32 %v319, %v1005
        %v1084 = vadd.f32 %v320, %v1009
        %v1085 = vadd.f32 %v321, %v1009
        %v1086 = vadd.f32 %v322, %v1013
        %v1087 = vadd.f32 %v323, %v1013
        %v1088 = vadd.f32 %v324, %v1017
        %v1089 = vadd.f32 %v325, %v1017
        %v1090 = vadd.f32 %v326, %v1021
        %v1091 = vadd.f32 %v327, %v1021
        %v1092 = vadd.f32 %v328, %v1025
        %v1093 = vadd.f32 %v329, %v1025
        %v1094 = vadd.f32 %v330, %v1029
        %v1095 = vadd.f32 %v331, %v1029
        %v1096 = vadd.f32 %v332, %v1033
        %v1097 = vadd.f32 %v333, %v1033
        %v1098 = vadd.f32 %v334, %v1037
        %v1099 = vadd.f32 %v335, %v1037
        %v1100 = vadd.f32 %v336, %v1041
        %v1101 = vadd.f32 %v337, %v1041
        %v1102 = vadd.f32 %v338, %v1045
        %v1103 = vadd.f32 %v339, %v1045
        %v1104 = vadd.f32 %v340, %v1049
        %v1105 = vadd.f32 %v341, %v1049
        %v1106 = vadd.f32 %v342, %v1053
        %v1107 = vadd.f32 %v343, %v1053
        %v1108 = vadd.f32 %v344, %v1057
        %v1109 = vadd.f32 %v345, %v1057
        %v1110 = vadd.f32 %v346, %v1061
        %v1111 = vadd.f32 %v347, %v1061
        %v1112 = vadd.f32 %v348, %v1065
        %v1113 = vadd.f32 %v349, %v1065
        %v1114 = vmul.f32 %v1082, %v1082
        %v1115 = vmul.f32 %v1083, %v1083
        %v1116 = vmul.f32 %v1084, %v1084
        %v1117 = vmul.f32 %v1085, %v1085
        %v1118 = vmul.f32 %v1086, %v1086
        %v1119 = vmul.f32 %v1087, %v1087
        %v1120 = vmul.f32 %v1088, %v1088
        %v1121 = vmul.f32 %v1089, %v1089
        %v1122 = vmul.f32 %v1090, %v1090
        %v1123 = vmul.f32 %v1091, %v1091
        %v1124 = vmul.f32 %v1092, %v1092
        %v1125 = vmul.f32 %v1093, %v1093
        %v1126 = vmul.f32 %v1094, %v1094
        %v1127 = vmul.f32 %v1095, %v1095
        %v1128 = vmul.f32 %v1096, %v1096
        %v1129 = vmul.f32 %v1097, %v1097
        %v1130 = vmul.f32 %v1098, %v1098
        %v1131 = vmul.f32 %v1099, %v1099
        %v1132 = vmul.f32 %v1100, %v1100
        %v1133 = vmul.f32 %v1101, %v1101
        %v1134 = vmul.f32 %v1102, %v1102
        %v1135 = vmul.f32 %v1103, %v1103
        %v1136 = vmul.f32 %v1104, %v1104
        %v1137 = vmul.f32 %v1105, %v1105
        %v1138 = vmul.f32 %v1106, %v1106
        %v1139 = vmul.f32 %v1107, %v1107
        %v1140 = vmul.f32 %v1108, %v1108
        %v1141 = vmul.f32 %v1109, %v1109
        %v1142 = vmul.f32 %v1110, %v1110
        %v1143 = vmul.f32 %v1111, %v1111
        %v1144 = vmul.f32 %v1112, %v1112
        %v1145 = vmul.f32 %v1113, %v1113
        %1146 = vadd.xlane.f32.xlu0 %v1114
        %v1147 = vpop.xlane.xlu0 %1146
        %1148 = vadd.xlane.f32.xlu0 %v1115
        %v1149 = vpop.xlane.xlu0 %1148
        %1150 = vadd.xlane.f32.xlu0 %v1116
        %v1151 = vpop.xlane.xlu0 %1150
        %1152 = vadd.xlane.f32.xlu0 %v1117
        %v1153 = vpop.xlane.xlu0 %1152
        %1154 = vadd.xlane.f32.xlu0 %v1118
        %v1155 = vpop.xlane.xlu0 %1154
        %1156 = vadd.xlane.f32.xlu0 %v1119
        %v1157 = vpop.xlane.xlu0 %1156
        %1158 = vadd.xlane.f32.xlu0 %v1120
        %v1159 = vpop.xlane.xlu0 %1158
        %1160 = vadd.xlane.f32.xlu0 %v1121
        %v1161 = vpop.xlane.xlu0 %1160
        %1162 = vadd.xlane.f32.xlu0 %v1122
        %v1163 = vpop.xlane.xlu0 %1162
        %1164 = vadd.xlane.f32.xlu0 %v1123
        %v1165 = vpop.xlane.xlu0 %1164
        %1166 = vadd.xlane.f32.xlu0 %v1124
        %v1167 = vpop.xlane.xlu0 %1166
        %1168 = vadd.xlane.f32.xlu0 %v1125
        %v1169 = vpop.xlane.xlu0 %1168
        %1170 = vadd.xlane.f32.xlu0 %v1126
        %v1171 = vpop.xlane.xlu0 %1170
        %1172 = vadd.xlane.f32.xlu0 %v1127
        %v1173 = vpop.xlane.xlu0 %1172
        %1174 = vadd.xlane.f32.xlu0 %v1128
        %v1175 = vpop.xlane.xlu0 %1174
        %1176 = vadd.xlane.f32.xlu0 %v1129
        %v1177 = vpop.xlane.xlu0 %1176
        %1178 = vadd.xlane.f32.xlu0 %v1130
        %v1179 = vpop.xlane.xlu0 %1178
        %1180 = vadd.xlane.f32.xlu0 %v1131
        %v1181 = vpop.xlane.xlu0 %1180
        %1182 = vadd.xlane.f32.xlu0 %v1132
        %v1183 = vpop.xlane.xlu0 %1182
        %1184 = vadd.xlane.f32.xlu0 %v1133
        %v1185 = vpop.xlane.xlu0 %1184
        %1186 = vadd.xlane.f32.xlu0 %v1134
        %v1187 = vpop.xlane.xlu0 %1186
        %1188 = vadd.xlane.f32.xlu0 %v1135
        %v1189 = vpop.xlane.xlu0 %1188
        %1190 = vadd.xlane.f32.xlu0 %v1136
        %v1191 = vpop.xlane.xlu0 %1190
        %1192 = vadd.xlane.f32.xlu0 %v1137
        %v1193 = vpop.xlane.xlu0 %1192
        %1194 = vadd.xlane.f32.xlu0 %v1138
        %v1195 = vpop.xlane.xlu0 %1194
        %1196 = vadd.xlane.f32.xlu0 %v1139
        %v1197 = vpop.xlane.xlu0 %1196
        %1198 = vadd.xlane.f32.xlu0 %v1140
        %v1199 = vpop.xlane.xlu0 %1198
        %1200 = vadd.xlane.f32.xlu0 %v1141
        %v1201 = vpop.xlane.xlu0 %1200
        %1202 = vadd.xlane.f32.xlu0 %v1142
        %v1203 = vpop.xlane.xlu0 %1202
        %1204 = vadd.xlane.f32.xlu0 %v1143
        %v1205 = vpop.xlane.xlu0 %1204
        %1206 = vadd.xlane.f32.xlu0 %v1144
        %v1207 = vpop.xlane.xlu0 %1206
        %1208 = vadd.xlane.f32.xlu0 %v1145
        %v1209 = vpop.xlane.xlu0 %1208
        %v1210 = vmul.f32 %v1147, %v446
        %v1211 = vmul.f32 %v1149, %v446
        %v1212 = vmul.f32 %v1151, %v446
        %v1213 = vmul.f32 %v1153, %v446
        %v1214 = vmul.f32 %v1155, %v446
        %v1215 = vmul.f32 %v1157, %v446
        %v1216 = vmul.f32 %v1159, %v446
        %v1217 = vmul.f32 %v1161, %v446
        %v1218 = vmul.f32 %v1163, %v446
        %v1219 = vmul.f32 %v1165, %v446
        %v1220 = vmul.f32 %v1167, %v446
        %v1221 = vmul.f32 %v1169, %v446
        %v1222 = vmul.f32 %v1171, %v446
        %v1223 = vmul.f32 %v1173, %v446
        %v1224 = vmul.f32 %v1175, %v446
        %v1225 = vmul.f32 %v1177, %v446
        %v1226 = vmul.f32 %v1179, %v446
        %v1227 = vmul.f32 %v1181, %v446
        %v1228 = vmul.f32 %v1183, %v446
        %v1229 = vmul.f32 %v1185, %v446
        %v1230 = vmul.f32 %v1187, %v446
        %v1231 = vmul.f32 %v1189, %v446
        %v1232 = vmul.f32 %v1191, %v446
        %v1233 = vmul.f32 %v1193, %v446
        %v1234 = vmul.f32 %v1195, %v446
        %v1235 = vmul.f32 %v1197, %v446
        %v1236 = vmul.f32 %v1199, %v446
        %v1237 = vmul.f32 %v1201, %v446
        %v1238 = vmul.f32 %v1203, %v446
        %v1239 = vmul.f32 %v1205, %v446
        %v1240 = vmul.f32 %v1207, %v446
        %v1241 = vmul.f32 %v1209, %v446
        %v1242 = vadd.f32 %v1210, 1e-05
        %v1243 = vadd.f32 %v1211, 1e-05
        %v1244 = vadd.f32 %v1212, 1e-05
        %v1245 = vadd.f32 %v1213, 1e-05
        %v1246 = vadd.f32 %v1214, 1e-05
        %v1247 = vadd.f32 %v1215, 1e-05
        %v1248 = vadd.f32 %v1216, 1e-05
        %v1249 = vadd.f32 %v1217, 1e-05
        %v1250 = vadd.f32 %v1218, 1e-05
        %v1251 = vadd.f32 %v1219, 1e-05
        %v1252 = vadd.f32 %v1220, 1e-05
        %v1253 = vadd.f32 %v1221, 1e-05
        %v1254 = vadd.f32 %v1222, 1e-05
        %v1255 = vadd.f32 %v1223, 1e-05
        %v1256 = vadd.f32 %v1224, 1e-05
        %v1257 = vadd.f32 %v1225, 1e-05
        %v1258 = vadd.f32 %v1226, 1e-05
        %v1259 = vadd.f32 %v1227, 1e-05
        %v1260 = vadd.f32 %v1228, 1e-05
        %v1261 = vadd.f32 %v1229, 1e-05
        %v1262 = vadd.f32 %v1230, 1e-05
        %v1263 = vadd.f32 %v1231, 1e-05
        %v1264 = vadd.f32 %v1232, 1e-05
        %v1265 = vadd.f32 %v1233, 1e-05
        %v1266 = vadd.f32 %v1234, 1e-05
        %v1267 = vadd.f32 %v1235, 1e-05
        %v1268 = vadd.f32 %v1236, 1e-05
        %v1269 = vadd.f32 %v1237, 1e-05
        %v1270 = vadd.f32 %v1238, 1e-05
        %v1271 = vadd.f32 %v1239, 1e-05
        %v1272 = vadd.f32 %v1240, 1e-05
        %v1273 = vadd.f32 %v1241, 1e-05
        %v1274 = vrsqrt.pop %v1242
        %v1275 = vrsqrt.pop %v1243
        %v1276 = vrsqrt.pop %v1244
        %v1277 = vrsqrt.pop %v1245
        %v1278 = vrsqrt.pop %v1246
        %v1279 = vrsqrt.pop %v1247
        %v1280 = vrsqrt.pop %v1248
        %v1281 = vrsqrt.pop %v1249
        %v1282 = vrsqrt.pop %v1250
        %v1283 = vrsqrt.pop %v1251
        %v1284 = vrsqrt.pop %v1252
        %v1285 = vrsqrt.pop %v1253
        %v1286 = vrsqrt.pop %v1254
        %v1287 = vrsqrt.pop %v1255
        %v1288 = vrsqrt.pop %v1256
        %v1289 = vrsqrt.pop %v1257
        %v1290 = vrsqrt.pop %v1258
        %v1291 = vrsqrt.pop %v1259
        %v1292 = vrsqrt.pop %v1260
        %v1293 = vrsqrt.pop %v1261
        %v1294 = vrsqrt.pop %v1262
        %v1295 = vrsqrt.pop %v1263
        %v1296 = vrsqrt.pop %v1264
        %v1297 = vrsqrt.pop %v1265
        %v1298 = vrsqrt.pop %v1266
        %v1299 = vrsqrt.pop %v1267
        %v1300 = vrsqrt.pop %v1268
        %v1301 = vrsqrt.pop %v1269
        %v1302 = vrsqrt.pop %v1270
        %v1303 = vrsqrt.pop %v1271
        %v1304 = vrsqrt.pop %v1272
        %v1305 = vrsqrt.pop %v1273
        %v1306 = vmul.f32 %v1082, %v1274
        %v1307 = vmul.f32 %v1083, %v1275
        %v1308 = vmul.f32 %v1084, %v1276
        %v1309 = vmul.f32 %v1085, %v1277
        %v1310 = vmul.f32 %v1086, %v1278
        %v1311 = vmul.f32 %v1087, %v1279
        %v1312 = vmul.f32 %v1088, %v1280
        %v1313 = vmul.f32 %v1089, %v1281
        %v1314 = vmul.f32 %v1090, %v1282
        %v1315 = vmul.f32 %v1091, %v1283
        %v1316 = vmul.f32 %v1092, %v1284
        %v1317 = vmul.f32 %v1093, %v1285
        %v1318 = vmul.f32 %v1094, %v1286
        %v1319 = vmul.f32 %v1095, %v1287
        %v1320 = vmul.f32 %v1096, %v1288
        %v1321 = vmul.f32 %v1097, %v1289
        %v1322 = vmul.f32 %v1098, %v1290
        %v1323 = vmul.f32 %v1099, %v1291
        %v1324 = vmul.f32 %v1100, %v1292
        %v1325 = vmul.f32 %v1101, %v1293
        %v1326 = vmul.f32 %v1102, %v1294
        %v1327 = vmul.f32 %v1103, %v1295
        %v1328 = vmul.f32 %v1104, %v1296
        %v1329 = vmul.f32 %v1105, %v1297
        %v1330 = vmul.f32 %v1106, %v1298
        %v1331 = vmul.f32 %v1107, %v1299
        %v1332 = vmul.f32 %v1108, %v1300
        %v1333 = vmul.f32 %v1109, %v1301
        %v1334 = vmul.f32 %v1110, %v1302
        %v1335 = vmul.f32 %v1111, %v1303
        %v1336 = vmul.f32 %v1112, %v1304
        %v1337 = vmul.f32 %v1113, %v1305
        %v1338 = vld [vmem:[%s2] sm:$0x1]
        %v1340 = vlaneseq
        %v1341 = vshrl.u32 %v1340, 7
        %v1342 = vsub.s32 0, %v1341
        %v1343 = vrot.slane %v1338, %v1342
        %v1345 = vmul.f32 %v1306, %v1343
        %v1346 = vmul.f32 %v1307, %v1343
        %v1347 = vmul.f32 %v1308, %v1343
        %v1348 = vmul.f32 %v1309, %v1343
        %v1349 = vmul.f32 %v1310, %v1343
        %v1350 = vmul.f32 %v1311, %v1343
        %v1351 = vmul.f32 %v1312, %v1343
        %v1352 = vmul.f32 %v1313, %v1343
        %v1353 = vmul.f32 %v1314, %v1343
        %v1354 = vmul.f32 %v1315, %v1343
        %v1355 = vmul.f32 %v1316, %v1343
        %v1356 = vmul.f32 %v1317, %v1343
        %v1357 = vmul.f32 %v1318, %v1343
        %v1358 = vmul.f32 %v1319, %v1343
        %v1359 = vmul.f32 %v1320, %v1343
        %v1360 = vmul.f32 %v1321, %v1343
        %v1361 = vmul.f32 %v1322, %v1343
        %v1362 = vmul.f32 %v1323, %v1343
        %v1363 = vmul.f32 %v1324, %v1343
        %v1364 = vmul.f32 %v1325, %v1343
        %v1365 = vmul.f32 %v1326, %v1343
        %v1366 = vmul.f32 %v1327, %v1343
        %v1367 = vmul.f32 %v1328, %v1343
        %v1368 = vmul.f32 %v1329, %v1343
        %v1369 = vmul.f32 %v1330, %v1343
        %v1370 = vmul.f32 %v1331, %v1343
        %v1371 = vmul.f32 %v1332, %v1343
        %v1372 = vmul.f32 %v1333, %v1343
        %v1373 = vmul.f32 %v1334, %v1343
        %v1374 = vmul.f32 %v1335, %v1343
        %v1375 = vmul.f32 %v1336, %v1343
        %v1376 = vmul.f32 %v1337, %v1343
        %v1377 = vpack.c.bf16 %v1346, %v1345
        %v1378 = vpack.c.bf16 %v1348, %v1347
        %v1379 = vpack.c.bf16 %v1350, %v1349
        %v1380 = vpack.c.bf16 %v1352, %v1351
        %v1381 = vpack.c.bf16 %v1354, %v1353
        %v1382 = vpack.c.bf16 %v1356, %v1355
        %v1383 = vpack.c.bf16 %v1358, %v1357
        %v1384 = vpack.c.bf16 %v1360, %v1359
        %v1385 = vpack.c.bf16 %v1362, %v1361
        %v1386 = vpack.c.bf16 %v1364, %v1363
        %v1387 = vpack.c.bf16 %v1366, %v1365
        %v1388 = vpack.c.bf16 %v1368, %v1367
        %v1389 = vpack.c.bf16 %v1370, %v1369
        %v1390 = vpack.c.bf16 %v1372, %v1371
        %v1391 = vpack.c.bf16 %v1374, %v1373
        %v1392 = vpack.c.bf16 %v1376, %v1375
        %v1393 = vld [vmem:[#allocation7] sm:$0xff]
        %v1394 = vld [vmem:[#allocation7 + $0x8] sm:$0xff]
        %v1395 = vld [vmem:[#allocation7 + $0x10] sm:$0xff]
        %v1396 = vld [vmem:[#allocation7 + $0x18] sm:$0xff]
        %v1397 = vld [vmem:[#allocation7 + $0x20] sm:$0xff]
        %v1398 = vld [vmem:[#allocation7 + $0x28] sm:$0xff]
        %v1399 = vld [vmem:[#allocation7 + $0x30] sm:$0xff]
        %v1400 = vld [vmem:[#allocation7 + $0x38] sm:$0xff]
        %v1401 = vld [vmem:[#allocation7 + $0x40] sm:$0xff]
        %v1402 = vld [vmem:[#allocation7 + $0x48] sm:$0xff]
        %v1403 = vld [vmem:[#allocation7 + $0x50] sm:$0xff]
        %v1404 = vld [vmem:[#allocation7 + $0x58] sm:$0xff]
        %v1405 = vld [vmem:[#allocation7 + $0x60] sm:$0xff]
        %v1406 = vld [vmem:[#allocation7 + $0x68] sm:$0xff]
        %v1407 = vld [vmem:[#allocation7 + $0x70] sm:$0xff]
        %v1408 = vld [vmem:[#allocation7 + $0x78] sm:$0xff]
        %v1409 = vld [vmem:[#allocation7 + $0x80] sm:$0xff]
        %v1410 = vld [vmem:[#allocation7 + $0x88] sm:$0xff]
        %v1411 = vld [vmem:[#allocation7 + $0x90] sm:$0xff]
        %v1412 = vld [vmem:[#allocation7 + $0x98] sm:$0xff]
        %v1413 = vld [vmem:[#allocation7 + $0xa0] sm:$0xff]
        %v1414 = vld [vmem:[#allocation7 + $0xa8] sm:$0xff]
        %v1415 = vld [vmem:[#allocation7 + $0xb0] sm:$0xff]
        %v1416 = vld [vmem:[#allocation7 + $0xb8] sm:$0xff]
        %v1417 = vld [vmem:[#allocation7 + $0xc0] sm:$0xff]
        %v1418 = vld [vmem:[#allocation7 + $0xc8] sm:$0xff]
        %v1419 = vld [vmem:[#allocation7 + $0xd0] sm:$0xff]
        %v1420 = vld [vmem:[#allocation7 + $0xd8] sm:$0xff]
        %v1421 = vld [vmem:[#allocation7 + $0xe0] sm:$0xff]
        %v1422 = vld [vmem:[#allocation7 + $0xe8] sm:$0xff]
        %v1423 = vld [vmem:[#allocation7 + $0xf0] sm:$0xff]
        %v1424 = vld [vmem:[#allocation7 + $0xf8] sm:$0xff]
        %v1425 = vld [vmem:[#allocation7 + $0x100] sm:$0xff]
        %v1426 = vld [vmem:[#allocation7 + $0x108] sm:$0xff]
        %v1427 = vld [vmem:[#allocation7 + $0x110] sm:$0xff]
        %v1428 = vld [vmem:[#allocation7 + $0x118] sm:$0xff]
        %v1429 = vld [vmem:[#allocation7 + $0x120] sm:$0xff]
        %v1430 = vld [vmem:[#allocation7 + $0x128] sm:$0xff]
        %v1431 = vld [vmem:[#allocation7 + $0x130] sm:$0xff]
        %v1432 = vld [vmem:[#allocation7 + $0x138] sm:$0xff]
        %v1433 = vld [vmem:[#allocation7 + $0x140] sm:$0xff]
        %v1434 = vld [vmem:[#allocation7 + $0x148] sm:$0xff]
        %v1435 = vld [vmem:[#allocation7 + $0x150] sm:$0xff]
        %v1436 = vld [vmem:[#allocation7 + $0x158] sm:$0xff]
        %v1437 = vld [vmem:[#allocation7 + $0x160] sm:$0xff]
        %v1438 = vld [vmem:[#allocation7 + $0x168] sm:$0xff]
        %v1439 = vld [vmem:[#allocation7 + $0x170] sm:$0xff]
        %v1440 = vld [vmem:[#allocation7 + $0x178] sm:$0xff]
        %v1441 = vld [vmem:[#allocation7 + $0x180] sm:$0xff]
        %v1442 = vld [vmem:[#allocation7 + $0x188] sm:$0xff]
        %v1443 = vld [vmem:[#allocation7 + $0x190] sm:$0xff]
        %v1444 = vld [vmem:[#allocation7 + $0x198] sm:$0xff]
        %v1445 = vld [vmem:[#allocation7 + $0x1a0] sm:$0xff]
        %v1446 = vld [vmem:[#allocation7 + $0x1a8] sm:$0xff]
        %v1447 = vld [vmem:[#allocation7 + $0x1b0] sm:$0xff]
        %v1448 = vld [vmem:[#allocation7 + $0x1b8] sm:$0xff]
        %v1449 = vld [vmem:[#allocation7 + $0x1c0] sm:$0xff]
        %v1450 = vld [vmem:[#allocation7 + $0x1c8] sm:$0xff]
        %v1451 = vld [vmem:[#allocation7 + $0x1d0] sm:$0xff]
        %v1452 = vld [vmem:[#allocation7 + $0x1d8] sm:$0xff]
        %v1453 = vld [vmem:[#allocation7 + $0x1e0] sm:$0xff]
        %v1454 = vld [vmem:[#allocation7 + $0x1e8] sm:$0xff]
        %v1455 = vld [vmem:[#allocation7 + $0x1f0] sm:$0xff]
        %v1456 = vld [vmem:[#allocation7 + $0x1f8] sm:$0xff]
        %v1521 = vunpack.c.l.b16 %v1393
        %v1522 = vunpack.c.h.b16 %v1393
        %v1523 = vunpack.c.l.b16 %v1394
        %v1524 = vunpack.c.h.b16 %v1394
        %v1525 = vunpack.c.l.b16 %v1395
        %v1526 = vunpack.c.h.b16 %v1395
        %v1527 = vunpack.c.l.b16 %v1396
        %v1528 = vunpack.c.h.b16 %v1396
        %v1529 = vunpack.c.l.b16 %v1397
        %v1530 = vunpack.c.h.b16 %v1397
        %v1531 = vunpack.c.l.b16 %v1398
        %v1532 = vunpack.c.h.b16 %v1398
        %v1533 = vunpack.c.l.b16 %v1399
        %v1534 = vunpack.c.h.b16 %v1399
        %v1535 = vunpack.c.l.b16 %v1400
        %v1536 = vunpack.c.h.b16 %v1400
        %v1537 = vunpack.c.l.b16 %v1401
        %v1538 = vunpack.c.h.b16 %v1401
        %v1539 = vunpack.c.l.b16 %v1402
        %v1540 = vunpack.c.h.b16 %v1402
        %v1541 = vunpack.c.l.b16 %v1403
        %v1542 = vunpack.c.h.b16 %v1403
        %v1543 = vunpack.c.l.b16 %v1404
        %v1544 = vunpack.c.h.b16 %v1404
        %v1545 = vunpack.c.l.b16 %v1405
        %v1546 = vunpack.c.h.b16 %v1405
        %v1547 = vunpack.c.l.b16 %v1406
        %v1548 = vunpack.c.h.b16 %v1406
        %v1549 = vunpack.c.l.b16 %v1407
        %v1550 = vunpack.c.h.b16 %v1407
        %v1551 = vunpack.c.l.b16 %v1408
        %v1552 = vunpack.c.h.b16 %v1408
        %v1553 = vunpack.c.l.b16 %v1409
        %v1554 = vunpack.c.h.b16 %v1409
        %v1555 = vunpack.c.l.b16 %v1410
        %v1556 = vunpack.c.h.b16 %v1410
        %v1557 = vunpack.c.l.b16 %v1411
        %v1558 = vunpack.c.h.b16 %v1411
        %v1559 = vunpack.c.l.b16 %v1412
        %v1560 = vunpack.c.h.b16 %v1412
        %v1561 = vunpack.c.l.b16 %v1413
        %v1562 = vunpack.c.h.b16 %v1413
        %v1563 = vunpack.c.l.b16 %v1414
        %v1564 = vunpack.c.h.b16 %v1414
        %v1565 = vunpack.c.l.b16 %v1415
        %v1566 = vunpack.c.h.b16 %v1415
        %v1567 = vunpack.c.l.b16 %v1416
        %v1568 = vunpack.c.h.b16 %v1416
        %v1569 = vunpack.c.l.b16 %v1417
        %v1570 = vunpack.c.h.b16 %v1417
        %v1571 = vunpack.c.l.b16 %v1418
        %v1572 = vunpack.c.h.b16 %v1418
        %v1573 = vunpack.c.l.b16 %v1419
        %v1574 = vunpack.c.h.b16 %v1419
        %v1575 = vunpack.c.l.b16 %v1420
        %v1576 = vunpack.c.h.b16 %v1420
        %v1577 = vunpack.c.l.b16 %v1421
        %v1578 = vunpack.c.h.b16 %v1421
        %v1579 = vunpack.c.l.b16 %v1422
        %v1580 = vunpack.c.h.b16 %v1422
        %v1581 = vunpack.c.l.b16 %v1423
        %v1582 = vunpack.c.h.b16 %v1423
        %v1583 = vunpack.c.l.b16 %v1424
        %v1584 = vunpack.c.h.b16 %v1424
        %v1585 = vunpack.c.l.b16 %v1425
        %v1586 = vunpack.c.h.b16 %v1425
        %v1587 = vunpack.c.l.b16 %v1426
        %v1588 = vunpack.c.h.b16 %v1426
        %v1589 = vunpack.c.l.b16 %v1427
        %v1590 = vunpack.c.h.b16 %v1427
        %v1591 = vunpack.c.l.b16 %v1428
        %v1592 = vunpack.c.h.b16 %v1428
        %v1593 = vunpack.c.l.b16 %v1429
        %v1594 = vunpack.c.h.b16 %v1429
        %v1595 = vunpack.c.l.b16 %v1430
        %v1596 = vunpack.c.h.b16 %v1430
        %v1597 = vunpack.c.l.b16 %v1431
        %v1598 = vunpack.c.h.b16 %v1431
        %v1599 = vunpack.c.l.b16 %v1432
        %v1600 = vunpack.c.h.b16 %v1432
        %v1601 = vunpack.c.l.b16 %v1433
        %v1602 = vunpack.c.h.b16 %v1433
        %v1603 = vunpack.c.l.b16 %v1434
        %v1604 = vunpack.c.h.b16 %v1434
        %v1605 = vunpack.c.l.b16 %v1435
        %v1606 = vunpack.c.h.b16 %v1435
        %v1607 = vunpack.c.l.b16 %v1436
        %v1608 = vunpack.c.h.b16 %v1436
        %v1609 = vunpack.c.l.b16 %v1437
        %v1610 = vunpack.c.h.b16 %v1437
        %v1611 = vunpack.c.l.b16 %v1438
        %v1612 = vunpack.c.h.b16 %v1438
        %v1613 = vunpack.c.l.b16 %v1439
        %v1614 = vunpack.c.h.b16 %v1439
        %v1615 = vunpack.c.l.b16 %v1440
        %v1616 = vunpack.c.h.b16 %v1440
        %v1617 = vunpack.c.l.b16 %v1441
        %v1618 = vunpack.c.h.b16 %v1441
        %v1619 = vunpack.c.l.b16 %v1442
        %v1620 = vunpack.c.h.b16 %v1442
        %v1621 = vunpack.c.l.b16 %v1443
        %v1622 = vunpack.c.h.b16 %v1443
        %v1623 = vunpack.c.l.b16 %v1444
        %v1624 = vunpack.c.h.b16 %v1444
        %v1625 = vunpack.c.l.b16 %v1445
        %v1626 = vunpack.c.h.b16 %v1445
        %v1627 = vunpack.c.l.b16 %v1446
        %v1628 = vunpack.c.h.b16 %v1446
        %v1629 = vunpack.c.l.b16 %v1447
        %v1630 = vunpack.c.h.b16 %v1447
        %v1631 = vunpack.c.l.b16 %v1448
        %v1632 = vunpack.c.h.b16 %v1448
        %v1633 = vunpack.c.l.b16 %v1449
        %v1634 = vunpack.c.h.b16 %v1449
        %v1635 = vunpack.c.l.b16 %v1450
        %v1636 = vunpack.c.h.b16 %v1450
        %v1637 = vunpack.c.l.b16 %v1451
        %v1638 = vunpack.c.h.b16 %v1451
        %v1639 = vunpack.c.l.b16 %v1452
        %v1640 = vunpack.c.h.b16 %v1452
        %v1641 = vunpack.c.l.b16 %v1453
        %v1642 = vunpack.c.h.b16 %v1453
        %v1643 = vunpack.c.l.b16 %v1454
        %v1644 = vunpack.c.h.b16 %v1454
        %v1645 = vunpack.c.l.b16 %v1455
        %v1646 = vunpack.c.h.b16 %v1455
        %v1647 = vunpack.c.l.b16 %v1456
        %v1648 = vunpack.c.h.b16 %v1456
        %v1649 = vpack.c.b16 %v1529, %v1521
        %v1650 = vpack.c.b16 %v1530, %v1522
        %v1651 = vpack.c.b16 %v1531, %v1523
        %v1652 = vpack.c.b16 %v1532, %v1524
        %v1653 = vpack.c.b16 %v1533, %v1525
        %v1654 = vpack.c.b16 %v1534, %v1526
        %v1655 = vpack.c.b16 %v1535, %v1527
        %v1656 = vpack.c.b16 %v1536, %v1528
        %v1657 = vpack.c.b16 %v1545, %v1537
        %v1658 = vpack.c.b16 %v1546, %v1538
        %v1659 = vpack.c.b16 %v1547, %v1539
        %v1660 = vpack.c.b16 %v1548, %v1540
        %v1661 = vpack.c.b16 %v1549, %v1541
        %v1662 = vpack.c.b16 %v1550, %v1542
        %v1663 = vpack.c.b16 %v1551, %v1543
        %v1664 = vpack.c.b16 %v1552, %v1544
        %v1665 = vpack.c.b16 %v1561, %v1553
        %v1666 = vpack.c.b16 %v1562, %v1554
        %v1667 = vpack.c.b16 %v1563, %v1555
        %v1668 = vpack.c.b16 %v1564, %v1556
        %v1669 = vpack.c.b16 %v1565, %v1557
        %v1670 = vpack.c.b16 %v1566, %v1558
        %v1671 = vpack.c.b16 %v1567, %v1559
        %v1672 = vpack.c.b16 %v1568, %v1560
        %v1673 = vpack.c.b16 %v1577, %v1569
        %v1674 = vpack.c.b16 %v1578, %v1570
        %v1675 = vpack.c.b16 %v1579, %v1571
        %v1676 = vpack.c.b16 %v1580, %v1572
        %v1677 = vpack.c.b16 %v1581, %v1573
        %v1678 = vpack.c.b16 %v1582, %v1574
        %v1679 = vpack.c.b16 %v1583, %v1575
        %v1680 = vpack.c.b16 %v1584, %v1576
        %v1681 = vpack.c.b16 %v1593, %v1585
        %v1682 = vpack.c.b16 %v1594, %v1586
        %v1683 = vpack.c.b16 %v1595, %v1587
        %v1684 = vpack.c.b16 %v1596, %v1588
        %v1685 = vpack.c.b16 %v1597, %v1589
        %v1686 = vpack.c.b16 %v1598, %v1590
        %v1687 = vpack.c.b16 %v1599, %v1591
        %v1688 = vpack.c.b16 %v1600, %v1592
        %v1689 = vpack.c.b16 %v1609, %v1601
        %v1690 = vpack.c.b16 %v1610, %v1602
        %v1691 = vpack.c.b16 %v1611, %v1603
        %v1692 = vpack.c.b16 %v1612, %v1604
        %v1693 = vpack.c.b16 %v1613, %v1605
        %v1694 = vpack.c.b16 %v1614, %v1606
        %v1695 = vpack.c.b16 %v1615, %v1607
        %v1696 = vpack.c.b16 %v1616, %v1608
        %v1697 = vpack.c.b16 %v1625, %v1617
        %v1698 = vpack.c.b16 %v1626, %v1618
        %v1699 = vpack.c.b16 %v1627, %v1619
        %v1700 = vpack.c.b16 %v1628, %v1620
        %v1701 = vpack.c.b16 %v1629, %v1621
        %v1702 = vpack.c.b16 %v1630, %v1622
        %v1703 = vpack.c.b16 %v1631, %v1623
        %v1704 = vpack.c.b16 %v1632, %v1624
        %v1705 = vpack.c.b16 %v1641, %v1633
        %v1706 = vpack.c.b16 %v1642, %v1634
        %v1707 = vpack.c.b16 %v1643, %v1635
        %v1708 = vpack.c.b16 %v1644, %v1636
        %v1709 = vpack.c.b16 %v1645, %v1637
        %v1710 = vpack.c.b16 %v1646, %v1638
        %v1711 = vpack.c.b16 %v1647, %v1639
        %v1712 = vpack.c.b16 %v1648, %v1640
        %1777 = vmatprep.subr.bf16.mxu0 %v1650
        %1778 = vmatpush1.bf16.msra.mxu0 %v1649
        %1779 = vmatprep.subr.bf16.mxu0 %v1658
        %1780 = vmatpush1.bf16.msra.mxu0 %v1657
        %1781 = vmatprep.subr.bf16.mxu0 %v1666
        %1782 = vmatpush1.bf16.msra.mxu0 %v1665
        %1783 = vmatprep.subr.bf16.mxu0 %v1674
        %1784 = vmatpush1.bf16.msra.mxu0 %v1673
        %1785 = vmatprep.subr.bf16.mxu0 %v1682
        %1786 = vmatpush1.bf16.msra.mxu0 %v1681
        %1787 = vmatprep.subr.bf16.mxu0 %v1690
        %1788 = vmatpush1.bf16.msra.mxu0 %v1689
        %1789 = vmatprep.subr.bf16.mxu0 %v1698
        %1790 = vmatpush1.bf16.msra.mxu0 %v1697
        %1791 = vmatprep.subr.bf16.mxu0 %v1706
        %1792 = vmatpush1.bf16.msra.mxu0 %v1705
        %1793 = vmatprep.subr.bf16.mxu0 0
        %1794 = vmatpush1.bf16.msra.mxu0 0
        %1795 = vmatprep.subr.bf16.mxu0 0
        %1796 = vmatpush1.bf16.msra.mxu0 0
        %1797 = vmatprep.subr.bf16.mxu0 0
        %1798 = vmatpush1.bf16.msra.mxu0 0
        %1799 = vmatprep.subr.bf16.mxu0 0
        %1800 = vmatpush1.bf16.msra.mxu0 0
        %1801 = vmatprep.subr.bf16.mxu0 0
        %1802 = vmatpush1.bf16.msra.mxu0 0
        %1803 = vmatprep.subr.bf16.mxu0 0
        %1804 = vmatpush1.bf16.msra.mxu0 0
        %1805 = vmatprep.subr.bf16.mxu0 0
        %1806 = vmatpush1.bf16.msra.mxu0 0
        %1807 = vmatprep.subr.bf16.mxu0 0
        %1808 = vmatpush1.bf16.msra.mxu0 0
        %1809 = vmatprep.mubr.bf16.mxu0 0
        %1810 = vmatmul.mubr.bf16.gmra.mrb[0].mxu0 %v1377
        %v1811 = vpop.f32.mrb[0].mxu0
        %v1812 = vadd.f32 0.0, %v1811
        %v1813 = vpop.f32.mrb[0].mxu0
        %v1814 = vadd.f32 0.0, %v1813
        %v1815 = vpop.f32.mrb[0].mxu0
        %v1816 = vadd.f32 0.0, %v1815
        %v1817 = vpop.f32.mrb[0].mxu0
        %v1818 = vadd.f32 0.0, %v1817
        %1819 = vmatprep.mubr.bf16.mxu0 0
        %1820 = vmatmul.mubr.bf16.gmra.mrb[0].mxu0 %v1378
        %v1821 = vpop.f32.mrb[0].mxu0
        %v1822 = vadd.f32 0.0, %v1821
        %v1823 = vpop.f32.mrb[0].mxu0
        %v1824 = vadd.f32 0.0, %v1823
        %v1825 = vpop.f32.mrb[0].mxu0
        %v1826 = vadd.f32 0.0, %v1825
        %v1827 = vpop.f32.mrb[0].mxu0
        %v1828 = vadd.f32 0.0, %v1827
        %1829 = vmatprep.mubr.bf16.mxu0 0
        %1830 = vmatmul.mubr.bf16.gmra.mrb[0].mxu0 %v1379
        %v1831 = vpop.f32.mrb[0].mxu0
        %v1832 = vadd.f32 0.0, %v1831
        %v1833 = vpop.f32.mrb[0].mxu0
        %v1834 = vadd.f32 0.0, %v1833
        %v1835 = vpop.f32.mrb[0].mxu0
        %v1836 = vadd.f32 0.0, %v1835
        %v1837 = vpop.f32.mrb[0].mxu0
        %v1838 = vadd.f32 0.0, %v1837
        %1839 = vmatprep.mubr.bf16.mxu0 0
        %1840 = vmatmul.mubr.bf16.gmra.mrb[0].mxu0 %v1380
        %v1841 = vpop.f32.mrb[0].mxu0
        %v1842 = vadd.f32 0.0, %v1841
        %v1843 = vpop.f32.mrb[0].mxu0
        %v1844 = vadd.f32 0.0, %v1843
        %v1845 = vpop.f32.mrb[0].mxu0
        %v1846 = vadd.f32 0.0, %v1845
        %v1847 = vpop.f32.mrb[0].mxu0
        %v1848 = vadd.f32 0.0, %v1847
        %1849 = vmatprep.mubr.bf16.mxu0 0
        %1850 = vmatmul.mubr.bf16.gmra.mrb[0].mxu0 %v1381
        %v1851 = vpop.f32.mrb[0].mxu0
        %v1852 = vadd.f32 0.0, %v1851
        %v1853 = vpop.f32.mrb[0].mxu0
        %v1854 = vadd.f32 0.0, %v1853
        %v1855 = vpop.f32.mrb[0].mxu0
        %v1856 = vadd.f32 0.0, %v1855
        %v1857 = vpop.f32.mrb[0].mxu0
        %v1858 = vadd.f32 0.0, %v1857
        %1859 = vmatprep.mubr.bf16.mxu0 0
        %1860 = vmatmul.mubr.bf16.gmra.mrb[0].mxu0 %v1382
        %v1861 = vpop.f32.mrb[0].mxu0
        %v1862 = vadd.f32 0.0, %v1861
        %v1863 = vpop.f32.mrb[0].mxu0
        %v1864 = vadd.f32 0.0, %v1863
        %v1865 = vpop.f32.mrb[0].mxu0
        %v1866 = vadd.f32 0.0, %v1865
        %v1867 = vpop.f32.mrb[0].mxu0
        %v1868 = vadd.f32 0.0, %v1867
        %1869 = vmatprep.mubr.bf16.mxu0 0
        %1870 = vmatmul.mubr.bf16.gmra.mrb[0].mxu0 %v1383
        %v1871 = vpop.f32.mrb[0].mxu0
        %v1872 = vadd.f32 0.0, %v1871
        %v1873 = vpop.f32.mrb[0].mxu0
        %v1874 = vadd.f32 0.0, %v1873
        %v1875 = vpop.f32.mrb[0].mxu0
        %v1876 = vadd.f32 0.0, %v1875
        %v1877 = vpop.f32.mrb[0].mxu0
        %v1878 = vadd.f32 0.0, %v1877
        %1879 = vmatprep.mubr.bf16.mxu0 0
        %1880 = vmatmul.mubr.bf16.gmra.mrb[0].mxu0 %v1384
        %v1881 = vpop.f32.mrb[0].mxu0
        %v1882 = vadd.f32 0.0, %v1881
        %v1883 = vpop.f32.mrb[0].mxu0
        %v1884 = vadd.f32 0.0, %v1883
        %v1885 = vpop.f32.mrb[0].mxu0
        %v1886 = vadd.f32 0.0, %v1885
        %v1887 = vpop.f32.mrb[0].mxu0
        %v1888 = vadd.f32 0.0, %v1887
        %1889 = vmatprep.mubr.bf16.mxu0 0
        %1890 = vmatmul.mubr.bf16.gmra.mrb[0].mxu0 %v1385
        %v1891 = vpop.f32.mrb[0].mxu0
        %v1892 = vadd.f32 0.0, %v1891
        %v1893 = vpop.f32.mrb[0].mxu0
        %v1894 = vadd.f32 0.0, %v1893
        %v1895 = vpop.f32.mrb[0].mxu0
        %v1896 = vadd.f32 0.0, %v1895
        %v1897 = vpop.f32.mrb[0].mxu0
        %v1898 = vadd.f32 0.0, %v1897
        %1899 = vmatprep.mubr.bf16.mxu0 0
        %1900 = vmatmul.mubr.bf16.gmra.mrb[0].mxu0 %v1386
        %v1901 = vpop.f32.mrb[0].mxu0
        %v1902 = vadd.f32 0.0, %v1901
        %v1903 = vpop.f32.mrb[0].mxu0
        %v1904 = vadd.f32 0.0, %v1903
        %v1905 = vpop.f32.mrb[0].mxu0
        %v1906 = vadd.f32 0.0, %v1905
        %v1907 = vpop.f32.mrb[0].mxu0
        %v1908 = vadd.f32 0.0, %v1907
        %1909 = vmatprep.mubr.bf16.mxu0 0
        %1910 = vmatmul.mubr.bf16.gmra.mrb[0].mxu0 %v1387
        %v1911 = vpop.f32.mrb[0].mxu0
        %v1912 = vadd.f32 0.0, %v1911
        %v1913 = vpop.f32.mrb[0].mxu0
        %v1914 = vadd.f32 0.0, %v1913
        %v1915 = vpop.f32.mrb[0].mxu0
        %v1916 = vadd.f32 0.0, %v1915
        %v1917 = vpop.f32.mrb[0].mxu0
        %v1918 = vadd.f32 0.0, %v1917
        %1919 = vmatprep.mubr.bf16.mxu0 0
        %1920 = vmatmul.mubr.bf16.gmra.mrb[0].mxu0 %v1388
        %v1921 = vpop.f32.mrb[0].mxu0
        %v1922 = vadd.f32 0.0, %v1921
        %v1923 = vpop.f32.mrb[0].mxu0
        %v1924 = vadd.f32 0.0, %v1923
        %v1925 = vpop.f32.mrb[0].mxu0
        %v1926 = vadd.f32 0.0, %v1925
        %v1927 = vpop.f32.mrb[0].mxu0
        %v1928 = vadd.f32 0.0, %v1927
        %1929 = vmatprep.mubr.bf16.mxu0 0
        %1930 = vmatmul.mubr.bf16.gmra.mrb[0].mxu0 %v1389
        %v1931 = vpop.f32.mrb[0].mxu0
        %v1932 = vadd.f32 0.0, %v1931
        %v1933 = vpop.f32.mrb[0].mxu0
        %v1934 = vadd.f32 0.0, %v1933
        %v1935 = vpop.f32.mrb[0].mxu0
        %v1936 = vadd.f32 0.0, %v1935
        %v1937 = vpop.f32.mrb[0].mxu0
        %v1938 = vadd.f32 0.0, %v1937
        %1939 = vmatprep.mubr.bf16.mxu0 0
        %1940 = vmatmul.mubr.bf16.gmra.mrb[0].mxu0 %v1390
        %v1941 = vpop.f32.mrb[0].mxu0
        %v1942 = vadd.f32 0.0, %v1941
        %v1943 = vpop.f32.mrb[0].mxu0
        %v1944 = vadd.f32 0.0, %v1943
        %v1945 = vpop.f32.mrb[0].mxu0
        %v1946 = vadd.f32 0.0, %v1945
        %v1947 = vpop.f32.mrb[0].mxu0
        %v1948 = vadd.f32 0.0, %v1947
        %1949 = vmatprep.mubr.bf16.mxu0 0
        %1950 = vmatmul.mubr.bf16.gmra.mrb[0].mxu0 %v1391
        %v1951 = vpop.f32.mrb[0].mxu0
        %v1952 = vadd.f32 0.0, %v1951
        %v1953 = vpop.f32.mrb[0].mxu0
        %v1954 = vadd.f32 0.0, %v1953
        %v1955 = vpop.f32.mrb[0].mxu0
        %v1956 = vadd.f32 0.0, %v1955
        %v1957 = vpop.f32.mrb[0].mxu0
        %v1958 = vadd.f32 0.0, %v1957
        %1959 = vmatprep.mubr.bf16.mxu0 0
        %1960 = vmatmul.mubr.bf16.gmra.mrb[0].mxu0 %v1392
        %v1961 = vpop.f32.mrb[0].mxu0
        %v1962 = vadd.f32 0.0, %v1961
        %v1963 = vpop.f32.mrb[0].mxu0
        %v1964 = vadd.f32 0.0, %v1963
        %v1965 = vpop.f32.mrb[0].mxu0
        %v1966 = vadd.f32 0.0, %v1965
        %v1967 = vpop.f32.mrb[0].mxu0
        %v1968 = vadd.f32 0.0, %v1967
        %1969 = vdwg.mxu0
        %1970 = vmatprep.subr.bf16.mxu0 %v1652
        %1971 = vmatpush1.bf16.msra.mxu0 %v1651
        %1972 = vmatprep.subr.bf16.mxu0 %v1660
        %1973 = vmatpush1.bf16.msra.mxu0 %v1659
        %1974 = vmatprep.subr.bf16.mxu0 %v1668
        %1975 = vmatpush1.bf16.msra.mxu0 %v1667
        %1976 = vmatprep.subr.bf16.mxu0 %v1676
        %1977 = vmatpush1.bf16.msra.mxu0 %v1675
        %1978 = vmatprep.subr.bf16.mxu0 %v1684
        %1979 = vmatpush1.bf16.msra.mxu0 %v1683
        %1980 = vmatprep.subr.bf16.mxu0 %v1692
        %1981 = vmatpush1.bf16.msra.mxu0 %v1691
        %1982 = vmatprep.subr.bf16.mxu0 %v1700
        %1983 = vmatpush1.bf16.msra.mxu0 %v1699
        %1984 = vmatprep.subr.bf16.mxu0 %v1708
        %1985 = vmatpush1.bf16.msra.mxu0 %v1707
        %1986 = vmatprep.subr.bf16.mxu0 0
        %1987 = vmatpush1.bf16.msra.mxu0 0
        %1988 = vmatprep.subr.bf16.mxu0 0
        %1989 = vmatpush1.bf16.msra.mxu0 0
        %1990 = vmatprep.subr.bf16.mxu0 0
        %1991 = vmatpush1.bf16.msra.mxu0 0
        %1992 = vmatprep.subr.bf16.mxu0 0
        %1993 = vmatpush1.bf16.msra.mxu0 0
        %1994 = vmatprep.subr.bf16.mxu0 0
        %1995 = vmatpush1.bf16.msra.mxu0 0
        %1996 = vmatprep.subr.bf16.mxu0 0
        %1997 = vmatpush1.bf16.msra.mxu0 0
        %1998 = vmatprep.subr.bf16.mxu0 0
        %1999 = vmatpush1.bf16.msra.mxu0 0
        %2000 = vmatprep.subr.bf16.mxu0 0
        %2001 = vmatpush1.bf16.msra.mxu0 0
        %2002 = vmatprep.mubr.bf16.mxu0 0
        %2003 = vmatmul.mubr.bf16.gmra.mrb[0].mxu0 %v1377
        %v2004 = vpop.f32.mrb[0].mxu0
        %v2005 = vadd.f32 0.0, %v2004
        %v2006 = vpop.f32.mrb[0].mxu0
        %v2007 = vadd.f32 0.0, %v2006
        %v2008 = vpop.f32.mrb[0].mxu0
        %v2009 = vadd.f32 0.0, %v2008
        %v2010 = vpop.f32.mrb[0].mxu0
        %v2011 = vadd.f32 0.0, %v2010
        %2012 = vmatprep.mubr.bf16.mxu0 0
        %2013 = vmatmul.mubr.bf16.gmra.mrb[0].mxu0 %v1378
        %v2014 = vpop.f32.mrb[0].mxu0
        %v2015 = vadd.f32 0.0, %v2014
        %v2016 = vpop.f32.mrb[0].mxu0
        %v2017 = vadd.f32 0.0, %v2016
        %v2018 = vpop.f32.mrb[0].mxu0
        %v2019 = vadd.f32 0.0, %v2018
        %v2020 = vpop.f32.mrb[0].mxu0
        %v2021 = vadd.f32 0.0, %v2020
        %2022 = vmatprep.mubr.bf16.mxu0 0
        %2023 = vmatmul.mubr.bf16.gmra.mrb[0].mxu0 %v1379
        %v2024 = vpop.f32.mrb[0].mxu0
        %v2025 = vadd.f32 0.0, %v2024
        %v2026 = vpop.f32.mrb[0].mxu0
        %v2027 = vadd.f32 0.0, %v2026
        %v2028 = vpop.f32.mrb[0].mxu0
        %v2029 = vadd.f32 0.0, %v2028
        %v2030 = vpop.f32.mrb[0].mxu0
        %v2031 = vadd.f32 0.0, %v2030
        %2032 = vmatprep.mubr.bf16.mxu0 0
        %2033 = vmatmul.mubr.bf16.gmra.mrb[0].mxu0 %v1380
        %v2034 = vpop.f32.mrb[0].mxu0
        %v2035 = vadd.f32 0.0, %v2034
        %v2036 = vpop.f32.mrb[0].mxu0
        %v2037 = vadd.f32 0.0, %v2036
        %v2038 = vpop.f32.mrb[0].mxu0
        %v2039 = vadd.f32 0.0, %v2038
        %v2040 = vpop.f32.mrb[0].mxu0
        %v2041 = vadd.f32 0.0, %v2040
        %2042 = vmatprep.mubr.bf16.mxu0 0
        %2043 = vmatmul.mubr.bf16.gmra.mrb[0].mxu0 %v1381
        %v2044 = vpop.f32.mrb[0].mxu0
        %v2045 = vadd.f32 0.0, %v2044
        %v2046 = vpop.f32.mrb[0].mxu0
        %v2047 = vadd.f32 0.0, %v2046
        %v2048 = vpop.f32.mrb[0].mxu0
        %v2049 = vadd.f32 0.0, %v2048
        %v2050 = vpop.f32.mrb[0].mxu0
        %v2051 = vadd.f32 0.0, %v2050
        %2052 = vmatprep.mubr.bf16.mxu0 0
        %2053 = vmatmul.mubr.bf16.gmra.mrb[0].mxu0 %v1382
        %v2054 = vpop.f32.mrb[0].mxu0
        %v2055 = vadd.f32 0.0, %v2054
        %v2056 = vpop.f32.mrb[0].mxu0
        %v2057 = vadd.f32 0.0, %v2056
        %v2058 = vpop.f32.mrb[0].mxu0
        %v2059 = vadd.f32 0.0, %v2058
        %v2060 = vpop.f32.mrb[0].mxu0
        %v2061 = vadd.f32 0.0, %v2060
        %2062 = vmatprep.mubr.bf16.mxu0 0
        %2063 = vmatmul.mubr.bf16.gmra.mrb[0].mxu0 %v1383
        %v2064 = vpop.f32.mrb[0].mxu0
        %v2065 = vadd.f32 0.0, %v2064
        %v2066 = vpop.f32.mrb[0].mxu0
        %v2067 = vadd.f32 0.0, %v2066
        %v2068 = vpop.f32.mrb[0].mxu0
        %v2069 = vadd.f32 0.0, %v2068
        %v2070 = vpop.f32.mrb[0].mxu0
        %v2071 = vadd.f32 0.0, %v2070
        %2072 = vmatprep.mubr.bf16.mxu0 0
        %2073 = vmatmul.mubr.bf16.gmra.mrb[0].mxu0 %v1384
        %v2074 = vpop.f32.mrb[0].mxu0
        %v2075 = vadd.f32 0.0, %v2074
        %v2076 = vpop.f32.mrb[0].mxu0
        %v2077 = vadd.f32 0.0, %v2076
        %v2078 = vpop.f32.mrb[0].mxu0
        %v2079 = vadd.f32 0.0, %v2078
        %v2080 = vpop.f32.mrb[0].mxu0
        %v2081 = vadd.f32 0.0, %v2080
        %2082 = vmatprep.mubr.bf16.mxu0 0
        %2083 = vmatmul.mubr.bf16.gmra.mrb[0].mxu0 %v1385
        %v2084 = vpop.f32.mrb[0].mxu0
        %v2085 = vadd.f32 0.0, %v2084
        %v2086 = vpop.f32.mrb[0].mxu0
        %v2087 = vadd.f32 0.0, %v2086
        %v2088 = vpop.f32.mrb[0].mxu0
        %v2089 = vadd.f32 0.0, %v2088
        %v2090 = vpop.f32.mrb[0].mxu0
        %v2091 = vadd.f32 0.0, %v2090
        %2092 = vmatprep.mubr.bf16.mxu0 0
        %2093 = vmatmul.mubr.bf16.gmra.mrb[0].mxu0 %v1386
        %v2094 = vpop.f32.mrb[0].mxu0
        %v2095 = vadd.f32 0.0, %v2094
        %v2096 = vpop.f32.mrb[0].mxu0
        %v2097 = vadd.f32 0.0, %v2096
        %v2098 = vpop.f32.mrb[0].mxu0
        %v2099 = vadd.f32 0.0, %v2098
        %v2100 = vpop.f32.mrb[0].mxu0
        %v2101 = vadd.f32 0.0, %v2100
        %2102 = vmatprep.mubr.bf16.mxu0 0
        %2103 = vmatmul.mubr.bf16.gmra.mrb[0].mxu0 %v1387
        %v2104 = vpop.f32.mrb[0].mxu0
        %v2105 = vadd.f32 0.0, %v2104
        %v2106 = vpop.f32.mrb[0].mxu0
        %v2107 = vadd.f32 0.0, %v2106
        %v2108 = vpop.f32.mrb[0].mxu0
        %v2109 = vadd.f32 0.0, %v2108
        %v2110 = vpop.f32.mrb[0].mxu0
        %v2111 = vadd.f32 0.0, %v2110
        %2112 = vmatprep.mubr.bf16.mxu0 0
        %2113 = vmatmul.mubr.bf16.gmra.mrb[0].mxu0 %v1388
        %v2114 = vpop.f32.mrb[0].mxu0
        %v2115 = vadd.f32 0.0, %v2114
        %v2116 = vpop.f32.mrb[0].mxu0
        %v2117 = vadd.f32 0.0, %v2116
        %v2118 = vpop.f32.mrb[0].mxu0
        %v2119 = vadd.f32 0.0, %v2118
        %v2120 = vpop.f32.mrb[0].mxu0
        %v2121 = vadd.f32 0.0, %v2120
        %2122 = vmatprep.mubr.bf16.mxu0 0
        %2123 = vmatmul.mubr.bf16.gmra.mrb[0].mxu0 %v1389
        %v2124 = vpop.f32.mrb[0].mxu0
        %v2125 = vadd.f32 0.0, %v2124
        %v2126 = vpop.f32.mrb[0].mxu0
        %v2127 = vadd.f32 0.0, %v2126
        %v2128 = vpop.f32.mrb[0].mxu0
        %v2129 = vadd.f32 0.0, %v2128
        %v2130 = vpop.f32.mrb[0].mxu0
        %v2131 = vadd.f32 0.0, %v2130
        %2132 = vmatprep.mubr.bf16.mxu0 0
        %2133 = vmatmul.mubr.bf16.gmra.mrb[0].mxu0 %v1390
        %v2134 = vpop.f32.mrb[0].mxu0
        %v2135 = vadd.f32 0.0, %v2134
        %v2136 = vpop.f32.mrb[0].mxu0
        %v2137 = vadd.f32 0.0, %v2136
        %v2138 = vpop.f32.mrb[0].mxu0
        %v2139 = vadd.f32 0.0, %v2138
        %v2140 = vpop.f32.mrb[0].mxu0
        %v2141 = vadd.f32 0.0, %v2140
        %2142 = vmatprep.mubr.bf16.mxu0 0
        %2143 = vmatmul.mubr.bf16.gmra.mrb[0].mxu0 %v1391
        %v2144 = vpop.f32.mrb[0].mxu0
        %v2145 = vadd.f32 0.0, %v2144
        %v2146 = vpop.f32.mrb[0].mxu0
        %v2147 = vadd.f32 0.0, %v2146
        %v2148 = vpop.f32.mrb[0].mxu0
        %v2149 = vadd.f32 0.0, %v2148
        %v2150 = vpop.f32.mrb[0].mxu0
        %v2151 = vadd.f32 0.0, %v2150
        %2152 = vmatprep.mubr.bf16.mxu0 0
        %2153 = vmatmul.mubr.bf16.gmra.mrb[0].mxu0 %v1392
        %v2154 = vpop.f32.mrb[0].mxu0
        %v2155 = vadd.f32 0.0, %v2154
        %v2156 = vpop.f32.mrb[0].mxu0
        %v2157 = vadd.f32 0.0, %v2156
        %v2158 = vpop.f32.mrb[0].mxu0
        %v2159 = vadd.f32 0.0, %v2158
        %v2160 = vpop.f32.mrb[0].mxu0
        %v2161 = vadd.f32 0.0, %v2160
        %2162 = vdwg.mxu0
        %2163 = vmatprep.subr.bf16.mxu0 %v1654
        %2164 = vmatpush1.bf16.msra.mxu0 %v1653
        %2165 = vmatprep.subr.bf16.mxu0 %v1662
        %2166 = vmatpush1.bf16.msra.mxu0 %v1661
        %2167 = vmatprep.subr.bf16.mxu0 %v1670
        %2168 = vmatpush1.bf16.msra.mxu0 %v1669
        %2169 = vmatprep.subr.bf16.mxu0 %v1678
        %2170 = vmatpush1.bf16.msra.mxu0 %v1677
        %2171 = vmatprep.subr.bf16.mxu0 %v1686
        %2172 = vmatpush1.bf16.msra.mxu0 %v1685
        %2173 = vmatprep.subr.bf16.mxu0 %v1694
        %2174 = vmatpush1.bf16.msra.mxu0 %v1693
        %2175 = vmatprep.subr.bf16.mxu0 %v1702
        %2176 = vmatpush1.bf16.msra.mxu0 %v1701
        %2177 = vmatprep.subr.bf16.mxu0 %v1710
        %2178 = vmatpush1.bf16.msra.mxu0 %v1709
        %2179 = vmatprep.subr.bf16.mxu0 0
        %2180 = vmatpush1.bf16.msra.mxu0 0
        %2181 = vmatprep.subr.bf16.mxu0 0
        %2182 = vmatpush1.bf16.msra.mxu0 0
        %2183 = vmatprep.subr.bf16.mxu0 0
        %2184 = vmatpush1.bf16.msra.mxu0 0
        %2185 = vmatprep.subr.bf16.mxu0 0
        %2186 = vmatpush1.bf16.msra.mxu0 0
        %2187 = vmatprep.subr.bf16.mxu0 0
        %2188 = vmatpush1.bf16.msra.mxu0 0
        %2189 = vmatprep.subr.bf16.mxu0 0
        %2190 = vmatpush1.bf16.msra.mxu0 0
        %2191 = vmatprep.subr.bf16.mxu0 0
        %2192 = vmatpush1.bf16.msra.mxu0 0
        %2193 = vmatprep.subr.bf16.mxu0 0
        %2194 = vmatpush1.bf16.msra.mxu0 0
        %2195 = vmatprep.mubr.bf16.mxu0 0
        %2196 = vmatmul.mubr.bf16.gmra.mrb[0].mxu0 %v1377
        %v2197 = vpop.f32.mrb[0].mxu0
        %v2198 = vadd.f32 0.0, %v2197
        %v2199 = vpop.f32.mrb[0].mxu0
        %v2200 = vadd.f32 0.0, %v2199
        %v2201 = vpop.f32.mrb[0].mxu0
        %v2202 = vadd.f32 0.0, %v2201
        %v2203 = vpop.f32.mrb[0].mxu0
        %v2204 = vadd.f32 0.0, %v2203
        %2205 = vmatprep.mubr.bf16.mxu0 0
        %2206 = vmatmul.mubr.bf16.gmra.mrb[0].mxu0 %v1378
        %v2207 = vpop.f32.mrb[0].mxu0
        %v2208 = vadd.f32 0.0, %v2207
        %v2209 = vpop.f32.mrb[0].mxu0
        %v2210 = vadd.f32 0.0, %v2209
        %v2211 = vpop.f32.mrb[0].mxu0
        %v2212 = vadd.f32 0.0, %v2211
        %v2213 = vpop.f32.mrb[0].mxu0
        %v2214 = vadd.f32 0.0, %v2213
        %2215 = vmatprep.mubr.bf16.mxu0 0
        %2216 = vmatmul.mubr.bf16.gmra.mrb[0].mxu0 %v1379
        %v2217 = vpop.f32.mrb[0].mxu0
        %v2218 = vadd.f32 0.0, %v2217
        %v2219 = vpop.f32.mrb[0].mxu0
        %v2220 = vadd.f32 0.0, %v2219
        %v2221 = vpop.f32.mrb[0].mxu0
        %v2222 = vadd.f32 0.0, %v2221
        %v2223 = vpop.f32.mrb[0].mxu0
        %v2224 = vadd.f32 0.0, %v2223
        %2225 = vmatprep.mubr.bf16.mxu0 0
        %2226 = vmatmul.mubr.bf16.gmra.mrb[0].mxu0 %v1380
        %v2227 = vpop.f32.mrb[0].mxu0
        %v2228 = vadd.f32 0.0, %v2227
        %v2229 = vpop.f32.mrb[0].mxu0
        %v2230 = vadd.f32 0.0, %v2229
        %v2231 = vpop.f32.mrb[0].mxu0
        %v2232 = vadd.f32 0.0, %v2231
        %v2233 = vpop.f32.mrb[0].mxu0
        %v2234 = vadd.f32 0.0, %v2233
        %2235 = vmatprep.mubr.bf16.mxu0 0
        %2236 = vmatmul.mubr.bf16.gmra.mrb[0].mxu0 %v1381
        %v2237 = vpop.f32.mrb[0].mxu0
        %v2238 = vadd.f32 0.0, %v2237
        %v2239 = vpop.f32.mrb[0].mxu0
        %v2240 = vadd.f32 0.0, %v2239
        %v2241 = vpop.f32.mrb[0].mxu0
        %v2242 = vadd.f32 0.0, %v2241
        %v2243 = vpop.f32.mrb[0].mxu0
        %v2244 = vadd.f32 0.0, %v2243
        %2245 = vmatprep.mubr.bf16.mxu0 0
        %2246 = vmatmul.mubr.bf16.gmra.mrb[0].mxu0 %v1382
        %v2247 = vpop.f32.mrb[0].mxu0
        %v2248 = vadd.f32 0.0, %v2247
        %v2249 = vpop.f32.mrb[0].mxu0
        %v2250 = vadd.f32 0.0, %v2249
        %v2251 = vpop.f32.mrb[0].mxu0
        %v2252 = vadd.f32 0.0, %v2251
        %v2253 = vpop.f32.mrb[0].mxu0
        %v2254 = vadd.f32 0.0, %v2253
        %2255 = vmatprep.mubr.bf16.mxu0 0
        %2256 = vmatmul.mubr.bf16.gmra.mrb[0].mxu0 %v1383
        %v2257 = vpop.f32.mrb[0].mxu0
        %v2258 = vadd.f32 0.0, %v2257
        %v2259 = vpop.f32.mrb[0].mxu0
        %v2260 = vadd.f32 0.0, %v2259
        %v2261 = vpop.f32.mrb[0].mxu0
        %v2262 = vadd.f32 0.0, %v2261
        %v2263 = vpop.f32.mrb[0].mxu0
        %v2264 = vadd.f32 0.0, %v2263
        %2265 = vmatprep.mubr.bf16.mxu0 0
        %2266 = vmatmul.mubr.bf16.gmra.mrb[0].mxu0 %v1384
        %v2267 = vpop.f32.mrb[0].mxu0
        %v2268 = vadd.f32 0.0, %v2267
        %v2269 = vpop.f32.mrb[0].mxu0
        %v2270 = vadd.f32 0.0, %v2269
        %v2271 = vpop.f32.mrb[0].mxu0
        %v2272 = vadd.f32 0.0, %v2271
        %v2273 = vpop.f32.mrb[0].mxu0
        %v2274 = vadd.f32 0.0, %v2273
        %2275 = vmatprep.mubr.bf16.mxu0 0
        %2276 = vmatmul.mubr.bf16.gmra.mrb[0].mxu0 %v1385
        %v2277 = vpop.f32.mrb[0].mxu0
        %v2278 = vadd.f32 0.0, %v2277
        %v2279 = vpop.f32.mrb[0].mxu0
        %v2280 = vadd.f32 0.0, %v2279
        %v2281 = vpop.f32.mrb[0].mxu0
        %v2282 = vadd.f32 0.0, %v2281
        %v2283 = vpop.f32.mrb[0].mxu0
        %v2284 = vadd.f32 0.0, %v2283
        %2285 = vmatprep.mubr.bf16.mxu0 0
        %2286 = vmatmul.mubr.bf16.gmra.mrb[0].mxu0 %v1386
        %v2287 = vpop.f32.mrb[0].mxu0
        %v2288 = vadd.f32 0.0, %v2287
        %v2289 = vpop.f32.mrb[0].mxu0
        %v2290 = vadd.f32 0.0, %v2289
        %v2291 = vpop.f32.mrb[0].mxu0
        %v2292 = vadd.f32 0.0, %v2291
        %v2293 = vpop.f32.mrb[0].mxu0
        %v2294 = vadd.f32 0.0, %v2293
        %2295 = vmatprep.mubr.bf16.mxu0 0
        %2296 = vmatmul.mubr.bf16.gmra.mrb[0].mxu0 %v1387
        %v2297 = vpop.f32.mrb[0].mxu0
        %v2298 = vadd.f32 0.0, %v2297
        %v2299 = vpop.f32.mrb[0].mxu0
        %v2300 = vadd.f32 0.0, %v2299
        %v2301 = vpop.f32.mrb[0].mxu0
        %v2302 = vadd.f32 0.0, %v2301
        %v2303 = vpop.f32.mrb[0].mxu0
        %v2304 = vadd.f32 0.0, %v2303
        %2305 = vmatprep.mubr.bf16.mxu0 0
        %2306 = vmatmul.mubr.bf16.gmra.mrb[0].mxu0 %v1388
        %v2307 = vpop.f32.mrb[0].mxu0
        %v2308 = vadd.f32 0.0, %v2307
        %v2309 = vpop.f32.mrb[0].mxu0
        %v2310 = vadd.f32 0.0, %v2309
        %v2311 = vpop.f32.mrb[0].mxu0
        %v2312 = vadd.f32 0.0, %v2311
        %v2313 = vpop.f32.mrb[0].mxu0
        %v2314 = vadd.f32 0.0, %v2313
        %2315 = vmatprep.mubr.bf16.mxu0 0
        %2316 = vmatmul.mubr.bf16.gmra.mrb[0].mxu0 %v1389
        %v2317 = vpop.f32.mrb[0].mxu0
        %v2318 = vadd.f32 0.0, %v2317
        %v2319 = vpop.f32.mrb[0].mxu0
        %v2320 = vadd.f32 0.0, %v2319
        %v2321 = vpop.f32.mrb[0].mxu0
        %v2322 = vadd.f32 0.0, %v2321
        %v2323 = vpop.f32.mrb[0].mxu0
        %v2324 = vadd.f32 0.0, %v2323
        %2325 = vmatprep.mubr.bf16.mxu0 0
        %2326 = vmatmul.mubr.bf16.gmra.mrb[0].mxu0 %v1390
        %v2327 = vpop.f32.mrb[0].mxu0
        %v2328 = vadd.f32 0.0, %v2327
        %v2329 = vpop.f32.mrb[0].mxu0
        %v2330 = vadd.f32 0.0, %v2329
        %v2331 = vpop.f32.mrb[0].mxu0
        %v2332 = vadd.f32 0.0, %v2331
        %v2333 = vpop.f32.mrb[0].mxu0
        %v2334 = vadd.f32 0.0, %v2333
        %2335 = vmatprep.mubr.bf16.mxu0 0
        %2336 = vmatmul.mubr.bf16.gmra.mrb[0].mxu0 %v1391
        %v2337 = vpop.f32.mrb[0].mxu0
        %v2338 = vadd.f32 0.0, %v2337
        %v2339 = vpop.f32.mrb[0].mxu0
        %v2340 = vadd.f32 0.0, %v2339
        %v2341 = vpop.f32.mrb[0].mxu0
        %v2342 = vadd.f32 0.0, %v2341
        %v2343 = vpop.f32.mrb[0].mxu0
        %v2344 = vadd.f32 0.0, %v2343
        %2345 = vmatprep.mubr.bf16.mxu0 0
        %2346 = vmatmul.mubr.bf16.gmra.mrb[0].mxu0 %v1392
        %v2347 = vpop.f32.mrb[0].mxu0
        %v2348 = vadd.f32 0.0, %v2347
        %v2349 = vpop.f32.mrb[0].mxu0
        %v2350 = vadd.f32 0.0, %v2349
        %v2351 = vpop.f32.mrb[0].mxu0
        %v2352 = vadd.f32 0.0, %v2351
        %v2353 = vpop.f32.mrb[0].mxu0
        %v2354 = vadd.f32 0.0, %v2353
        %2355 = vdwg.mxu0
        %2356 = vmatprep.subr.bf16.mxu0 %v1656
        %2357 = vmatpush1.bf16.msra.mxu0 %v1655
        %2358 = vmatprep.subr.bf16.mxu0 %v1664
        %2359 = vmatpush1.bf16.msra.mxu0 %v1663
        %2360 = vmatprep.subr.bf16.mxu0 %v1672
        %2361 = vmatpush1.bf16.msra.mxu0 %v1671
        %2362 = vmatprep.subr.bf16.mxu0 %v1680
        %2363 = vmatpush1.bf16.msra.mxu0 %v1679
        %2364 = vmatprep.subr.bf16.mxu0 %v1688
        %2365 = vmatpush1.bf16.msra.mxu0 %v1687
        %2366 = vmatprep.subr.bf16.mxu0 %v1696
        %2367 = vmatpush1.bf16.msra.mxu0 %v1695
        %2368 = vmatprep.subr.bf16.mxu0 %v1704
        %2369 = vmatpush1.bf16.msra.mxu0 %v1703
        %2370 = vmatprep.subr.bf16.mxu0 %v1712
        %2371 = vmatpush1.bf16.msra.mxu0 %v1711
        %2372 = vmatprep.subr.bf16.mxu0 0
        %2373 = vmatpush1.bf16.msra.mxu0 0
        %2374 = vmatprep.subr.bf16.mxu0 0
        %2375 = vmatpush1.bf16.msra.mxu0 0
        %2376 = vmatprep.subr.bf16.mxu0 0
        %2377 = vmatpush1.bf16.msra.mxu0 0
        %2378 = vmatprep.subr.bf16.mxu0 0
        %2379 = vmatpush1.bf16.msra.mxu0 0
        %2380 = vmatprep.subr.bf16.mxu0 0
        %2381 = vmatpush1.bf16.msra.mxu0 0
        %2382 = vmatprep.subr.bf16.mxu0 0
        %2383 = vmatpush1.bf16.msra.mxu0 0
        %2384 = vmatprep.subr.bf16.mxu0 0
        %2385 = vmatpush1.bf16.msra.mxu0 0
        %2386 = vmatprep.subr.bf16.mxu0 0
        %2387 = vmatpush1.bf16.msra.mxu0 0
        %2388 = vmatprep.mubr.bf16.mxu0 0
        %2389 = vmatmul.mubr.bf16.gmra.mrb[0].mxu0 %v1377
        %v2390 = vpop.f32.mrb[0].mxu0
        %v2391 = vadd.f32 0.0, %v2390
        %v2392 = vpop.f32.mrb[0].mxu0
        %v2393 = vadd.f32 0.0, %v2392
        %v2394 = vpop.f32.mrb[0].mxu0
        %v2395 = vadd.f32 0.0, %v2394
        %v2396 = vpop.f32.mrb[0].mxu0
        %v2397 = vadd.f32 0.0, %v2396
        %2398 = vmatprep.mubr.bf16.mxu0 0
        %2399 = vmatmul.mubr.bf16.gmra.mrb[0].mxu0 %v1378
        %v2400 = vpop.f32.mrb[0].mxu0
        %v2401 = vadd.f32 0.0, %v2400
        %v2402 = vpop.f32.mrb[0].mxu0
        %v2403 = vadd.f32 0.0, %v2402
        %v2404 = vpop.f32.mrb[0].mxu0
        %v2405 = vadd.f32 0.0, %v2404
        %v2406 = vpop.f32.mrb[0].mxu0
        %v2407 = vadd.f32 0.0, %v2406
        %2408 = vmatprep.mubr.bf16.mxu0 0
        %2409 = vmatmul.mubr.bf16.gmra.mrb[0].mxu0 %v1379
        %v2410 = vpop.f32.mrb[0].mxu0
        %v2411 = vadd.f32 0.0, %v2410
        %v2412 = vpop.f32.mrb[0].mxu0
        %v2413 = vadd.f32 0.0, %v2412
        %v2414 = vpop.f32.mrb[0].mxu0
        %v2415 = vadd.f32 0.0, %v2414
        %v2416 = vpop.f32.mrb[0].mxu0
        %v2417 = vadd.f32 0.0, %v2416
        %2418 = vmatprep.mubr.bf16.mxu0 0
        %2419 = vmatmul.mubr.bf16.gmra.mrb[0].mxu0 %v1380
        %v2420 = vpop.f32.mrb[0].mxu0
        %v2421 = vadd.f32 0.0, %v2420
        %v2422 = vpop.f32.mrb[0].mxu0
        %v2423 = vadd.f32 0.0, %v2422
        %v2424 = vpop.f32.mrb[0].mxu0
        %v2425 = vadd.f32 0.0, %v2424
        %v2426 = vpop.f32.mrb[0].mxu0
        %v2427 = vadd.f32 0.0, %v2426
        %2428 = vmatprep.mubr.bf16.mxu0 0
        %2429 = vmatmul.mubr.bf16.gmra.mrb[0].mxu0 %v1381
        %v2430 = vpop.f32.mrb[0].mxu0
        %v2431 = vadd.f32 0.0, %v2430
        %v2432 = vpop.f32.mrb[0].mxu0
        %v2433 = vadd.f32 0.0, %v2432
        %v2434 = vpop.f32.mrb[0].mxu0
        %v2435 = vadd.f32 0.0, %v2434
        %v2436 = vpop.f32.mrb[0].mxu0
        %v2437 = vadd.f32 0.0, %v2436
        %2438 = vmatprep.mubr.bf16.mxu0 0
        %2439 = vmatmul.mubr.bf16.gmra.mrb[0].mxu0 %v1382
        %v2440 = vpop.f32.mrb[0].mxu0
        %v2441 = vadd.f32 0.0, %v2440
        %v2442 = vpop.f32.mrb[0].mxu0
        %v2443 = vadd.f32 0.0, %v2442
        %v2444 = vpop.f32.mrb[0].mxu0
        %v2445 = vadd.f32 0.0, %v2444
        %v2446 = vpop.f32.mrb[0].mxu0
        %v2447 = vadd.f32 0.0, %v2446
        %2448 = vmatprep.mubr.bf16.mxu0 0
        %2449 = vmatmul.mubr.bf16.gmra.mrb[0].mxu0 %v1383
        %v2450 = vpop.f32.mrb[0].mxu0
        %v2451 = vadd.f32 0.0, %v2450
        %v2452 = vpop.f32.mrb[0].mxu0
        %v2453 = vadd.f32 0.0, %v2452
        %v2454 = vpop.f32.mrb[0].mxu0
        %v2455 = vadd.f32 0.0, %v2454
        %v2456 = vpop.f32.mrb[0].mxu0
        %v2457 = vadd.f32 0.0, %v2456
        %2458 = vmatprep.mubr.bf16.mxu0 0
        %2459 = vmatmul.mubr.bf16.gmra.mrb[0].mxu0 %v1384
        %v2460 = vpop.f32.mrb[0].mxu0
        %v2461 = vadd.f32 0.0, %v2460
        %v2462 = vpop.f32.mrb[0].mxu0
        %v2463 = vadd.f32 0.0, %v2462
        %v2464 = vpop.f32.mrb[0].mxu0
        %v2465 = vadd.f32 0.0, %v2464
        %v2466 = vpop.f32.mrb[0].mxu0
        %v2467 = vadd.f32 0.0, %v2466
        %2468 = vmatprep.mubr.bf16.mxu0 0
        %2469 = vmatmul.mubr.bf16.gmra.mrb[0].mxu0 %v1385
        %v2470 = vpop.f32.mrb[0].mxu0
        %v2471 = vadd.f32 0.0, %v2470
        %v2472 = vpop.f32.mrb[0].mxu0
        %v2473 = vadd.f32 0.0, %v2472
        %v2474 = vpop.f32.mrb[0].mxu0
        %v2475 = vadd.f32 0.0, %v2474
        %v2476 = vpop.f32.mrb[0].mxu0
        %v2477 = vadd.f32 0.0, %v2476
        %2478 = vmatprep.mubr.bf16.mxu0 0
        %2479 = vmatmul.mubr.bf16.gmra.mrb[0].mxu0 %v1386
        %v2480 = vpop.f32.mrb[0].mxu0
        %v2481 = vadd.f32 0.0, %v2480
        %v2482 = vpop.f32.mrb[0].mxu0
        %v2483 = vadd.f32 0.0, %v2482
        %v2484 = vpop.f32.mrb[0].mxu0
        %v2485 = vadd.f32 0.0, %v2484
        %v2486 = vpop.f32.mrb[0].mxu0
        %v2487 = vadd.f32 0.0, %v2486
        %2488 = vmatprep.mubr.bf16.mxu0 0
        %2489 = vmatmul.mubr.bf16.gmra.mrb[0].mxu0 %v1387
        %v2490 = vpop.f32.mrb[0].mxu0
        %v2491 = vadd.f32 0.0, %v2490
        %v2492 = vpop.f32.mrb[0].mxu0
        %v2493 = vadd.f32 0.0, %v2492
        %v2494 = vpop.f32.mrb[0].mxu0
        %v2495 = vadd.f32 0.0, %v2494
        %v2496 = vpop.f32.mrb[0].mxu0
        %v2497 = vadd.f32 0.0, %v2496
        %2498 = vmatprep.mubr.bf16.mxu0 0
        %2499 = vmatmul.mubr.bf16.gmra.mrb[0].mxu0 %v1388
        %v2500 = vpop.f32.mrb[0].mxu0
        %v2501 = vadd.f32 0.0, %v2500
        %v2502 = vpop.f32.mrb[0].mxu0
        %v2503 = vadd.f32 0.0, %v2502
        %v2504 = vpop.f32.mrb[0].mxu0
        %v2505 = vadd.f32 0.0, %v2504
        %v2506 = vpop.f32.mrb[0].mxu0
        %v2507 = vadd.f32 0.0, %v2506
        %2508 = vmatprep.mubr.bf16.mxu0 0
        %2509 = vmatmul.mubr.bf16.gmra.mrb[0].mxu0 %v1389
        %v2510 = vpop.f32.mrb[0].mxu0
        %v2511 = vadd.f32 0.0, %v2510
        %v2512 = vpop.f32.mrb[0].mxu0
        %v2513 = vadd.f32 0.0, %v2512
        %v2514 = vpop.f32.mrb[0].mxu0
        %v2515 = vadd.f32 0.0, %v2514
        %v2516 = vpop.f32.mrb[0].mxu0
        %v2517 = vadd.f32 0.0, %v2516
        %2518 = vmatprep.mubr.bf16.mxu0 0
        %2519 = vmatmul.mubr.bf16.gmra.mrb[0].mxu0 %v1390
        %v2520 = vpop.f32.mrb[0].mxu0
        %v2521 = vadd.f32 0.0, %v2520
        %v2522 = vpop.f32.mrb[0].mxu0
        %v2523 = vadd.f32 0.0, %v2522
        %v2524 = vpop.f32.mrb[0].mxu0
        %v2525 = vadd.f32 0.0, %v2524
        %v2526 = vpop.f32.mrb[0].mxu0
        %v2527 = vadd.f32 0.0, %v2526
        %2528 = vmatprep.mubr.bf16.mxu0 0
        %2529 = vmatmul.mubr.bf16.gmra.mrb[0].mxu0 %v1391
        %v2530 = vpop.f32.mrb[0].mxu0
        %v2531 = vadd.f32 0.0, %v2530
        %v2532 = vpop.f32.mrb[0].mxu0
        %v2533 = vadd.f32 0.0, %v2532
        %v2534 = vpop.f32.mrb[0].mxu0
        %v2535 = vadd.f32 0.0, %v2534
        %v2536 = vpop.f32.mrb[0].mxu0
        %v2537 = vadd.f32 0.0, %v2536
        %2538 = vmatprep.mubr.bf16.mxu0 0
        %2539 = vmatmul.mubr.bf16.gmra.mrb[0].mxu0 %v1392
        %v2540 = vpop.f32.mrb[0].mxu0
        %v2541 = vadd.f32 0.0, %v2540
        %v2542 = vpop.f32.mrb[0].mxu0
        %v2543 = vadd.f32 0.0, %v2542
        %v2544 = vpop.f32.mrb[0].mxu0
        %v2545 = vadd.f32 0.0, %v2544
        %v2546 = vpop.f32.mrb[0].mxu0
        %v2547 = vadd.f32 0.0, %v2546
        %2548 = vdwg.mxu0
        %v2549 = vxor.u32 %v1812, 2147483648
        %v2550 = vxor.u32 %v1814, 2147483648
        %v2551 = vxor.u32 %v2005, 2147483648
        %v2552 = vxor.u32 %v2007, 2147483648
        %v2553 = vxor.u32 %v1816, 2147483648
        %v2554 = vxor.u32 %v1818, 2147483648
        %v2555 = vxor.u32 %v2009, 2147483648
        %v2556 = vxor.u32 %v2011, 2147483648
        %v2557 = vxor.u32 %v1822, 2147483648
        %v2558 = vxor.u32 %v1824, 2147483648
        %v2559 = vxor.u32 %v2015, 2147483648
        %v2560 = vxor.u32 %v2017, 2147483648
        %v2561 = vxor.u32 %v1826, 2147483648
        %v2562 = vxor.u32 %v1828, 2147483648
        %v2563 = vxor.u32 %v2019, 2147483648
        %v2564 = vxor.u32 %v2021, 2147483648
        %v2565 = vxor.u32 %v1832, 2147483648
        %v2566 = vxor.u32 %v1834, 2147483648
        %v2567 = vxor.u32 %v2025, 2147483648
        %v2568 = vxor.u32 %v2027, 2147483648
        %v2569 = vxor.u32 %v1836, 2147483648
        %v2570 = vxor.u32 %v1838, 2147483648
        %v2571 = vxor.u32 %v2029, 2147483648
        %v2572 = vxor.u32 %v2031, 2147483648
        %v2573 = vxor.u32 %v1842, 2147483648
        %v2574 = vxor.u32 %v1844, 2147483648
        %v2575 = vxor.u32 %v2035, 2147483648
        %v2576 = vxor.u32 %v2037, 2147483648
        %v2577 = vxor.u32 %v1846, 2147483648
        %v2578 = vxor.u32 %v1848, 2147483648
        %v2579 = vxor.u32 %v2039, 2147483648
        %v2580 = vxor.u32 %v2041, 2147483648
        %v2581 = vxor.u32 %v1852, 2147483648
        %v2582 = vxor.u32 %v1854, 2147483648
        %v2583 = vxor.u32 %v2045, 2147483648
        %v2584 = vxor.u32 %v2047, 2147483648
        %v2585 = vxor.u32 %v1856, 2147483648
        %v2586 = vxor.u32 %v1858, 2147483648
        %v2587 = vxor.u32 %v2049, 2147483648
        %v2588 = vxor.u32 %v2051, 2147483648
        %v2589 = vxor.u32 %v1862, 2147483648
        %v2590 = vxor.u32 %v1864, 2147483648
        %v2591 = vxor.u32 %v2055, 2147483648
        %v2592 = vxor.u32 %v2057, 2147483648
        %v2593 = vxor.u32 %v1866, 2147483648
        %v2594 = vxor.u32 %v1868, 2147483648
        %v2595 = vxor.u32 %v2059, 2147483648
        %v2596 = vxor.u32 %v2061, 2147483648
        %v2597 = vxor.u32 %v1872, 2147483648
        %v2598 = vxor.u32 %v1874, 2147483648
        %v2599 = vxor.u32 %v2065, 2147483648
        %v2600 = vxor.u32 %v2067, 2147483648
        %v2601 = vxor.u32 %v1876, 2147483648
        %v2602 = vxor.u32 %v1878, 2147483648
        %v2603 = vxor.u32 %v2069, 2147483648
        %v2604 = vxor.u32 %v2071, 2147483648
        %v2605 = vxor.u32 %v1882, 2147483648
        %v2606 = vxor.u32 %v1884, 2147483648
        %v2607 = vxor.u32 %v2075, 2147483648
        %v2608 = vxor.u32 %v2077, 2147483648
        %v2609 = vxor.u32 %v1886, 2147483648
        %v2610 = vxor.u32 %v1888, 2147483648
        %v2611 = vxor.u32 %v2079, 2147483648
        %v2612 = vxor.u32 %v2081, 2147483648
        %v2613 = vxor.u32 %v1892, 2147483648
        %v2614 = vxor.u32 %v1894, 2147483648
        %v2615 = vxor.u32 %v2085, 2147483648
        %v2616 = vxor.u32 %v2087, 2147483648
        %v2617 = vxor.u32 %v1896, 2147483648
        %v2618 = vxor.u32 %v1898, 2147483648
        %v2619 = vxor.u32 %v2089, 2147483648
        %v2620 = vxor.u32 %v2091, 2147483648
        %v2621 = vxor.u32 %v1902, 2147483648
        %v2622 = vxor.u32 %v1904, 2147483648
        %v2623 = vxor.u32 %v2095, 2147483648
        %v2624 = vxor.u32 %v2097, 2147483648
        %v2625 = vxor.u32 %v1906, 2147483648
        %v2626 = vxor.u32 %v1908, 2147483648
        %v2627 = vxor.u32 %v2099, 2147483648
        %v2628 = vxor.u32 %v2101, 2147483648
        %v2629 = vxor.u32 %v1912, 2147483648
        %v2630 = vxor.u32 %v1914, 2147483648
        %v2631 = vxor.u32 %v2105, 2147483648
        %v2632 = vxor.u32 %v2107, 2147483648
        %v2633 = vxor.u32 %v1916, 2147483648
        %v2634 = vxor.u32 %v1918, 2147483648
        %v2635 = vxor.u32 %v2109, 2147483648
        %v2636 = vxor.u32 %v2111, 2147483648
        %v2637 = vxor.u32 %v1922, 2147483648
        %v2638 = vxor.u32 %v1924, 2147483648
        %v2639 = vxor.u32 %v2115, 2147483648
        %v2640 = vxor.u32 %v2117, 2147483648
        %v2641 = vxor.u32 %v1926, 2147483648
        %v2642 = vxor.u32 %v1928, 2147483648
        %v2643 = vxor.u32 %v2119, 2147483648
        %v2644 = vxor.u32 %v2121, 2147483648
        %v2645 = vxor.u32 %v1932, 2147483648
        %v2646 = vxor.u32 %v1934, 2147483648
        %v2647 = vxor.u32 %v2125, 2147483648
        %v2648 = vxor.u32 %v2127, 2147483648
        %v2649 = vxor.u32 %v1936, 2147483648
        %v2650 = vxor.u32 %v1938, 2147483648
        %v2651 = vxor.u32 %v2129, 2147483648
        %v2652 = vxor.u32 %v2131, 2147483648
        %v2653 = vxor.u32 %v1942, 2147483648
        %v2654 = vxor.u32 %v1944, 2147483648
        %v2655 = vxor.u32 %v2135, 2147483648
        %v2656 = vxor.u32 %v2137, 2147483648
        %v2657 = vxor.u32 %v1946, 2147483648
        %v2658 = vxor.u32 %v1948, 2147483648
        %v2659 = vxor.u32 %v2139, 2147483648
        %v2660 = vxor.u32 %v2141, 2147483648
        %v2661 = vxor.u32 %v1952, 2147483648
        %v2662 = vxor.u32 %v1954, 2147483648
        %v2663 = vxor.u32 %v2145, 2147483648
        %v2664 = vxor.u32 %v2147, 2147483648
        %v2665 = vxor.u32 %v1956, 2147483648
        %v2666 = vxor.u32 %v1958, 2147483648
        %v2667 = vxor.u32 %v2149, 2147483648
        %v2668 = vxor.u32 %v2151, 2147483648
        %v2669 = vxor.u32 %v1962, 2147483648
        %v2670 = vxor.u32 %v1964, 2147483648
        %v2671 = vxor.u32 %v2155, 2147483648
        %v2672 = vxor.u32 %v2157, 2147483648
        %v2673 = vxor.u32 %v1966, 2147483648
        %v2674 = vxor.u32 %v1968, 2147483648
        %v2675 = vxor.u32 %v2159, 2147483648
        %v2676 = vxor.u32 %v2161, 2147483648
        %v2677 = vmul.f32 %v2549, 1.442695
        %v2678 = vpow.pop %v2677
        %v2679 = vmul.f32 %v2550, 1.442695
        %v2680 = vpow.pop %v2679
        %v2681 = vmul.f32 %v2551, 1.442695
        %v2682 = vpow.pop %v2681
        %v2683 = vmul.f32 %v2552, 1.442695
        %v2684 = vpow.pop %v2683
        %v2685 = vmul.f32 %v2553, 1.442695
        %v2686 = vpow.pop %v2685
        %v2687 = vmul.f32 %v2554, 1.442695
        %v2688 = vpow.pop %v2687
        %v2689 = vmul.f32 %v2555, 1.442695
        %v2690 = vpow.pop %v2689
        %v2691 = vmul.f32 %v2556, 1.442695
        %v2692 = vpow.pop %v2691
        %v2693 = vmul.f32 %v2557, 1.442695
        %v2694 = vpow.pop %v2693
        %v2695 = vmul.f32 %v2558, 1.442695
        %v2696 = vpow.pop %v2695
        %v2697 = vmul.f32 %v2559, 1.442695
        %v2698 = vpow.pop %v2697
        %v2699 = vmul.f32 %v2560, 1.442695
        %v2700 = vpow.pop %v2699
        %v2701 = vmul.f32 %v2561, 1.442695
        %v2702 = vpow.pop %v2701
        %v2703 = vmul.f32 %v2562, 1.442695
        %v2704 = vpow.pop %v2703
        %v2705 = vmul.f32 %v2563, 1.442695
        %v2706 = vpow.pop %v2705
        %v2707 = vmul.f32 %v2564, 1.442695
        %v2708 = vpow.pop %v2707
        %v2709 = vmul.f32 %v2565, 1.442695
        %v2710 = vpow.pop %v2709
        %v2711 = vmul.f32 %v2566, 1.442695
        %v2712 = vpow.pop %v2711
        %v2713 = vmul.f32 %v2567, 1.442695
        %v2714 = vpow.pop %v2713
        %v2715 = vmul.f32 %v2568, 1.442695
        %v2716 = vpow.pop %v2715
        %v2717 = vmul.f32 %v2569, 1.442695
        %v2718 = vpow.pop %v2717
        %v2719 = vmul.f32 %v2570, 1.442695
        %v2720 = vpow.pop %v2719
        %v2721 = vmul.f32 %v2571, 1.442695
        %v2722 = vpow.pop %v2721
        %v2723 = vmul.f32 %v2572, 1.442695
        %v2724 = vpow.pop %v2723
        %v2725 = vmul.f32 %v2573, 1.442695
        %v2726 = vpow.pop %v2725
        %v2727 = vmul.f32 %v2574, 1.442695
        %v2728 = vpow.pop %v2727
        %v2729 = vmul.f32 %v2575, 1.442695
        %v2730 = vpow.pop %v2729
        %v2731 = vmul.f32 %v2576, 1.442695
        %v2732 = vpow.pop %v2731
        %v2733 = vmul.f32 %v2577, 1.442695
        %v2734 = vpow.pop %v2733
        %v2735 = vmul.f32 %v2578, 1.442695
        %v2736 = vpow.pop %v2735
        %v2737 = vmul.f32 %v2579, 1.442695
        %v2738 = vpow.pop %v2737
        %v2739 = vmul.f32 %v2580, 1.442695
        %v2740 = vpow.pop %v2739
        %v2741 = vmul.f32 %v2581, 1.442695
        %v2742 = vpow.pop %v2741
        %v2743 = vmul.f32 %v2582, 1.442695
        %v2744 = vpow.pop %v2743
        %v2745 = vmul.f32 %v2583, 1.442695
        %v2746 = vpow.pop %v2745
        %v2747 = vmul.f32 %v2584, 1.442695
        %v2748 = vpow.pop %v2747
        %v2749 = vmul.f32 %v2585, 1.442695
        %v2750 = vpow.pop %v2749
        %v2751 = vmul.f32 %v2586, 1.442695
        %v2752 = vpow.pop %v2751
        %v2753 = vmul.f32 %v2587, 1.442695
        %v2754 = vpow.pop %v2753
        %v2755 = vmul.f32 %v2588, 1.442695
        %v2756 = vpow.pop %v2755
        %v2757 = vmul.f32 %v2589, 1.442695
        %v2758 = vpow.pop %v2757
        %v2759 = vmul.f32 %v2590, 1.442695
        %v2760 = vpow.pop %v2759
        %v2761 = vmul.f32 %v2591, 1.442695
        %v2762 = vpow.pop %v2761
        %v2763 = vmul.f32 %v2592, 1.442695
        %v2764 = vpow.pop %v2763
        %v2765 = vmul.f32 %v2593, 1.442695
        %v2766 = vpow.pop %v2765
        %v2767 = vmul.f32 %v2594, 1.442695
        %v2768 = vpow.pop %v2767
        %v2769 = vmul.f32 %v2595, 1.442695
        %v2770 = vpow.pop %v2769
        %v2771 = vmul.f32 %v2596, 1.442695
        %v2772 = vpow.pop %v2771
        %v2773 = vmul.f32 %v2597, 1.442695
        %v2774 = vpow.pop %v2773
        %v2775 = vmul.f32 %v2598, 1.442695
        %v2776 = vpow.pop %v2775
        %v2777 = vmul.f32 %v2599, 1.442695
        %v2778 = vpow.pop %v2777
        %v2779 = vmul.f32 %v2600, 1.442695
        %v2780 = vpow.pop %v2779
        %v2781 = vmul.f32 %v2601, 1.442695
        %v2782 = vpow.pop %v2781
        %v2783 = vmul.f32 %v2602, 1.442695
        %v2784 = vpow.pop %v2783
        %v2785 = vmul.f32 %v2603, 1.442695
        %v2786 = vpow.pop %v2785
        %v2787 = vmul.f32 %v2604, 1.442695
        %v2788 = vpow.pop %v2787
        %v2789 = vmul.f32 %v2605, 1.442695
        %v2790 = vpow.pop %v2789
        %v2791 = vmul.f32 %v2606, 1.442695
        %v2792 = vpow.pop %v2791
        %v2793 = vmul.f32 %v2607, 1.442695
        %v2794 = vpow.pop %v2793
        %v2795 = vmul.f32 %v2608, 1.442695
        %v2796 = vpow.pop %v2795
        %v2797 = vmul.f32 %v2609, 1.442695
        %v2798 = vpow.pop %v2797
        %v2799 = vmul.f32 %v2610, 1.442695
        %v2800 = vpow.pop %v2799
        %v2801 = vmul.f32 %v2611, 1.442695
        %v2802 = vpow.pop %v2801
        %v2803 = vmul.f32 %v2612, 1.442695
        %v2804 = vpow.pop %v2803
        %v2805 = vmul.f32 %v2613, 1.442695
        %v2806 = vpow.pop %v2805
        %v2807 = vmul.f32 %v2614, 1.442695
        %v2808 = vpow.pop %v2807
        %v2809 = vmul.f32 %v2615, 1.442695
        %v2810 = vpow.pop %v2809
        %v2811 = vmul.f32 %v2616, 1.442695
        %v2812 = vpow.pop %v2811
        %v2813 = vmul.f32 %v2617, 1.442695
        %v2814 = vpow.pop %v2813
        %v2815 = vmul.f32 %v2618, 1.442695
        %v2816 = vpow.pop %v2815
        %v2817 = vmul.f32 %v2619, 1.442695
        %v2818 = vpow.pop %v2817
        %v2819 = vmul.f32 %v2620, 1.442695
        %v2820 = vpow.pop %v2819
        %v2821 = vmul.f32 %v2621, 1.442695
        %v2822 = vpow.pop %v2821
        %v2823 = vmul.f32 %v2622, 1.442695
        %v2824 = vpow.pop %v2823
        %v2825 = vmul.f32 %v2623, 1.442695
        %v2826 = vpow.pop %v2825
        %v2827 = vmul.f32 %v2624, 1.442695
        %v2828 = vpow.pop %v2827
        %v2829 = vmul.f32 %v2625, 1.442695
        %v2830 = vpow.pop %v2829
        %v2831 = vmul.f32 %v2626, 1.442695
        %v2832 = vpow.pop %v2831
        %v2833 = vmul.f32 %v2627, 1.442695
        %v2834 = vpow.pop %v2833
        %v2835 = vmul.f32 %v2628, 1.442695
        %v2836 = vpow.pop %v2835
        %v2837 = vmul.f32 %v2629, 1.442695
        %v2838 = vpow.pop %v2837
        %v2839 = vmul.f32 %v2630, 1.442695
        %v2840 = vpow.pop %v2839
        %v2841 = vmul.f32 %v2631, 1.442695
        %v2842 = vpow.pop %v2841
        %v2843 = vmul.f32 %v2632, 1.442695
        %v2844 = vpow.pop %v2843
        %v2845 = vmul.f32 %v2633, 1.442695
        %v2846 = vpow.pop %v2845
        %v2847 = vmul.f32 %v2634, 1.442695
        %v2848 = vpow.pop %v2847
        %v2849 = vmul.f32 %v2635, 1.442695
        %v2850 = vpow.pop %v2849
        %v2851 = vmul.f32 %v2636, 1.442695
        %v2852 = vpow.pop %v2851
        %v2853 = vmul.f32 %v2637, 1.442695
        %v2854 = vpow.pop %v2853
        %v2855 = vmul.f32 %v2638, 1.442695
        %v2856 = vpow.pop %v2855
        %v2857 = vmul.f32 %v2639, 1.442695
        %v2858 = vpow.pop %v2857
        %v2859 = vmul.f32 %v2640, 1.442695
        %v2860 = vpow.pop %v2859
        %v2861 = vmul.f32 %v2641, 1.442695
        %v2862 = vpow.pop %v2861
        %v2863 = vmul.f32 %v2642, 1.442695
        %v2864 = vpow.pop %v2863
        %v2865 = vmul.f32 %v2643, 1.442695
        %v2866 = vpow.pop %v2865
        %v2867 = vmul.f32 %v2644, 1.442695
        %v2868 = vpow.pop %v2867
        %v2869 = vmul.f32 %v2645, 1.442695
        %v2870 = vpow.pop %v2869
        %v2871 = vmul.f32 %v2646, 1.442695
        %v2872 = vpow.pop %v2871
        %v2873 = vmul.f32 %v2647, 1.442695
        %v2874 = vpow.pop %v2873
        %v2875 = vmul.f32 %v2648, 1.442695
        %v2876 = vpow.pop %v2875
        %v2877 = vmul.f32 %v2649, 1.442695
        %v2878 = vpow.pop %v2877
        %v2879 = vmul.f32 %v2650, 1.442695
        %v2880 = vpow.pop %v2879
        %v2881 = vmul.f32 %v2651, 1.442695
        %v2882 = vpow.pop %v2881
        %v2883 = vmul.f32 %v2652, 1.442695
        %v2884 = vpow.pop %v2883
        %v2885 = vmul.f32 %v2653, 1.442695
        %v2886 = vpow.pop %v2885
        %v2887 = vmul.f32 %v2654, 1.442695
        %v2888 = vpow.pop %v2887
        %v2889 = vmul.f32 %v2655, 1.442695
        %v2890 = vpow.pop %v2889
        %v2891 = vmul.f32 %v2656, 1.442695
        %v2892 = vpow.pop %v2891
        %v2893 = vmul.f32 %v2657, 1.442695
        %v2894 = vpow.pop %v2893
        %v2895 = vmul.f32 %v2658, 1.442695
        %v2896 = vpow.pop %v2895
        %v2897 = vmul.f32 %v2659, 1.442695
        %v2898 = vpow.pop %v2897
        %v2899 = vmul.f32 %v2660, 1.442695
        %v2900 = vpow.pop %v2899
        %v2901 = vmul.f32 %v2661, 1.442695
        %v2902 = vpow.pop %v2901
        %v2903 = vmul.f32 %v2662, 1.442695
        %v2904 = vpow.pop %v2903
        %v2905 = vmul.f32 %v2663, 1.442695
        %v2906 = vpow.pop %v2905
        %v2907 = vmul.f32 %v2664, 1.442695
        %v2908 = vpow.pop %v2907
        %v2909 = vmul.f32 %v2665, 1.442695
        %v2910 = vpow.pop %v2909
        %v2911 = vmul.f32 %v2666, 1.442695
        %v2912 = vpow.pop %v2911
        %v2913 = vmul.f32 %v2667, 1.442695
        %v2914 = vpow.pop %v2913
        %v2915 = vmul.f32 %v2668, 1.442695
        %v2916 = vpow.pop %v2915
        %v2917 = vmul.f32 %v2669, 1.442695
        %v2918 = vpow.pop %v2917
        %v2919 = vmul.f32 %v2670, 1.442695
        %v2920 = vpow.pop %v2919
        %v2921 = vmul.f32 %v2671, 1.442695
        %v2922 = vpow.pop %v2921
        %v2923 = vmul.f32 %v2672, 1.442695
        %v2924 = vpow.pop %v2923
        %v2925 = vmul.f32 %v2673, 1.442695
        %v2926 = vpow.pop %v2925
        %v2927 = vmul.f32 %v2674, 1.442695
        %v2928 = vpow.pop %v2927
        %v2929 = vmul.f32 %v2675, 1.442695
        %v2930 = vpow.pop %v2929
        %v2931 = vmul.f32 %v2676, 1.442695
        %v2932 = vpow.pop %v2931
        %v2933 = vadd.f32 %v2678, 1.0
        %v2934 = vadd.f32 %v2680, 1.0
        %v2935 = vadd.f32 %v2682, 1.0
        %v2936 = vadd.f32 %v2684, 1.0
        %v2937 = vadd.f32 %v2686, 1.0
        %v2938 = vadd.f32 %v2688, 1.0
        %v2939 = vadd.f32 %v2690, 1.0
        %v2940 = vadd.f32 %v2692, 1.0
        %v2941 = vadd.f32 %v2694, 1.0
        %v2942 = vadd.f32 %v2696, 1.0
        %v2943 = vadd.f32 %v2698, 1.0
        %v2944 = vadd.f32 %v2700, 1.0
        %v2945 = vadd.f32 %v2702, 1.0
        %v2946 = vadd.f32 %v2704, 1.0
        %v2947 = vadd.f32 %v2706, 1.0
        %v2948 = vadd.f32 %v2708, 1.0
        %v2949 = vadd.f32 %v2710, 1.0
        %v2950 = vadd.f32 %v2712, 1.0
        %v2951 = vadd.f32 %v2714, 1.0
        %v2952 = vadd.f32 %v2716, 1.0
        %v2953 = vadd.f32 %v2718, 1.0
        %v2954 = vadd.f32 %v2720, 1.0
        %v2955 = vadd.f32 %v2722, 1.0
        %v2956 = vadd.f32 %v2724, 1.0
        %v2957 = vadd.f32 %v2726, 1.0
        %v2958 = vadd.f32 %v2728, 1.0
        %v2959 = vadd.f32 %v2730, 1.0
        %v2960 = vadd.f32 %v2732, 1.0
        %v2961 = vadd.f32 %v2734, 1.0
        %v2962 = vadd.f32 %v2736, 1.0
        %v2963 = vadd.f32 %v2738, 1.0
        %v2964 = vadd.f32 %v2740, 1.0
        %v2965 = vadd.f32 %v2742, 1.0
        %v2966 = vadd.f32 %v2744, 1.0
        %v2967 = vadd.f32 %v2746, 1.0
        %v2968 = vadd.f32 %v2748, 1.0
        %v2969 = vadd.f32 %v2750, 1.0
        %v2970 = vadd.f32 %v2752, 1.0
        %v2971 = vadd.f32 %v2754, 1.0
        %v2972 = vadd.f32 %v2756, 1.0
        %v2973 = vadd.f32 %v2758, 1.0
        %v2974 = vadd.f32 %v2760, 1.0
        %v2975 = vadd.f32 %v2762, 1.0
        %v2976 = vadd.f32 %v2764, 1.0
        %v2977 = vadd.f32 %v2766, 1.0
        %v2978 = vadd.f32 %v2768, 1.0
        %v2979 = vadd.f32 %v2770, 1.0
        %v2980 = vadd.f32 %v2772, 1.0
        %v2981 = vadd.f32 %v2774, 1.0
        %v2982 = vadd.f32 %v2776, 1.0
        %v2983 = vadd.f32 %v2778, 1.0
        %v2984 = vadd.f32 %v2780, 1.0
        %v2985 = vadd.f32 %v2782, 1.0
        %v2986 = vadd.f32 %v2784, 1.0
        %v2987 = vadd.f32 %v2786, 1.0
        %v2988 = vadd.f32 %v2788, 1.0
        %v2989 = vadd.f32 %v2790, 1.0
        %v2990 = vadd.f32 %v2792, 1.0
        %v2991 = vadd.f32 %v2794, 1.0
        %v2992 = vadd.f32 %v2796, 1.0
        %v2993 = vadd.f32 %v2798, 1.0
        %v2994 = vadd.f32 %v2800, 1.0
        %v2995 = vadd.f32 %v2802, 1.0
        %v2996 = vadd.f32 %v2804, 1.0
        %v2997 = vadd.f32 %v2806, 1.0
        %v2998 = vadd.f32 %v2808, 1.0
        %v2999 = vadd.f32 %v2810, 1.0
        %v3000 = vadd.f32 %v2812, 1.0
        %v3001 = vadd.f32 %v2814, 1.0
        %v3002 = vadd.f32 %v2816, 1.0
        %v3003 = vadd.f32 %v2818, 1.0
        %v3004 = vadd.f32 %v2820, 1.0
        %v3005 = vadd.f32 %v2822, 1.0
        %v3006 = vadd.f32 %v2824, 1.0
        %v3007 = vadd.f32 %v2826, 1.0
        %v3008 = vadd.f32 %v2828, 1.0
        %v3009 = vadd.f32 %v2830, 1.0
        %v3010 = vadd.f32 %v2832, 1.0
        %v3011 = vadd.f32 %v2834, 1.0
        %v3012 = vadd.f32 %v2836, 1.0
        %v3013 = vadd.f32 %v2838, 1.0
        %v3014 = vadd.f32 %v2840, 1.0
        %v3015 = vadd.f32 %v2842, 1.0
        %v3016 = vadd.f32 %v2844, 1.0
        %v3017 = vadd.f32 %v2846, 1.0
        %v3018 = vadd.f32 %v2848, 1.0
        %v3019 = vadd.f32 %v2850, 1.0
        %v3020 = vadd.f32 %v2852, 1.0
        %v3021 = vadd.f32 %v2854, 1.0
        %v3022 = vadd.f32 %v2856, 1.0
        %v3023 = vadd.f32 %v2858, 1.0
        %v3024 = vadd.f32 %v2860, 1.0
        %v3025 = vadd.f32 %v2862, 1.0
        %v3026 = vadd.f32 %v2864, 1.0
        %v3027 = vadd.f32 %v2866, 1.0
        %v3028 = vadd.f32 %v2868, 1.0
        %v3029 = vadd.f32 %v2870, 1.0
        %v3030 = vadd.f32 %v2872, 1.0
        %v3031 = vadd.f32 %v2874, 1.0
        %v3032 = vadd.f32 %v2876, 1.0
        %v3033 = vadd.f32 %v2878, 1.0
        %v3034 = vadd.f32 %v2880, 1.0
        %v3035 = vadd.f32 %v2882, 1.0
        %v3036 = vadd.f32 %v2884, 1.0
        %v3037 = vadd.f32 %v2886, 1.0
        %v3038 = vadd.f32 %v2888, 1.0
        %v3039 = vadd.f32 %v2890, 1.0
        %v3040 = vadd.f32 %v2892, 1.0
        %v3041 = vadd.f32 %v2894, 1.0
        %v3042 = vadd.f32 %v2896, 1.0
        %v3043 = vadd.f32 %v2898, 1.0
        %v3044 = vadd.f32 %v2900, 1.0
        %v3045 = vadd.f32 %v2902, 1.0
        %v3046 = vadd.f32 %v2904, 1.0
        %v3047 = vadd.f32 %v2906, 1.0
        %v3048 = vadd.f32 %v2908, 1.0
        %v3049 = vadd.f32 %v2910, 1.0
        %v3050 = vadd.f32 %v2912, 1.0
        %v3051 = vadd.f32 %v2914, 1.0
        %v3052 = vadd.f32 %v2916, 1.0
        %v3053 = vadd.f32 %v2918, 1.0
        %v3054 = vadd.f32 %v2920, 1.0
        %v3055 = vadd.f32 %v2922, 1.0
        %v3056 = vadd.f32 %v2924, 1.0
        %v3057 = vadd.f32 %v2926, 1.0
        %v3058 = vadd.f32 %v2928, 1.0
        %v3059 = vadd.f32 %v2930, 1.0
        %v3060 = vadd.f32 %v2932, 1.0
        %v3061 = vrcp.pop %v2933
        %v3062 = vmul.f32 1.0, %v3061
        %v3063 = vrcp.pop %v2934
        %v3064 = vmul.f32 1.0, %v3063
        %v3065 = vrcp.pop %v2935
        %v3066 = vmul.f32 1.0, %v3065
        %v3067 = vrcp.pop %v2936
        %v3068 = vmul.f32 1.0, %v3067
        %v3069 = vrcp.pop %v2937
        %v3070 = vmul.f32 1.0, %v3069
        %v3071 = vrcp.pop %v2938
        %v3072 = vmul.f32 1.0, %v3071
        %v3073 = vrcp.pop %v2939
        %v3074 = vmul.f32 1.0, %v3073
        %v3075 = vrcp.pop %v2940
        %v3076 = vmul.f32 1.0, %v3075
        %v3077 = vrcp.pop %v2941
        %v3078 = vmul.f32 1.0, %v3077
        %v3079 = vrcp.pop %v2942
        %v3080 = vmul.f32 1.0, %v3079
        %v3081 = vrcp.pop %v2943
        %v3082 = vmul.f32 1.0, %v3081
        %v3083 = vrcp.pop %v2944
        %v3084 = vmul.f32 1.0, %v3083
        %v3085 = vrcp.pop %v2945
        %v3086 = vmul.f32 1.0, %v3085
        %v3087 = vrcp.pop %v2946
        %v3088 = vmul.f32 1.0, %v3087
        %v3089 = vrcp.pop %v2947
        %v3090 = vmul.f32 1.0, %v3089
        %v3091 = vrcp.pop %v2948
        %v3092 = vmul.f32 1.0, %v3091
        %v3093 = vrcp.pop %v2949
        %v3094 = vmul.f32 1.0, %v3093
        %v3095 = vrcp.pop %v2950
        %v3096 = vmul.f32 1.0, %v3095
        %v3097 = vrcp.pop %v2951
        %v3098 = vmul.f32 1.0, %v3097
        %v3099 = vrcp.pop %v2952
        %v3100 = vmul.f32 1.0, %v3099
        %v3101 = vrcp.pop %v2953
        %v3102 = vmul.f32 1.0, %v3101
        %v3103 = vrcp.pop %v2954
        %v3104 = vmul.f32 1.0, %v3103
        %v3105 = vrcp.pop %v2955
        %v3106 = vmul.f32 1.0, %v3105
        %v3107 = vrcp.pop %v2956
        %v3108 = vmul.f32 1.0, %v3107
        %v3109 = vrcp.pop %v2957
        %v3110 = vmul.f32 1.0, %v3109
        %v3111 = vrcp.pop %v2958
        %v3112 = vmul.f32 1.0, %v3111
        %v3113 = vrcp.pop %v2959
        %v3114 = vmul.f32 1.0, %v3113
        %v3115 = vrcp.pop %v2960
        %v3116 = vmul.f32 1.0, %v3115
        %v3117 = vrcp.pop %v2961
        %v3118 = vmul.f32 1.0, %v3117
        %v3119 = vrcp.pop %v2962
        %v3120 = vmul.f32 1.0, %v3119
        %v3121 = vrcp.pop %v2963
        %v3122 = vmul.f32 1.0, %v3121
        %v3123 = vrcp.pop %v2964
        %v3124 = vmul.f32 1.0, %v3123
        %v3125 = vrcp.pop %v2965
        %v3126 = vmul.f32 1.0, %v3125
        %v3127 = vrcp.pop %v2966
        %v3128 = vmul.f32 1.0, %v3127
        %v3129 = vrcp.pop %v2967
        %v3130 = vmul.f32 1.0, %v3129
        %v3131 = vrcp.pop %v2968
        %v3132 = vmul.f32 1.0, %v3131
        %v3133 = vrcp.pop %v2969
        %v3134 = vmul.f32 1.0, %v3133
        %v3135 = vrcp.pop %v2970
        %v3136 = vmul.f32 1.0, %v3135
        %v3137 = vrcp.pop %v2971
        %v3138 = vmul.f32 1.0, %v3137
        %v3139 = vrcp.pop %v2972
        %v3140 = vmul.f32 1.0, %v3139
        %v3141 = vrcp.pop %v2973
        %v3142 = vmul.f32 1.0, %v3141
        %v3143 = vrcp.pop %v2974
        %v3144 = vmul.f32 1.0, %v3143
        %v3145 = vrcp.pop %v2975
        %v3146 = vmul.f32 1.0, %v3145
        %v3147 = vrcp.pop %v2976
        %v3148 = vmul.f32 1.0, %v3147
        %v3149 = vrcp.pop %v2977
        %v3150 = vmul.f32 1.0, %v3149
        %v3151 = vrcp.pop %v2978
        %v3152 = vmul.f32 1.0, %v3151
        %v3153 = vrcp.pop %v2979
        %v3154 = vmul.f32 1.0, %v3153
        %v3155 = vrcp.pop %v2980
        %v3156 = vmul.f32 1.0, %v3155
        %v3157 = vrcp.pop %v2981
        %v3158 = vmul.f32 1.0, %v3157
        %v3159 = vrcp.pop %v2982
        %v3160 = vmul.f32 1.0, %v3159
        %v3161 = vrcp.pop %v2983
        %v3162 = vmul.f32 1.0, %v3161
        %v3163 = vrcp.pop %v2984
        %v3164 = vmul.f32 1.0, %v3163
        %v3165 = vrcp.pop %v2985
        %v3166 = vmul.f32 1.0, %v3165
        %v3167 = vrcp.pop %v2986
        %v3168 = vmul.f32 1.0, %v3167
        %v3169 = vrcp.pop %v2987
        %v3170 = vmul.f32 1.0, %v3169
        %v3171 = vrcp.pop %v2988
        %v3172 = vmul.f32 1.0, %v3171
        %v3173 = vrcp.pop %v2989
        %v3174 = vmul.f32 1.0, %v3173
        %v3175 = vrcp.pop %v2990
        %v3176 = vmul.f32 1.0, %v3175
        %v3177 = vrcp.pop %v2991
        %v3178 = vmul.f32 1.0, %v3177
        %v3179 = vrcp.pop %v2992
        %v3180 = vmul.f32 1.0, %v3179
        %v3181 = vrcp.pop %v2993
        %v3182 = vmul.f32 1.0, %v3181
        %v3183 = vrcp.pop %v2994
        %v3184 = vmul.f32 1.0, %v3183
        %v3185 = vrcp.pop %v2995
        %v3186 = vmul.f32 1.0, %v3185
        %v3187 = vrcp.pop %v2996
        %v3188 = vmul.f32 1.0, %v3187
        %v3189 = vrcp.pop %v2997
        %v3190 = vmul.f32 1.0, %v3189
        %v3191 = vrcp.pop %v2998
        %v3192 = vmul.f32 1.0, %v3191
        %v3193 = vrcp.pop %v2999
        %v3194 = vmul.f32 1.0, %v3193
        %v3195 = vrcp.pop %v3000
        %v3196 = vmul.f32 1.0, %v3195
        %v3197 = vrcp.pop %v3001
        %v3198 = vmul.f32 1.0, %v3197
        %v3199 = vrcp.pop %v3002
        %v3200 = vmul.f32 1.0, %v3199
        %v3201 = vrcp.pop %v3003
        %v3202 = vmul.f32 1.0, %v3201
        %v3203 = vrcp.pop %v3004
        %v3204 = vmul.f32 1.0, %v3203
        %v3205 = vrcp.pop %v3005
        %v3206 = vmul.f32 1.0, %v3205
        %v3207 = vrcp.pop %v3006
        %v3208 = vmul.f32 1.0, %v3207
        %v3209 = vrcp.pop %v3007
        %v3210 = vmul.f32 1.0, %v3209
        %v3211 = vrcp.pop %v3008
        %v3212 = vmul.f32 1.0, %v3211
        %v3213 = vrcp.pop %v3009
        %v3214 = vmul.f32 1.0, %v3213
        %v3215 = vrcp.pop %v3010
        %v3216 = vmul.f32 1.0, %v3215
        %v3217 = vrcp.pop %v3011
        %v3218 = vmul.f32 1.0, %v3217
        %v3219 = vrcp.pop %v3012
        %v3220 = vmul.f32 1.0, %v3219
        %v3221 = vrcp.pop %v3013
        %v3222 = vmul.f32 1.0, %v3221
        %v3223 = vrcp.pop %v3014
        %v3224 = vmul.f32 1.0, %v3223
        %v3225 = vrcp.pop %v3015
        %v3226 = vmul.f32 1.0, %v3225
        %v3227 = vrcp.pop %v3016
        %v3228 = vmul.f32 1.0, %v3227
        %v3229 = vrcp.pop %v3017
        %v3230 = vmul.f32 1.0, %v3229
        %v3231 = vrcp.pop %v3018
        %v3232 = vmul.f32 1.0, %v3231
        %v3233 = vrcp.pop %v3019
        %v3234 = vmul.f32 1.0, %v3233
        %v3235 = vrcp.pop %v3020
        %v3236 = vmul.f32 1.0, %v3235
        %v3237 = vrcp.pop %v3021
        %v3238 = vmul.f32 1.0, %v3237
        %v3239 = vrcp.pop %v3022
        %v3240 = vmul.f32 1.0, %v3239
        %v3241 = vrcp.pop %v3023
        %v3242 = vmul.f32 1.0, %v3241
        %v3243 = vrcp.pop %v3024
        %v3244 = vmul.f32 1.0, %v3243
        %v3245 = vrcp.pop %v3025
        %v3246 = vmul.f32 1.0, %v3245
        %v3247 = vrcp.pop %v3026
        %v3248 = vmul.f32 1.0, %v3247
        %v3249 = vrcp.pop %v3027
        %v3250 = vmul.f32 1.0, %v3249
        %v3251 = vrcp.pop %v3028
        %v3252 = vmul.f32 1.0, %v3251
        %v3253 = vrcp.pop %v3029
        %v3254 = vmul.f32 1.0, %v3253
        %v3255 = vrcp.pop %v3030
        %v3256 = vmul.f32 1.0, %v3255
        %v3257 = vrcp.pop %v3031
        %v3258 = vmul.f32 1.0, %v3257
        %v3259 = vrcp.pop %v3032
        %v3260 = vmul.f32 1.0, %v3259
        %v3261 = vrcp.pop %v3033
        %v3262 = vmul.f32 1.0, %v3261
        %v3263 = vrcp.pop %v3034
        %v3264 = vmul.f32 1.0, %v3263
        %v3265 = vrcp.pop %v3035
        %v3266 = vmul.f32 1.0, %v3265
        %v3267 = vrcp.pop %v3036
        %v3268 = vmul.f32 1.0, %v3267
        %v3269 = vrcp.pop %v3037
        %v3270 = vmul.f32 1.0, %v3269
        %v3271 = vrcp.pop %v3038
        %v3272 = vmul.f32 1.0, %v3271
        %v3273 = vrcp.pop %v3039
        %v3274 = vmul.f32 1.0, %v3273
        %v3275 = vrcp.pop %v3040
        %v3276 = vmul.f32 1.0, %v3275
        %v3277 = vrcp.pop %v3041
        %v3278 = vmul.f32 1.0, %v3277
        %v3279 = vrcp.pop %v3042
        %v3280 = vmul.f32 1.0, %v3279
        %v3281 = vrcp.pop %v3043
        %v3282 = vmul.f32 1.0, %v3281
        %v3283 = vrcp.pop %v3044
        %v3284 = vmul.f32 1.0, %v3283
        %v3285 = vrcp.pop %v3045
        %v3286 = vmul.f32 1.0, %v3285
        %v3287 = vrcp.pop %v3046
        %v3288 = vmul.f32 1.0, %v3287
        %v3289 = vrcp.pop %v3047
        %v3290 = vmul.f32 1.0, %v3289
        %v3291 = vrcp.pop %v3048
        %v3292 = vmul.f32 1.0, %v3291
        %v3293 = vrcp.pop %v3049
        %v3294 = vmul.f32 1.0, %v3293
        %v3295 = vrcp.pop %v3050
        %v3296 = vmul.f32 1.0, %v3295
        %v3297 = vrcp.pop %v3051
        %v3298 = vmul.f32 1.0, %v3297
        %v3299 = vrcp.pop %v3052
        %v3300 = vmul.f32 1.0, %v3299
        %v3301 = vrcp.pop %v3053
        %v3302 = vmul.f32 1.0, %v3301
        %v3303 = vrcp.pop %v3054
        %v3304 = vmul.f32 1.0, %v3303
        %v3305 = vrcp.pop %v3055
        %v3306 = vmul.f32 1.0, %v3305
        %v3307 = vrcp.pop %v3056
        %v3308 = vmul.f32 1.0, %v3307
        %v3309 = vrcp.pop %v3057
        %v3310 = vmul.f32 1.0, %v3309
        %v3311 = vrcp.pop %v3058
        %v3312 = vmul.f32 1.0, %v3311
        %v3313 = vrcp.pop %v3059
        %v3314 = vmul.f32 1.0, %v3313
        %v3315 = vrcp.pop %v3060
        %v3316 = vmul.f32 1.0, %v3315
        %v3317 = vmul.f32 %v1812, %v3062
        %v3318 = vmul.f32 %v1814, %v3064
        %v3319 = vmul.f32 %v2005, %v3066
        %v3320 = vmul.f32 %v2007, %v3068
        %v3321 = vmul.f32 %v1816, %v3070
        %v3322 = vmul.f32 %v1818, %v3072
        %v3323 = vmul.f32 %v2009, %v3074
        %v3324 = vmul.f32 %v2011, %v3076
        %v3325 = vmul.f32 %v1822, %v3078
        %v3326 = vmul.f32 %v1824, %v3080
        %v3327 = vmul.f32 %v2015, %v3082
        %v3328 = vmul.f32 %v2017, %v3084
        %v3329 = vmul.f32 %v1826, %v3086
        %v3330 = vmul.f32 %v1828, %v3088
        %v3331 = vmul.f32 %v2019, %v3090
        %v3332 = vmul.f32 %v2021, %v3092
        %v3333 = vmul.f32 %v1832, %v3094
        %v3334 = vmul.f32 %v1834, %v3096
        %v3335 = vmul.f32 %v2025, %v3098
        %v3336 = vmul.f32 %v2027, %v3100
        %v3337 = vmul.f32 %v1836, %v3102
        %v3338 = vmul.f32 %v1838, %v3104
        %v3339 = vmul.f32 %v2029, %v3106
        %v3340 = vmul.f32 %v2031, %v3108
        %v3341 = vmul.f32 %v1842, %v3110
        %v3342 = vmul.f32 %v1844, %v3112
        %v3343 = vmul.f32 %v2035, %v3114
        %v3344 = vmul.f32 %v2037, %v3116
        %v3345 = vmul.f32 %v1846, %v3118
        %v3346 = vmul.f32 %v1848, %v3120
        %v3347 = vmul.f32 %v2039, %v3122
        %v3348 = vmul.f32 %v2041, %v3124
        %v3349 = vmul.f32 %v1852, %v3126
        %v3350 = vmul.f32 %v1854, %v3128
        %v3351 = vmul.f32 %v2045, %v3130
        %v3352 = vmul.f32 %v2047, %v3132
        %v3353 = vmul.f32 %v1856, %v3134
        %v3354 = vmul.f32 %v1858, %v3136
        %v3355 = vmul.f32 %v2049, %v3138
        %v3356 = vmul.f32 %v2051, %v3140
        %v3357 = vmul.f32 %v1862, %v3142
        %v3358 = vmul.f32 %v1864, %v3144
        %v3359 = vmul.f32 %v2055, %v3146
        %v3360 = vmul.f32 %v2057, %v3148
        %v3361 = vmul.f32 %v1866, %v3150
        %v3362 = vmul.f32 %v1868, %v3152
        %v3363 = vmul.f32 %v2059, %v3154
        %v3364 = vmul.f32 %v2061, %v3156
        %v3365 = vmul.f32 %v1872, %v3158
        %v3366 = vmul.f32 %v1874, %v3160
        %v3367 = vmul.f32 %v2065, %v3162
        %v3368 = vmul.f32 %v2067, %v3164
        %v3369 = vmul.f32 %v1876, %v3166
        %v3370 = vmul.f32 %v1878, %v3168
        %v3371 = vmul.f32 %v2069, %v3170
        %v3372 = vmul.f32 %v2071, %v3172
        %v3373 = vmul.f32 %v1882, %v3174
        %v3374 = vmul.f32 %v1884, %v3176
        %v3375 = vmul.f32 %v2075, %v3178
        %v3376 = vmul.f32 %v2077, %v3180
        %v3377 = vmul.f32 %v1886, %v3182
        %v3378 = vmul.f32 %v1888, %v3184
        %v3379 = vmul.f32 %v2079, %v3186
        %v3380 = vmul.f32 %v2081, %v3188
        %v3381 = vmul.f32 %v1892, %v3190
        %v3382 = vmul.f32 %v1894, %v3192
        %v3383 = vmul.f32 %v2085, %v3194
        %v3384 = vmul.f32 %v2087, %v3196
        %v3385 = vmul.f32 %v1896, %v3198
        %v3386 = vmul.f32 %v1898, %v3200
        %v3387 = vmul.f32 %v2089, %v3202
        %v3388 = vmul.f32 %v2091, %v3204
        %v3389 = vmul.f32 %v1902, %v3206
        %v3390 = vmul.f32 %v1904, %v3208
        %v3391 = vmul.f32 %v2095, %v3210
        %v3392 = vmul.f32 %v2097, %v3212
        %v3393 = vmul.f32 %v1906, %v3214
        %v3394 = vmul.f32 %v1908, %v3216
        %v3395 = vmul.f32 %v2099, %v3218
        %v3396 = vmul.f32 %v2101, %v3220
        %v3397 = vmul.f32 %v1912, %v3222
        %v3398 = vmul.f32 %v1914, %v3224
        %v3399 = vmul.f32 %v2105, %v3226
        %v3400 = vmul.f32 %v2107, %v3228
        %v3401 = vmul.f32 %v1916, %v3230
        %v3402 = vmul.f32 %v1918, %v3232
        %v3403 = vmul.f32 %v2109, %v3234
        %v3404 = vmul.f32 %v2111, %v3236
        %v3405 = vmul.f32 %v1922, %v3238
        %v3406 = vmul.f32 %v1924, %v3240
        %v3407 = vmul.f32 %v2115, %v3242
        %v3408 = vmul.f32 %v2117, %v3244
        %v3409 = vmul.f32 %v1926, %v3246
        %v3410 = vmul.f32 %v1928, %v3248
        %v3411 = vmul.f32 %v2119, %v3250
        %v3412 = vmul.f32 %v2121, %v3252
        %v3413 = vmul.f32 %v1932, %v3254
        %v3414 = vmul.f32 %v1934, %v3256
        %v3415 = vmul.f32 %v2125, %v3258
        %v3416 = vmul.f32 %v2127, %v3260
        %v3417 = vmul.f32 %v1936, %v3262
        %v3418 = vmul.f32 %v1938, %v3264
        %v3419 = vmul.f32 %v2129, %v3266
        %v3420 = vmul.f32 %v2131, %v3268
        %v3421 = vmul.f32 %v1942, %v3270
        %v3422 = vmul.f32 %v1944, %v3272
        %v3423 = vmul.f32 %v2135, %v3274
        %v3424 = vmul.f32 %v2137, %v3276
        %v3425 = vmul.f32 %v1946, %v3278
        %v3426 = vmul.f32 %v1948, %v3280
        %v3427 = vmul.f32 %v2139, %v3282
        %v3428 = vmul.f32 %v2141, %v3284
        %v3429 = vmul.f32 %v1952, %v3286
        %v3430 = vmul.f32 %v1954, %v3288
        %v3431 = vmul.f32 %v2145, %v3290
        %v3432 = vmul.f32 %v2147, %v3292
        %v3433 = vmul.f32 %v1956, %v3294
        %v3434 = vmul.f32 %v1958, %v3296
        %v3435 = vmul.f32 %v2149, %v3298
        %v3436 = vmul.f32 %v2151, %v3300
        %v3437 = vmul.f32 %v1962, %v3302
        %v3438 = vmul.f32 %v1964, %v3304
        %v3439 = vmul.f32 %v2155, %v3306
        %v3440 = vmul.f32 %v2157, %v3308
        %v3441 = vmul.f32 %v1966, %v3310
        %v3442 = vmul.f32 %v1968, %v3312
        %v3443 = vmul.f32 %v2159, %v3314
        %v3444 = vmul.f32 %v2161, %v3316
        %v3445 = vmul.f32 %v3317, %v2198
        %v3446 = vmul.f32 %v3318, %v2200
        %v3447 = vmul.f32 %v3319, %v2391
        %v3448 = vmul.f32 %v3320, %v2393
        %v3449 = vmul.f32 %v3321, %v2202
        %v3450 = vmul.f32 %v3322, %v2204
        %v3451 = vmul.f32 %v3323, %v2395
        %v3452 = vmul.f32 %v3324, %v2397
        %v3453 = vmul.f32 %v3325, %v2208
        %v3454 = vmul.f32 %v3326, %v2210
        %v3455 = vmul.f32 %v3327, %v2401
        %v3456 = vmul.f32 %v3328, %v2403
        %v3457 = vmul.f32 %v3329, %v2212
        %v3458 = vmul.f32 %v3330, %v2214
        %v3459 = vmul.f32 %v3331, %v2405
        %v3460 = vmul.f32 %v3332, %v2407
        %v3461 = vmul.f32 %v3333, %v2218
        %v3462 = vmul.f32 %v3334, %v2220
        %v3463 = vmul.f32 %v3335, %v2411
        %v3464 = vmul.f32 %v3336, %v2413
        %v3465 = vmul.f32 %v3337, %v2222
        %v3466 = vmul.f32 %v3338, %v2224
        %v3467 = vmul.f32 %v3339, %v2415
        %v3468 = vmul.f32 %v3340, %v2417
        %v3469 = vmul.f32 %v3341, %v2228
        %v3470 = vmul.f32 %v3342, %v2230
        %v3471 = vmul.f32 %v3343, %v2421
        %v3472 = vmul.f32 %v3344, %v2423
        %v3473 = vmul.f32 %v3345, %v2232
        %v3474 = vmul.f32 %v3346, %v2234
        %v3475 = vmul.f32 %v3347, %v2425
        %v3476 = vmul.f32 %v3348, %v2427
        %v3477 = vmul.f32 %v3349, %v2238
        %v3478 = vmul.f32 %v3350, %v2240
        %v3479 = vmul.f32 %v3351, %v2431
        %v3480 = vmul.f32 %v3352, %v2433
        %v3481 = vmul.f32 %v3353, %v2242
        %v3482 = vmul.f32 %v3354, %v2244
        %v3483 = vmul.f32 %v3355, %v2435
        %v3484 = vmul.f32 %v3356, %v2437
        %v3485 = vmul.f32 %v3357, %v2248
        %v3486 = vmul.f32 %v3358, %v2250
        %v3487 = vmul.f32 %v3359, %v2441
        %v3488 = vmul.f32 %v3360, %v2443
        %v3489 = vmul.f32 %v3361, %v2252
        %v3490 = vmul.f32 %v3362, %v2254
        %v3491 = vmul.f32 %v3363, %v2445
        %v3492 = vmul.f32 %v3364, %v2447
        %v3493 = vmul.f32 %v3365, %v2258
        %v3494 = vmul.f32 %v3366, %v2260
        %v3495 = vmul.f32 %v3367, %v2451
        %v3496 = vmul.f32 %v3368, %v2453
        %v3497 = vmul.f32 %v3369, %v2262
        %v3498 = vmul.f32 %v3370, %v2264
        %v3499 = vmul.f32 %v3371, %v2455
        %v3500 = vmul.f32 %v3372, %v2457
        %v3501 = vmul.f32 %v3373, %v2268
        %v3502 = vmul.f32 %v3374, %v2270
        %v3503 = vmul.f32 %v3375, %v2461
        %v3504 = vmul.f32 %v3376, %v2463
        %v3505 = vmul.f32 %v3377, %v2272
        %v3506 = vmul.f32 %v3378, %v2274
        %v3507 = vmul.f32 %v3379, %v2465
        %v3508 = vmul.f32 %v3380, %v2467
        %v3509 = vmul.f32 %v3381, %v2278
        %v3510 = vmul.f32 %v3382, %v2280
        %v3511 = vmul.f32 %v3383, %v2471
        %v3512 = vmul.f32 %v3384, %v2473
        %v3513 = vmul.f32 %v3385, %v2282
        %v3514 = vmul.f32 %v3386, %v2284
        %v3515 = vmul.f32 %v3387, %v2475
        %v3516 = vmul.f32 %v3388, %v2477
        %v3517 = vmul.f32 %v3389, %v2288
        %v3518 = vmul.f32 %v3390, %v2290
        %v3519 = vmul.f32 %v3391, %v2481
        %v3520 = vmul.f32 %v3392, %v2483
        %v3521 = vmul.f32 %v3393, %v2292
        %v3522 = vmul.f32 %v3394, %v2294
        %v3523 = vmul.f32 %v3395, %v2485
        %v3524 = vmul.f32 %v3396, %v2487
        %v3525 = vmul.f32 %v3397, %v2298
        %v3526 = vmul.f32 %v3398, %v2300
        %v3527 = vmul.f32 %v3399, %v2491
        %v3528 = vmul.f32 %v3400, %v2493
        %v3529 = vmul.f32 %v3401, %v2302
        %v3530 = vmul.f32 %v3402, %v2304
        %v3531 = vmul.f32 %v3403, %v2495
        %v3532 = vmul.f32 %v3404, %v2497
        %v3533 = vmul.f32 %v3405, %v2308
        %v3534 = vmul.f32 %v3406, %v2310
        %v3535 = vmul.f32 %v3407, %v2501
        %v3536 = vmul.f32 %v3408, %v2503
        %v3537 = vmul.f32 %v3409, %v2312
        %v3538 = vmul.f32 %v3410, %v2314
        %v3539 = vmul.f32 %v3411, %v2505
        %v3540 = vmul.f32 %v3412, %v2507
        %v3541 = vmul.f32 %v3413, %v2318
        %v3542 = vmul.f32 %v3414, %v2320
        %v3543 = vmul.f32 %v3415, %v2511
        %v3544 = vmul.f32 %v3416, %v2513
        %v3545 = vmul.f32 %v3417, %v2322
        %v3546 = vmul.f32 %v3418, %v2324
        %v3547 = vmul.f32 %v3419, %v2515
        %v3548 = vmul.f32 %v3420, %v2517
        %v3549 = vmul.f32 %v3421, %v2328
        %v3550 = vmul.f32 %v3422, %v2330
        %v3551 = vmul.f32 %v3423, %v2521
        %v3552 = vmul.f32 %v3424, %v2523
        %v3553 = vmul.f32 %v3425, %v2332
        %v3554 = vmul.f32 %v3426, %v2334
        %v3555 = vmul.f32 %v3427, %v2525
        %v3556 = vmul.f32 %v3428, %v2527
        %v3557 = vmul.f32 %v3429, %v2338
        %v3558 = vmul.f32 %v3430, %v2340
        %v3559 = vmul.f32 %v3431, %v2531
        %v3560 = vmul.f32 %v3432, %v2533
        %v3561 = vmul.f32 %v3433, %v2342
        %v3562 = vmul.f32 %v3434, %v2344
        %v3563 = vmul.f32 %v3435, %v2535
        %v3564 = vmul.f32 %v3436, %v2537
        %v3565 = vmul.f32 %v3437, %v2348
        %v3566 = vmul.f32 %v3438, %v2350
        %v3567 = vmul.f32 %v3439, %v2541
        %v3568 = vmul.f32 %v3440, %v2543
        %v3569 = vmul.f32 %v3441, %v2352
        %v3570 = vmul.f32 %v3442, %v2354
        %v3571 = vmul.f32 %v3443, %v2545
        %v3572 = vmul.f32 %v3444, %v2547
        %v3573 = vpack.c.bf16 %v3449, %v3445
        %v3574 = vpack.c.bf16 %v3450, %v3446
        %v3575 = vpack.c.bf16 %v3451, %v3447
        %v3576 = vpack.c.bf16 %v3452, %v3448
        %v3577 = vpack.c.bf16 %v3457, %v3453
        %v3578 = vpack.c.bf16 %v3458, %v3454
        %v3579 = vpack.c.bf16 %v3459, %v3455
        %v3580 = vpack.c.bf16 %v3460, %v3456
        %v3581 = vpack.c.bf16 %v3465, %v3461
        %v3582 = vpack.c.bf16 %v3466, %v3462
        %v3583 = vpack.c.bf16 %v3467, %v3463
        %v3584 = vpack.c.bf16 %v3468, %v3464
        %v3585 = vpack.c.bf16 %v3473, %v3469
        %v3586 = vpack.c.bf16 %v3474, %v3470
        %v3587 = vpack.c.bf16 %v3475, %v3471
        %v3588 = vpack.c.bf16 %v3476, %v3472
        %v3589 = vpack.c.bf16 %v3481, %v3477
        %v3590 = vpack.c.bf16 %v3482, %v3478
        %v3591 = vpack.c.bf16 %v3483, %v3479
        %v3592 = vpack.c.bf16 %v3484, %v3480
        %v3593 = vpack.c.bf16 %v3489, %v3485
        %v3594 = vpack.c.bf16 %v3490, %v3486
        %v3595 = vpack.c.bf16 %v3491, %v3487
        %v3596 = vpack.c.bf16 %v3492, %v3488
        %v3597 = vpack.c.bf16 %v3497, %v3493
        %v3598 = vpack.c.bf16 %v3498, %v3494
        %v3599 = vpack.c.bf16 %v3499, %v3495
        %v3600 = vpack.c.bf16 %v3500, %v3496
        %v3601 = vpack.c.bf16 %v3505, %v3501
        %v3602 = vpack.c.bf16 %v3506, %v3502
        %v3603 = vpack.c.bf16 %v3507, %v3503
        %v3604 = vpack.c.bf16 %v3508, %v3504
        %v3605 = vpack.c.bf16 %v3513, %v3509
        %v3606 = vpack.c.bf16 %v3514, %v3510
        %v3607 = vpack.c.bf16 %v3515, %v3511
        %v3608 = vpack.c.bf16 %v3516, %v3512
        %v3609 = vpack.c.bf16 %v3521, %v3517
        %v3610 = vpack.c.bf16 %v3522, %v3518
        %v3611 = vpack.c.bf16 %v3523, %v3519
        %v3612 = vpack.c.bf16 %v3524, %v3520
        %v3613 = vpack.c.bf16 %v3529, %v3525
        %v3614 = vpack.c.bf16 %v3530, %v3526
        %v3615 = vpack.c.bf16 %v3531, %v3527
        %v3616 = vpack.c.bf16 %v3532, %v3528
        %v3617 = vpack.c.bf16 %v3537, %v3533
        %v3618 = vpack.c.bf16 %v3538, %v3534
        %v3619 = vpack.c.bf16 %v3539, %v3535
        %v3620 = vpack.c.bf16 %v3540, %v3536
        %v3621 = vpack.c.bf16 %v3545, %v3541
        %v3622 = vpack.c.bf16 %v3546, %v3542
        %v3623 = vpack.c.bf16 %v3547, %v3543
        %v3624 = vpack.c.bf16 %v3548, %v3544
        %v3625 = vpack.c.bf16 %v3553, %v3549
        %v3626 = vpack.c.bf16 %v3554, %v3550
        %v3627 = vpack.c.bf16 %v3555, %v3551
        %v3628 = vpack.c.bf16 %v3556, %v3552
        %v3629 = vpack.c.bf16 %v3561, %v3557
        %v3630 = vpack.c.bf16 %v3562, %v3558
        %v3631 = vpack.c.bf16 %v3563, %v3559
        %v3632 = vpack.c.bf16 %v3564, %v3560
        %v3633 = vpack.c.bf16 %v3569, %v3565
        %v3634 = vpack.c.bf16 %v3570, %v3566
        %v3635 = vpack.c.bf16 %v3571, %v3567
        %v3636 = vpack.c.bf16 %v3572, %v3568
        %v3637 = vld [vmem:[#allocation8] sm:$0xf]
        %v3638 = vld [vmem:[#allocation8 + $0x4] sm:$0xf]
        %v3639 = vld [vmem:[#allocation8 + $0x8] sm:$0xf]
        %v3640 = vld [vmem:[#allocation8 + $0xc] sm:$0xf]
        %v3641 = vld [vmem:[#allocation8 + $0x10] sm:$0xf]
        %v3642 = vld [vmem:[#allocation8 + $0x14] sm:$0xf]
        %v3643 = vld [vmem:[#allocation8 + $0x18] sm:$0xf]
        %v3644 = vld [vmem:[#allocation8 + $0x1c] sm:$0xf]
        %v3645 = vld [vmem:[#allocation8 + $0x20] sm:$0xf]
        %v3646 = vld [vmem:[#allocation8 + $0x24] sm:$0xf]
        %v3647 = vld [vmem:[#allocation8 + $0x28] sm:$0xf]
        %v3648 = vld [vmem:[#allocation8 + $0x2c] sm:$0xf]
        %v3649 = vld [vmem:[#allocation8 + $0x30] sm:$0xf]
        %v3650 = vld [vmem:[#allocation8 + $0x34] sm:$0xf]
        %v3651 = vld [vmem:[#allocation8 + $0x38] sm:$0xf]
        %v3652 = vld [vmem:[#allocation8 + $0x3c] sm:$0xf]
        %v3653 = vld [vmem:[#allocation8 + $0x40] sm:$0xf]
        %v3654 = vld [vmem:[#allocation8 + $0x44] sm:$0xf]
        %v3655 = vld [vmem:[#allocation8 + $0x48] sm:$0xf]
        %v3656 = vld [vmem:[#allocation8 + $0x4c] sm:$0xf]
        %v3657 = vld [vmem:[#allocation8 + $0x50] sm:$0xf]
        %v3658 = vld [vmem:[#allocation8 + $0x54] sm:$0xf]
        %v3659 = vld [vmem:[#allocation8 + $0x58] sm:$0xf]
        %v3660 = vld [vmem:[#allocation8 + $0x5c] sm:$0xf]
        %v3661 = vld [vmem:[#allocation8 + $0x60] sm:$0xf]
        %v3662 = vld [vmem:[#allocation8 + $0x64] sm:$0xf]
        %v3663 = vld [vmem:[#allocation8 + $0x68] sm:$0xf]
        %v3664 = vld [vmem:[#allocation8 + $0x6c] sm:$0xf]
        %v3665 = vld [vmem:[#allocation8 + $0x70] sm:$0xf]
        %v3666 = vld [vmem:[#allocation8 + $0x74] sm:$0xf]
        %v3667 = vld [vmem:[#allocation8 + $0x78] sm:$0xf]
        %v3668 = vld [vmem:[#allocation8 + $0x7c] sm:$0xf]
        %v3669 = vld [vmem:[#allocation8 + $0x80] sm:$0xf]
        %v3670 = vld [vmem:[#allocation8 + $0x84] sm:$0xf]
        %v3671 = vld [vmem:[#allocation8 + $0x88] sm:$0xf]
        %v3672 = vld [vmem:[#allocation8 + $0x8c] sm:$0xf]
        %v3673 = vld [vmem:[#allocation8 + $0x90] sm:$0xf]
        %v3674 = vld [vmem:[#allocation8 + $0x94] sm:$0xf]
        %v3675 = vld [vmem:[#allocation8 + $0x98] sm:$0xf]
        %v3676 = vld [vmem:[#allocation8 + $0x9c] sm:$0xf]
        %v3677 = vld [vmem:[#allocation8 + $0xa0] sm:$0xf]
        %v3678 = vld [vmem:[#allocation8 + $0xa4] sm:$0xf]
        %v3679 = vld [vmem:[#allocation8 + $0xa8] sm:$0xf]
        %v3680 = vld [vmem:[#allocation8 + $0xac] sm:$0xf]
        %v3681 = vld [vmem:[#allocation8 + $0xb0] sm:$0xf]
        %v3682 = vld [vmem:[#allocation8 + $0xb4] sm:$0xf]
        %v3683 = vld [vmem:[#allocation8 + $0xb8] sm:$0xf]
        %v3684 = vld [vmem:[#allocation8 + $0xbc] sm:$0xf]
        %v3685 = vld [vmem:[#allocation8 + $0xc0] sm:$0xf]
        %v3686 = vld [vmem:[#allocation8 + $0xc4] sm:$0xf]
        %v3687 = vld [vmem:[#allocation8 + $0xc8] sm:$0xf]
        %v3688 = vld [vmem:[#allocation8 + $0xcc] sm:$0xf]
        %v3689 = vld [vmem:[#allocation8 + $0xd0] sm:$0xf]
        %v3690 = vld [vmem:[#allocation8 + $0xd4] sm:$0xf]
        %v3691 = vld [vmem:[#allocation8 + $0xd8] sm:$0xf]
        %v3692 = vld [vmem:[#allocation8 + $0xdc] sm:$0xf]
        %v3693 = vld [vmem:[#allocation8 + $0xe0] sm:$0xf]
        %v3694 = vld [vmem:[#allocation8 + $0xe4] sm:$0xf]
        %v3695 = vld [vmem:[#allocation8 + $0xe8] sm:$0xf]
        %v3696 = vld [vmem:[#allocation8 + $0xec] sm:$0xf]
        %v3697 = vld [vmem:[#allocation8 + $0xf0] sm:$0xf]
        %v3698 = vld [vmem:[#allocation8 + $0xf4] sm:$0xf]
        %v3699 = vld [vmem:[#allocation8 + $0xf8] sm:$0xf]
        %v3700 = vld [vmem:[#allocation8 + $0xfc] sm:$0xf]
        %v3765 = vunpack.c.l.b16 %v3637
        %v3766 = vunpack.c.l.b16 %v3638
        %v3767 = vunpack.c.l.b16 %v3639
        %v3768 = vunpack.c.l.b16 %v3640
        %v3769 = vunpack.c.l.b16 %v3641
        %v3770 = vunpack.c.l.b16 %v3642
        %v3771 = vunpack.c.l.b16 %v3643
        %v3772 = vunpack.c.l.b16 %v3644
        %v3773 = vunpack.c.l.b16 %v3645
        %v3774 = vunpack.c.l.b16 %v3646
        %v3775 = vunpack.c.l.b16 %v3647
        %v3776 = vunpack.c.l.b16 %v3648
        %v3777 = vunpack.c.l.b16 %v3649
        %v3778 = vunpack.c.l.b16 %v3650
        %v3779 = vunpack.c.l.b16 %v3651
        %v3780 = vunpack.c.l.b16 %v3652
        %v3781 = vunpack.c.l.b16 %v3653
        %v3782 = vunpack.c.l.b16 %v3654
        %v3783 = vunpack.c.l.b16 %v3655
        %v3784 = vunpack.c.l.b16 %v3656
        %v3785 = vunpack.c.l.b16 %v3657
        %v3786 = vunpack.c.l.b16 %v3658
        %v3787 = vunpack.c.l.b16 %v3659
        %v3788 = vunpack.c.l.b16 %v3660
        %v3789 = vunpack.c.l.b16 %v3661
        %v3790 = vunpack.c.l.b16 %v3662
        %v3791 = vunpack.c.l.b16 %v3663
        %v3792 = vunpack.c.l.b16 %v3664
        %v3793 = vunpack.c.l.b16 %v3665
        %v3794 = vunpack.c.l.b16 %v3666
        %v3795 = vunpack.c.l.b16 %v3667
        %v3796 = vunpack.c.l.b16 %v3668
        %v3797 = vunpack.c.l.b16 %v3669
        %v3798 = vunpack.c.l.b16 %v3670
        %v3799 = vunpack.c.l.b16 %v3671
        %v3800 = vunpack.c.l.b16 %v3672
        %v3801 = vunpack.c.l.b16 %v3673
        %v3802 = vunpack.c.l.b16 %v3674
        %v3803 = vunpack.c.l.b16 %v3675
        %v3804 = vunpack.c.l.b16 %v3676
        %v3805 = vunpack.c.l.b16 %v3677
        %v3806 = vunpack.c.l.b16 %v3678
        %v3807 = vunpack.c.l.b16 %v3679
        %v3808 = vunpack.c.l.b16 %v3680
        %v3809 = vunpack.c.l.b16 %v3681
        %v3810 = vunpack.c.l.b16 %v3682
        %v3811 = vunpack.c.l.b16 %v3683
        %v3812 = vunpack.c.l.b16 %v3684
        %v3813 = vunpack.c.l.b16 %v3685
        %v3814 = vunpack.c.l.b16 %v3686
        %v3815 = vunpack.c.l.b16 %v3687
        %v3816 = vunpack.c.l.b16 %v3688
        %v3817 = vunpack.c.l.b16 %v3689
        %v3818 = vunpack.c.l.b16 %v3690
        %v3819 = vunpack.c.l.b16 %v3691
        %v3820 = vunpack.c.l.b16 %v3692
        %v3821 = vunpack.c.l.b16 %v3693
        %v3822 = vunpack.c.l.b16 %v3694
        %v3823 = vunpack.c.l.b16 %v3695
        %v3824 = vunpack.c.l.b16 %v3696
        %v3825 = vunpack.c.l.b16 %v3697
        %v3826 = vunpack.c.l.b16 %v3698
        %v3827 = vunpack.c.l.b16 %v3699
        %v3828 = vunpack.c.l.b16 %v3700
        %v3829 = vpack.c.b16 %v3766, %v3765
        %v3830 = vpack.c.b16 %v3768, %v3767
        %v3831 = vpack.c.b16 %v3770, %v3769
        %v3832 = vpack.c.b16 %v3772, %v3771
        %v3833 = vpack.c.b16 %v3774, %v3773
        %v3834 = vpack.c.b16 %v3776, %v3775
        %v3835 = vpack.c.b16 %v3778, %v3777
        %v3836 = vpack.c.b16 %v3780, %v3779
        %v3837 = vpack.c.b16 %v3782, %v3781
        %v3838 = vpack.c.b16 %v3784, %v3783
        %v3839 = vpack.c.b16 %v3786, %v3785
        %v3840 = vpack.c.b16 %v3788, %v3787
        %v3841 = vpack.c.b16 %v3790, %v3789
        %v3842 = vpack.c.b16 %v3792, %v3791
        %v3843 = vpack.c.b16 %v3794, %v3793
        %v3844 = vpack.c.b16 %v3796, %v3795
        %v3845 = vpack.c.b16 %v3798, %v3797
        %v3846 = vpack.c.b16 %v3800, %v3799
        %v3847 = vpack.c.b16 %v3802, %v3801
        %v3848 = vpack.c.b16 %v3804, %v3803
        %v3849 = vpack.c.b16 %v3806, %v3805
        %v3850 = vpack.c.b16 %v3808, %v3807
        %v3851 = vpack.c.b16 %v3810, %v3809
        %v3852 = vpack.c.b16 %v3812, %v3811
        %v3853 = vpack.c.b16 %v3814, %v3813
        %v3854 = vpack.c.b16 %v3816, %v3815
        %v3855 = vpack.c.b16 %v3818, %v3817
        %v3856 = vpack.c.b16 %v3820, %v3819
        %v3857 = vpack.c.b16 %v3822, %v3821
        %v3858 = vpack.c.b16 %v3824, %v3823
        %v3859 = vpack.c.b16 %v3826, %v3825
        %v3860 = vpack.c.b16 %v3828, %v3827
        %3893 = vmatprep.subr.bf16.mxu0 0
        %3894 = vmatpush1.bf16.msra.mxu0 %v3829
        %3895 = vmatprep.subr.bf16.mxu0 0
        %3896 = vmatpush1.bf16.msra.mxu0 %v3830
        %3897 = vmatprep.subr.bf16.mxu0 0
        %3898 = vmatpush1.bf16.msra.mxu0 %v3831
        %3899 = vmatprep.subr.bf16.mxu0 0
        %3900 = vmatpush1.bf16.msra.mxu0 %v3832
        %3901 = vmatprep.subr.bf16.mxu0 0
        %3902 = vmatpush1.bf16.msra.mxu0 %v3833
        %3903 = vmatprep.subr.bf16.mxu0 0
        %3904 = vmatpush1.bf16.msra.mxu0 %v3834
        %3905 = vmatprep.subr.bf16.mxu0 0
        %3906 = vmatpush1.bf16.msra.mxu0 %v3835
        %3907 = vmatprep.subr.bf16.mxu0 0
        %3908 = vmatpush1.bf16.msra.mxu0 %v3836
        %3909 = vmatprep.subr.bf16.mxu0 0
        %3910 = vmatpush1.bf16.msra.mxu0 %v3837
        %3911 = vmatprep.subr.bf16.mxu0 0
        %3912 = vmatpush1.bf16.msra.mxu0 %v3838
        %3913 = vmatprep.subr.bf16.mxu0 0
        %3914 = vmatpush1.bf16.msra.mxu0 %v3839
        %3915 = vmatprep.subr.bf16.mxu0 0
        %3916 = vmatpush1.bf16.msra.mxu0 %v3840
        %3917 = vmatprep.subr.bf16.mxu0 0
        %3918 = vmatpush1.bf16.msra.mxu0 %v3841
        %3919 = vmatprep.subr.bf16.mxu0 0
        %3920 = vmatpush1.bf16.msra.mxu0 %v3842
        %3921 = vmatprep.subr.bf16.mxu0 0
        %3922 = vmatpush1.bf16.msra.mxu0 %v3843
        %3923 = vmatprep.subr.bf16.mxu0 0
        %3924 = vmatpush1.bf16.msra.mxu0 %v3844
        %3925 = vmatprep.mubr.bf16.mxu0 %v3574
        %3926 = vmatmul.mubr.bf16.gmra.mrb[0].mxu0 %v3573
        %v3927 = vpop.f32.mrb[0].mxu0
        %v3928 = vadd.f32 0.0, %v3927
        %v3929 = vpop.f32.mrb[0].mxu0
        %v3930 = vpop.f32.mrb[0].mxu0
        %v3931 = vadd.f32 0.0, %v3930
        %v3932 = vpop.f32.mrb[0].mxu0
        %3933 = vmatprep.mubr.bf16.mxu0 %v3578
        %3934 = vmatmul.mubr.bf16.gmra.mrb[0].mxu0 %v3577
        %v3935 = vpop.f32.mrb[0].mxu0
        %v3936 = vadd.f32 0.0, %v3935
        %v3937 = vpop.f32.mrb[0].mxu0
        %v3938 = vpop.f32.mrb[0].mxu0
        %v3939 = vadd.f32 0.0, %v3938
        %v3940 = vpop.f32.mrb[0].mxu0
        %3941 = vmatprep.mubr.bf16.mxu0 %v3582
        %3942 = vmatmul.mubr.bf16.gmra.mrb[0].mxu0 %v3581
        %v3943 = vpop.f32.mrb[0].mxu0
        %v3944 = vadd.f32 0.0, %v3943
        %v3945 = vpop.f32.mrb[0].mxu0
        %v3946 = vpop.f32.mrb[0].mxu0
        %v3947 = vadd.f32 0.0, %v3946
        %v3948 = vpop.f32.mrb[0].mxu0
        %3949 = vmatprep.mubr.bf16.mxu0 %v3586
        %3950 = vmatmul.mubr.bf16.gmra.mrb[0].mxu0 %v3585
        %v3951 = vpop.f32.mrb[0].mxu0
        %v3952 = vadd.f32 0.0, %v3951
        %v3953 = vpop.f32.mrb[0].mxu0
        %v3954 = vpop.f32.mrb[0].mxu0
        %v3955 = vadd.f32 0.0, %v3954
        %v3956 = vpop.f32.mrb[0].mxu0
        %3957 = vmatprep.mubr.bf16.mxu0 %v3590
        %3958 = vmatmul.mubr.bf16.gmra.mrb[0].mxu0 %v3589
        %v3959 = vpop.f32.mrb[0].mxu0
        %v3960 = vadd.f32 0.0, %v3959
        %v3961 = vpop.f32.mrb[0].mxu0
        %v3962 = vpop.f32.mrb[0].mxu0
        %v3963 = vadd.f32 0.0, %v3962
        %v3964 = vpop.f32.mrb[0].mxu0
        %3965 = vmatprep.mubr.bf16.mxu0 %v3594
        %3966 = vmatmul.mubr.bf16.gmra.mrb[0].mxu0 %v3593
        %v3967 = vpop.f32.mrb[0].mxu0
        %v3968 = vadd.f32 0.0, %v3967
        %v3969 = vpop.f32.mrb[0].mxu0
        %v3970 = vpop.f32.mrb[0].mxu0
        %v3971 = vadd.f32 0.0, %v3970
        %v3972 = vpop.f32.mrb[0].mxu0
        %3973 = vmatprep.mubr.bf16.mxu0 %v3598
        %3974 = vmatmul.mubr.bf16.gmra.mrb[0].mxu0 %v3597
        %v3975 = vpop.f32.mrb[0].mxu0
        %v3976 = vadd.f32 0.0, %v3975
        %v3977 = vpop.f32.mrb[0].mxu0
        %v3978 = vpop.f32.mrb[0].mxu0
        %v3979 = vadd.f32 0.0, %v3978
        %v3980 = vpop.f32.mrb[0].mxu0
        %3981 = vmatprep.mubr.bf16.mxu0 %v3602
        %3982 = vmatmul.mubr.bf16.gmra.mrb[0].mxu0 %v3601
        %v3983 = vpop.f32.mrb[0].mxu0
        %v3984 = vadd.f32 0.0, %v3983
        %v3985 = vpop.f32.mrb[0].mxu0
        %v3986 = vpop.f32.mrb[0].mxu0
        %v3987 = vadd.f32 0.0, %v3986
        %v3988 = vpop.f32.mrb[0].mxu0
        %3989 = vmatprep.mubr.bf16.mxu0 %v3606
        %3990 = vmatmul.mubr.bf16.gmra.mrb[0].mxu0 %v3605
        %v3991 = vpop.f32.mrb[0].mxu0
        %v3992 = vadd.f32 0.0, %v3991
        %v3993 = vpop.f32.mrb[0].mxu0
        %v3994 = vpop.f32.mrb[0].mxu0
        %v3995 = vadd.f32 0.0, %v3994
        %v3996 = vpop.f32.mrb[0].mxu0
        %3997 = vmatprep.mubr.bf16.mxu0 %v3610
        %3998 = vmatmul.mubr.bf16.gmra.mrb[0].mxu0 %v3609
        %v3999 = vpop.f32.mrb[0].mxu0
        %v4000 = vadd.f32 0.0, %v3999
        %v4001 = vpop.f32.mrb[0].mxu0
        %v4002 = vpop.f32.mrb[0].mxu0
        %v4003 = vadd.f32 0.0, %v4002
        %v4004 = vpop.f32.mrb[0].mxu0
        %4005 = vmatprep.mubr.bf16.mxu0 %v3614
        %4006 = vmatmul.mubr.bf16.gmra.mrb[0].mxu0 %v3613
        %v4007 = vpop.f32.mrb[0].mxu0
        %v4008 = vadd.f32 0.0, %v4007
        %v4009 = vpop.f32.mrb[0].mxu0
        %v4010 = vpop.f32.mrb[0].mxu0
        %v4011 = vadd.f32 0.0, %v4010
        %v4012 = vpop.f32.mrb[0].mxu0
        %4013 = vmatprep.mubr.bf16.mxu0 %v3618
        %4014 = vmatmul.mubr.bf16.gmra.mrb[0].mxu0 %v3617
        %v4015 = vpop.f32.mrb[0].mxu0
        %v4016 = vadd.f32 0.0, %v4015
        %v4017 = vpop.f32.mrb[0].mxu0
        %v4018 = vpop.f32.mrb[0].mxu0
        %v4019 = vadd.f32 0.0, %v4018
        %v4020 = vpop.f32.mrb[0].mxu0
        %4021 = vmatprep.mubr.bf16.mxu0 %v3622
        %4022 = vmatmul.mubr.bf16.gmra.mrb[0].mxu0 %v3621
        %v4023 = vpop.f32.mrb[0].mxu0
        %v4024 = vadd.f32 0.0, %v4023
        %v4025 = vpop.f32.mrb[0].mxu0
        %v4026 = vpop.f32.mrb[0].mxu0
        %v4027 = vadd.f32 0.0, %v4026
        %v4028 = vpop.f32.mrb[0].mxu0
        %4029 = vmatprep.mubr.bf16.mxu0 %v3626
        %4030 = vmatmul.mubr.bf16.gmra.mrb[0].mxu0 %v3625
        %v4031 = vpop.f32.mrb[0].mxu0
        %v4032 = vadd.f32 0.0, %v4031
        %v4033 = vpop.f32.mrb[0].mxu0
        %v4034 = vpop.f32.mrb[0].mxu0
        %v4035 = vadd.f32 0.0, %v4034
        %v4036 = vpop.f32.mrb[0].mxu0
        %4037 = vmatprep.mubr.bf16.mxu0 %v3630
        %4038 = vmatmul.mubr.bf16.gmra.mrb[0].mxu0 %v3629
        %v4039 = vpop.f32.mrb[0].mxu0
        %v4040 = vadd.f32 0.0, %v4039
        %v4041 = vpop.f32.mrb[0].mxu0
        %v4042 = vpop.f32.mrb[0].mxu0
        %v4043 = vadd.f32 0.0, %v4042
        %v4044 = vpop.f32.mrb[0].mxu0
        %4045 = vmatprep.mubr.bf16.mxu0 %v3634
        %4046 = vmatmul.mubr.bf16.gmra.mrb[0].mxu0 %v3633
        %v4047 = vpop.f32.mrb[0].mxu0
        %v4048 = vadd.f32 0.0, %v4047
        %v4049 = vpop.f32.mrb[0].mxu0
        %v4050 = vpop.f32.mrb[0].mxu0
        %v4051 = vadd.f32 0.0, %v4050
        %v4052 = vpop.f32.mrb[0].mxu0
        %4053 = vdwg.mxu0
        %4054 = vmatprep.subr.bf16.mxu0 0
        %4055 = vmatpush1.bf16.msra.mxu0 %v3845
        %4056 = vmatprep.subr.bf16.mxu0 0
        %4057 = vmatpush1.bf16.msra.mxu0 %v3846
        %4058 = vmatprep.subr.bf16.mxu0 0
        %4059 = vmatpush1.bf16.msra.mxu0 %v3847
        %4060 = vmatprep.subr.bf16.mxu0 0
        %4061 = vmatpush1.bf16.msra.mxu0 %v3848
        %4062 = vmatprep.subr.bf16.mxu0 0
        %4063 = vmatpush1.bf16.msra.mxu0 %v3849
        %4064 = vmatprep.subr.bf16.mxu0 0
        %4065 = vmatpush1.bf16.msra.mxu0 %v3850
        %4066 = vmatprep.subr.bf16.mxu0 0
        %4067 = vmatpush1.bf16.msra.mxu0 %v3851
        %4068 = vmatprep.subr.bf16.mxu0 0
        %4069 = vmatpush1.bf16.msra.mxu0 %v3852
        %4070 = vmatprep.subr.bf16.mxu0 0
        %4071 = vmatpush1.bf16.msra.mxu0 %v3853
        %4072 = vmatprep.subr.bf16.mxu0 0
        %4073 = vmatpush1.bf16.msra.mxu0 %v3854
        %4074 = vmatprep.subr.bf16.mxu0 0
        %4075 = vmatpush1.bf16.msra.mxu0 %v3855
        %4076 = vmatprep.subr.bf16.mxu0 0
        %4077 = vmatpush1.bf16.msra.mxu0 %v3856
        %4078 = vmatprep.subr.bf16.mxu0 0
        %4079 = vmatpush1.bf16.msra.mxu0 %v3857
        %4080 = vmatprep.subr.bf16.mxu0 0
        %4081 = vmatpush1.bf16.msra.mxu0 %v3858
        %4082 = vmatprep.subr.bf16.mxu0 0
        %4083 = vmatpush1.bf16.msra.mxu0 %v3859
        %4084 = vmatprep.subr.bf16.mxu0 0
        %4085 = vmatpush1.bf16.msra.mxu0 %v3860
        %4086 = vmatprep.mubr.bf16.mxu0 %v3576
        %4087 = vmatmul.mubr.bf16.gmra.mrb[0].mxu0 %v3575
        %v4088 = vpop.f32.mrb[0].mxu0
        %v4089 = vadd.f32 %v3928, %v4088
        %v4090 = vpop.f32.mrb[0].mxu0
        %v4091 = vpop.f32.mrb[0].mxu0
        %v4092 = vadd.f32 %v3931, %v4091
        %v4093 = vpop.f32.mrb[0].mxu0
        %4094 = vmatprep.mubr.bf16.mxu0 %v3580
        %4095 = vmatmul.mubr.bf16.gmra.mrb[0].mxu0 %v3579
        %v4096 = vpop.f32.mrb[0].mxu0
        %v4097 = vadd.f32 %v3936, %v4096
        %v4098 = vpop.f32.mrb[0].mxu0
        %v4099 = vpop.f32.mrb[0].mxu0
        %v4100 = vadd.f32 %v3939, %v4099
        %v4101 = vpop.f32.mrb[0].mxu0
        %4102 = vmatprep.mubr.bf16.mxu0 %v3584
        %4103 = vmatmul.mubr.bf16.gmra.mrb[0].mxu0 %v3583
        %v4104 = vpop.f32.mrb[0].mxu0
        %v4105 = vadd.f32 %v3944, %v4104
        %v4106 = vpop.f32.mrb[0].mxu0
        %v4107 = vpop.f32.mrb[0].mxu0
        %v4108 = vadd.f32 %v3947, %v4107
        %v4109 = vpop.f32.mrb[0].mxu0
        %4110 = vmatprep.mubr.bf16.mxu0 %v3588
        %4111 = vmatmul.mubr.bf16.gmra.mrb[0].mxu0 %v3587
        %v4112 = vpop.f32.mrb[0].mxu0
        %v4113 = vadd.f32 %v3952, %v4112
        %v4114 = vpop.f32.mrb[0].mxu0
        %v4115 = vpop.f32.mrb[0].mxu0
        %v4116 = vadd.f32 %v3955, %v4115
        %v4117 = vpop.f32.mrb[0].mxu0
        %4118 = vmatprep.mubr.bf16.mxu0 %v3592
        %4119 = vmatmul.mubr.bf16.gmra.mrb[0].mxu0 %v3591
        %v4120 = vpop.f32.mrb[0].mxu0
        %v4121 = vadd.f32 %v3960, %v4120
        %v4122 = vpop.f32.mrb[0].mxu0
        %v4123 = vpop.f32.mrb[0].mxu0
        %v4124 = vadd.f32 %v3963, %v4123
        %v4125 = vpop.f32.mrb[0].mxu0
        %4126 = vmatprep.mubr.bf16.mxu0 %v3596
        %4127 = vmatmul.mubr.bf16.gmra.mrb[0].mxu0 %v3595
        %v4128 = vpop.f32.mrb[0].mxu0
        %v4129 = vadd.f32 %v3968, %v4128
        %v4130 = vpop.f32.mrb[0].mxu0
        %v4131 = vpop.f32.mrb[0].mxu0
        %v4132 = vadd.f32 %v3971, %v4131
        %v4133 = vpop.f32.mrb[0].mxu0
        %4134 = vmatprep.mubr.bf16.mxu0 %v3600
        %4135 = vmatmul.mubr.bf16.gmra.mrb[0].mxu0 %v3599
        %v4136 = vpop.f32.mrb[0].mxu0
        %v4137 = vadd.f32 %v3976, %v4136
        %v4138 = vpop.f32.mrb[0].mxu0
        %v4139 = vpop.f32.mrb[0].mxu0
        %v4140 = vadd.f32 %v3979, %v4139
        %v4141 = vpop.f32.mrb[0].mxu0
        %4142 = vmatprep.mubr.bf16.mxu0 %v3604
        %4143 = vmatmul.mubr.bf16.gmra.mrb[0].mxu0 %v3603
        %v4144 = vpop.f32.mrb[0].mxu0
        %v4145 = vadd.f32 %v3984, %v4144
        %v4146 = vpop.f32.mrb[0].mxu0
        %v4147 = vpop.f32.mrb[0].mxu0
        %v4148 = vadd.f32 %v3987, %v4147
        %v4149 = vpop.f32.mrb[0].mxu0
        %4150 = vmatprep.mubr.bf16.mxu0 %v3608
        %4151 = vmatmul.mubr.bf16.gmra.mrb[0].mxu0 %v3607
        %v4152 = vpop.f32.mrb[0].mxu0
        %v4153 = vadd.f32 %v3992, %v4152
        %v4154 = vpop.f32.mrb[0].mxu0
        %v4155 = vpop.f32.mrb[0].mxu0
        %v4156 = vadd.f32 %v3995, %v4155
        %v4157 = vpop.f32.mrb[0].mxu0
        %4158 = vmatprep.mubr.bf16.mxu0 %v3612
        %4159 = vmatmul.mubr.bf16.gmra.mrb[0].mxu0 %v3611
        %v4160 = vpop.f32.mrb[0].mxu0
        %v4161 = vadd.f32 %v4000, %v4160
        %v4162 = vpop.f32.mrb[0].mxu0
        %v4163 = vpop.f32.mrb[0].mxu0
        %v4164 = vadd.f32 %v4003, %v4163
        %v4165 = vpop.f32.mrb[0].mxu0
        %4166 = vmatprep.mubr.bf16.mxu0 %v3616
        %4167 = vmatmul.mubr.bf16.gmra.mrb[0].mxu0 %v3615
        %v4168 = vpop.f32.mrb[0].mxu0
        %v4169 = vadd.f32 %v4008, %v4168
        %v4170 = vpop.f32.mrb[0].mxu0
        %v4171 = vpop.f32.mrb[0].mxu0
        %v4172 = vadd.f32 %v4011, %v4171
        %v4173 = vpop.f32.mrb[0].mxu0
        %4174 = vmatprep.mubr.bf16.mxu0 %v3620
        %4175 = vmatmul.mubr.bf16.gmra.mrb[0].mxu0 %v3619
        %v4176 = vpop.f32.mrb[0].mxu0
        %v4177 = vadd.f32 %v4016, %v4176
        %v4178 = vpop.f32.mrb[0].mxu0
        %v4179 = vpop.f32.mrb[0].mxu0
        %v4180 = vadd.f32 %v4019, %v4179
        %v4181 = vpop.f32.mrb[0].mxu0
        %4182 = vmatprep.mubr.bf16.mxu0 %v3624
        %4183 = vmatmul.mubr.bf16.gmra.mrb[0].mxu0 %v3623
        %v4184 = vpop.f32.mrb[0].mxu0
        %v4185 = vadd.f32 %v4024, %v4184
        %v4186 = vpop.f32.mrb[0].mxu0
        %v4187 = vpop.f32.mrb[0].mxu0
        %v4188 = vadd.f32 %v4027, %v4187
        %v4189 = vpop.f32.mrb[0].mxu0
        %4190 = vmatprep.mubr.bf16.mxu0 %v3628
        %4191 = vmatmul.mubr.bf16.gmra.mrb[0].mxu0 %v3627
        %v4192 = vpop.f32.mrb[0].mxu0
        %v4193 = vadd.f32 %v4032, %v4192
        %v4194 = vpop.f32.mrb[0].mxu0
        %v4195 = vpop.f32.mrb[0].mxu0
        %v4196 = vadd.f32 %v4035, %v4195
        %v4197 = vpop.f32.mrb[0].mxu0
        %4198 = vmatprep.mubr.bf16.mxu0 %v3632
        %4199 = vmatmul.mubr.bf16.gmra.mrb[0].mxu0 %v3631
        %v4200 = vpop.f32.mrb[0].mxu0
        %v4201 = vadd.f32 %v4040, %v4200
        %v4202 = vpop.f32.mrb[0].mxu0
        %v4203 = vpop.f32.mrb[0].mxu0
        %v4204 = vadd.f32 %v4043, %v4203
        %v4205 = vpop.f32.mrb[0].mxu0
        %4206 = vmatprep.mubr.bf16.mxu0 %v3636
        %4207 = vmatmul.mubr.bf16.gmra.mrb[0].mxu0 %v3635
        %v4208 = vpop.f32.mrb[0].mxu0
        %v4209 = vadd.f32 %v4048, %v4208
        %v4210 = vpop.f32.mrb[0].mxu0
        %v4211 = vpop.f32.mrb[0].mxu0
        %v4212 = vadd.f32 %v4051, %v4211
        %v4213 = vpop.f32.mrb[0].mxu0
        %4214 = vdwg.mxu0
        %v4215 = vadd.f32 %v1082, %v4089
        %v4216 = vadd.f32 %v1083, %v4092
        %v4217 = vadd.f32 %v1084, %v4097
        %v4218 = vadd.f32 %v1085, %v4100
        %v4219 = vadd.f32 %v1086, %v4105
        %v4220 = vadd.f32 %v1087, %v4108
        %v4221 = vadd.f32 %v1088, %v4113
        %v4222 = vadd.f32 %v1089, %v4116
        %v4223 = vadd.f32 %v1090, %v4121
        %v4224 = vadd.f32 %v1091, %v4124
        %v4225 = vadd.f32 %v1092, %v4129
        %v4226 = vadd.f32 %v1093, %v4132
        %v4227 = vadd.f32 %v1094, %v4137
        %v4228 = vadd.f32 %v1095, %v4140
        %v4229 = vadd.f32 %v1096, %v4145
        %v4230 = vadd.f32 %v1097, %v4148
        %v4231 = vadd.f32 %v1098, %v4153
        %v4232 = vadd.f32 %v1099, %v4156
        %v4233 = vadd.f32 %v1100, %v4161
        %v4234 = vadd.f32 %v1101, %v4164
        %v4235 = vadd.f32 %v1102, %v4169
        %v4236 = vadd.f32 %v1103, %v4172
        %v4237 = vadd.f32 %v1104, %v4177
        %v4238 = vadd.f32 %v1105, %v4180
        %v4239 = vadd.f32 %v1106, %v4185
        %v4240 = vadd.f32 %v1107, %v4188
        %v4241 = vadd.f32 %v1108, %v4193
        %v4242 = vadd.f32 %v1109, %v4196
        %v4243 = vadd.f32 %v1110, %v4201
        %v4244 = vadd.f32 %v1111, %v4204
        %v4245 = vadd.f32 %v1112, %v4209
        %v4246 = vadd.f32 %v1113, %v4212
        %4247 = vst [vmem:[%s314] sm:$0xff] %v4215
        %4248 = vst [vmem:[%s314 + $0x8] sm:$0xff] %v4216
        %4249 = vst [vmem:[%s314 + $0x10] sm:$0xff] %v4217
        %4250 = vst [vmem:[%s314 + $0x18] sm:$0xff] %v4218
        %4251 = vst [vmem:[%s314 + $0x20] sm:$0xff] %v4219
        %4252 = vst [vmem:[%s314 + $0x28] sm:$0xff] %v4220
        %4253 = vst [vmem:[%s314 + $0x30] sm:$0xff] %v4221
        %4254 = vst [vmem:[%s314 + $0x38] sm:$0xff] %v4222
        %4255 = vst [vmem:[%s314 + $0x40] sm:$0xff] %v4223
        %4256 = vst [vmem:[%s314 + $0x48] sm:$0xff] %v4224
        %4257 = vst [vmem:[%s314 + $0x50] sm:$0xff] %v4225
        %4258 = vst [vmem:[%s314 + $0x58] sm:$0xff] %v4226
        %4259 = vst [vmem:[%s314 + $0x60] sm:$0xff] %v4227
        %4260 = vst [vmem:[%s314 + $0x68] sm:$0xff] %v4228
        %4261 = vst [vmem:[%s314 + $0x70] sm:$0xff] %v4229
        %4262 = vst [vmem:[%s314 + $0x78] sm:$0xff] %v4230
        %4263 = vst [vmem:[%s314 + $0x80] sm:$0xff] %v4231
        %4264 = vst [vmem:[%s314 + $0x88] sm:$0xff] %v4232
        %4265 = vst [vmem:[%s314 + $0x90] sm:$0xff] %v4233
        %4266 = vst [vmem:[%s314 + $0x98] sm:$0xff] %v4234
        %4267 = vst [vmem:[%s314 + $0xa0] sm:$0xff] %v4235
        %4268 = vst [vmem:[%s314 + $0xa8] sm:$0xff] %v4236
        %4269 = vst [vmem:[%s314 + $0xb0] sm:$0xff] %v4237
        %4270 = vst [vmem:[%s314 + $0xb8] sm:$0xff] %v4238
        %4271 = vst [vmem:[%s314 + $0xc0] sm:$0xff] %v4239
        %4272 = vst [vmem:[%s314 + $0xc8] sm:$0xff] %v4240
        %4273 = vst [vmem:[%s314 + $0xd0] sm:$0xff] %v4241
        %4274 = vst [vmem:[%s314 + $0xd8] sm:$0xff] %v4242
        %4275 = vst [vmem:[%s314 + $0xe0] sm:$0xff] %v4243
        %4276 = vst [vmem:[%s314 + $0xe8] sm:$0xff] %v4244
        %4277 = vst [vmem:[%s314 + $0xf0] sm:$0xff] %v4245
        %4278 = vst [vmem:[%s314 + $0xf8] sm:$0xff] %v4246
        %s4279 = sand.u32 %s164, 1
        %s4280 = scalar_lea.sflag [#allocation4], %s4279
        %s4281 = sand.u32 %s164, 1
        %s4282 = smul.addr %s4281, 256
        %s4283 = scalar_lea.vmem [#allocation10], %s4282
        // Predicated region
        $region61: #{tpu_custom_call.1} parent=43 // pred_check
          %p4284 = pneg %p174
        $region62: #{tpu_custom_call.1} parent=43 // pred_check_branch
          %4286 = sbr.rel (%p4284) target = $region64
        $region63: #{tpu_custom_call.1} parent=43 // pred_region
          %s4287 = smul.u32 16, %s25
          %s4289 = ssub.s32 4096, 4096
          %4290 = vsyncadd %s4280, %s4289
          %s4291 = smul.addr %s4287, 2
          %s4292 = smul.addr %s4291, 128
          %s4293 = scalar_lea.hbm %s6, %s4292
          %s4294 = sshll.u32 %s4283, 4
          %s4295 = int_to_ptr.vmem [resolvable:$true] %s4294
          %4300 = dma.vmem_to_hbm [thread:$0]  %s4295, 4096, %s4293, %s4280, 128, 128, 8
        $region64: #{tpu_custom_call.1} parent=43 // pred_fallthru
          _
      $region44: #{tpu_custom_call.1} parent=5 // pred_fallthru
        _
      %p4301 = scmp.le.s32.totalorder 2, %s20
      // Predicated region
      $region65: #{tpu_custom_call.1} parent=5 // pred_check
        %p4302 = pneg %p4301
      $region66: #{tpu_custom_call.1} parent=5 // pred_check_branch
        %4304 = sbr.rel (%p4302) target = $region68
      $region67: #{tpu_custom_call.1} parent=5 // pred_region
        %s4305 = ssub.s32 %s20, 2
        // Predicated region
        $region69: #{tpu_custom_call.1} parent=67 // pred_check
          %p4306 = pneg %p180
        $region70: #{tpu_custom_call.1} parent=67 // pred_check_branch
          %4308 = sbr.rel (%p4306) target = $region72
        $region71: #{tpu_custom_call.1} parent=67 // pred_region
          %s4309 = sand.u32 %s165, 1
          %s4310 = scalar_lea.sflag [#allocation4], %s4309
          %s4311 = sand.u32 %s165, 1
          %s4312 = smul.addr %s4311, 256
          %s4313 = scalar_lea.vmem [#allocation10], %s4312
          %4314 = dma.done %s4310, 4096
        $region72: #{tpu_custom_call.1} parent=67 // pred_fallthru
          _
      $region68: #{tpu_custom_call.1} parent=5 // pred_fallthru
        _
    $region6: #{tpu_custom_call.1} parent=1 // loop_footer
      %s24 = sadd.s32 1, %s20
    $region7: #{tpu_custom_call.1} parent=1 // loop_footer_branch
      %19 = sbr.rel target = $region3
    $region8: #{tpu_custom_call.1} parent=1 // loop_exit
      _
    %4315 = vsyncpa [#allocation3], 1
    %s4316 = scalar_lea.sflag [#allocation3], 1
    %4317 = vsyncpa %s4316, 1
    %4318 = vsyncpa [#allocation6], 1
    %4319 = vsyncpa [#allocation9], 1
    %4320 = vsyncpa [#allocation4], 1
    %s4321 = scalar_lea.sflag [#allocation4], 1
    %4322 = vsyncpa %s4321, 1

</llo_original>
